<compile_context>
chip_gen: v7x
topology: tpu7x:2x2x1
jax: 0.10.0
libtpu: 0.0.40
codegen_flags: <defaults>
</compile_context>

<pallas_src>
import numpy as np
import jax
import jax.numpy as jnp
from jax import lax
from jax.experimental import pallas as pl
from jax.experimental.pallas import tpu as pltpu

N_NODES = 22
IN_FEAT = 6
OUT_FEAT = 64
FLAT = N_NODES * IN_FEAT          # 132
HID = 256
HID2 = 2 * HID                    # 512 (e_1 hidden | e_3 hidden)
N_M = 43                          # |m|      (upper-tri incl. diag, adj > 0)
N_MINV = 210                      # |m_inv|  (strict upper-tri, adj <= 0)
NSQ = N_NODES * N_NODES           # 484
PROJ = 2 * OUT_FEAT               # 128 = [M*h1 | M*(h0-h1)] rows per node


def mgc_kernel(x_ref, w1_ref, w2_ref, wf_ref, b_ref, out_ref, v_scr, p_scr):
    """Everything is transposed: batch on lanes.

    x_ref   : (133, tb)   rows 6j+c = channel c of node j, row 132 = 1
    w1_ref  : (513, 133)  [W1f^T | b1f^T] with an extra constant-1 row
    w2_ref  : (484, 513)  [W2s^T | b2s^T]  (scatter + adj + symmetrize folded)
    wf_ref  : (128, 132)  per-node folded [M*W1 ; M*(W0-W1)] projection
    b_ref   : (64, 1)     output bias
    out_ref : (1408, tb)  row 64*i+f = out[b, i, f]
    v_scr   : (484, tb)   flattened symmetrized adjacency, row 22*i+j = adjs[i,j]
    p_scr   : (2816, tb)  per-node projections, rows 128j..128j+63 = (M*h1)_j^T,
                          rows 128j+64..128j+127 = (M*(h0-h1))_j^T
    """
    f32 = jnp.float32
    tb = x_ref.shape[1]

    # ---- fused adjacency MLP (biases folded via the ones rows) ----
    u = jnp.maximum(
        jnp.dot(w1_ref[...], x_ref[...], preferred_element_type=f32), 0.0)   # (513, tb)
    v_scr[...] = jnp.dot(w2_ref[...], u, preferred_element_type=f32)          # (484, tb)

    # ---- node projection + modulation for all 22 nodes, whole block ----
    for j in range(N_NODES):
        p_scr[PROJ * j:PROJ * (j + 1), :] = jnp.dot(
            wf_ref[:, IN_FEAT * j:IN_FEAT * (j + 1)],
            x_ref[IN_FEAT * j:IN_FEAT * (j + 1), :],
            preferred_element_type=f32)                                        # (128, tb)

    bias_b = jnp.broadcast_to(b_ref[...], (OUT_FEAT, tb))                      # hoisted

    # ---- graph conv: out[i] = sum_j adjs[i,j]*(M*h1)[j]
    #                          + adjs[i,i]*(M*(h0-h1))[i] + bias ----
    # Rolled over the 22 output nodes (code size); the 22-term contraction is
    # statically unrolled lane-dense broadcast-MACs on the VPU.
    def ibody(i, carry):
        dmh_start = pl.multiple_of(PROJ * i + OUT_FEAT, OUT_FEAT)
        dmh = p_scr[pl.ds(dmh_start, OUT_FEAT), :]                             # (64, tb)
        diag = v_scr[pl.ds((N_NODES + 1) * i, 1), :]                           # (1, tb)
        acc = diag * dmh + bias_b
        for j in range(N_NODES):
            a_ij = v_scr[pl.ds(N_NODES * i + j, 1), :]                         # (1, tb)
            acc = acc + a_ij * p_scr[PROJ * j:PROJ * j + OUT_FEAT, :]
        out_ref[pl.ds(pl.multiple_of(OUT_FEAT * i, OUT_FEAT), OUT_FEAT), :] = acc
        return carry

    lax.fori_loop(0, N_NODES, ibody, 0)


def modulated_graph_conv(x, consts, tb=128):
    """x: (B, 22, 6) f32 -> (B, 22, 64) f32."""
    assert tb % 128 == 0, "batch tile is the lane dimension of every block"
    w1fa, w2a, wfold, biast = consts
    B = x.shape[0]
    nb = max(1, -(-B // tb))
    Bp = nb * tb

    xf = jnp.asarray(x, jnp.float32).reshape(B, FLAT)
    if Bp != B:
        xf = jnp.pad(xf, ((0, Bp - B), (0, 0)))
    # transposed + ones row (folds the first-layer bias)
    xfa = jnp.concatenate([xf.T, jnp.ones((1, Bp), jnp.float32)], axis=0)      # (133, Bp)

    out_t = pl.pallas_call(
        mgc_kernel,
        out_shape=jax.ShapeDtypeStruct((N_NODES * OUT_FEAT, Bp), jnp.float32),
        grid=(nb,),
        in_specs=[pl.BlockSpec((FLAT + 1, tb), lambda i: (0, i)),
                  pl.BlockSpec(w1fa.shape, lambda i: (0, 0)),
                  pl.BlockSpec(w2a.shape, lambda i: (0, 0)),
                  pl.BlockSpec(wfold.shape, lambda i: (0, 0)),
                  pl.BlockSpec(biast.shape, lambda i: (0, 0))],
        out_specs=pl.BlockSpec((N_NODES * OUT_FEAT, tb), lambda i: (0, i)),
        scratch_shapes=[pltpu.VMEM((NSQ, tb), jnp.float32),
                        pltpu.VMEM((N_NODES * PROJ, tb), jnp.float32)],
        compiler_params=pltpu.CompilerParams(
            dimension_semantics=("parallel",)),
    )(xfa, w1fa, w2a, wfold, biast)

    return out_t.T.reshape(Bp, N_NODES, OUT_FEAT)[:B]


def reference_np(x, W, Mmod, bias, e1w1, e1b1, e1w2, e1b2,
                 e3w1, e3b1, e3w2, e3b2, adj, m, m_inv):
    x = np.asarray(x, np.float32)
    B = x.shape[0]
    h0 = x @ np.asarray(W[0])
    h1 = x @ np.asarray(W[1])
    xf = x.reshape(B, FLAT)
    o1 = np.maximum(xf @ e1w1 + e1b1, 0.0) @ e1w2 + e1b2
    o3 = np.maximum(xf @ e3w1 + e3b1, 0.0) @ e3w2 + e3b2
    adj1 = np.tile(adj[None], (B, 1, 1))
    adj1[:, m_inv] = o3
    adj1[:, m] = adj1[:, m] + o1
    adjs = np.transpose(adj1, (0, 2, 1)) + adj1
    E = np.eye(N_NODES, dtype=np.float32)
    out = (adjs * E) @ (Mmod * h0) + (adjs * (1.0 - E)) @ (Mmod * h1) + bias.reshape(1, 1, -1)
    return out


if __name__ == "__main__":
    B = 200
    TB = 128

    # ---- deterministic parameters ----
    def uniform(k, shape, bound):
        return jax.random.uniform(k, shape, jnp.float32, -bound, bound)

    ks = jax.random.split(jax.random.PRNGKey(42), 12)
    gain = 1.414
    W = uniform(ks[0], (2, IN_FEAT, OUT_FEAT), gain * np.sqrt(6.0 / (IN_FEAT + OUT_FEAT)))
    Mmod = uniform(ks[1], (N_NODES, OUT_FEAT), gain * np.sqrt(6.0 / (N_NODES + OUT_FEAT)))
    bias = uniform(ks[2], (OUT_FEAT,), 1.0 / np.sqrt(OUT_FEAT))
    # e_* weights stored already transposed to (in, out) for direct matmul.
    e1w1 = uniform(ks[3], (FLAT, HID), np.sqrt(6.0 / FLAT))
    e1b1 = uniform(ks[4], (1, HID), 1.0 / np.sqrt(FLAT))
    e1w2 = uniform(ks[5], (HID, N_M), np.sqrt(6.0 / HID))
    e1b2 = uniform(ks[6], (1, N_M), 1.0 / np.sqrt(HID))
    e3w1 = uniform(ks[7], (FLAT, HID), np.sqrt(6.0 / FLAT))
    e3b1 = uniform(ks[8], (1, HID), 1.0 / np.sqrt(FLAT))
    e3w2 = uniform(ks[9], (HID, N_MINV), np.sqrt(6.0 / HID))
    e3b2 = uniform(ks[10], (1, N_MINV), 1.0 / np.sqrt(HID))

    # ---- adjacency (22-joint chain skeleton with self-loops) + masks ----
    adj_np = np.eye(N_NODES, dtype=np.float32)
    for i in range(N_NODES - 1):
        adj_np[i, i + 1] = 0.5
        adj_np[i + 1, i] = 0.5

    m = adj_np > 0
    for i in range(N_NODES):
        for j in range(i):
            m[i, j] = False
    m_inv = adj_np <= 0
    for i in range(N_NODES):
        for j in range(i + 1):
            m_inv[i, j] = False
    assert int(m.sum()) == N_M and int(m_inv.sum()) == N_MINV

    # one-hot scatter matrices (row-major True order, like torch mask indexing)
    m_pos = np.argwhere(m)
    Pm = np.zeros((N_M, NSQ), np.float32)
    Pm[np.arange(N_M), m_pos[:, 0] * N_NODES + m_pos[:, 1]] = 1.0
    minv_pos = np.argwhere(m_inv)
    Pminv = np.zeros((N_MINV, NSQ), np.float32)
    Pminv[np.arange(N_MINV), minv_pos[:, 0] * N_NODES + minv_pos[:, 1]] = 1.0
    adjkeep = (adj_np * (~m_inv)).reshape(1, NSQ).astype(np.float32)

    # permutation matrix of k=22i+j -> 22j+i (transpose of the flattened adj)
    Pperm = np.zeros((NSQ, NSQ), np.float32)
    for i in range(N_NODES):
        for j in range(N_NODES):
            Pperm[i * N_NODES + j, j * N_NODES + i] = 1.0

    # ---- host-side constant folding ----
    e1w1n, e1b1n = np.asarray(e1w1), np.asarray(e1b1)
    e3w1n, e3b1n = np.asarray(e3w1), np.asarray(e3b1)
    e1w2n, e1b2n = np.asarray(e1w2), np.asarray(e1b2)
    e3w2n, e3b2n = np.asarray(e3w2), np.asarray(e3b2)

    W1f = np.concatenate([e1w1n, e3w1n], axis=1)                       # (132, 512)
    b1f = np.concatenate([e1b1n, e3b1n], axis=1)                       # (1, 512)
    W2f = np.concatenate([e1w2n @ Pm, e3w2n @ Pminv], axis=0)          # (512, 484)
    b2f = e1b2n @ Pm + e3b2n @ Pminv + adjkeep                         # (1, 484)
    W2s = W2f + W2f @ Pperm                                            # symmetrized
    b2s = b2f + b2f @ Pperm

    # transposed + bias-augmented weights (biases carried by constant-1 rows)
    W1fa = np.zeros((HID2 + 1, FLAT + 1), np.float32)                  # (513, 133)
    W1fa[:HID2, :FLAT] = W1f.T
    W1fa[:HID2, FLAT] = b1f[0]
    W1fa[HID2, FLAT] = 1.0                                             # keeps u[512]=1 through ReLU
    W2a = np.zeros((NSQ, HID2 + 1), np.float32)                        # (484, 513)
    W2a[:, :HID2] = W2s.T
    W2a[:, HID2] = b2s[0]

    # per-node folded projection + modulation weight:
    #   rows 0..63  : M[j,f] * W1[c,f]          -> (M*h1)_j
    #   rows 64..127: M[j,f] * (W0[c,f]-W1[c,f]) -> (M*(h0-h1))_j
    W0n, W1n, Mn = np.asarray(W[0]), np.asarray(W[1]), np.asarray(Mmod)
    top = np.einsum('jf,cf->fjc', Mn, W1n).reshape(OUT_FEAT, FLAT)
    bot = np.einsum('jf,cf->fjc', Mn, W0n - W1n).reshape(OUT_FEAT, FLAT)
    Wfold = np.concatenate([top, bot], axis=0)                         # (128, 132)

    biasT = np.asarray(bias).reshape(OUT_FEAT, 1)                      # (64, 1)

    consts = [jnp.asarray(c, jnp.float32) for c in [W1fa, W2a, Wfold, biasT]]

    # ---- input + run ----
    x = jax.random.normal(jax.random.PRNGKey(0), (B, N_NODES, IN_FEAT), jnp.float32)
    out = modulated_graph_conv(x, consts, tb=TB)
    out = jax.block_until_ready(out)

    # ---- check against pure-numpy reference of the torch forward ----
    ref = reference_np(np.asarray(x), np.asarray(W), np.asarray(Mmod), np.asarray(bias),
                       e1w1n, e1b1n, e1w2n, e1b2n,
                       e3w1n, e3b1n, e3w2n, e3b2n,
                       adj_np, m, m_inv)
    assert out.shape == (B, N_NODES, OUT_FEAT)
    np.testing.assert_allclose(np.asarray(out), ref, rtol=2e-3, atol=2e-3)
    print("KERNEL_OK")
</pallas_src>

<mosaic_0001>
module attributes {stable_mosaic.version = 11 : i64} {
  func.func @mgc_kernel(%arg0: i32, %arg1: memref<133x128xf32, #tpu.memory_space<vmem>>, %arg2: memref<513x133xf32, #tpu.memory_space<vmem>>, %arg3: memref<484x513xf32, #tpu.memory_space<vmem>>, %arg4: memref<128x132xf32, #tpu.memory_space<vmem>>, %arg5: memref<64x1xf32, #tpu.memory_space<vmem>>, %arg6: memref<1408x128xf32, #tpu.memory_space<vmem>>, %arg7: memref<484x128xf32, #tpu.memory_space<vmem>>, %arg8: memref<2816x128xf32, #tpu.memory_space<vmem>>) attributes {dimension_semantics = [#tpu.dimension_semantics<parallel>], iteration_bounds = array<i64: 2>, scalar_prefetch = 0 : i64, scratch_operands = 2 : i64, tpu.core_type = #tpu.core_type<tc>, window_params = [{transform_indices = @transform_0, window_bounds = array<i64: 133, 128>}, {pipeline_mode = #tpu.pipeline_mode<synchronous>, transform_indices = @transform_1, window_bounds = array<i64: 513, 133>}, {pipeline_mode = #tpu.pipeline_mode<synchronous>, transform_indices = @transform_2, window_bounds = array<i64: 484, 513>}, {pipeline_mode = #tpu.pipeline_mode<synchronous>, transform_indices = @transform_3, window_bounds = array<i64: 128, 132>}, {pipeline_mode = #tpu.pipeline_mode<synchronous>, transform_indices = @transform_4, window_bounds = array<i64: 64, 1>}, {transform_indices = @transform_5, window_bounds = array<i64: 1408, 128>}]} {
    %c0 = arith.constant 0 : index
    %c0_0 = arith.constant 0 : index
    %0 = vector.load %arg2[%c0, %c0_0] : memref<513x133xf32, #tpu.memory_space<vmem>>, vector<513x133xf32>
    %c0_1 = arith.constant 0 : index
    %c0_2 = arith.constant 0 : index
    %1 = vector.load %arg1[%c0_1, %c0_2] : memref<133x128xf32, #tpu.memory_space<vmem>>, vector<133x128xf32>
    %cst = arith.constant dense<0.000000e+00> : vector<513x128xf32>
    %2 = tpu.matmul %0, %1, %cst {dimension_numbers = #tpu.dot_dimension_numbers<[1], [0], [0], [1], [0, 0, 1, 1], [], []>} : vector<513x133xf32>, vector<133x128xf32>, vector<513x128xf32> -> vector<513x128xf32>
    %cst_3 = arith.constant 0.000000e+00 : f32
    %3 = vector.broadcast %cst_3 : f32 to vector<513x128xf32>
    %4 = arith.maximumf %2, %3 : vector<513x128xf32>
    %c0_4 = arith.constant 0 : index
    %c0_5 = arith.constant 0 : index
    %5 = vector.load %arg3[%c0_4, %c0_5] : memref<484x513xf32, #tpu.memory_space<vmem>>, vector<484x513xf32>
    %cst_6 = arith.constant dense<0.000000e+00> : vector<484x128xf32>
    %6 = tpu.matmul %5, %4, %cst_6 {dimension_numbers = #tpu.dot_dimension_numbers<[1], [0], [0], [1], [0, 0, 1, 1], [], []>} : vector<484x513xf32>, vector<513x128xf32>, vector<484x128xf32> -> vector<484x128xf32>
    %c0_7 = arith.constant 0 : index
    %c0_8 = arith.constant 0 : index
    %7 = vector.load %arg7[%c0_7, %c0_8] : memref<484x128xf32, #tpu.memory_space<vmem>>, vector<484x128xf32>
    tpu.vector_store %arg7[%c0_7, %c0_8], %6 {strides = array<i32>} : memref<484x128xf32, #tpu.memory_space<vmem>>, vector<484x128xf32>,
    %c0_9 = arith.constant 0 : index
    %c0_10 = arith.constant 0 : index
    %8 = vector.load %arg4[%c0_9, %c0_10] : memref<128x132xf32, #tpu.memory_space<vmem>>, vector<128x6xf32>
    %c0_11 = arith.constant 0 : index
    %c0_12 = arith.constant 0 : index
    %9 = vector.load %arg1[%c0_11, %c0_12] : memref<133x128xf32, #tpu.memory_space<vmem>>, vector<6x128xf32>
    %cst_13 = arith.constant dense<0.000000e+00> : vector<128x128xf32>
    %10 = tpu.matmul %8, %9, %cst_13 {dimension_numbers = #tpu.dot_dimension_numbers<[1], [0], [0], [1], [0, 0, 1, 1], [], []>} : vector<128x6xf32>, vector<6x128xf32>, vector<128x128xf32> -> vector<128x128xf32>
    %c0_14 = arith.constant 0 : index
    %c0_15 = arith.constant 0 : index
    %11 = vector.load %arg8[%c0_14, %c0_15] : memref<2816x128xf32, #tpu.memory_space<vmem>>, vector<128x128xf32>
    tpu.vector_store %arg8[%c0_14, %c0_15], %10 {strides = array<i32>} : memref<2816x128xf32, #tpu.memory_space<vmem>>, vector<128x128xf32>,
    %c0_16 = arith.constant 0 : index
    %c6 = arith.constant 6 : index
    %12 = vector.load %arg4[%c0_16, %c6] : memref<128x132xf32, #tpu.memory_space<vmem>>, vector<128x6xf32>
    %c6_17 = arith.constant 6 : index
    %c0_18 = arith.constant 0 : index
    %13 = vector.load %arg1[%c6_17, %c0_18] : memref<133x128xf32, #tpu.memory_space<vmem>>, vector<6x128xf32>
    %cst_19 = arith.constant dense<0.000000e+00> : vector<128x128xf32>
    %14 = tpu.matmul %12, %13, %cst_19 {dimension_numbers = #tpu.dot_dimension_numbers<[1], [0], [0], [1], [0, 0, 1, 1], [], []>} : vector<128x6xf32>, vector<6x128xf32>, vector<128x128xf32> -> vector<128x128xf32>
    %c128 = arith.constant 128 : index
    %c0_20 = arith.constant 0 : index
    %15 = vector.load %arg8[%c128, %c0_20] : memref<2816x128xf32, #tpu.memory_space<vmem>>, vector<128x128xf32>
    tpu.vector_store %arg8[%c128, %c0_20], %14 {strides = array<i32>} : memref<2816x128xf32, #tpu.memory_space<vmem>>, vector<128x128xf32>,
    %c0_21 = arith.constant 0 : index
    %c12 = arith.constant 12 : index
    %16 = vector.load %arg4[%c0_21, %c12] : memref<128x132xf32, #tpu.memory_space<vmem>>, vector<128x6xf32>
    %c12_22 = arith.constant 12 : index
    %c0_23 = arith.constant 0 : index
    %17 = vector.load %arg1[%c12_22, %c0_23] : memref<133x128xf32, #tpu.memory_space<vmem>>, vector<6x128xf32>
    %cst_24 = arith.constant dense<0.000000e+00> : vector<128x128xf32>
    %18 = tpu.matmul %16, %17, %cst_24 {dimension_numbers = #tpu.dot_dimension_numbers<[1], [0], [0], [1], [0, 0, 1, 1], [], []>} : vector<128x6xf32>, vector<6x128xf32>, vector<128x128xf32> -> vector<128x128xf32>
    %c256 = arith.constant 256 : index
    %c0_25 = arith.constant 0 : index
    %19 = vector.load %arg8[%c256, %c0_25] : memref<2816x128xf32, #tpu.memory_space<vmem>>, vector<128x128xf32>
    tpu.vector_store %arg8[%c256, %c0_25], %18 {strides = array<i32>} : memref<2816x128xf32, #tpu.memory_space<vmem>>, vector<128x128xf32>,
    %c0_26 = arith.constant 0 : index
    %c18 = arith.constant 18 : index
    %20 = vector.load %arg4[%c0_26, %c18] : memref<128x132xf32, #tpu.memory_space<vmem>>, vector<128x6xf32>
    %c18_27 = arith.constant 18 : index
    %c0_28 = arith.constant 0 : index
    %21 = vector.load %arg1[%c18_27, %c0_28] : memref<133x128xf32, #tpu.memory_space<vmem>>, vector<6x128xf32>
    %cst_29 = arith.constant dense<0.000000e+00> : vector<128x128xf32>
    %22 = tpu.matmul %20, %21, %cst_29 {dimension_numbers = #tpu.dot_dimension_numbers<[1], [0], [0], [1], [0, 0, 1, 1], [], []>} : vector<128x6xf32>, vector<6x128xf32>, vector<128x128xf32> -> vector<128x128xf32>
    %c384 = arith.constant 384 : index
    %c0_30 = arith.constant 0 : index
    %23 = vector.load %arg8[%c384, %c0_30] : memref<2816x128xf32, #tpu.memory_space<vmem>>, vector<128x128xf32>
    tpu.vector_store %arg8[%c384, %c0_30], %22 {strides = array<i32>} : memref<2816x128xf32, #tpu.memory_space<vmem>>, vector<128x128xf32>,
    %c0_31 = arith.constant 0 : index
    %c24 = arith.constant 24 : index
    %24 = vector.load %arg4[%c0_31, %c24] : memref<128x132xf32, #tpu.memory_space<vmem>>, vector<128x6xf32>
    %c24_32 = arith.constant 24 : index
    %c0_33 = arith.constant 0 : index
    %25 = vector.load %arg1[%c24_32, %c0_33] : memref<133x128xf32, #tpu.memory_space<vmem>>, vector<6x128xf32>
    %cst_34 = arith.constant dense<0.000000e+00> : vector<128x128xf32>
    %26 = tpu.matmul %24, %25, %cst_34 {dimension_numbers = #tpu.dot_dimension_numbers<[1], [0], [0], [1], [0, 0, 1, 1], [], []>} : vector<128x6xf32>, vector<6x128xf32>, vector<128x128xf32> -> vector<128x128xf32>
    %c512 = arith.constant 512 : index
    %c0_35 = arith.constant 0 : index
    %27 = vector.load %arg8[%c512, %c0_35] : memref<2816x128xf32, #tpu.memory_space<vmem>>, vector<128x128xf32>
    tpu.vector_store %arg8[%c512, %c0_35], %26 {strides = array<i32>} : memref<2816x128xf32, #tpu.memory_space<vmem>>, vector<128x128xf32>,
    %c0_36 = arith.constant 0 : index
    %c30 = arith.constant 30 : index
    %28 = vector.load %arg4[%c0_36, %c30] : memref<128x132xf32, #tpu.memory_space<vmem>>, vector<128x6xf32>
    %c30_37 = arith.constant 30 : index
    %c0_38 = arith.constant 0 : index
    %29 = vector.load %arg1[%c30_37, %c0_38] : memref<133x128xf32, #tpu.memory_space<vmem>>, vector<6x128xf32>
    %cst_39 = arith.constant dense<0.000000e+00> : vector<128x128xf32>
    %30 = tpu.matmul %28, %29, %cst_39 {dimension_numbers = #tpu.dot_dimension_numbers<[1], [0], [0], [1], [0, 0, 1, 1], [], []>} : vector<128x6xf32>, vector<6x128xf32>, vector<128x128xf32> -> vector<128x128xf32>
    %c640 = arith.constant 640 : index
    %c0_40 = arith.constant 0 : index
    %31 = vector.load %arg8[%c640, %c0_40] : memref<2816x128xf32, #tpu.memory_space<vmem>>, vector<128x128xf32>
    tpu.vector_store %arg8[%c640, %c0_40], %30 {strides = array<i32>} : memref<2816x128xf32, #tpu.memory_space<vmem>>, vector<128x128xf32>,
    %c0_41 = arith.constant 0 : index
    %c36 = arith.constant 36 : index
    %32 = vector.load %arg4[%c0_41, %c36] : memref<128x132xf32, #tpu.memory_space<vmem>>, vector<128x6xf32>
    %c36_42 = arith.constant 36 : index
    %c0_43 = arith.constant 0 : index
    %33 = vector.load %arg1[%c36_42, %c0_43] : memref<133x128xf32, #tpu.memory_space<vmem>>, vector<6x128xf32>
    %cst_44 = arith.constant dense<0.000000e+00> : vector<128x128xf32>
    %34 = tpu.matmul %32, %33, %cst_44 {dimension_numbers = #tpu.dot_dimension_numbers<[1], [0], [0], [1], [0, 0, 1, 1], [], []>} : vector<128x6xf32>, vector<6x128xf32>, vector<128x128xf32> -> vector<128x128xf32>
    %c768 = arith.constant 768 : index
    %c0_45 = arith.constant 0 : index
    %35 = vector.load %arg8[%c768, %c0_45] : memref<2816x128xf32, #tpu.memory_space<vmem>>, vector<128x128xf32>
    tpu.vector_store %arg8[%c768, %c0_45], %34 {strides = array<i32>} : memref<2816x128xf32, #tpu.memory_space<vmem>>, vector<128x128xf32>,
    %c0_46 = arith.constant 0 : index
    %c42 = arith.constant 42 : index
    %36 = vector.load %arg4[%c0_46, %c42] : memref<128x132xf32, #tpu.memory_space<vmem>>, vector<128x6xf32>
    %c42_47 = arith.constant 42 : index
    %c0_48 = arith.constant 0 : index
    %37 = vector.load %arg1[%c42_47, %c0_48] : memref<133x128xf32, #tpu.memory_space<vmem>>, vector<6x128xf32>
    %cst_49 = arith.constant dense<0.000000e+00> : vector<128x128xf32>
    %38 = tpu.matmul %36, %37, %cst_49 {dimension_numbers = #tpu.dot_dimension_numbers<[1], [0], [0], [1], [0, 0, 1, 1], [], []>} : vector<128x6xf32>, vector<6x128xf32>, vector<128x128xf32> -> vector<128x128xf32>
    %c896 = arith.constant 896 : index
    %c0_50 = arith.constant 0 : index
    %39 = vector.load %arg8[%c896, %c0_50] : memref<2816x128xf32, #tpu.memory_space<vmem>>, vector<128x128xf32>
    tpu.vector_store %arg8[%c896, %c0_50], %38 {strides = array<i32>} : memref<2816x128xf32, #tpu.memory_space<vmem>>, vector<128x128xf32>,
    %c0_51 = arith.constant 0 : index
    %c48 = arith.constant 48 : index
    %40 = vector.load %arg4[%c0_51, %c48] : memref<128x132xf32, #tpu.memory_space<vmem>>, vector<128x6xf32>
    %c48_52 = arith.constant 48 : index
    %c0_53 = arith.constant 0 : index
    %41 = vector.load %arg1[%c48_52, %c0_53] : memref<133x128xf32, #tpu.memory_space<vmem>>, vector<6x128xf32>
    %cst_54 = arith.constant dense<0.000000e+00> : vector<128x128xf32>
    %42 = tpu.matmul %40, %41, %cst_54 {dimension_numbers = #tpu.dot_dimension_numbers<[1], [0], [0], [1], [0, 0, 1, 1], [], []>} : vector<128x6xf32>, vector<6x128xf32>, vector<128x128xf32> -> vector<128x128xf32>
    %c1024 = arith.constant 1024 : index
    %c0_55 = arith.constant 0 : index
    %43 = vector.load %arg8[%c1024, %c0_55] : memref<2816x128xf32, #tpu.memory_space<vmem>>, vector<128x128xf32>
    tpu.vector_store %arg8[%c1024, %c0_55], %42 {strides = array<i32>} : memref<2816x128xf32, #tpu.memory_space<vmem>>, vector<128x128xf32>,
    %c0_56 = arith.constant 0 : index
    %c54 = arith.constant 54 : index
    %44 = vector.load %arg4[%c0_56, %c54] : memref<128x132xf32, #tpu.memory_space<vmem>>, vector<128x6xf32>
    %c54_57 = arith.constant 54 : index
    %c0_58 = arith.constant 0 : index
    %45 = vector.load %arg1[%c54_57, %c0_58] : memref<133x128xf32, #tpu.memory_space<vmem>>, vector<6x128xf32>
    %cst_59 = arith.constant dense<0.000000e+00> : vector<128x128xf32>
    %46 = tpu.matmul %44, %45, %cst_59 {dimension_numbers = #tpu.dot_dimension_numbers<[1], [0], [0], [1], [0, 0, 1, 1], [], []>} : vector<128x6xf32>, vector<6x128xf32>, vector<128x128xf32> -> vector<128x128xf32>
    %c1152 = arith.constant 1152 : index
    %c0_60 = arith.constant 0 : index
    %47 = vector.load %arg8[%c1152, %c0_60] : memref<2816x128xf32, #tpu.memory_space<vmem>>, vector<128x128xf32>
    tpu.vector_store %arg8[%c1152, %c0_60], %46 {strides = array<i32>} : memref<2816x128xf32, #tpu.memory_space<vmem>>, vector<128x128xf32>,
    %c0_61 = arith.constant 0 : index
    %c60 = arith.constant 60 : index
    %48 = vector.load %arg4[%c0_61, %c60] : memref<128x132xf32, #tpu.memory_space<vmem>>, vector<128x6xf32>
    %c60_62 = arith.constant 60 : index
    %c0_63 = arith.constant 0 : index
    %49 = vector.load %arg1[%c60_62, %c0_63] : memref<133x128xf32, #tpu.memory_space<vmem>>, vector<6x128xf32>
    %cst_64 = arith.constant dense<0.000000e+00> : vector<128x128xf32>
    %50 = tpu.matmul %48, %49, %cst_64 {dimension_numbers = #tpu.dot_dimension_numbers<[1], [0], [0], [1], [0, 0, 1, 1], [], []>} : vector<128x6xf32>, vector<6x128xf32>, vector<128x128xf32> -> vector<128x128xf32>
    %c1280 = arith.constant 1280 : index
    %c0_65 = arith.constant 0 : index
    %51 = vector.load %arg8[%c1280, %c0_65] : memref<2816x128xf32, #tpu.memory_space<vmem>>, vector<128x128xf32>
    tpu.vector_store %arg8[%c1280, %c0_65], %50 {strides = array<i32>} : memref<2816x128xf32, #tpu.memory_space<vmem>>, vector<128x128xf32>,
    %c0_66 = arith.constant 0 : index
    %c66 = arith.constant 66 : index
    %52 = vector.load %arg4[%c0_66, %c66] : memref<128x132xf32, #tpu.memory_space<vmem>>, vector<128x6xf32>
    %c66_67 = arith.constant 66 : index
    %c0_68 = arith.constant 0 : index
    %53 = vector.load %arg1[%c66_67, %c0_68] : memref<133x128xf32, #tpu.memory_space<vmem>>, vector<6x128xf32>
    %cst_69 = arith.constant dense<0.000000e+00> : vector<128x128xf32>
    %54 = tpu.matmul %52, %53, %cst_69 {dimension_numbers = #tpu.dot_dimension_numbers<[1], [0], [0], [1], [0, 0, 1, 1], [], []>} : vector<128x6xf32>, vector<6x128xf32>, vector<128x128xf32> -> vector<128x128xf32>
    %c1408 = arith.constant 1408 : index
    %c0_70 = arith.constant 0 : index
    %55 = vector.load %arg8[%c1408, %c0_70] : memref<2816x128xf32, #tpu.memory_space<vmem>>, vector<128x128xf32>
    tpu.vector_store %arg8[%c1408, %c0_70], %54 {strides = array<i32>} : memref<2816x128xf32, #tpu.memory_space<vmem>>, vector<128x128xf32>,
    %c0_71 = arith.constant 0 : index
    %c72 = arith.constant 72 : index
    %56 = vector.load %arg4[%c0_71, %c72] : memref<128x132xf32, #tpu.memory_space<vmem>>, vector<128x6xf32>
    %c72_72 = arith.constant 72 : index
    %c0_73 = arith.constant 0 : index
    %57 = vector.load %arg1[%c72_72, %c0_73] : memref<133x128xf32, #tpu.memory_space<vmem>>, vector<6x128xf32>
    %cst_74 = arith.constant dense<0.000000e+00> : vector<128x128xf32>
    %58 = tpu.matmul %56, %57, %cst_74 {dimension_numbers = #tpu.dot_dimension_numbers<[1], [0], [0], [1], [0, 0, 1, 1], [], []>} : vector<128x6xf32>, vector<6x128xf32>, vector<128x128xf32> -> vector<128x128xf32>
    %c1536 = arith.constant 1536 : index
    %c0_75 = arith.constant 0 : index
    %59 = vector.load %arg8[%c1536, %c0_75] : memref<2816x128xf32, #tpu.memory_space<vmem>>, vector<128x128xf32>
    tpu.vector_store %arg8[%c1536, %c0_75], %58 {strides = array<i32>} : memref<2816x128xf32, #tpu.memory_space<vmem>>, vector<128x128xf32>,
    %c0_76 = arith.constant 0 : index
    %c78 = arith.constant 78 : index
    %60 = vector.load %arg4[%c0_76, %c78] : memref<128x132xf32, #tpu.memory_space<vmem>>, vector<128x6xf32>
    %c78_77 = arith.constant 78 : index
    %c0_78 = arith.constant 0 : index
    %61 = vector.load %arg1[%c78_77, %c0_78] : memref<133x128xf32, #tpu.memory_space<vmem>>, vector<6x128xf32>
    %cst_79 = arith.constant dense<0.000000e+00> : vector<128x128xf32>
    %62 = tpu.matmul %60, %61, %cst_79 {dimension_numbers = #tpu.dot_dimension_numbers<[1], [0], [0], [1], [0, 0, 1, 1], [], []>} : vector<128x6xf32>, vector<6x128xf32>, vector<128x128xf32> -> vector<128x128xf32>
    %c1664 = arith.constant 1664 : index
    %c0_80 = arith.constant 0 : index
    %63 = vector.load %arg8[%c1664, %c0_80] : memref<2816x128xf32, #tpu.memory_space<vmem>>, vector<128x128xf32>
    tpu.vector_store %arg8[%c1664, %c0_80], %62 {strides = array<i32>} : memref<2816x128xf32, #tpu.memory_space<vmem>>, vector<128x128xf32>,
    %c0_81 = arith.constant 0 : index
    %c84 = arith.constant 84 : index
    %64 = vector.load %arg4[%c0_81, %c84] : memref<128x132xf32, #tpu.memory_space<vmem>>, vector<128x6xf32>
    %c84_82 = arith.constant 84 : index
    %c0_83 = arith.constant 0 : index
    %65 = vector.load %arg1[%c84_82, %c0_83] : memref<133x128xf32, #tpu.memory_space<vmem>>, vector<6x128xf32>
    %cst_84 = arith.constant dense<0.000000e+00> : vector<128x128xf32>
    %66 = tpu.matmul %64, %65, %cst_84 {dimension_numbers = #tpu.dot_dimension_numbers<[1], [0], [0], [1], [0, 0, 1, 1], [], []>} : vector<128x6xf32>, vector<6x128xf32>, vector<128x128xf32> -> vector<128x128xf32>
    %c1792 = arith.constant 1792 : index
    %c0_85 = arith.constant 0 : index
    %67 = vector.load %arg8[%c1792, %c0_85] : memref<2816x128xf32, #tpu.memory_space<vmem>>, vector<128x128xf32>
    tpu.vector_store %arg8[%c1792, %c0_85], %66 {strides = array<i32>} : memref<2816x128xf32, #tpu.memory_space<vmem>>, vector<128x128xf32>,
    %c0_86 = arith.constant 0 : index
    %c90 = arith.constant 90 : index
    %68 = vector.load %arg4[%c0_86, %c90] : memref<128x132xf32, #tpu.memory_space<vmem>>, vector<128x6xf32>
    %c90_87 = arith.constant 90 : index
    %c0_88 = arith.constant 0 : index
    %69 = vector.load %arg1[%c90_87, %c0_88] : memref<133x128xf32, #tpu.memory_space<vmem>>, vector<6x128xf32>
    %cst_89 = arith.constant dense<0.000000e+00> : vector<128x128xf32>
    %70 = tpu.matmul %68, %69, %cst_89 {dimension_numbers = #tpu.dot_dimension_numbers<[1], [0], [0], [1], [0, 0, 1, 1], [], []>} : vector<128x6xf32>, vector<6x128xf32>, vector<128x128xf32> -> vector<128x128xf32>
    %c1920 = arith.constant 1920 : index
    %c0_90 = arith.constant 0 : index
    %71 = vector.load %arg8[%c1920, %c0_90] : memref<2816x128xf32, #tpu.memory_space<vmem>>, vector<128x128xf32>
    tpu.vector_store %arg8[%c1920, %c0_90], %70 {strides = array<i32>} : memref<2816x128xf32, #tpu.memory_space<vmem>>, vector<128x128xf32>,
    %c0_91 = arith.constant 0 : index
    %c96 = arith.constant 96 : index
    %72 = vector.load %arg4[%c0_91, %c96] : memref<128x132xf32, #tpu.memory_space<vmem>>, vector<128x6xf32>
    %c96_92 = arith.constant 96 : index
    %c0_93 = arith.constant 0 : index
    %73 = vector.load %arg1[%c96_92, %c0_93] : memref<133x128xf32, #tpu.memory_space<vmem>>, vector<6x128xf32>
    %cst_94 = arith.constant dense<0.000000e+00> : vector<128x128xf32>
    %74 = tpu.matmul %72, %73, %cst_94 {dimension_numbers = #tpu.dot_dimension_numbers<[1], [0], [0], [1], [0, 0, 1, 1], [], []>} : vector<128x6xf32>, vector<6x128xf32>, vector<128x128xf32> -> vector<128x128xf32>
    %c2048 = arith.constant 2048 : index
    %c0_95 = arith.constant 0 : index
    %75 = vector.load %arg8[%c2048, %c0_95] : memref<2816x128xf32, #tpu.memory_space<vmem>>, vector<128x128xf32>
    tpu.vector_store %arg8[%c2048, %c0_95], %74 {strides = array<i32>} : memref<2816x128xf32, #tpu.memory_space<vmem>>, vector<128x128xf32>,
    %c0_96 = arith.constant 0 : index
    %c102 = arith.constant 102 : index
    %76 = vector.load %arg4[%c0_96, %c102] : memref<128x132xf32, #tpu.memory_space<vmem>>, vector<128x6xf32>
    %c102_97 = arith.constant 102 : index
    %c0_98 = arith.constant 0 : index
    %77 = vector.load %arg1[%c102_97, %c0_98] : memref<133x128xf32, #tpu.memory_space<vmem>>, vector<6x128xf32>
    %cst_99 = arith.constant dense<0.000000e+00> : vector<128x128xf32>
    %78 = tpu.matmul %76, %77, %cst_99 {dimension_numbers = #tpu.dot_dimension_numbers<[1], [0], [0], [1], [0, 0, 1, 1], [], []>} : vector<128x6xf32>, vector<6x128xf32>, vector<128x128xf32> -> vector<128x128xf32>
    %c2176 = arith.constant 2176 : index
    %c0_100 = arith.constant 0 : index
    %79 = vector.load %arg8[%c2176, %c0_100] : memref<2816x128xf32, #tpu.memory_space<vmem>>, vector<128x128xf32>
    tpu.vector_store %arg8[%c2176, %c0_100], %78 {strides = array<i32>} : memref<2816x128xf32, #tpu.memory_space<vmem>>, vector<128x128xf32>,
    %c0_101 = arith.constant 0 : index
    %c108 = arith.constant 108 : index
    %80 = vector.load %arg4[%c0_101, %c108] : memref<128x132xf32, #tpu.memory_space<vmem>>, vector<128x6xf32>
    %c108_102 = arith.constant 108 : index
    %c0_103 = arith.constant 0 : index
    %81 = vector.load %arg1[%c108_102, %c0_103] : memref<133x128xf32, #tpu.memory_space<vmem>>, vector<6x128xf32>
    %cst_104 = arith.constant dense<0.000000e+00> : vector<128x128xf32>
    %82 = tpu.matmul %80, %81, %cst_104 {dimension_numbers = #tpu.dot_dimension_numbers<[1], [0], [0], [1], [0, 0, 1, 1], [], []>} : vector<128x6xf32>, vector<6x128xf32>, vector<128x128xf32> -> vector<128x128xf32>
    %c2304 = arith.constant 2304 : index
    %c0_105 = arith.constant 0 : index
    %83 = vector.load %arg8[%c2304, %c0_105] : memref<2816x128xf32, #tpu.memory_space<vmem>>, vector<128x128xf32>
    tpu.vector_store %arg8[%c2304, %c0_105], %82 {strides = array<i32>} : memref<2816x128xf32, #tpu.memory_space<vmem>>, vector<128x128xf32>,
    %c0_106 = arith.constant 0 : index
    %c114 = arith.constant 114 : index
    %84 = vector.load %arg4[%c0_106, %c114] : memref<128x132xf32, #tpu.memory_space<vmem>>, vector<128x6xf32>
    %c114_107 = arith.constant 114 : index
    %c0_108 = arith.constant 0 : index
    %85 = vector.load %arg1[%c114_107, %c0_108] : memref<133x128xf32, #tpu.memory_space<vmem>>, vector<6x128xf32>
    %cst_109 = arith.constant dense<0.000000e+00> : vector<128x128xf32>
    %86 = tpu.matmul %84, %85, %cst_109 {dimension_numbers = #tpu.dot_dimension_numbers<[1], [0], [0], [1], [0, 0, 1, 1], [], []>} : vector<128x6xf32>, vector<6x128xf32>, vector<128x128xf32> -> vector<128x128xf32>
    %c2432 = arith.constant 2432 : index
    %c0_110 = arith.constant 0 : index
    %87 = vector.load %arg8[%c2432, %c0_110] : memref<2816x128xf32, #tpu.memory_space<vmem>>, vector<128x128xf32>
    tpu.vector_store %arg8[%c2432, %c0_110], %86 {strides = array<i32>} : memref<2816x128xf32, #tpu.memory_space<vmem>>, vector<128x128xf32>,
    %c0_111 = arith.constant 0 : index
    %c120 = arith.constant 120 : index
    %88 = vector.load %arg4[%c0_111, %c120] : memref<128x132xf32, #tpu.memory_space<vmem>>, vector<128x6xf32>
    %c120_112 = arith.constant 120 : index
    %c0_113 = arith.constant 0 : index
    %89 = vector.load %arg1[%c120_112, %c0_113] : memref<133x128xf32, #tpu.memory_space<vmem>>, vector<6x128xf32>
    %cst_114 = arith.constant dense<0.000000e+00> : vector<128x128xf32>
    %90 = tpu.matmul %88, %89, %cst_114 {dimension_numbers = #tpu.dot_dimension_numbers<[1], [0], [0], [1], [0, 0, 1, 1], [], []>} : vector<128x6xf32>, vector<6x128xf32>, vector<128x128xf32> -> vector<128x128xf32>
    %c2560 = arith.constant 2560 : index
    %c0_115 = arith.constant 0 : index
    %91 = vector.load %arg8[%c2560, %c0_115] : memref<2816x128xf32, #tpu.memory_space<vmem>>, vector<128x128xf32>
    tpu.vector_store %arg8[%c2560, %c0_115], %90 {strides = array<i32>} : memref<2816x128xf32, #tpu.memory_space<vmem>>, vector<128x128xf32>,
    %c0_116 = arith.constant 0 : index
    %c126 = arith.constant 126 : index
    %92 = vector.load %arg4[%c0_116, %c126] : memref<128x132xf32, #tpu.memory_space<vmem>>, vector<128x6xf32>
    %c126_117 = arith.constant 126 : index
    %c0_118 = arith.constant 0 : index
    %93 = vector.load %arg1[%c126_117, %c0_118] : memref<133x128xf32, #tpu.memory_space<vmem>>, vector<6x128xf32>
    %cst_119 = arith.constant dense<0.000000e+00> : vector<128x128xf32>
    %94 = tpu.matmul %92, %93, %cst_119 {dimension_numbers = #tpu.dot_dimension_numbers<[1], [0], [0], [1], [0, 0, 1, 1], [], []>} : vector<128x6xf32>, vector<6x128xf32>, vector<128x128xf32> -> vector<128x128xf32>
    %c2688 = arith.constant 2688 : index
    %c0_120 = arith.constant 0 : index
    %95 = vector.load %arg8[%c2688, %c0_120] : memref<2816x128xf32, #tpu.memory_space<vmem>>, vector<128x128xf32>
    tpu.vector_store %arg8[%c2688, %c0_120], %94 {strides = array<i32>} : memref<2816x128xf32, #tpu.memory_space<vmem>>, vector<128x128xf32>,
    %c0_121 = arith.constant 0 : index
    %c0_122 = arith.constant 0 : index
    %96 = vector.load %arg5[%c0_121, %c0_122] : memref<64x1xf32, #tpu.memory_space<vmem>>, vector<64x1xf32>
    %97 = vector.shape_cast %96 : vector<64x1xf32> to vector<64x1xf32>
    %98 = vector.broadcast %97 : vector<64x1xf32> to vector<64x128xf32>
    %c0_i32 = arith.constant 0 : i32
    %c22_i32 = arith.constant 22 : i32
    %99 = arith.addi %c0_i32, %c22_i32 : i32
    %c1_i32 = arith.constant 1 : i32
    scf.for %arg9 = %c0_i32 to %99 step %c1_i32  : i32 {
      %c128_i32 = arith.constant 128 : i32
      %100 = arith.muli %c128_i32, %arg9 : i32
      %c64_i32 = arith.constant 64 : i32
      %101 = arith.addi %100, %c64_i32 : i32
      %102 = tpu.assume_multiple %101, 64 : i32
      %103 = arith.index_cast %102 : i32 to index
      %c0_124 = arith.constant 0 : index
      %104 = vector.load %arg8[%103, %c0_124] : memref<2816x128xf32, #tpu.memory_space<vmem>>, vector<64x128xf32>
      %c23_i32 = arith.constant 23 : i32
      %105 = arith.muli %c23_i32, %arg9 : i32
      %106 = arith.index_cast %105 : i32 to index
      %c0_125 = arith.constant 0 : index
      %107 = vector.load %arg7[%106, %c0_125] : memref<484x128xf32, #tpu.memory_space<vmem>>, vector<1x128xf32>
      %108 = vector.broadcast %107 : vector<1x128xf32> to vector<64x128xf32>
      %109 = arith.mulf %108, %104 : vector<64x128xf32>
      %110 = arith.addf %109, %98 : vector<64x128xf32>
      %c22_i32_126 = arith.constant 22 : i32
      %111 = arith.muli %c22_i32_126, %arg9 : i32
      %c0_i32_127 = arith.constant 0 : i32
      %112 = arith.addi %111, %c0_i32_127 : i32
      %113 = arith.index_cast %112 : i32 to index
      %c0_128 = arith.constant 0 : index
      %114 = vector.load %arg7[%113, %c0_128] : memref<484x128xf32, #tpu.memory_space<vmem>>, vector<1x128xf32>
      %c0_129 = arith.constant 0 : index
      %c0_130 = arith.constant 0 : index
      %115 = vector.load %arg8[%c0_129, %c0_130] : memref<2816x128xf32, #tpu.memory_space<vmem>>, vector<64x128xf32>
      %116 = vector.broadcast %114 : vector<1x128xf32> to vector<64x128xf32>
      %117 = arith.mulf %116, %115 : vector<64x128xf32>
      %118 = arith.addf %110, %117 : vector<64x128xf32>
      %c22_i32_131 = arith.constant 22 : i32
      %119 = arith.muli %c22_i32_131, %arg9 : i32
      %c1_i32_132 = arith.constant 1 : i32
      %120 = arith.addi %119, %c1_i32_132 : i32
      %121 = arith.index_cast %120 : i32 to index
      %c0_133 = arith.constant 0 : index
      %122 = vector.load %arg7[%121, %c0_133] : memref<484x128xf32, #tpu.memory_space<vmem>>, vector<1x128xf32>
      %c128_134 = arith.constant 128 : index
      %c0_135 = arith.constant 0 : index
      %123 = vector.load %arg8[%c128_134, %c0_135] : memref<2816x128xf32, #tpu.memory_space<vmem>>, vector<64x128xf32>
      %124 = vector.broadcast %122 : vector<1x128xf32> to vector<64x128xf32>
      %125 = arith.mulf %124, %123 : vector<64x128xf32>
      %126 = arith.addf %118, %125 : vector<64x128xf32>
      %c22_i32_136 = arith.constant 22 : i32
      %127 = arith.muli %c22_i32_136, %arg9 : i32
      %c2_i32 = arith.constant 2 : i32
      %128 = arith.addi %127, %c2_i32 : i32
      %129 = arith.index_cast %128 : i32 to index
      %c0_137 = arith.constant 0 : index
      %130 = vector.load %arg7[%129, %c0_137] : memref<484x128xf32, #tpu.memory_space<vmem>>, vector<1x128xf32>
      %c256_138 = arith.constant 256 : index
      %c0_139 = arith.constant 0 : index
      %131 = vector.load %arg8[%c256_138, %c0_139] : memref<2816x128xf32, #tpu.memory_space<vmem>>, vector<64x128xf32>
      %132 = vector.broadcast %130 : vector<1x128xf32> to vector<64x128xf32>
      %133 = arith.mulf %132, %131 : vector<64x128xf32>
      %134 = arith.addf %126, %133 : vector<64x128xf32>
      %c22_i32_140 = arith.constant 22 : i32
      %135 = arith.muli %c22_i32_140, %arg9 : i32
      %c3_i32 = arith.constant 3 : i32
      %136 = arith.addi %135, %c3_i32 : i32
      %137 = arith.index_cast %136 : i32 to index
      %c0_141 = arith.constant 0 : index
      %138 = vector.load %arg7[%137, %c0_141] : memref<484x128xf32, #tpu.memory_space<vmem>>, vector<1x128xf32>
      %c384_142 = arith.constant 384 : index
      %c0_143 = arith.constant 0 : index
      %139 = vector.load %arg8[%c384_142, %c0_143] : memref<2816x128xf32, #tpu.memory_space<vmem>>, vector<64x128xf32>
      %140 = vector.broadcast %138 : vector<1x128xf32> to vector<64x128xf32>
      %141 = arith.mulf %140, %139 : vector<64x128xf32>
      %142 = arith.addf %134, %141 : vector<64x128xf32>
      %c22_i32_144 = arith.constant 22 : i32
      %143 = arith.muli %c22_i32_144, %arg9 : i32
      %c4_i32 = arith.constant 4 : i32
      %144 = arith.addi %143, %c4_i32 : i32
      %145 = arith.index_cast %144 : i32 to index
      %c0_145 = arith.constant 0 : index
      %146 = vector.load %arg7[%145, %c0_145] : memref<484x128xf32, #tpu.memory_space<vmem>>, vector<1x128xf32>
      %c512_146 = arith.constant 512 : index
      %c0_147 = arith.constant 0 : index
      %147 = vector.load %arg8[%c512_146, %c0_147] : memref<2816x128xf32, #tpu.memory_space<vmem>>, vector<64x128xf32>
      %148 = vector.broadcast %146 : vector<1x128xf32> to vector<64x128xf32>
      %149 = arith.mulf %148, %147 : vector<64x128xf32>
      %150 = arith.addf %142, %149 : vector<64x128xf32>
      %c22_i32_148 = arith.constant 22 : i32
      %151 = arith.muli %c22_i32_148, %arg9 : i32
      %c5_i32 = arith.constant 5 : i32
      %152 = arith.addi %151, %c5_i32 : i32
      %153 = arith.index_cast %152 : i32 to index
      %c0_149 = arith.constant 0 : index
      %154 = vector.load %arg7[%153, %c0_149] : memref<484x128xf32, #tpu.memory_space<vmem>>, vector<1x128xf32>
      %c640_150 = arith.constant 640 : index
      %c0_151 = arith.constant 0 : index
      %155 = vector.load %arg8[%c640_150, %c0_151] : memref<2816x128xf32, #tpu.memory_space<vmem>>, vector<64x128xf32>
      %156 = vector.broadcast %154 : vector<1x128xf32> to vector<64x128xf32>
      %157 = arith.mulf %156, %155 : vector<64x128xf32>
      %158 = arith.addf %150, %157 : vector<64x128xf32>
      %c22_i32_152 = arith.constant 22 : i32
      %159 = arith.muli %c22_i32_152, %arg9 : i32
      %c6_i32 = arith.constant 6 : i32
      %160 = arith.addi %159, %c6_i32 : i32
      %161 = arith.index_cast %160 : i32 to index
      %c0_153 = arith.constant 0 : index
      %162 = vector.load %arg7[%161, %c0_153] : memref<484x128xf32, #tpu.memory_space<vmem>>, vector<1x128xf32>
      %c768_154 = arith.constant 768 : index
      %c0_155 = arith.constant 0 : index
      %163 = vector.load %arg8[%c768_154, %c0_155] : memref<2816x128xf32, #tpu.memory_space<vmem>>, vector<64x128xf32>
      %164 = vector.broadcast %162 : vector<1x128xf32> to vector<64x128xf32>
      %165 = arith.mulf %164, %163 : vector<64x128xf32>
      %166 = arith.addf %158, %165 : vector<64x128xf32>
      %c22_i32_156 = arith.constant 22 : i32
      %167 = arith.muli %c22_i32_156, %arg9 : i32
      %c7_i32 = arith.constant 7 : i32
      %168 = arith.addi %167, %c7_i32 : i32
      %169 = arith.index_cast %168 : i32 to index
      %c0_157 = arith.constant 0 : index
      %170 = vector.load %arg7[%169, %c0_157] : memref<484x128xf32, #tpu.memory_space<vmem>>, vector<1x128xf32>
      %c896_158 = arith.constant 896 : index
      %c0_159 = arith.constant 0 : index
      %171 = vector.load %arg8[%c896_158, %c0_159] : memref<2816x128xf32, #tpu.memory_space<vmem>>, vector<64x128xf32>
      %172 = vector.broadcast %170 : vector<1x128xf32> to vector<64x128xf32>
      %173 = arith.mulf %172, %171 : vector<64x128xf32>
      %174 = arith.addf %166, %173 : vector<64x128xf32>
      %c22_i32_160 = arith.constant 22 : i32
      %175 = arith.muli %c22_i32_160, %arg9 : i32
      %c8_i32 = arith.constant 8 : i32
      %176 = arith.addi %175, %c8_i32 : i32
      %177 = arith.index_cast %176 : i32 to index
      %c0_161 = arith.constant 0 : index
      %178 = vector.load %arg7[%177, %c0_161] : memref<484x128xf32, #tpu.memory_space<vmem>>, vector<1x128xf32>
      %c1024_162 = arith.constant 1024 : index
      %c0_163 = arith.constant 0 : index
      %179 = vector.load %arg8[%c1024_162, %c0_163] : memref<2816x128xf32, #tpu.memory_space<vmem>>, vector<64x128xf32>
      %180 = vector.broadcast %178 : vector<1x128xf32> to vector<64x128xf32>
      %181 = arith.mulf %180, %179 : vector<64x128xf32>
      %182 = arith.addf %174, %181 : vector<64x128xf32>
      %c22_i32_164 = arith.constant 22 : i32
      %183 = arith.muli %c22_i32_164, %arg9 : i32
      %c9_i32 = arith.constant 9 : i32
      %184 = arith.addi %183, %c9_i32 : i32
      %185 = arith.index_cast %184 : i32 to index
      %c0_165 = arith.constant 0 : index
      %186 = vector.load %arg7[%185, %c0_165] : memref<484x128xf32, #tpu.memory_space<vmem>>, vector<1x128xf32>
      %c1152_166 = arith.constant 1152 : index
      %c0_167 = arith.constant 0 : index
      %187 = vector.load %arg8[%c1152_166, %c0_167] : memref<2816x128xf32, #tpu.memory_space<vmem>>, vector<64x128xf32>
      %188 = vector.broadcast %186 : vector<1x128xf32> to vector<64x128xf32>
      %189 = arith.mulf %188, %187 : vector<64x128xf32>
      %190 = arith.addf %182, %189 : vector<64x128xf32>
      %c22_i32_168 = arith.constant 22 : i32
      %191 = arith.muli %c22_i32_168, %arg9 : i32
      %c10_i32 = arith.constant 10 : i32
      %192 = arith.addi %191, %c10_i32 : i32
      %193 = arith.index_cast %192 : i32 to index
      %c0_169 = arith.constant 0 : index
      %194 = vector.load %arg7[%193, %c0_169] : memref<484x128xf32, #tpu.memory_space<vmem>>, vector<1x128xf32>
      %c1280_170 = arith.constant 1280 : index
      %c0_171 = arith.constant 0 : index
      %195 = vector.load %arg8[%c1280_170, %c0_171] : memref<2816x128xf32, #tpu.memory_space<vmem>>, vector<64x128xf32>
      %196 = vector.broadcast %194 : vector<1x128xf32> to vector<64x128xf32>
      %197 = arith.mulf %196, %195 : vector<64x128xf32>
      %198 = arith.addf %190, %197 : vector<64x128xf32>
      %c22_i32_172 = arith.constant 22 : i32
      %199 = arith.muli %c22_i32_172, %arg9 : i32
      %c11_i32 = arith.constant 11 : i32
      %200 = arith.addi %199, %c11_i32 : i32
      %201 = arith.index_cast %200 : i32 to index
      %c0_173 = arith.constant 0 : index
      %202 = vector.load %arg7[%201, %c0_173] : memref<484x128xf32, #tpu.memory_space<vmem>>, vector<1x128xf32>
      %c1408_174 = arith.constant 1408 : index
      %c0_175 = arith.constant 0 : index
      %203 = vector.load %arg8[%c1408_174, %c0_175] : memref<2816x128xf32, #tpu.memory_space<vmem>>, vector<64x128xf32>
      %204 = vector.broadcast %202 : vector<1x128xf32> to vector<64x128xf32>
      %205 = arith.mulf %204, %203 : vector<64x128xf32>
      %206 = arith.addf %198, %205 : vector<64x128xf32>
      %c22_i32_176 = arith.constant 22 : i32
      %207 = arith.muli %c22_i32_176, %arg9 : i32
      %c12_i32 = arith.constant 12 : i32
      %208 = arith.addi %207, %c12_i32 : i32
      %209 = arith.index_cast %208 : i32 to index
      %c0_177 = arith.constant 0 : index
      %210 = vector.load %arg7[%209, %c0_177] : memref<484x128xf32, #tpu.memory_space<vmem>>, vector<1x128xf32>
      %c1536_178 = arith.constant 1536 : index
      %c0_179 = arith.constant 0 : index
      %211 = vector.load %arg8[%c1536_178, %c0_179] : memref<2816x128xf32, #tpu.memory_space<vmem>>, vector<64x128xf32>
      %212 = vector.broadcast %210 : vector<1x128xf32> to vector<64x128xf32>
      %213 = arith.mulf %212, %211 : vector<64x128xf32>
      %214 = arith.addf %206, %213 : vector<64x128xf32>
      %c22_i32_180 = arith.constant 22 : i32
      %215 = arith.muli %c22_i32_180, %arg9 : i32
      %c13_i32 = arith.constant 13 : i32
      %216 = arith.addi %215, %c13_i32 : i32
      %217 = arith.index_cast %216 : i32 to index
      %c0_181 = arith.constant 0 : index
      %218 = vector.load %arg7[%217, %c0_181] : memref<484x128xf32, #tpu.memory_space<vmem>>, vector<1x128xf32>
      %c1664_182 = arith.constant 1664 : index
      %c0_183 = arith.constant 0 : index
      %219 = vector.load %arg8[%c1664_182, %c0_183] : memref<2816x128xf32, #tpu.memory_space<vmem>>, vector<64x128xf32>
      %220 = vector.broadcast %218 : vector<1x128xf32> to vector<64x128xf32>
      %221 = arith.mulf %220, %219 : vector<64x128xf32>
      %222 = arith.addf %214, %221 : vector<64x128xf32>
      %c22_i32_184 = arith.constant 22 : i32
      %223 = arith.muli %c22_i32_184, %arg9 : i32
      %c14_i32 = arith.constant 14 : i32
      %224 = arith.addi %223, %c14_i32 : i32
      %225 = arith.index_cast %224 : i32 to index
      %c0_185 = arith.constant 0 : index
      %226 = vector.load %arg7[%225, %c0_185] : memref<484x128xf32, #tpu.memory_space<vmem>>, vector<1x128xf32>
      %c1792_186 = arith.constant 1792 : index
      %c0_187 = arith.constant 0 : index
      %227 = vector.load %arg8[%c1792_186, %c0_187] : memref<2816x128xf32, #tpu.memory_space<vmem>>, vector<64x128xf32>
      %228 = vector.broadcast %226 : vector<1x128xf32> to vector<64x128xf32>
      %229 = arith.mulf %228, %227 : vector<64x128xf32>
      %230 = arith.addf %222, %229 : vector<64x128xf32>
      %c22_i32_188 = arith.constant 22 : i32
      %231 = arith.muli %c22_i32_188, %arg9 : i32
      %c15_i32 = arith.constant 15 : i32
      %232 = arith.addi %231, %c15_i32 : i32
      %233 = arith.index_cast %232 : i32 to index
      %c0_189 = arith.constant 0 : index
      %234 = vector.load %arg7[%233, %c0_189] : memref<484x128xf32, #tpu.memory_space<vmem>>, vector<1x128xf32>
      %c1920_190 = arith.constant 1920 : index
      %c0_191 = arith.constant 0 : index
      %235 = vector.load %arg8[%c1920_190, %c0_191] : memref<2816x128xf32, #tpu.memory_space<vmem>>, vector<64x128xf32>
      %236 = vector.broadcast %234 : vector<1x128xf32> to vector<64x128xf32>
      %237 = arith.mulf %236, %235 : vector<64x128xf32>
      %238 = arith.addf %230, %237 : vector<64x128xf32>
      %c22_i32_192 = arith.constant 22 : i32
      %239 = arith.muli %c22_i32_192, %arg9 : i32
      %c16_i32 = arith.constant 16 : i32
      %240 = arith.addi %239, %c16_i32 : i32
      %241 = arith.index_cast %240 : i32 to index
      %c0_193 = arith.constant 0 : index
      %242 = vector.load %arg7[%241, %c0_193] : memref<484x128xf32, #tpu.memory_space<vmem>>, vector<1x128xf32>
      %c2048_194 = arith.constant 2048 : index
      %c0_195 = arith.constant 0 : index
      %243 = vector.load %arg8[%c2048_194, %c0_195] : memref<2816x128xf32, #tpu.memory_space<vmem>>, vector<64x128xf32>
      %244 = vector.broadcast %242 : vector<1x128xf32> to vector<64x128xf32>
      %245 = arith.mulf %244, %243 : vector<64x128xf32>
      %246 = arith.addf %238, %245 : vector<64x128xf32>
      %c22_i32_196 = arith.constant 22 : i32
      %247 = arith.muli %c22_i32_196, %arg9 : i32
      %c17_i32 = arith.constant 17 : i32
      %248 = arith.addi %247, %c17_i32 : i32
      %249 = arith.index_cast %248 : i32 to index
      %c0_197 = arith.constant 0 : index
      %250 = vector.load %arg7[%249, %c0_197] : memref<484x128xf32, #tpu.memory_space<vmem>>, vector<1x128xf32>
      %c2176_198 = arith.constant 2176 : index
      %c0_199 = arith.constant 0 : index
      %251 = vector.load %arg8[%c2176_198, %c0_199] : memref<2816x128xf32, #tpu.memory_space<vmem>>, vector<64x128xf32>
      %252 = vector.broadcast %250 : vector<1x128xf32> to vector<64x128xf32>
      %253 = arith.mulf %252, %251 : vector<64x128xf32>
      %254 = arith.addf %246, %253 : vector<64x128xf32>
      %c22_i32_200 = arith.constant 22 : i32
      %255 = arith.muli %c22_i32_200, %arg9 : i32
      %c18_i32 = arith.constant 18 : i32
      %256 = arith.addi %255, %c18_i32 : i32
      %257 = arith.index_cast %256 : i32 to index
      %c0_201 = arith.constant 0 : index
      %258 = vector.load %arg7[%257, %c0_201] : memref<484x128xf32, #tpu.memory_space<vmem>>, vector<1x128xf32>
      %c2304_202 = arith.constant 2304 : index
      %c0_203 = arith.constant 0 : index
      %259 = vector.load %arg8[%c2304_202, %c0_203] : memref<2816x128xf32, #tpu.memory_space<vmem>>, vector<64x128xf32>
      %260 = vector.broadcast %258 : vector<1x128xf32> to vector<64x128xf32>
      %261 = arith.mulf %260, %259 : vector<64x128xf32>
      %262 = arith.addf %254, %261 : vector<64x128xf32>
      %c22_i32_204 = arith.constant 22 : i32
      %263 = arith.muli %c22_i32_204, %arg9 : i32
      %c19_i32 = arith.constant 19 : i32
      %264 = arith.addi %263, %c19_i32 : i32
      %265 = arith.index_cast %264 : i32 to index
      %c0_205 = arith.constant 0 : index
      %266 = vector.load %arg7[%265, %c0_205] : memref<484x128xf32, #tpu.memory_space<vmem>>, vector<1x128xf32>
      %c2432_206 = arith.constant 2432 : index
      %c0_207 = arith.constant 0 : index
      %267 = vector.load %arg8[%c2432_206, %c0_207] : memref<2816x128xf32, #tpu.memory_space<vmem>>, vector<64x128xf32>
      %268 = vector.broadcast %266 : vector<1x128xf32> to vector<64x128xf32>
      %269 = arith.mulf %268, %267 : vector<64x128xf32>
      %270 = arith.addf %262, %269 : vector<64x128xf32>
      %c22_i32_208 = arith.constant 22 : i32
      %271 = arith.muli %c22_i32_208, %arg9 : i32
      %c20_i32 = arith.constant 20 : i32
      %272 = arith.addi %271, %c20_i32 : i32
      %273 = arith.index_cast %272 : i32 to index
      %c0_209 = arith.constant 0 : index
      %274 = vector.load %arg7[%273, %c0_209] : memref<484x128xf32, #tpu.memory_space<vmem>>, vector<1x128xf32>
      %c2560_210 = arith.constant 2560 : index
      %c0_211 = arith.constant 0 : index
      %275 = vector.load %arg8[%c2560_210, %c0_211] : memref<2816x128xf32, #tpu.memory_space<vmem>>, vector<64x128xf32>
      %276 = vector.broadcast %274 : vector<1x128xf32> to vector<64x128xf32>
      %277 = arith.mulf %276, %275 : vector<64x128xf32>
      %278 = arith.addf %270, %277 : vector<64x128xf32>
      %c22_i32_212 = arith.constant 22 : i32
      %279 = arith.muli %c22_i32_212, %arg9 : i32
      %c21_i32 = arith.constant 21 : i32
      %280 = arith.addi %279, %c21_i32 : i32
      %281 = arith.index_cast %280 : i32 to index
      %c0_213 = arith.constant 0 : index
      %282 = vector.load %arg7[%281, %c0_213] : memref<484x128xf32, #tpu.memory_space<vmem>>, vector<1x128xf32>
      %c2688_214 = arith.constant 2688 : index
      %c0_215 = arith.constant 0 : index
      %283 = vector.load %arg8[%c2688_214, %c0_215] : memref<2816x128xf32, #tpu.memory_space<vmem>>, vector<64x128xf32>
      %284 = vector.broadcast %282 : vector<1x128xf32> to vector<64x128xf32>
      %285 = arith.mulf %284, %283 : vector<64x128xf32>
      %286 = arith.addf %278, %285 : vector<64x128xf32>
      %c64_i32_216 = arith.constant 64 : i32
      %287 = arith.muli %c64_i32_216, %arg9 : i32
      %288 = tpu.assume_multiple %287, 64 : i32
      %289 = arith.index_cast %288 : i32 to index
      %c0_217 = arith.constant 0 : index
      %290 = vector.load %arg6[%289, %c0_217] : memref<1408x128xf32, #tpu.memory_space<vmem>>, vector<64x128xf32>
      tpu.vector_store %arg6[%289, %c0_217], %286 {strides = array<i32>} : memref<1408x128xf32, #tpu.memory_space<vmem>>, vector<64x128xf32>,
    }
    %c22_i32_123 = arith.constant 22 : i32
    return
  }
  func.func @transform_0(%arg0: i32) -> (i32, i32) {
    %c0_i32 = arith.constant 0 : i32
    %c0_i32_0 = arith.constant 0 : i32
    return %c0_i32, %arg0 : i32, i32
  }
  func.func @transform_1(%arg0: i32) -> (i32, i32) {
    %c0_i32 = arith.constant 0 : i32
    %c0_i32_0 = arith.constant 0 : i32
    %c0_i32_1 = arith.constant 0 : i32
    return %c0_i32, %c0_i32_0 : i32, i32
  }
  func.func @transform_2(%arg0: i32) -> (i32, i32) {
    %c0_i32 = arith.constant 0 : i32
    %c0_i32_0 = arith.constant 0 : i32
    %c0_i32_1 = arith.constant 0 : i32
    return %c0_i32, %c0_i32_0 : i32, i32
  }
  func.func @transform_3(%arg0: i32) -> (i32, i32) {
    %c0_i32 = arith.constant 0 : i32
    %c0_i32_0 = arith.constant 0 : i32
    %c0_i32_1 = arith.constant 0 : i32
    return %c0_i32, %c0_i32_0 : i32, i32
  }
  func.func @transform_4(%arg0: i32) -> (i32, i32) {
    %c0_i32 = arith.constant 0 : i32
    %c0_i32_0 = arith.constant 0 : i32
    %c0_i32_1 = arith.constant 0 : i32
    return %c0_i32, %c0_i32_0 : i32, i32
  }
  func.func @transform_5(%arg0: i32) -> (i32, i32) {
    %c0_i32 = arith.constant 0 : i32
    %c0_i32_0 = arith.constant 0 : i32
    return %c0_i32, %arg0 : i32, i32
  }
}

</mosaic_0001>

<llo_original>
// kernel: tpu_custom_call.1
$region0: #{tpu_custom_call.1}
  #allocation0 [shape = 'u32[]', space=smem, size = 0x4, offset = 0x4, fixed_abs, tag = 'smem constant byte address 0x4 - core index']
  #allocation1 [shape = 'u32[144,128]{1,0:T(1,128)}', space=vmem, size = 0x12000, scoped, tag = 'internal scratch']
  #allocation2 [shape = 'f32[484,128]{1,0:T(8,128)}', space=vmem, size = 0x3d000, scoped, tag = 'scratch operand']
  #allocation3 [shape = 'f32[2816,128]{1,0:T(8,128)}', space=vmem, size = 0x160000, scoped, tag = 'scratch operand']
  %s0 = inlined_call_operand.vmem [shape: f32[133,256], index: 0, kind: input, shape index: {}]
  %s1 = inlined_call_operand.vmem [shape: f32[513,133], index: 1, kind: input, shape index: {}]
  %s2 = inlined_call_operand.vmem [shape: f32[484,513], index: 2, kind: input, shape index: {}]
  %s3 = inlined_call_operand.vmem [shape: f32[128,132], index: 3, kind: input, shape index: {}]
  %s4 = inlined_call_operand.vmem [shape: f32[64,1], index: 4, kind: input, shape index: {}]
  %s5 = inlined_call_operand.hbm [shape: f32[1408,256], index: 5, kind: output, shape index: {}]
  %s6 = sld [smem:[#allocation0]]
  $region98: #{tpu_custom_call.1} parent=0
    _
  %s8 = ssub.s32 1, %s6
  %s9 = scalar_select 0, %s8, %s6
  $region1: #{tpu_custom_call.1} parent=0
    #allocation4 [shape = 'u8[139264]{0}', space=vmem, size = 0x22000, scoped, tag = 'input window, operand 0']
    #allocation5 [shape = 'u8[1441792]{0}', space=vmem, size = 0x160000, scoped, tag = 'output window, operand 0']
    #allocation6 [shape = 's32[2]{0}', space=sflag, size = 0x8, scoped, tag = 'scoped memory for tpu_custom_call.1']
    %10 = vsyncpa [#allocation6], 0
    %s11 = scalar_lea.sflag [#allocation6], 1
    %12 = vsyncpa %s11, 0
    loop: start=0, step=1, limit=4
    $region2: #{tpu_custom_call.1} parent=1 // loop_pre_header
      _
    $region3: #{tpu_custom_call.1} parent=1 // loop_header
      %s14 = sphi 0, %s18
      %p15 = scmp.ge.s32.totalorder %s14, 4
      %s24 = sphi 0, %s26
      %s27 = sphi 0, %s24
      %s28 = sphi 0, %s27
      %s44 = sphi 0, %s28
      %s48 = sphi 0, %s48
      %s50 = sphi 0, %s48
      %s51 = sphi 0, %s50
      %s65 = sphi 0, %s51
      %s69 = sphi 0, %s69
      %s71 = sphi 0, %s69
      %s72 = sphi 0, %s71
      %s86 = sphi 0, %s72
      %s90 = sphi 0, %s90
      %s92 = sphi 0, %s90
      %s93 = sphi 0, %s92
      %s107 = sphi 0, %s93
      %s111 = sphi 0, %s111
      %s113 = sphi 0, %s111
      %s114 = sphi 0, %s113
      %s128 = sphi 0, %s114
      %s134 = sphi 0, %s136
      %s137 = sphi 0, %s134
      %s138 = sphi 0, %s137
      %s154 = sphi 0, %s138
    $region4: #{tpu_custom_call.1} parent=1 // loop_header_branch
      %17 = sbr.rel (%p15) target = $region8
    $region5: #{tpu_custom_call.1} parent=1 // loop_body
      %s19 = ssub.s32 %s14, 1
      %s20 = ssub.s32 %s14, 2
      %s21 = sadd.s32 %s14, 1
      %s22 = ssub.s32 %s14, %s21
      %p23 = scmp.eq.s32.totalorder %s22, 0
      %s25 = sadd.s32 %s24, 1
      %s26 = scalar_select %p23, %s24, %s25
      %p29 = pneg %p23
      %p30 = scmp.eq.s32.totalorder %s14, 1
      %p31 = por %p29, %p30
      %p32 = scmp.ne.s32.totalorder %s24, %s27
      %p33 = scmp.eq.s32.totalorder %s14, 0
      %p34 = por %p32, %p33
      %p35 = scmp.ne.s32.totalorder %s24, %s27
      %p36 = scmp.eq.s32.totalorder %s19, 1
      %p37 = por %p35, %p36
      %p38 = scmp.ne.s32.totalorder %s27, %s28
      %p39 = scmp.eq.s32.totalorder %s19, 0
      %p40 = por %p38, %p39
      %p41 = scmp.ne.s32.totalorder %s27, %s28
      %p42 = scmp.eq.s32.totalorder %s20, 1
      %p43 = por %p41, %p42
      %p45 = scmp.ne.s32.totalorder %s28, %s44
      %p46 = scmp.eq.s32.totalorder %s20, 0
      %p47 = por %p45, %p46
      %s49 = sadd.s32 %s48, 1
      %p52 = scmp.eq.s32.totalorder %s14, 1
      %p53 = scmp.ne.s32.totalorder %s48, %s50
      %p54 = scmp.eq.s32.totalorder %s14, 0
      %p55 = por %p53, %p54
      %p56 = scmp.ne.s32.totalorder %s48, %s50
      %p57 = scmp.eq.s32.totalorder %s19, 1
      %p58 = por %p56, %p57
      %p59 = scmp.ne.s32.totalorder %s50, %s51
      %p60 = scmp.eq.s32.totalorder %s19, 0
      %p61 = por %p59, %p60
      %p62 = scmp.ne.s32.totalorder %s50, %s51
      %p63 = scmp.eq.s32.totalorder %s20, 1
      %p64 = por %p62, %p63
      %p66 = scmp.ne.s32.totalorder %s51, %s65
      %p67 = scmp.eq.s32.totalorder %s20, 0
      %p68 = por %p66, %p67
      %s70 = sadd.s32 %s69, 1
      %p73 = scmp.eq.s32.totalorder %s14, 1
      %p74 = scmp.ne.s32.totalorder %s69, %s71
      %p75 = scmp.eq.s32.totalorder %s14, 0
      %p76 = por %p74, %p75
      %p77 = scmp.ne.s32.totalorder %s69, %s71
      %p78 = scmp.eq.s32.totalorder %s19, 1
      %p79 = por %p77, %p78
      %p80 = scmp.ne.s32.totalorder %s71, %s72
      %p81 = scmp.eq.s32.totalorder %s19, 0
      %p82 = por %p80, %p81
      %p83 = scmp.ne.s32.totalorder %s71, %s72
      %p84 = scmp.eq.s32.totalorder %s20, 1
      %p85 = por %p83, %p84
      %p87 = scmp.ne.s32.totalorder %s72, %s86
      %p88 = scmp.eq.s32.totalorder %s20, 0
      %p89 = por %p87, %p88
      %s91 = sadd.s32 %s90, 1
      %p94 = scmp.eq.s32.totalorder %s14, 1
      %p95 = scmp.ne.s32.totalorder %s90, %s92
      %p96 = scmp.eq.s32.totalorder %s14, 0
      %p97 = por %p95, %p96
      %p98 = scmp.ne.s32.totalorder %s90, %s92
      %p99 = scmp.eq.s32.totalorder %s19, 1
      %p100 = por %p98, %p99
      %p101 = scmp.ne.s32.totalorder %s92, %s93
      %p102 = scmp.eq.s32.totalorder %s19, 0
      %p103 = por %p101, %p102
      %p104 = scmp.ne.s32.totalorder %s92, %s93
      %p105 = scmp.eq.s32.totalorder %s20, 1
      %p106 = por %p104, %p105
      %p108 = scmp.ne.s32.totalorder %s93, %s107
      %p109 = scmp.eq.s32.totalorder %s20, 0
      %p110 = por %p108, %p109
      %s112 = sadd.s32 %s111, 1
      %p115 = scmp.eq.s32.totalorder %s14, 1
      %p116 = scmp.ne.s32.totalorder %s111, %s113
      %p117 = scmp.eq.s32.totalorder %s14, 0
      %p118 = por %p116, %p117
      %p119 = scmp.ne.s32.totalorder %s111, %s113
      %p120 = scmp.eq.s32.totalorder %s19, 1
      %p121 = por %p119, %p120
      %p122 = scmp.ne.s32.totalorder %s113, %s114
      %p123 = scmp.eq.s32.totalorder %s19, 0
      %p124 = por %p122, %p123
      %p125 = scmp.ne.s32.totalorder %s113, %s114
      %p126 = scmp.eq.s32.totalorder %s20, 1
      %p127 = por %p125, %p126
      %p129 = scmp.ne.s32.totalorder %s114, %s128
      %p130 = scmp.eq.s32.totalorder %s20, 0
      %p131 = por %p129, %p130
      %s132 = ssub.s32 %s14, %s21
      %p133 = scmp.eq.s32.totalorder %s132, 0
      %s135 = sadd.s32 %s134, 1
      %s136 = scalar_select %p133, %s134, %s135
      %p139 = pneg %p133
      %p140 = scmp.eq.s32.totalorder %s14, 1
      %p141 = por %p139, %p140
      %p142 = scmp.ne.s32.totalorder %s134, %s137
      %p143 = scmp.eq.s32.totalorder %s14, 0
      %p144 = por %p142, %p143
      %p145 = scmp.ne.s32.totalorder %s134, %s137
      %p146 = scmp.eq.s32.totalorder %s19, 1
      %p147 = por %p145, %p146
      %p148 = scmp.ne.s32.totalorder %s137, %s138
      %p149 = scmp.eq.s32.totalorder %s19, 0
      %p150 = por %p148, %p149
      %p151 = scmp.ne.s32.totalorder %s137, %s138
      %p152 = scmp.eq.s32.totalorder %s20, 1
      %p153 = por %p151, %p152
      %p155 = scmp.ne.s32.totalorder %s138, %s154
      %p156 = scmp.eq.s32.totalorder %s20, 0
      %p157 = por %p155, %p156
      %p158 = scmp.le.s32.totalorder 1, %s14
      %p159 = scmp.lt.s32.totalorder %s14, 3
      %p160 = pnand %p158, %p159
      %p161 = pneg %p160
      // Predicated region
      $region9: #{tpu_custom_call.1} parent=5 // pred_check
        _
      $region10: #{tpu_custom_call.1} parent=5 // pred_check_branch
        %163 = sbr.rel (%p160) target = $region12
      $region11: #{tpu_custom_call.1} parent=5 // pred_region
        %s164 = ssub.s32 %s14, 1
        // Predicated region
        $region13: #{tpu_custom_call.1} parent=11 // pred_check
          %p165 = pneg %p61
        $region14: #{tpu_custom_call.1} parent=11 // pred_check_branch
          %167 = sbr.rel (%p165) target = $region16
        $region15: #{tpu_custom_call.1} parent=11 // pred_region
          _
        $region16: #{tpu_custom_call.1} parent=11 // pred_fallthru
          _
        // Predicated region
        $region17: #{tpu_custom_call.1} parent=11 // pred_check
          %p168 = pneg %p82
        $region18: #{tpu_custom_call.1} parent=11 // pred_check_branch
          %170 = sbr.rel (%p168) target = $region20
        $region19: #{tpu_custom_call.1} parent=11 // pred_region
          _
        $region20: #{tpu_custom_call.1} parent=11 // pred_fallthru
          _
        // Predicated region
        $region21: #{tpu_custom_call.1} parent=11 // pred_check
          %p171 = pneg %p103
        $region22: #{tpu_custom_call.1} parent=11 // pred_check_branch
          %173 = sbr.rel (%p171) target = $region24
        $region23: #{tpu_custom_call.1} parent=11 // pred_region
          _
        $region24: #{tpu_custom_call.1} parent=11 // pred_fallthru
          _
        // Predicated region
        $region25: #{tpu_custom_call.1} parent=11 // pred_check
          %p174 = pneg %p124
        $region26: #{tpu_custom_call.1} parent=11 // pred_check_branch
          %176 = sbr.rel (%p174) target = $region28
        $region27: #{tpu_custom_call.1} parent=11 // pred_region
          _
        $region28: #{tpu_custom_call.1} parent=11 // pred_fallthru
          _
      $region12: #{tpu_custom_call.1} parent=5 // pred_fallthru
        _
      %p177 = scmp.lt.s32.totalorder %s14, 2
      // Predicated region
      $region29: #{tpu_custom_call.1} parent=5 // pred_check
        %p178 = pneg %p177
      $region30: #{tpu_custom_call.1} parent=5 // pred_check_branch
        %180 = sbr.rel (%p178) target = $region32
      $region31: #{tpu_custom_call.1} parent=5 // pred_region
        // Predicated region
        $region33: #{tpu_custom_call.1} parent=31 // pred_check
          %p181 = pneg %p34
        $region34: #{tpu_custom_call.1} parent=31 // pred_check_branch
          %183 = sbr.rel (%p181) target = $region36
        $region35: #{tpu_custom_call.1} parent=31 // pred_region
          %s184 = sand.u32 %s24, 1
          %s185 = sand.u32 %s24, 1
          %s186 = smul.addr %s185, 136
          %s187 = scalar_lea.vmem [#allocation4], %s186
          %s188 = smul.addr %s14, 8
          %s189 = scalar_lea.vmem %s0, %s188
          // Predicated region
          $region37: #{tpu_custom_call.1} parent=35 // pred_check
            _
          $region38: #{tpu_custom_call.1} parent=35 // pred_check_branch
            %191 = sbr.rel (0) target = $region40
          $region39: #{tpu_custom_call.1} parent=35 // pred_region
            // Predicated region
            $region41: #{tpu_custom_call.1} parent=39 // pred_check
              _
            $region42: #{tpu_custom_call.1} parent=39 // pred_check_branch
              %193 = sbr.rel (0) target = $region44
            $region43: #{tpu_custom_call.1} parent=39 // pred_region
              // Predicated region
              $region56: #{tpu_custom_call.1} parent=43 // pred_check
                _
              $region57: #{tpu_custom_call.1} parent=43 // pred_check_branch
                %240 = sbr.rel (0) target = $region59
              $region58: #{tpu_custom_call.1} parent=43 // pred_region
                loop: start=0, step=1, limit=1
                $region60: #{tpu_custom_call.1} parent=58 // loop_pre_header
                  _
                $region61: #{tpu_custom_call.1} parent=58 // loop_header
                  %s242 = sphi 0, %s246
                  %p243 = scmp.ge.s32.totalorder %s242, 1
                  %s247 = sphi %s189, %s189
                  %s248 = sphi %s187, %s187
                $region62: #{tpu_custom_call.1} parent=58 // loop_header_branch
                  %245 = sbr.rel (%p243) target = $region66
                $region63: #{tpu_custom_call.1} parent=58 // loop_body
                  %v249 = vld [vmem:[%s247] sm:$0xff]
                  %250 = vst [vmem:[%s248] sm:$0xff] %v249
                  %v251 = vld [vmem:[%s247 + $0x10] sm:$0xff]
                  %252 = vst [vmem:[%s248 + $0x8] sm:$0xff] %v251
                  %v253 = vld [vmem:[%s247 + $0x20] sm:$0xff]
                  %254 = vst [vmem:[%s248 + $0x10] sm:$0xff] %v253
                  %v255 = vld [vmem:[%s247 + $0x30] sm:$0xff]
                  %256 = vst [vmem:[%s248 + $0x18] sm:$0xff] %v255
                  %v257 = vld [vmem:[%s247 + $0x40] sm:$0xff]
                  %258 = vst [vmem:[%s248 + $0x20] sm:$0xff] %v257
                  %v259 = vld [vmem:[%s247 + $0x50] sm:$0xff]
                  %260 = vst [vmem:[%s248 + $0x28] sm:$0xff] %v259
                  %v261 = vld [vmem:[%s247 + $0x60] sm:$0xff]
                  %262 = vst [vmem:[%s248 + $0x30] sm:$0xff] %v261
                  %v263 = vld [vmem:[%s247 + $0x70] sm:$0xff]
                  %264 = vst [vmem:[%s248 + $0x38] sm:$0xff] %v263
                  %v265 = vld [vmem:[%s247 + $0x80] sm:$0xff]
                  %266 = vst [vmem:[%s248 + $0x40] sm:$0xff] %v265
                  %v267 = vld [vmem:[%s247 + $0x90] sm:$0xff]
                  %268 = vst [vmem:[%s248 + $0x48] sm:$0xff] %v267
                  %v269 = vld [vmem:[%s247 + $0xa0] sm:$0xff]
                  %270 = vst [vmem:[%s248 + $0x50] sm:$0xff] %v269
                  %v271 = vld [vmem:[%s247 + $0xb0] sm:$0xff]
                  %272 = vst [vmem:[%s248 + $0x58] sm:$0xff] %v271
                  %v273 = vld [vmem:[%s247 + $0xc0] sm:$0xff]
                  %274 = vst [vmem:[%s248 + $0x60] sm:$0xff] %v273
                  %v275 = vld [vmem:[%s247 + $0xd0] sm:$0xff]
                  %276 = vst [vmem:[%s248 + $0x68] sm:$0xff] %v275
                  %v277 = vld [vmem:[%s247 + $0xe0] sm:$0xff]
                  %278 = vst [vmem:[%s248 + $0x70] sm:$0xff] %v277
                  %v279 = vld [vmem:[%s247 + $0xf0] sm:$0xff]
                  %280 = vst [vmem:[%s248 + $0x78] sm:$0xff] %v279
                  %v281 = vld [vmem:[%s247 + $0x100] sm:$0xff]
                  %282 = vst [vmem:[%s248 + $0x80] sm:$0xff] %v281
                $region64: #{tpu_custom_call.1} parent=58 // loop_footer
                  %s246 = sadd.s32 1, %s242
                $region65: #{tpu_custom_call.1} parent=58 // loop_footer_branch
                  %241 = sbr.rel target = $region61
                $region66: #{tpu_custom_call.1} parent=58 // loop_exit
                  _
              $region59: #{tpu_custom_call.1} parent=43 // pred_fallthru
                _
              // Predicated region
              $region67: #{tpu_custom_call.1} parent=43 // pred_check
                _
              $region68: #{tpu_custom_call.1} parent=43 // pred_check_branch
                %284 = sbr.rel target = $region70
              $region69: #{tpu_custom_call.1} parent=43 // pred_region
                _
              $region70: #{tpu_custom_call.1} parent=43 // pred_fallthru
                _
            $region44: #{tpu_custom_call.1} parent=39 // pred_fallthru
              _
            // Predicated region
            $region45: #{tpu_custom_call.1} parent=39 // pred_check
              _
            $region46: #{tpu_custom_call.1} parent=39 // pred_check_branch
              %195 = sbr.rel target = $region48
            $region47: #{tpu_custom_call.1} parent=39 // pred_region
              loop: start=0, step=1, limit=1
              $region49: #{tpu_custom_call.1} parent=47 // loop_pre_header
                _
              $region50: #{tpu_custom_call.1} parent=47 // loop_header
                %s198 = sphi 0, %s202
                %p199 = scmp.ge.s32.totalorder %s198, 1
                %s203 = sphi %s189, %s189
                %s204 = sphi %s187, %s187
              $region51: #{tpu_custom_call.1} parent=47 // loop_header_branch
                %201 = sbr.rel (%p199) target = $region55
              $region52: #{tpu_custom_call.1} parent=47 // loop_body
                %v205 = vld [vmem:[%s203] sm:$0xff]
                %206 = vst [vmem:[%s204] sm:$0xff] %v205
                %v207 = vld [vmem:[%s203 + $0x10] sm:$0xff]
                %208 = vst [vmem:[%s204 + $0x8] sm:$0xff] %v207
                %v209 = vld [vmem:[%s203 + $0x20] sm:$0xff]
                %210 = vst [vmem:[%s204 + $0x10] sm:$0xff] %v209
                %v211 = vld [vmem:[%s203 + $0x30] sm:$0xff]
                %212 = vst [vmem:[%s204 + $0x18] sm:$0xff] %v211
                %v213 = vld [vmem:[%s203 + $0x40] sm:$0xff]
                %214 = vst [vmem:[%s204 + $0x20] sm:$0xff] %v213
                %v215 = vld [vmem:[%s203 + $0x50] sm:$0xff]
                %216 = vst [vmem:[%s204 + $0x28] sm:$0xff] %v215
                %v217 = vld [vmem:[%s203 + $0x60] sm:$0xff]
                %218 = vst [vmem:[%s204 + $0x30] sm:$0xff] %v217
                %v219 = vld [vmem:[%s203 + $0x70] sm:$0xff]
                %220 = vst [vmem:[%s204 + $0x38] sm:$0xff] %v219
                %v221 = vld [vmem:[%s203 + $0x80] sm:$0xff]
                %222 = vst [vmem:[%s204 + $0x40] sm:$0xff] %v221
                %v223 = vld [vmem:[%s203 + $0x90] sm:$0xff]
                %224 = vst [vmem:[%s204 + $0x48] sm:$0xff] %v223
                %v225 = vld [vmem:[%s203 + $0xa0] sm:$0xff]
                %226 = vst [vmem:[%s204 + $0x50] sm:$0xff] %v225
                %v227 = vld [vmem:[%s203 + $0xb0] sm:$0xff]
                %228 = vst [vmem:[%s204 + $0x58] sm:$0xff] %v227
                %v229 = vld [vmem:[%s203 + $0xc0] sm:$0xff]
                %230 = vst [vmem:[%s204 + $0x60] sm:$0xff] %v229
                %v231 = vld [vmem:[%s203 + $0xd0] sm:$0xff]
                %232 = vst [vmem:[%s204 + $0x68] sm:$0xff] %v231
                %v233 = vld [vmem:[%s203 + $0xe0] sm:$0xff]
                %234 = vst [vmem:[%s204 + $0x70] sm:$0xff] %v233
                %v235 = vld [vmem:[%s203 + $0xf0] sm:$0xff]
                %236 = vst [vmem:[%s204 + $0x78] sm:$0xff] %v235
                %v237 = vld [vmem:[%s203 + $0x100] sm:$0xff]
                %238 = vst [vmem:[%s204 + $0x80] sm:$0xff] %v237
              $region53: #{tpu_custom_call.1} parent=47 // loop_footer
                %s202 = sadd.s32 1, %s198
              $region54: #{tpu_custom_call.1} parent=47 // loop_footer_branch
                %197 = sbr.rel target = $region50
              $region55: #{tpu_custom_call.1} parent=47 // loop_exit
                _
            $region48: #{tpu_custom_call.1} parent=39 // pred_fallthru
              _
          $region40: #{tpu_custom_call.1} parent=35 // pred_fallthru
            _
          %285 = vnop
        $region36: #{tpu_custom_call.1} parent=31 // pred_fallthru
          _
      $region32: #{tpu_custom_call.1} parent=5 // pred_fallthru
        _
      %p286 = scmp.le.s32.totalorder 1, %s14
      %p287 = scmp.lt.s32.totalorder %s14, 3
      %p288 = pnand %p286, %p287
      %p289 = pneg %p288
      // Predicated region
      $region71: #{tpu_custom_call.1} parent=5 // pred_check
        _
      $region72: #{tpu_custom_call.1} parent=5 // pred_check_branch
        %291 = sbr.rel (%p288) target = $region74
      $region73: #{tpu_custom_call.1} parent=5 // pred_region
        %s292 = ssub.s32 %s14, 1
        %s293 = sand.u32 %s27, 1
        %s294 = sand.u32 %s27, 1
        %s295 = smul.addr %s294, 136
        %s296 = scalar_lea.vmem [#allocation4], %s295
        // Predicated region
        $region75: #{tpu_custom_call.1} parent=73 // pred_check
          %p297 = pneg %p40
        $region76: #{tpu_custom_call.1} parent=73 // pred_check_branch
          %299 = sbr.rel (%p297) target = $region78
        $region77: #{tpu_custom_call.1} parent=73 // pred_region
          _
        $region78: #{tpu_custom_call.1} parent=73 // pred_fallthru
          _
        %s300 = sand.u32 %s27, 1
        %s301 = sand.u32 %s27, 1
        %s302 = smul.addr %s301, 136
        %s303 = scalar_lea.vmem [#allocation4], %s302
        %p304 = pneg %p40
        %p305 = pneg %p37
        %p306 = pneg %p61
        %p307 = pneg %p58
        %p308 = pneg %p82
        %p309 = pneg %p79
        %p310 = pneg %p103
        %p311 = pneg %p100
        %p312 = pneg %p124
        %p313 = pneg %p121
        %p314 = pneg %p150
        %p315 = pneg %p147
        %s316 = sand.u32 %s137, 1
        %s317 = scalar_lea.sflag [#allocation6], %s316
        %s318 = sand.u32 %s137, 1
        %s319 = smul.addr %s318, 1408
        %s320 = scalar_lea.vmem [#allocation5], %s319
        %v321 = vld [vmem:[%s1] sm:$0xff]
        %v322 = vld [vmem:[%s1 + $0x8] sm:$0xff]
        %v323 = vld [vmem:[%s1 + $0x10] sm:$0xff]
        %v324 = vld [vmem:[%s1 + $0x18] sm:$0xff]
        %v325 = vld [vmem:[%s1 + $0x20] sm:$0xff]
        %v326 = vld [vmem:[%s1 + $0x28] sm:$0xff]
        %v327 = vld [vmem:[%s1 + $0x30] sm:$0xff]
        %v328 = vld [vmem:[%s1 + $0x38] sm:$0xff]
        %v329 = vld [vmem:[%s1 + $0x40] sm:$0xff]
        %v330 = vld [vmem:[%s1 + $0x48] sm:$0xff]
        %v331 = vld [vmem:[%s1 + $0x50] sm:$0xff]
        %v332 = vld [vmem:[%s1 + $0x58] sm:$0xff]
        %v333 = vld [vmem:[%s1 + $0x60] sm:$0xff]
        %v334 = vld [vmem:[%s1 + $0x68] sm:$0xff]
        %v335 = vld [vmem:[%s1 + $0x70] sm:$0xff]
        %v336 = vld [vmem:[%s1 + $0x78] sm:$0xff]
        %v337 = vld [vmem:[%s1 + $0x80] sm:$0xff]
        %v338 = vld [vmem:[%s1 + $0x88] sm:$0xff]
        %v339 = vld [vmem:[%s1 + $0x90] sm:$0xff]
        %v340 = vld [vmem:[%s1 + $0x98] sm:$0xff]
        %v341 = vld [vmem:[%s1 + $0xa0] sm:$0xff]
        %v342 = vld [vmem:[%s1 + $0xa8] sm:$0xff]
        %v343 = vld [vmem:[%s1 + $0xb0] sm:$0xff]
        %v344 = vld [vmem:[%s1 + $0xb8] sm:$0xff]
        %v345 = vld [vmem:[%s1 + $0xc0] sm:$0xff]
        %v346 = vld [vmem:[%s1 + $0xc8] sm:$0xff]
        %v347 = vld [vmem:[%s1 + $0xd0] sm:$0xff]
        %v348 = vld [vmem:[%s1 + $0xd8] sm:$0xff]
        %v349 = vld [vmem:[%s1 + $0xe0] sm:$0xff]
        %v350 = vld [vmem:[%s1 + $0xe8] sm:$0xff]
        %v351 = vld [vmem:[%s1 + $0xf0] sm:$0xff]
        %v352 = vld [vmem:[%s1 + $0xf8] sm:$0xff]
        %v353 = vld [vmem:[%s1 + $0x100] sm:$0xff]
        %v354 = vld [vmem:[%s1 + $0x108] sm:$0xff]
        %v355 = vld [vmem:[%s1 + $0x110] sm:$0xff]
        %v356 = vld [vmem:[%s1 + $0x118] sm:$0xff]
        %v357 = vld [vmem:[%s1 + $0x120] sm:$0xff]
        %v358 = vld [vmem:[%s1 + $0x128] sm:$0xff]
        %v359 = vld [vmem:[%s1 + $0x130] sm:$0xff]
        %v360 = vld [vmem:[%s1 + $0x138] sm:$0xff]
        %v361 = vld [vmem:[%s1 + $0x140] sm:$0xff]
        %v362 = vld [vmem:[%s1 + $0x148] sm:$0xff]
        %v363 = vld [vmem:[%s1 + $0x150] sm:$0xff]
        %v364 = vld [vmem:[%s1 + $0x158] sm:$0xff]
        %v365 = vld [vmem:[%s1 + $0x160] sm:$0xff]
        %v366 = vld [vmem:[%s1 + $0x168] sm:$0xff]
        %v367 = vld [vmem:[%s1 + $0x170] sm:$0xff]
        %v368 = vld [vmem:[%s1 + $0x178] sm:$0xff]
        %v369 = vld [vmem:[%s1 + $0x180] sm:$0xff]
        %v370 = vld [vmem:[%s1 + $0x188] sm:$0xff]
        %v371 = vld [vmem:[%s1 + $0x190] sm:$0xff]
        %v372 = vld [vmem:[%s1 + $0x198] sm:$0xff]
        %v373 = vld [vmem:[%s1 + $0x1a0] sm:$0xff]
        %v374 = vld [vmem:[%s1 + $0x1a8] sm:$0xff]
        %v375 = vld [vmem:[%s1 + $0x1b0] sm:$0xff]
        %v376 = vld [vmem:[%s1 + $0x1b8] sm:$0xff]
        %v377 = vld [vmem:[%s1 + $0x1c0] sm:$0xff]
        %v378 = vld [vmem:[%s1 + $0x1c8] sm:$0xff]
        %v379 = vld [vmem:[%s1 + $0x1d0] sm:$0xff]
        %v380 = vld [vmem:[%s1 + $0x1d8] sm:$0xff]
        %v381 = vld [vmem:[%s1 + $0x1e0] sm:$0xff]
        %v382 = vld [vmem:[%s1 + $0x1e8] sm:$0xff]
        %v383 = vld [vmem:[%s1 + $0x1f0] sm:$0xff]
        %v384 = vld [vmem:[%s1 + $0x1f8] sm:$0xff]
        %v385 = vld [vmem:[%s1 + $0x200] sm:$0xff]
        %v386 = vld [vmem:[%s1 + $0x208] sm:$0xff]
        %v387 = vld [vmem:[%s1 + $0x210] sm:$0xff]
        %v388 = vld [vmem:[%s1 + $0x218] sm:$0xff]
        %v389 = vld [vmem:[%s1 + $0x220] sm:$0xff]
        %v390 = vld [vmem:[%s1 + $0x228] sm:$0xff]
        %v391 = vld [vmem:[%s1 + $0x230] sm:$0xff]
        %v392 = vld [vmem:[%s1 + $0x238] sm:$0xff]
        %v393 = vld [vmem:[%s1 + $0x240] sm:$0xff]
        %v394 = vld [vmem:[%s1 + $0x248] sm:$0xff]
        %v395 = vld [vmem:[%s1 + $0x250] sm:$0xff]
        %v396 = vld [vmem:[%s1 + $0x258] sm:$0xff]
        %v397 = vld [vmem:[%s1 + $0x260] sm:$0xff]
        %v398 = vld [vmem:[%s1 + $0x268] sm:$0xff]
        %v399 = vld [vmem:[%s1 + $0x270] sm:$0xff]
        %v400 = vld [vmem:[%s1 + $0x278] sm:$0xff]
        %v401 = vld [vmem:[%s1 + $0x280] sm:$0xff]
        %v402 = vld [vmem:[%s1 + $0x288] sm:$0xff]
        %v403 = vld [vmem:[%s1 + $0x290] sm:$0xff]
        %v404 = vld [vmem:[%s1 + $0x298] sm:$0xff]
        %v405 = vld [vmem:[%s1 + $0x2a0] sm:$0xff]
        %v406 = vld [vmem:[%s1 + $0x2a8] sm:$0xff]
        %v407 = vld [vmem:[%s1 + $0x2b0] sm:$0xff]
        %v408 = vld [vmem:[%s1 + $0x2b8] sm:$0xff]
        %v409 = vld [vmem:[%s1 + $0x2c0] sm:$0xff]
        %v410 = vld [vmem:[%s1 + $0x2c8] sm:$0xff]
        %v411 = vld [vmem:[%s1 + $0x2d0] sm:$0xff]
        %v412 = vld [vmem:[%s1 + $0x2d8] sm:$0xff]
        %v413 = vld [vmem:[%s1 + $0x2e0] sm:$0xff]
        %v414 = vld [vmem:[%s1 + $0x2e8] sm:$0xff]
        %v415 = vld [vmem:[%s1 + $0x2f0] sm:$0xff]
        %v416 = vld [vmem:[%s1 + $0x2f8] sm:$0xff]
        %v417 = vld [vmem:[%s1 + $0x300] sm:$0xff]
        %v418 = vld [vmem:[%s1 + $0x308] sm:$0xff]
        %v419 = vld [vmem:[%s1 + $0x310] sm:$0xff]
        %v420 = vld [vmem:[%s1 + $0x318] sm:$0xff]
        %v421 = vld [vmem:[%s1 + $0x320] sm:$0xff]
        %v422 = vld [vmem:[%s1 + $0x328] sm:$0xff]
        %v423 = vld [vmem:[%s1 + $0x330] sm:$0xff]
        %v424 = vld [vmem:[%s1 + $0x338] sm:$0xff]
        %v425 = vld [vmem:[%s1 + $0x340] sm:$0xff]
        %v426 = vld [vmem:[%s1 + $0x348] sm:$0xff]
        %v427 = vld [vmem:[%s1 + $0x350] sm:$0xff]
        %v428 = vld [vmem:[%s1 + $0x358] sm:$0xff]
        %v429 = vld [vmem:[%s1 + $0x360] sm:$0xff]
        %v430 = vld [vmem:[%s1 + $0x368] sm:$0xff]
        %v431 = vld [vmem:[%s1 + $0x370] sm:$0xff]
        %v432 = vld [vmem:[%s1 + $0x378] sm:$0xff]
        %v433 = vld [vmem:[%s1 + $0x380] sm:$0xff]
        %v434 = vld [vmem:[%s1 + $0x388] sm:$0xff]
        %v435 = vld [vmem:[%s1 + $0x390] sm:$0xff]
        %v436 = vld [vmem:[%s1 + $0x398] sm:$0xff]
        %v437 = vld [vmem:[%s1 + $0x3a0] sm:$0xff]
        %v438 = vld [vmem:[%s1 + $0x3a8] sm:$0xff]
        %v439 = vld [vmem:[%s1 + $0x3b0] sm:$0xff]
        %v440 = vld [vmem:[%s1 + $0x3b8] sm:$0xff]
        %v441 = vld [vmem:[%s1 + $0x3c0] sm:$0xff]
        %v442 = vld [vmem:[%s1 + $0x3c8] sm:$0xff]
        %v443 = vld [vmem:[%s1 + $0x3d0] sm:$0xff]
        %v444 = vld [vmem:[%s1 + $0x3d8] sm:$0xff]
        %v445 = vld [vmem:[%s1 + $0x3e0] sm:$0xff]
        %v446 = vld [vmem:[%s1 + $0x3e8] sm:$0xff]
        %v447 = vld [vmem:[%s1 + $0x3f0] sm:$0xff]
        %v448 = vld [vmem:[%s1 + $0x3f8] sm:$0xff]
        %v449 = vld [vmem:[%s1 + $0x400] sm:$0x1]
        %v450 = vld [vmem:[%s1 + $0x408] sm:$0x1]
        %v451 = vld [vmem:[%s296] sm:$0xff]
        %v452 = vld [vmem:[%s296 + $0x8] sm:$0xff]
        %v453 = vld [vmem:[%s296 + $0x10] sm:$0xff]
        %v454 = vld [vmem:[%s296 + $0x18] sm:$0xff]
        %v455 = vld [vmem:[%s296 + $0x20] sm:$0xff]
        %v456 = vld [vmem:[%s296 + $0x28] sm:$0xff]
        %v457 = vld [vmem:[%s296 + $0x30] sm:$0xff]
        %v458 = vld [vmem:[%s296 + $0x38] sm:$0xff]
        %v459 = vld [vmem:[%s296 + $0x40] sm:$0xff]
        %v460 = vld [vmem:[%s296 + $0x48] sm:$0xff]
        %v461 = vld [vmem:[%s296 + $0x50] sm:$0xff]
        %v462 = vld [vmem:[%s296 + $0x58] sm:$0xff]
        %v463 = vld [vmem:[%s296 + $0x60] sm:$0xff]
        %v464 = vld [vmem:[%s296 + $0x68] sm:$0xff]
        %v465 = vld [vmem:[%s296 + $0x70] sm:$0xff]
        %v466 = vld [vmem:[%s296 + $0x78] sm:$0xff]
        %v467 = vld [vmem:[%s296 + $0x80] sm:$0x1f]
        %vm468 = vcmask 39936
        %v470 = vsel %vm468, %v322, 0
        %v473 = vsel %vm468, %v324, 0
        %v476 = vsel %vm468, %v326, 0
        %v479 = vsel %vm468, %v328, 0
        %v482 = vsel %vm468, %v330, 0
        %v485 = vsel %vm468, %v332, 0
        %v488 = vsel %vm468, %v334, 0
        %v491 = vsel %vm468, %v336, 0
        %v494 = vsel %vm468, %v338, 0
        %v497 = vsel %vm468, %v340, 0
        %v500 = vsel %vm468, %v342, 0
        %v503 = vsel %vm468, %v344, 0
        %v506 = vsel %vm468, %v346, 0
        %v509 = vsel %vm468, %v348, 0
        %v512 = vsel %vm468, %v350, 0
        %v515 = vsel %vm468, %v352, 0
        %v518 = vsel %vm468, %v354, 0
        %v521 = vsel %vm468, %v356, 0
        %v524 = vsel %vm468, %v358, 0
        %v527 = vsel %vm468, %v360, 0
        %v530 = vsel %vm468, %v362, 0
        %v533 = vsel %vm468, %v364, 0
        %v536 = vsel %vm468, %v366, 0
        %v539 = vsel %vm468, %v368, 0
        %v542 = vsel %vm468, %v370, 0
        %v545 = vsel %vm468, %v372, 0
        %v548 = vsel %vm468, %v374, 0
        %v551 = vsel %vm468, %v376, 0
        %v554 = vsel %vm468, %v378, 0
        %v557 = vsel %vm468, %v380, 0
        %v560 = vsel %vm468, %v382, 0
        %v563 = vsel %vm468, %v384, 0
        %v566 = vsel %vm468, %v386, 0
        %v569 = vsel %vm468, %v388, 0
        %v572 = vsel %vm468, %v390, 0
        %v575 = vsel %vm468, %v392, 0
        %v578 = vsel %vm468, %v394, 0
        %v581 = vsel %vm468, %v396, 0
        %v584 = vsel %vm468, %v398, 0
        %v587 = vsel %vm468, %v400, 0
        %v590 = vsel %vm468, %v402, 0
        %v593 = vsel %vm468, %v404, 0
        %v596 = vsel %vm468, %v406, 0
        %v599 = vsel %vm468, %v408, 0
        %v602 = vsel %vm468, %v410, 0
        %v605 = vsel %vm468, %v412, 0
        %v608 = vsel %vm468, %v414, 0
        %v611 = vsel %vm468, %v416, 0
        %v614 = vsel %vm468, %v418, 0
        %v617 = vsel %vm468, %v420, 0
        %v620 = vsel %vm468, %v422, 0
        %v623 = vsel %vm468, %v424, 0
        %v626 = vsel %vm468, %v426, 0
        %v629 = vsel %vm468, %v428, 0
        %v632 = vsel %vm468, %v430, 0
        %v635 = vsel %vm468, %v432, 0
        %v638 = vsel %vm468, %v434, 0
        %v641 = vsel %vm468, %v436, 0
        %v644 = vsel %vm468, %v438, 0
        %v647 = vsel %vm468, %v440, 0
        %v650 = vsel %vm468, %v442, 0
        %v653 = vsel %vm468, %v444, 0
        %v656 = vsel %vm468, %v446, 0
        %v659 = vsel %vm468, %v448, 0
        %v662 = vsel %vm468, %v450, 0
        %vm664 = vcmask 1044480
        %v666 = vsel %vm664, %v467, 0
        %668 = vmatprep.subr.mxu0 0.0
        %669 = vmatpush1.msra.mxu0 %v451
        %670 = vmatprep.subr.mxu0 0.0
        %671 = vmatpush1.msra.mxu0 %v452
        %672 = vmatprep.subr.mxu0 0.0
        %673 = vmatpush1.msra.mxu0 %v453
        %674 = vmatprep.subr.mxu0 0.0
        %675 = vmatpush1.msra.mxu0 %v454
        %676 = vmatprep.subr.mxu0 0.0
        %677 = vmatpush1.msra.mxu0 %v455
        %678 = vmatprep.subr.mxu0 0.0
        %679 = vmatpush1.msra.mxu0 %v456
        %680 = vmatprep.subr.mxu0 0.0
        %681 = vmatpush1.msra.mxu0 %v457
        %682 = vmatprep.subr.mxu0 0.0
        %683 = vmatpush1.msra.mxu0 %v458
        %684 = vmatprep.subr.mxu0 0.0
        %685 = vmatpush1.msra.mxu0 %v459
        %686 = vmatprep.subr.mxu0 0.0
        %687 = vmatpush1.msra.mxu0 %v460
        %688 = vmatprep.subr.mxu0 0.0
        %689 = vmatpush1.msra.mxu0 %v461
        %690 = vmatprep.subr.mxu0 0.0
        %691 = vmatpush1.msra.mxu0 %v462
        %692 = vmatprep.subr.mxu0 0.0
        %693 = vmatpush1.msra.mxu0 %v463
        %694 = vmatprep.subr.mxu0 0.0
        %695 = vmatpush1.msra.mxu0 %v464
        %696 = vmatprep.subr.mxu0 0.0
        %697 = vmatpush1.msra.mxu0 %v465
        %698 = vmatprep.subr.mxu0 0.0
        %699 = vmatpush1.msra.mxu0 %v466
        %700 = vmatprep.subr.mxu0 0.0
        %701 = vmatpush1.msra.mxu0 %v666
        %702 = vmatprep.subr.mxu0 0.0
        %703 = vmatpush1.msra.mxu0 0.0
        %704 = vmatprep.subr.mxu0 0.0
        %705 = vmatpush1.msra.mxu0 0.0
        %706 = vmatprep.subr.mxu0 0.0
        %707 = vmatpush1.msra.mxu0 0.0
        %708 = vmatprep.subr.mxu0 0.0
        %709 = vmatpush1.msra.mxu0 0.0
        %710 = vmatprep.subr.mxu0 0.0
        %711 = vmatpush1.msra.mxu0 0.0
        %712 = vmatprep.subr.mxu0 0.0
        %713 = vmatpush1.msra.mxu0 0.0
        %714 = vmatprep.subr.mxu0 0.0
        %715 = vmatpush1.msra.mxu0 0.0
        %716 = vmatprep.subr.mxu0 0.0
        %717 = vmatpush1.msra.mxu0 0.0
        %718 = vmatprep.subr.mxu0 0.0
        %719 = vmatpush1.msra.mxu0 0.0
        %720 = vmatprep.subr.mxu0 0.0
        %721 = vmatpush1.msra.mxu0 0.0
        %722 = vmatprep.subr.mxu0 0.0
        %723 = vmatpush1.msra.mxu0 0.0
        %724 = vmatprep.subr.mxu0 0.0
        %725 = vmatpush1.msra.mxu0 0.0
        %726 = vmatprep.subr.mxu0 0.0
        %727 = vmatpush1.msra.mxu0 0.0
        %728 = vmatprep.subr.mxu0 0.0
        %729 = vmatpush1.msra.mxu0 0.0
        %730 = vmatprep.subr.mxu0 0.0
        %731 = vmatpush1.msra.mxu0 0.0
        %732 = vmatprep.mubr.f32.mxu0 %v470
        %733 = vmatmul.mubr.f32.gmra.mrb[0].mxu0 %v321
        %v734 = vpop.f32.mrb[0].mxu0
        %v735 = vadd.f32 0.0, %v734
        %v736 = vpop.f32.mrb[0].mxu0
        %737 = vmatprep.mubr.f32.mxu0 %v473
        %738 = vmatmul.mubr.f32.gmra.mrb[0].mxu0 %v323
        %v739 = vpop.f32.mrb[0].mxu0
        %v740 = vadd.f32 0.0, %v739
        %v741 = vpop.f32.mrb[0].mxu0
        %742 = vmatprep.mubr.f32.mxu0 %v476
        %743 = vmatmul.mubr.f32.gmra.mrb[0].mxu0 %v325
        %v744 = vpop.f32.mrb[0].mxu0
        %v745 = vadd.f32 0.0, %v744
        %v746 = vpop.f32.mrb[0].mxu0
        %747 = vmatprep.mubr.f32.mxu0 %v479
        %748 = vmatmul.mubr.f32.gmra.mrb[0].mxu0 %v327
        %v749 = vpop.f32.mrb[0].mxu0
        %v750 = vadd.f32 0.0, %v749
        %v751 = vpop.f32.mrb[0].mxu0
        %752 = vmatprep.mubr.f32.mxu0 %v482
        %753 = vmatmul.mubr.f32.gmra.mrb[0].mxu0 %v329
        %v754 = vpop.f32.mrb[0].mxu0
        %v755 = vadd.f32 0.0, %v754
        %v756 = vpop.f32.mrb[0].mxu0
        %757 = vmatprep.mubr.f32.mxu0 %v485
        %758 = vmatmul.mubr.f32.gmra.mrb[0].mxu0 %v331
        %v759 = vpop.f32.mrb[0].mxu0
        %v760 = vadd.f32 0.0, %v759
        %v761 = vpop.f32.mrb[0].mxu0
        %762 = vmatprep.mubr.f32.mxu0 %v488
        %763 = vmatmul.mubr.f32.gmra.mrb[0].mxu0 %v333
        %v764 = vpop.f32.mrb[0].mxu0
        %v765 = vadd.f32 0.0, %v764
        %v766 = vpop.f32.mrb[0].mxu0
        %767 = vmatprep.mubr.f32.mxu0 %v491
        %768 = vmatmul.mubr.f32.gmra.mrb[0].mxu0 %v335
        %v769 = vpop.f32.mrb[0].mxu0
        %v770 = vadd.f32 0.0, %v769
        %v771 = vpop.f32.mrb[0].mxu0
        %772 = vmatprep.mubr.f32.mxu0 %v494
        %773 = vmatmul.mubr.f32.gmra.mrb[0].mxu0 %v337
        %v774 = vpop.f32.mrb[0].mxu0
        %v775 = vadd.f32 0.0, %v774
        %v776 = vpop.f32.mrb[0].mxu0
        %777 = vmatprep.mubr.f32.mxu0 %v497
        %778 = vmatmul.mubr.f32.gmra.mrb[0].mxu0 %v339
        %v779 = vpop.f32.mrb[0].mxu0
        %v780 = vadd.f32 0.0, %v779
        %v781 = vpop.f32.mrb[0].mxu0
        %782 = vmatprep.mubr.f32.mxu0 %v500
        %783 = vmatmul.mubr.f32.gmra.mrb[0].mxu0 %v341
        %v784 = vpop.f32.mrb[0].mxu0
        %v785 = vadd.f32 0.0, %v784
        %v786 = vpop.f32.mrb[0].mxu0
        %787 = vmatprep.mubr.f32.mxu0 %v503
        %788 = vmatmul.mubr.f32.gmra.mrb[0].mxu0 %v343
        %v789 = vpop.f32.mrb[0].mxu0
        %v790 = vadd.f32 0.0, %v789
        %v791 = vpop.f32.mrb[0].mxu0
        %792 = vmatprep.mubr.f32.mxu0 %v506
        %793 = vmatmul.mubr.f32.gmra.mrb[0].mxu0 %v345
        %v794 = vpop.f32.mrb[0].mxu0
        %v795 = vadd.f32 0.0, %v794
        %v796 = vpop.f32.mrb[0].mxu0
        %797 = vmatprep.mubr.f32.mxu0 %v509
        %798 = vmatmul.mubr.f32.gmra.mrb[0].mxu0 %v347
        %v799 = vpop.f32.mrb[0].mxu0
        %v800 = vadd.f32 0.0, %v799
        %v801 = vpop.f32.mrb[0].mxu0
        %802 = vmatprep.mubr.f32.mxu0 %v512
        %803 = vmatmul.mubr.f32.gmra.mrb[0].mxu0 %v349
        %v804 = vpop.f32.mrb[0].mxu0
        %v805 = vadd.f32 0.0, %v804
        %v806 = vpop.f32.mrb[0].mxu0
        %807 = vmatprep.mubr.f32.mxu0 %v515
        %808 = vmatmul.mubr.f32.gmra.mrb[0].mxu0 %v351
        %v809 = vpop.f32.mrb[0].mxu0
        %v810 = vadd.f32 0.0, %v809
        %v811 = vpop.f32.mrb[0].mxu0
        %812 = vmatprep.mubr.f32.mxu0 %v518
        %813 = vmatmul.mubr.f32.gmra.mrb[0].mxu0 %v353
        %v814 = vpop.f32.mrb[0].mxu0
        %v815 = vadd.f32 0.0, %v814
        %v816 = vpop.f32.mrb[0].mxu0
        %817 = vmatprep.mubr.f32.mxu0 %v521
        %818 = vmatmul.mubr.f32.gmra.mrb[0].mxu0 %v355
        %v819 = vpop.f32.mrb[0].mxu0
        %v820 = vadd.f32 0.0, %v819
        %v821 = vpop.f32.mrb[0].mxu0
        %822 = vmatprep.mubr.f32.mxu0 %v524
        %823 = vmatmul.mubr.f32.gmra.mrb[0].mxu0 %v357
        %v824 = vpop.f32.mrb[0].mxu0
        %v825 = vadd.f32 0.0, %v824
        %v826 = vpop.f32.mrb[0].mxu0
        %827 = vmatprep.mubr.f32.mxu0 %v527
        %828 = vmatmul.mubr.f32.gmra.mrb[0].mxu0 %v359
        %v829 = vpop.f32.mrb[0].mxu0
        %v830 = vadd.f32 0.0, %v829
        %v831 = vpop.f32.mrb[0].mxu0
        %832 = vmatprep.mubr.f32.mxu0 %v530
        %833 = vmatmul.mubr.f32.gmra.mrb[0].mxu0 %v361
        %v834 = vpop.f32.mrb[0].mxu0
        %v835 = vadd.f32 0.0, %v834
        %v836 = vpop.f32.mrb[0].mxu0
        %837 = vmatprep.mubr.f32.mxu0 %v533
        %838 = vmatmul.mubr.f32.gmra.mrb[0].mxu0 %v363
        %v839 = vpop.f32.mrb[0].mxu0
        %v840 = vadd.f32 0.0, %v839
        %v841 = vpop.f32.mrb[0].mxu0
        %842 = vmatprep.mubr.f32.mxu0 %v536
        %843 = vmatmul.mubr.f32.gmra.mrb[0].mxu0 %v365
        %v844 = vpop.f32.mrb[0].mxu0
        %v845 = vadd.f32 0.0, %v844
        %v846 = vpop.f32.mrb[0].mxu0
        %847 = vmatprep.mubr.f32.mxu0 %v539
        %848 = vmatmul.mubr.f32.gmra.mrb[0].mxu0 %v367
        %v849 = vpop.f32.mrb[0].mxu0
        %v850 = vadd.f32 0.0, %v849
        %v851 = vpop.f32.mrb[0].mxu0
        %852 = vmatprep.mubr.f32.mxu0 %v542
        %853 = vmatmul.mubr.f32.gmra.mrb[0].mxu0 %v369
        %v854 = vpop.f32.mrb[0].mxu0
        %v855 = vadd.f32 0.0, %v854
        %v856 = vpop.f32.mrb[0].mxu0
        %857 = vmatprep.mubr.f32.mxu0 %v545
        %858 = vmatmul.mubr.f32.gmra.mrb[0].mxu0 %v371
        %v859 = vpop.f32.mrb[0].mxu0
        %v860 = vadd.f32 0.0, %v859
        %v861 = vpop.f32.mrb[0].mxu0
        %862 = vmatprep.mubr.f32.mxu0 %v548
        %863 = vmatmul.mubr.f32.gmra.mrb[0].mxu0 %v373
        %v864 = vpop.f32.mrb[0].mxu0
        %v865 = vadd.f32 0.0, %v864
        %v866 = vpop.f32.mrb[0].mxu0
        %867 = vmatprep.mubr.f32.mxu0 %v551
        %868 = vmatmul.mubr.f32.gmra.mrb[0].mxu0 %v375
        %v869 = vpop.f32.mrb[0].mxu0
        %v870 = vadd.f32 0.0, %v869
        %v871 = vpop.f32.mrb[0].mxu0
        %872 = vmatprep.mubr.f32.mxu0 %v554
        %873 = vmatmul.mubr.f32.gmra.mrb[0].mxu0 %v377
        %v874 = vpop.f32.mrb[0].mxu0
        %v875 = vadd.f32 0.0, %v874
        %v876 = vpop.f32.mrb[0].mxu0
        %877 = vmatprep.mubr.f32.mxu0 %v557
        %878 = vmatmul.mubr.f32.gmra.mrb[0].mxu0 %v379
        %v879 = vpop.f32.mrb[0].mxu0
        %v880 = vadd.f32 0.0, %v879
        %v881 = vpop.f32.mrb[0].mxu0
        %882 = vmatprep.mubr.f32.mxu0 %v560
        %883 = vmatmul.mubr.f32.gmra.mrb[0].mxu0 %v381
        %v884 = vpop.f32.mrb[0].mxu0
        %v885 = vadd.f32 0.0, %v884
        %v886 = vpop.f32.mrb[0].mxu0
        %887 = vmatprep.mubr.f32.mxu0 %v563
        %888 = vmatmul.mubr.f32.gmra.mrb[0].mxu0 %v383
        %v889 = vpop.f32.mrb[0].mxu0
        %v890 = vadd.f32 0.0, %v889
        %v891 = vpop.f32.mrb[0].mxu0
        %892 = vmatprep.mubr.f32.mxu0 %v566
        %893 = vmatmul.mubr.f32.gmra.mrb[0].mxu0 %v385
        %v894 = vpop.f32.mrb[0].mxu0
        %v895 = vadd.f32 0.0, %v894
        %v896 = vpop.f32.mrb[0].mxu0
        %897 = vmatprep.mubr.f32.mxu0 %v569
        %898 = vmatmul.mubr.f32.gmra.mrb[0].mxu0 %v387
        %v899 = vpop.f32.mrb[0].mxu0
        %v900 = vadd.f32 0.0, %v899
        %v901 = vpop.f32.mrb[0].mxu0
        %902 = vmatprep.mubr.f32.mxu0 %v572
        %903 = vmatmul.mubr.f32.gmra.mrb[0].mxu0 %v389
        %v904 = vpop.f32.mrb[0].mxu0
        %v905 = vadd.f32 0.0, %v904
        %v906 = vpop.f32.mrb[0].mxu0
        %907 = vmatprep.mubr.f32.mxu0 %v575
        %908 = vmatmul.mubr.f32.gmra.mrb[0].mxu0 %v391
        %v909 = vpop.f32.mrb[0].mxu0
        %v910 = vadd.f32 0.0, %v909
        %v911 = vpop.f32.mrb[0].mxu0
        %912 = vmatprep.mubr.f32.mxu0 %v578
        %913 = vmatmul.mubr.f32.gmra.mrb[0].mxu0 %v393
        %v914 = vpop.f32.mrb[0].mxu0
        %v915 = vadd.f32 0.0, %v914
        %v916 = vpop.f32.mrb[0].mxu0
        %917 = vmatprep.mubr.f32.mxu0 %v581
        %918 = vmatmul.mubr.f32.gmra.mrb[0].mxu0 %v395
        %v919 = vpop.f32.mrb[0].mxu0
        %v920 = vadd.f32 0.0, %v919
        %v921 = vpop.f32.mrb[0].mxu0
        %922 = vmatprep.mubr.f32.mxu0 %v584
        %923 = vmatmul.mubr.f32.gmra.mrb[0].mxu0 %v397
        %v924 = vpop.f32.mrb[0].mxu0
        %v925 = vadd.f32 0.0, %v924
        %v926 = vpop.f32.mrb[0].mxu0
        %927 = vmatprep.mubr.f32.mxu0 %v587
        %928 = vmatmul.mubr.f32.gmra.mrb[0].mxu0 %v399
        %v929 = vpop.f32.mrb[0].mxu0
        %v930 = vadd.f32 0.0, %v929
        %v931 = vpop.f32.mrb[0].mxu0
        %932 = vmatprep.mubr.f32.mxu0 %v590
        %933 = vmatmul.mubr.f32.gmra.mrb[0].mxu0 %v401
        %v934 = vpop.f32.mrb[0].mxu0
        %v935 = vadd.f32 0.0, %v934
        %v936 = vpop.f32.mrb[0].mxu0
        %937 = vmatprep.mubr.f32.mxu0 %v593
        %938 = vmatmul.mubr.f32.gmra.mrb[0].mxu0 %v403
        %v939 = vpop.f32.mrb[0].mxu0
        %v940 = vadd.f32 0.0, %v939
        %v941 = vpop.f32.mrb[0].mxu0
        %942 = vmatprep.mubr.f32.mxu0 %v596
        %943 = vmatmul.mubr.f32.gmra.mrb[0].mxu0 %v405
        %v944 = vpop.f32.mrb[0].mxu0
        %v945 = vadd.f32 0.0, %v944
        %v946 = vpop.f32.mrb[0].mxu0
        %947 = vmatprep.mubr.f32.mxu0 %v599
        %948 = vmatmul.mubr.f32.gmra.mrb[0].mxu0 %v407
        %v949 = vpop.f32.mrb[0].mxu0
        %v950 = vadd.f32 0.0, %v949
        %v951 = vpop.f32.mrb[0].mxu0
        %952 = vmatprep.mubr.f32.mxu0 %v602
        %953 = vmatmul.mubr.f32.gmra.mrb[0].mxu0 %v409
        %v954 = vpop.f32.mrb[0].mxu0
        %v955 = vadd.f32 0.0, %v954
        %v956 = vpop.f32.mrb[0].mxu0
        %957 = vmatprep.mubr.f32.mxu0 %v605
        %958 = vmatmul.mubr.f32.gmra.mrb[0].mxu0 %v411
        %v959 = vpop.f32.mrb[0].mxu0
        %v960 = vadd.f32 0.0, %v959
        %v961 = vpop.f32.mrb[0].mxu0
        %962 = vmatprep.mubr.f32.mxu0 %v608
        %963 = vmatmul.mubr.f32.gmra.mrb[0].mxu0 %v413
        %v964 = vpop.f32.mrb[0].mxu0
        %v965 = vadd.f32 0.0, %v964
        %v966 = vpop.f32.mrb[0].mxu0
        %967 = vmatprep.mubr.f32.mxu0 %v611
        %968 = vmatmul.mubr.f32.gmra.mrb[0].mxu0 %v415
        %v969 = vpop.f32.mrb[0].mxu0
        %v970 = vadd.f32 0.0, %v969
        %v971 = vpop.f32.mrb[0].mxu0
        %972 = vmatprep.mubr.f32.mxu0 %v614
        %973 = vmatmul.mubr.f32.gmra.mrb[0].mxu0 %v417
        %v974 = vpop.f32.mrb[0].mxu0
        %v975 = vadd.f32 0.0, %v974
        %v976 = vpop.f32.mrb[0].mxu0
        %977 = vmatprep.mubr.f32.mxu0 %v617
        %978 = vmatmul.mubr.f32.gmra.mrb[0].mxu0 %v419
        %v979 = vpop.f32.mrb[0].mxu0
        %v980 = vadd.f32 0.0, %v979
        %v981 = vpop.f32.mrb[0].mxu0
        %982 = vmatprep.mubr.f32.mxu0 %v620
        %983 = vmatmul.mubr.f32.gmra.mrb[0].mxu0 %v421
        %v984 = vpop.f32.mrb[0].mxu0
        %v985 = vadd.f32 0.0, %v984
        %v986 = vpop.f32.mrb[0].mxu0
        %987 = vmatprep.mubr.f32.mxu0 %v623
        %988 = vmatmul.mubr.f32.gmra.mrb[0].mxu0 %v423
        %v989 = vpop.f32.mrb[0].mxu0
        %v990 = vadd.f32 0.0, %v989
        %v991 = vpop.f32.mrb[0].mxu0
        %992 = vmatprep.mubr.f32.mxu0 %v626
        %993 = vmatmul.mubr.f32.gmra.mrb[0].mxu0 %v425
        %v994 = vpop.f32.mrb[0].mxu0
        %v995 = vadd.f32 0.0, %v994
        %v996 = vpop.f32.mrb[0].mxu0
        %997 = vmatprep.mubr.f32.mxu0 %v629
        %998 = vmatmul.mubr.f32.gmra.mrb[0].mxu0 %v427
        %v999 = vpop.f32.mrb[0].mxu0
        %v1000 = vadd.f32 0.0, %v999
        %v1001 = vpop.f32.mrb[0].mxu0
        %1002 = vmatprep.mubr.f32.mxu0 %v632
        %1003 = vmatmul.mubr.f32.gmra.mrb[0].mxu0 %v429
        %v1004 = vpop.f32.mrb[0].mxu0
        %v1005 = vadd.f32 0.0, %v1004
        %v1006 = vpop.f32.mrb[0].mxu0
        %1007 = vmatprep.mubr.f32.mxu0 %v635
        %1008 = vmatmul.mubr.f32.gmra.mrb[0].mxu0 %v431
        %v1009 = vpop.f32.mrb[0].mxu0
        %v1010 = vadd.f32 0.0, %v1009
        %v1011 = vpop.f32.mrb[0].mxu0
        %1012 = vmatprep.mubr.f32.mxu0 %v638
        %1013 = vmatmul.mubr.f32.gmra.mrb[0].mxu0 %v433
        %v1014 = vpop.f32.mrb[0].mxu0
        %v1015 = vadd.f32 0.0, %v1014
        %v1016 = vpop.f32.mrb[0].mxu0
        %1017 = vmatprep.mubr.f32.mxu0 %v641
        %1018 = vmatmul.mubr.f32.gmra.mrb[0].mxu0 %v435
        %v1019 = vpop.f32.mrb[0].mxu0
        %v1020 = vadd.f32 0.0, %v1019
        %v1021 = vpop.f32.mrb[0].mxu0
        %1022 = vmatprep.mubr.f32.mxu0 %v644
        %1023 = vmatmul.mubr.f32.gmra.mrb[0].mxu0 %v437
        %v1024 = vpop.f32.mrb[0].mxu0
        %v1025 = vadd.f32 0.0, %v1024
        %v1026 = vpop.f32.mrb[0].mxu0
        %1027 = vmatprep.mubr.f32.mxu0 %v647
        %1028 = vmatmul.mubr.f32.gmra.mrb[0].mxu0 %v439
        %v1029 = vpop.f32.mrb[0].mxu0
        %v1030 = vadd.f32 0.0, %v1029
        %v1031 = vpop.f32.mrb[0].mxu0
        %1032 = vmatprep.mubr.f32.mxu0 %v650
        %1033 = vmatmul.mubr.f32.gmra.mrb[0].mxu0 %v441
        %v1034 = vpop.f32.mrb[0].mxu0
        %v1035 = vadd.f32 0.0, %v1034
        %v1036 = vpop.f32.mrb[0].mxu0
        %1037 = vmatprep.mubr.f32.mxu0 %v653
        %1038 = vmatmul.mubr.f32.gmra.mrb[0].mxu0 %v443
        %v1039 = vpop.f32.mrb[0].mxu0
        %v1040 = vadd.f32 0.0, %v1039
        %v1041 = vpop.f32.mrb[0].mxu0
        %1042 = vmatprep.mubr.f32.mxu0 %v656
        %1043 = vmatmul.mubr.f32.gmra.mrb[0].mxu0 %v445
        %v1044 = vpop.f32.mrb[0].mxu0
        %v1045 = vadd.f32 0.0, %v1044
        %v1046 = vpop.f32.mrb[0].mxu0
        %1047 = vmatprep.mubr.f32.mxu0 %v659
        %1048 = vmatmul.mubr.f32.gmra.mrb[0].mxu0 %v447
        %v1049 = vpop.f32.mrb[0].mxu0
        %v1050 = vadd.f32 0.0, %v1049
        %v1051 = vpop.f32.mrb[0].mxu0
        %1052 = vmatprep.mubr.f32.mxu0 %v662
        %1053 = vmatmul.mubr.f32.gmra.mrb[0].mxu0 %v449
        %v1054 = vpop.f32.mrb[0].mxu0
        %v1055 = vadd.f32 0.0, %v1054
        %v1056 = vpop.f32.mrb[0].mxu0
        %1057 = vdwg.mxu0
        %v1058 = vmax.f32 %v735, 0.0
        %v1059 = vmax.f32 %v740, 0.0
        %v1060 = vmax.f32 %v745, 0.0
        %v1061 = vmax.f32 %v750, 0.0
        %v1062 = vmax.f32 %v755, 0.0
        %v1063 = vmax.f32 %v760, 0.0
        %v1064 = vmax.f32 %v765, 0.0
        %v1065 = vmax.f32 %v770, 0.0
        %v1066 = vmax.f32 %v775, 0.0
        %v1067 = vmax.f32 %v780, 0.0
        %v1068 = vmax.f32 %v785, 0.0
        %v1069 = vmax.f32 %v790, 0.0
        %v1070 = vmax.f32 %v795, 0.0
        %v1071 = vmax.f32 %v800, 0.0
        %v1072 = vmax.f32 %v805, 0.0
        %v1073 = vmax.f32 %v810, 0.0
        %v1074 = vmax.f32 %v815, 0.0
        %v1075 = vmax.f32 %v820, 0.0
        %v1076 = vmax.f32 %v825, 0.0
        %v1077 = vmax.f32 %v830, 0.0
        %v1078 = vmax.f32 %v835, 0.0
        %v1079 = vmax.f32 %v840, 0.0
        %v1080 = vmax.f32 %v845, 0.0
        %v1081 = vmax.f32 %v850, 0.0
        %v1082 = vmax.f32 %v855, 0.0
        %v1083 = vmax.f32 %v860, 0.0
        %v1084 = vmax.f32 %v865, 0.0
        %v1085 = vmax.f32 %v870, 0.0
        %v1086 = vmax.f32 %v875, 0.0
        %v1087 = vmax.f32 %v880, 0.0
        %v1088 = vmax.f32 %v885, 0.0
        %v1089 = vmax.f32 %v890, 0.0
        %v1090 = vmax.f32 %v895, 0.0
        %v1091 = vmax.f32 %v900, 0.0
        %v1092 = vmax.f32 %v905, 0.0
        %v1093 = vmax.f32 %v910, 0.0
        %v1094 = vmax.f32 %v915, 0.0
        %v1095 = vmax.f32 %v920, 0.0
        %v1096 = vmax.f32 %v925, 0.0
        %v1097 = vmax.f32 %v930, 0.0
        %v1098 = vmax.f32 %v935, 0.0
        %v1099 = vmax.f32 %v940, 0.0
        %v1100 = vmax.f32 %v945, 0.0
        %v1101 = vmax.f32 %v950, 0.0
        %v1102 = vmax.f32 %v955, 0.0
        %v1103 = vmax.f32 %v960, 0.0
        %v1104 = vmax.f32 %v965, 0.0
        %v1105 = vmax.f32 %v970, 0.0
        %v1106 = vmax.f32 %v975, 0.0
        %v1107 = vmax.f32 %v980, 0.0
        %v1108 = vmax.f32 %v985, 0.0
        %v1109 = vmax.f32 %v990, 0.0
        %v1110 = vmax.f32 %v995, 0.0
        %v1111 = vmax.f32 %v1000, 0.0
        %v1112 = vmax.f32 %v1005, 0.0
        %v1113 = vmax.f32 %v1010, 0.0
        %v1114 = vmax.f32 %v1015, 0.0
        %v1115 = vmax.f32 %v1020, 0.0
        %v1116 = vmax.f32 %v1025, 0.0
        %v1117 = vmax.f32 %v1030, 0.0
        %v1118 = vmax.f32 %v1035, 0.0
        %v1119 = vmax.f32 %v1040, 0.0
        %v1120 = vmax.f32 %v1045, 0.0
        %v1121 = vmax.f32 %v1050, 0.0
        %v1122 = vmax.f32 %v1055, 0.0
        %v1123 = vld [vmem:[%s2] sm:$0xff]
        %v1124 = vld [vmem:[%s2 + $0x8] sm:$0xff]
        %v1125 = vld [vmem:[%s2 + $0x10] sm:$0xff]
        %v1126 = vld [vmem:[%s2 + $0x18] sm:$0xff]
        %v1127 = vld [vmem:[%s2 + $0x20] sm:$0xff]
        %v1128 = vld [vmem:[%s2 + $0x28] sm:$0xff]
        %v1129 = vld [vmem:[%s2 + $0x30] sm:$0xff]
        %v1130 = vld [vmem:[%s2 + $0x38] sm:$0xff]
        %v1131 = vld [vmem:[%s2 + $0x40] sm:$0xff]
        %v1132 = vld [vmem:[%s2 + $0x48] sm:$0xff]
        %v1133 = vld [vmem:[%s2 + $0x50] sm:$0xff]
        %v1134 = vld [vmem:[%s2 + $0x58] sm:$0xff]
        %v1135 = vld [vmem:[%s2 + $0x60] sm:$0xff]
        %v1136 = vld [vmem:[%s2 + $0x68] sm:$0xff]
        %v1137 = vld [vmem:[%s2 + $0x70] sm:$0xff]
        %v1138 = vld [vmem:[%s2 + $0x78] sm:$0xff]
        %v1139 = vld [vmem:[%s2 + $0x80] sm:$0xff]
        %v1140 = vld [vmem:[%s2 + $0x88] sm:$0xff]
        %v1141 = vld [vmem:[%s2 + $0x90] sm:$0xff]
        %v1142 = vld [vmem:[%s2 + $0x98] sm:$0xff]
        %v1143 = vld [vmem:[%s2 + $0xa0] sm:$0xff]
        %v1144 = vld [vmem:[%s2 + $0xa8] sm:$0xff]
        %v1145 = vld [vmem:[%s2 + $0xb0] sm:$0xff]
        %v1146 = vld [vmem:[%s2 + $0xb8] sm:$0xff]
        %v1147 = vld [vmem:[%s2 + $0xc0] sm:$0xff]
        %v1148 = vld [vmem:[%s2 + $0xc8] sm:$0xff]
        %v1149 = vld [vmem:[%s2 + $0xd0] sm:$0xff]
        %v1150 = vld [vmem:[%s2 + $0xd8] sm:$0xff]
        %v1151 = vld [vmem:[%s2 + $0xe0] sm:$0xff]
        %v1152 = vld [vmem:[%s2 + $0xe8] sm:$0xff]
        %v1153 = vld [vmem:[%s2 + $0xf0] sm:$0xff]
        %v1154 = vld [vmem:[%s2 + $0xf8] sm:$0xff]
        %v1155 = vld [vmem:[%s2 + $0x100] sm:$0xff]
        %v1156 = vld [vmem:[%s2 + $0x108] sm:$0xff]
        %v1157 = vld [vmem:[%s2 + $0x110] sm:$0xff]
        %v1158 = vld [vmem:[%s2 + $0x118] sm:$0xff]
        %v1159 = vld [vmem:[%s2 + $0x120] sm:$0xff]
        %v1160 = vld [vmem:[%s2 + $0x128] sm:$0xff]
        %v1161 = vld [vmem:[%s2 + $0x130] sm:$0xff]
        %v1162 = vld [vmem:[%s2 + $0x138] sm:$0xff]
        %v1163 = vld [vmem:[%s2 + $0x140] sm:$0xff]
        %v1164 = vld [vmem:[%s2 + $0x148] sm:$0xff]
        %v1165 = vld [vmem:[%s2 + $0x150] sm:$0xff]
        %v1166 = vld [vmem:[%s2 + $0x158] sm:$0xff]
        %v1167 = vld [vmem:[%s2 + $0x160] sm:$0xff]
        %v1168 = vld [vmem:[%s2 + $0x168] sm:$0xff]
        %v1169 = vld [vmem:[%s2 + $0x170] sm:$0xff]
        %v1170 = vld [vmem:[%s2 + $0x178] sm:$0xff]
        %v1171 = vld [vmem:[%s2 + $0x180] sm:$0xff]
        %v1172 = vld [vmem:[%s2 + $0x188] sm:$0xff]
        %v1173 = vld [vmem:[%s2 + $0x190] sm:$0xff]
        %v1174 = vld [vmem:[%s2 + $0x198] sm:$0xff]
        %v1175 = vld [vmem:[%s2 + $0x1a0] sm:$0xff]
        %v1176 = vld [vmem:[%s2 + $0x1a8] sm:$0xff]
        %v1177 = vld [vmem:[%s2 + $0x1b0] sm:$0xff]
        %v1178 = vld [vmem:[%s2 + $0x1b8] sm:$0xff]
        %v1179 = vld [vmem:[%s2 + $0x1c0] sm:$0xff]
        %v1180 = vld [vmem:[%s2 + $0x1c8] sm:$0xff]
        %v1181 = vld [vmem:[%s2 + $0x1d0] sm:$0xff]
        %v1182 = vld [vmem:[%s2 + $0x1d8] sm:$0xff]
        %v1183 = vld [vmem:[%s2 + $0x1e0] sm:$0xff]
        %v1184 = vld [vmem:[%s2 + $0x1e8] sm:$0xff]
        %v1185 = vld [vmem:[%s2 + $0x1f0] sm:$0xff]
        %v1186 = vld [vmem:[%s2 + $0x1f8] sm:$0xff]
        %v1187 = vld [vmem:[%s2 + $0x200] sm:$0xff]
        %v1188 = vld [vmem:[%s2 + $0x208] sm:$0xff]
        %v1189 = vld [vmem:[%s2 + $0x210] sm:$0xff]
        %v1190 = vld [vmem:[%s2 + $0x218] sm:$0xff]
        %v1191 = vld [vmem:[%s2 + $0x220] sm:$0xff]
        %v1192 = vld [vmem:[%s2 + $0x228] sm:$0xff]
        %v1193 = vld [vmem:[%s2 + $0x230] sm:$0xff]
        %v1194 = vld [vmem:[%s2 + $0x238] sm:$0xff]
        %v1195 = vld [vmem:[%s2 + $0x240] sm:$0xff]
        %v1196 = vld [vmem:[%s2 + $0x248] sm:$0xff]
        %v1197 = vld [vmem:[%s2 + $0x250] sm:$0xff]
        %v1198 = vld [vmem:[%s2 + $0x258] sm:$0xff]
        %v1199 = vld [vmem:[%s2 + $0x260] sm:$0xff]
        %v1200 = vld [vmem:[%s2 + $0x268] sm:$0xff]
        %v1201 = vld [vmem:[%s2 + $0x270] sm:$0xff]
        %v1202 = vld [vmem:[%s2 + $0x278] sm:$0xff]
        %v1203 = vld [vmem:[%s2 + $0x280] sm:$0xff]
        %v1204 = vld [vmem:[%s2 + $0x288] sm:$0xff]
        %v1205 = vld [vmem:[%s2 + $0x290] sm:$0xff]
        %v1206 = vld [vmem:[%s2 + $0x298] sm:$0xff]
        %v1207 = vld [vmem:[%s2 + $0x2a0] sm:$0xff]
        %v1208 = vld [vmem:[%s2 + $0x2a8] sm:$0xff]
        %v1209 = vld [vmem:[%s2 + $0x2b0] sm:$0xff]
        %v1210 = vld [vmem:[%s2 + $0x2b8] sm:$0xff]
        %v1211 = vld [vmem:[%s2 + $0x2c0] sm:$0xff]
        %v1212 = vld [vmem:[%s2 + $0x2c8] sm:$0xff]
        %v1213 = vld [vmem:[%s2 + $0x2d0] sm:$0xff]
        %v1214 = vld [vmem:[%s2 + $0x2d8] sm:$0xff]
        %v1215 = vld [vmem:[%s2 + $0x2e0] sm:$0xff]
        %v1216 = vld [vmem:[%s2 + $0x2e8] sm:$0xff]
        %v1217 = vld [vmem:[%s2 + $0x2f0] sm:$0xff]
        %v1218 = vld [vmem:[%s2 + $0x2f8] sm:$0xff]
        %v1219 = vld [vmem:[%s2 + $0x300] sm:$0xff]
        %v1220 = vld [vmem:[%s2 + $0x308] sm:$0xff]
        %v1221 = vld [vmem:[%s2 + $0x310] sm:$0xff]
        %v1222 = vld [vmem:[%s2 + $0x318] sm:$0xff]
        %v1223 = vld [vmem:[%s2 + $0x320] sm:$0xff]
        %v1224 = vld [vmem:[%s2 + $0x328] sm:$0xff]
        %v1225 = vld [vmem:[%s2 + $0x330] sm:$0xff]
        %v1226 = vld [vmem:[%s2 + $0x338] sm:$0xff]
        %v1227 = vld [vmem:[%s2 + $0x340] sm:$0xff]
        %v1228 = vld [vmem:[%s2 + $0x348] sm:$0xff]
        %v1229 = vld [vmem:[%s2 + $0x350] sm:$0xff]
        %v1230 = vld [vmem:[%s2 + $0x358] sm:$0xff]
        %v1231 = vld [vmem:[%s2 + $0x360] sm:$0xff]
        %v1232 = vld [vmem:[%s2 + $0x368] sm:$0xff]
        %v1233 = vld [vmem:[%s2 + $0x370] sm:$0xff]
        %v1234 = vld [vmem:[%s2 + $0x378] sm:$0xff]
        %v1235 = vld [vmem:[%s2 + $0x380] sm:$0xff]
        %v1236 = vld [vmem:[%s2 + $0x388] sm:$0xff]
        %v1237 = vld [vmem:[%s2 + $0x390] sm:$0xff]
        %v1238 = vld [vmem:[%s2 + $0x398] sm:$0xff]
        %v1239 = vld [vmem:[%s2 + $0x3a0] sm:$0xff]
        %v1240 = vld [vmem:[%s2 + $0x3a8] sm:$0xff]
        %v1241 = vld [vmem:[%s2 + $0x3b0] sm:$0xff]
        %v1242 = vld [vmem:[%s2 + $0x3b8] sm:$0xff]
        %v1243 = vld [vmem:[%s2 + $0x3c0] sm:$0xff]
        %v1244 = vld [vmem:[%s2 + $0x3c8] sm:$0xff]
        %v1245 = vld [vmem:[%s2 + $0x3d0] sm:$0xff]
        %v1246 = vld [vmem:[%s2 + $0x3d8] sm:$0xff]
        %v1247 = vld [vmem:[%s2 + $0x3e0] sm:$0xff]
        %v1248 = vld [vmem:[%s2 + $0x3e8] sm:$0xff]
        %v1249 = vld [vmem:[%s2 + $0x3f0] sm:$0xff]
        %v1250 = vld [vmem:[%s2 + $0x3f8] sm:$0xff]
        %v1251 = vld [vmem:[%s2 + $0x400] sm:$0xff]
        %v1252 = vld [vmem:[%s2 + $0x408] sm:$0xff]
        %v1253 = vld [vmem:[%s2 + $0x410] sm:$0xff]
        %v1254 = vld [vmem:[%s2 + $0x418] sm:$0xff]
        %v1255 = vld [vmem:[%s2 + $0x420] sm:$0xff]
        %v1256 = vld [vmem:[%s2 + $0x428] sm:$0xff]
        %v1257 = vld [vmem:[%s2 + $0x430] sm:$0xff]
        %v1258 = vld [vmem:[%s2 + $0x438] sm:$0xff]
        %v1259 = vld [vmem:[%s2 + $0x440] sm:$0xff]
        %v1260 = vld [vmem:[%s2 + $0x448] sm:$0xff]
        %v1261 = vld [vmem:[%s2 + $0x450] sm:$0xff]
        %v1262 = vld [vmem:[%s2 + $0x458] sm:$0xff]
        %v1263 = vld [vmem:[%s2 + $0x460] sm:$0xff]
        %v1264 = vld [vmem:[%s2 + $0x468] sm:$0xff]
        %v1265 = vld [vmem:[%s2 + $0x470] sm:$0xff]
        %v1266 = vld [vmem:[%s2 + $0x478] sm:$0xff]
        %v1267 = vld [vmem:[%s2 + $0x480] sm:$0xff]
        %v1268 = vld [vmem:[%s2 + $0x488] sm:$0xff]
        %v1269 = vld [vmem:[%s2 + $0x490] sm:$0xff]
        %v1270 = vld [vmem:[%s2 + $0x498] sm:$0xff]
        %v1271 = vld [vmem:[%s2 + $0x4a0] sm:$0xff]
        %v1272 = vld [vmem:[%s2 + $0x4a8] sm:$0xff]
        %v1273 = vld [vmem:[%s2 + $0x4b0] sm:$0xff]
        %v1274 = vld [vmem:[%s2 + $0x4b8] sm:$0xff]
        %v1275 = vld [vmem:[%s2 + $0x4c0] sm:$0xff]
        %v1276 = vld [vmem:[%s2 + $0x4c8] sm:$0xff]
        %v1277 = vld [vmem:[%s2 + $0x4d0] sm:$0xff]
        %v1278 = vld [vmem:[%s2 + $0x4d8] sm:$0xff]
        %v1279 = vld [vmem:[%s2 + $0x4e0] sm:$0xff]
        %v1280 = vld [vmem:[%s2 + $0x4e8] sm:$0xff]
        %v1281 = vld [vmem:[%s2 + $0x4f0] sm:$0xff]
        %v1282 = vld [vmem:[%s2 + $0x4f8] sm:$0xff]
        %v1283 = vld [vmem:[%s2 + $0x500] sm:$0xff]
        %v1284 = vld [vmem:[%s2 + $0x508] sm:$0xff]
        %v1285 = vld [vmem:[%s2 + $0x510] sm:$0xff]
        %v1286 = vld [vmem:[%s2 + $0x518] sm:$0xff]
        %v1287 = vld [vmem:[%s2 + $0x520] sm:$0xff]
        %v1288 = vld [vmem:[%s2 + $0x528] sm:$0xff]
        %v1289 = vld [vmem:[%s2 + $0x530] sm:$0xff]
        %v1290 = vld [vmem:[%s2 + $0x538] sm:$0xff]
        %v1291 = vld [vmem:[%s2 + $0x540] sm:$0xff]
        %v1292 = vld [vmem:[%s2 + $0x548] sm:$0xff]
        %v1293 = vld [vmem:[%s2 + $0x550] sm:$0xff]
        %v1294 = vld [vmem:[%s2 + $0x558] sm:$0xff]
        %v1295 = vld [vmem:[%s2 + $0x560] sm:$0xff]
        %v1296 = vld [vmem:[%s2 + $0x568] sm:$0xff]
        %v1297 = vld [vmem:[%s2 + $0x570] sm:$0xff]
        %v1298 = vld [vmem:[%s2 + $0x578] sm:$0xff]
        %v1299 = vld [vmem:[%s2 + $0x580] sm:$0xff]
        %v1300 = vld [vmem:[%s2 + $0x588] sm:$0xff]
        %v1301 = vld [vmem:[%s2 + $0x590] sm:$0xff]
        %v1302 = vld [vmem:[%s2 + $0x598] sm:$0xff]
        %v1303 = vld [vmem:[%s2 + $0x5a0] sm:$0xff]
        %v1304 = vld [vmem:[%s2 + $0x5a8] sm:$0xff]
        %v1305 = vld [vmem:[%s2 + $0x5b0] sm:$0xff]
        %v1306 = vld [vmem:[%s2 + $0x5b8] sm:$0xff]
        %v1307 = vld [vmem:[%s2 + $0x5c0] sm:$0xff]
        %v1308 = vld [vmem:[%s2 + $0x5c8] sm:$0xff]
        %v1309 = vld [vmem:[%s2 + $0x5d0] sm:$0xff]
        %v1310 = vld [vmem:[%s2 + $0x5d8] sm:$0xff]
        %v1311 = vld [vmem:[%s2 + $0x5e0] sm:$0xff]
        %v1312 = vld [vmem:[%s2 + $0x5e8] sm:$0xff]
        %v1313 = vld [vmem:[%s2 + $0x5f0] sm:$0xff]
        %v1314 = vld [vmem:[%s2 + $0x5f8] sm:$0xff]
        %v1315 = vld [vmem:[%s2 + $0x600] sm:$0xff]
        %v1316 = vld [vmem:[%s2 + $0x608] sm:$0xff]
        %v1317 = vld [vmem:[%s2 + $0x610] sm:$0xff]
        %v1318 = vld [vmem:[%s2 + $0x618] sm:$0xff]
        %v1319 = vld [vmem:[%s2 + $0x620] sm:$0xff]
        %v1320 = vld [vmem:[%s2 + $0x628] sm:$0xff]
        %v1321 = vld [vmem:[%s2 + $0x630] sm:$0xff]
        %v1322 = vld [vmem:[%s2 + $0x638] sm:$0xff]
        %v1323 = vld [vmem:[%s2 + $0x640] sm:$0xff]
        %v1324 = vld [vmem:[%s2 + $0x648] sm:$0xff]
        %v1325 = vld [vmem:[%s2 + $0x650] sm:$0xff]
        %v1326 = vld [vmem:[%s2 + $0x658] sm:$0xff]
        %v1327 = vld [vmem:[%s2 + $0x660] sm:$0xff]
        %v1328 = vld [vmem:[%s2 + $0x668] sm:$0xff]
        %v1329 = vld [vmem:[%s2 + $0x670] sm:$0xff]
        %v1330 = vld [vmem:[%s2 + $0x678] sm:$0xff]
        %v1331 = vld [vmem:[%s2 + $0x680] sm:$0xff]
        %v1332 = vld [vmem:[%s2 + $0x688] sm:$0xff]
        %v1333 = vld [vmem:[%s2 + $0x690] sm:$0xff]
        %v1334 = vld [vmem:[%s2 + $0x698] sm:$0xff]
        %v1335 = vld [vmem:[%s2 + $0x6a0] sm:$0xff]
        %v1336 = vld [vmem:[%s2 + $0x6a8] sm:$0xff]
        %v1337 = vld [vmem:[%s2 + $0x6b0] sm:$0xff]
        %v1338 = vld [vmem:[%s2 + $0x6b8] sm:$0xff]
        %v1339 = vld [vmem:[%s2 + $0x6c0] sm:$0xff]
        %v1340 = vld [vmem:[%s2 + $0x6c8] sm:$0xff]
        %v1341 = vld [vmem:[%s2 + $0x6d0] sm:$0xff]
        %v1342 = vld [vmem:[%s2 + $0x6d8] sm:$0xff]
        %v1343 = vld [vmem:[%s2 + $0x6e0] sm:$0xff]
        %v1344 = vld [vmem:[%s2 + $0x6e8] sm:$0xff]
        %v1345 = vld [vmem:[%s2 + $0x6f0] sm:$0xff]
        %v1346 = vld [vmem:[%s2 + $0x6f8] sm:$0xff]
        %v1347 = vld [vmem:[%s2 + $0x700] sm:$0xff]
        %v1348 = vld [vmem:[%s2 + $0x708] sm:$0xff]
        %v1349 = vld [vmem:[%s2 + $0x710] sm:$0xff]
        %v1350 = vld [vmem:[%s2 + $0x718] sm:$0xff]
        %v1351 = vld [vmem:[%s2 + $0x720] sm:$0xff]
        %v1352 = vld [vmem:[%s2 + $0x728] sm:$0xff]
        %v1353 = vld [vmem:[%s2 + $0x730] sm:$0xff]
        %v1354 = vld [vmem:[%s2 + $0x738] sm:$0xff]
        %v1355 = vld [vmem:[%s2 + $0x740] sm:$0xff]
        %v1356 = vld [vmem:[%s2 + $0x748] sm:$0xff]
        %v1357 = vld [vmem:[%s2 + $0x750] sm:$0xff]
        %v1358 = vld [vmem:[%s2 + $0x758] sm:$0xff]
        %v1359 = vld [vmem:[%s2 + $0x760] sm:$0xff]
        %v1360 = vld [vmem:[%s2 + $0x768] sm:$0xff]
        %v1361 = vld [vmem:[%s2 + $0x770] sm:$0xff]
        %v1362 = vld [vmem:[%s2 + $0x778] sm:$0xff]
        %v1363 = vld [vmem:[%s2 + $0x780] sm:$0xff]
        %v1364 = vld [vmem:[%s2 + $0x788] sm:$0xff]
        %v1365 = vld [vmem:[%s2 + $0x790] sm:$0xff]
        %v1366 = vld [vmem:[%s2 + $0x798] sm:$0xff]
        %v1367 = vld [vmem:[%s2 + $0x7a0] sm:$0xff]
        %v1368 = vld [vmem:[%s2 + $0x7a8] sm:$0xff]
        %v1369 = vld [vmem:[%s2 + $0x7b0] sm:$0xff]
        %v1370 = vld [vmem:[%s2 + $0x7b8] sm:$0xff]
        %v1371 = vld [vmem:[%s2 + $0x7c0] sm:$0xff]
        %v1372 = vld [vmem:[%s2 + $0x7c8] sm:$0xff]
        %v1373 = vld [vmem:[%s2 + $0x7d0] sm:$0xff]
        %v1374 = vld [vmem:[%s2 + $0x7d8] sm:$0xff]
        %v1375 = vld [vmem:[%s2 + $0x7e0] sm:$0xff]
        %v1376 = vld [vmem:[%s2 + $0x7e8] sm:$0xff]
        %v1377 = vld [vmem:[%s2 + $0x7f0] sm:$0xff]
        %v1378 = vld [vmem:[%s2 + $0x7f8] sm:$0xff]
        %v1379 = vld [vmem:[%s2 + $0x800] sm:$0xff]
        %v1380 = vld [vmem:[%s2 + $0x808] sm:$0xff]
        %v1381 = vld [vmem:[%s2 + $0x810] sm:$0xff]
        %v1382 = vld [vmem:[%s2 + $0x818] sm:$0xff]
        %v1383 = vld [vmem:[%s2 + $0x820] sm:$0xff]
        %v1384 = vld [vmem:[%s2 + $0x828] sm:$0xff]
        %v1385 = vld [vmem:[%s2 + $0x830] sm:$0xff]
        %v1386 = vld [vmem:[%s2 + $0x838] sm:$0xff]
        %v1387 = vld [vmem:[%s2 + $0x840] sm:$0xff]
        %v1388 = vld [vmem:[%s2 + $0x848] sm:$0xff]
        %v1389 = vld [vmem:[%s2 + $0x850] sm:$0xff]
        %v1390 = vld [vmem:[%s2 + $0x858] sm:$0xff]
        %v1391 = vld [vmem:[%s2 + $0x860] sm:$0xff]
        %v1392 = vld [vmem:[%s2 + $0x868] sm:$0xff]
        %v1393 = vld [vmem:[%s2 + $0x870] sm:$0xff]
        %v1394 = vld [vmem:[%s2 + $0x878] sm:$0xff]
        %v1395 = vld [vmem:[%s2 + $0x880] sm:$0xff]
        %v1396 = vld [vmem:[%s2 + $0x888] sm:$0xff]
        %v1397 = vld [vmem:[%s2 + $0x890] sm:$0xff]
        %v1398 = vld [vmem:[%s2 + $0x898] sm:$0xff]
        %v1399 = vld [vmem:[%s2 + $0x8a0] sm:$0xff]
        %v1400 = vld [vmem:[%s2 + $0x8a8] sm:$0xff]
        %v1401 = vld [vmem:[%s2 + $0x8b0] sm:$0xff]
        %v1402 = vld [vmem:[%s2 + $0x8b8] sm:$0xff]
        %v1403 = vld [vmem:[%s2 + $0x8c0] sm:$0xff]
        %v1404 = vld [vmem:[%s2 + $0x8c8] sm:$0xff]
        %v1405 = vld [vmem:[%s2 + $0x8d0] sm:$0xff]
        %v1406 = vld [vmem:[%s2 + $0x8d8] sm:$0xff]
        %v1407 = vld [vmem:[%s2 + $0x8e0] sm:$0xff]
        %v1408 = vld [vmem:[%s2 + $0x8e8] sm:$0xff]
        %v1409 = vld [vmem:[%s2 + $0x8f0] sm:$0xff]
        %v1410 = vld [vmem:[%s2 + $0x8f8] sm:$0xff]
        %v1411 = vld [vmem:[%s2 + $0x900] sm:$0xff]
        %v1412 = vld [vmem:[%s2 + $0x908] sm:$0xff]
        %v1413 = vld [vmem:[%s2 + $0x910] sm:$0xff]
        %v1414 = vld [vmem:[%s2 + $0x918] sm:$0xff]
        %v1415 = vld [vmem:[%s2 + $0x920] sm:$0xff]
        %v1416 = vld [vmem:[%s2 + $0x928] sm:$0xff]
        %v1417 = vld [vmem:[%s2 + $0x930] sm:$0xff]
        %v1418 = vld [vmem:[%s2 + $0x938] sm:$0xff]
        %v1419 = vld [vmem:[%s2 + $0x940] sm:$0xff]
        %v1420 = vld [vmem:[%s2 + $0x948] sm:$0xff]
        %v1421 = vld [vmem:[%s2 + $0x950] sm:$0xff]
        %v1422 = vld [vmem:[%s2 + $0x958] sm:$0xff]
        %v1423 = vld [vmem:[%s2 + $0x960] sm:$0xf]
        %v1424 = vld [vmem:[%s2 + $0x968] sm:$0xf]
        %v1425 = vld [vmem:[%s2 + $0x970] sm:$0xf]
        %v1426 = vld [vmem:[%s2 + $0x978] sm:$0xf]
        %v1427 = vld [vmem:[%s2 + $0x980] sm:$0xf]
        %vm1428 = vcmask 7168
        %v1430 = vsel %vm1428, %v1127, 0
        %v1433 = vsel %vm1428, %v1132, 0
        %v1436 = vsel %vm1428, %v1137, 0
        %v1439 = vsel %vm1428, %v1142, 0
        %v1442 = vsel %vm1428, %v1147, 0
        %v1445 = vsel %vm1428, %v1152, 0
        %v1448 = vsel %vm1428, %v1157, 0
        %v1451 = vsel %vm1428, %v1162, 0
        %v1454 = vsel %vm1428, %v1167, 0
        %v1457 = vsel %vm1428, %v1172, 0
        %v1460 = vsel %vm1428, %v1177, 0
        %v1463 = vsel %vm1428, %v1182, 0
        %v1466 = vsel %vm1428, %v1187, 0
        %v1469 = vsel %vm1428, %v1192, 0
        %v1472 = vsel %vm1428, %v1197, 0
        %v1475 = vsel %vm1428, %v1202, 0
        %v1478 = vsel %vm1428, %v1207, 0
        %v1481 = vsel %vm1428, %v1212, 0
        %v1484 = vsel %vm1428, %v1217, 0
        %v1487 = vsel %vm1428, %v1222, 0
        %v1490 = vsel %vm1428, %v1227, 0
        %v1493 = vsel %vm1428, %v1232, 0
        %v1496 = vsel %vm1428, %v1237, 0
        %v1499 = vsel %vm1428, %v1242, 0
        %v1502 = vsel %vm1428, %v1247, 0
        %v1505 = vsel %vm1428, %v1252, 0
        %v1508 = vsel %vm1428, %v1257, 0
        %v1511 = vsel %vm1428, %v1262, 0
        %v1514 = vsel %vm1428, %v1267, 0
        %v1517 = vsel %vm1428, %v1272, 0
        %v1520 = vsel %vm1428, %v1277, 0
        %v1523 = vsel %vm1428, %v1282, 0
        %v1526 = vsel %vm1428, %v1287, 0
        %v1529 = vsel %vm1428, %v1292, 0
        %v1532 = vsel %vm1428, %v1297, 0
        %v1535 = vsel %vm1428, %v1302, 0
        %v1538 = vsel %vm1428, %v1307, 0
        %v1541 = vsel %vm1428, %v1312, 0
        %v1544 = vsel %vm1428, %v1317, 0
        %v1547 = vsel %vm1428, %v1322, 0
        %v1550 = vsel %vm1428, %v1327, 0
        %v1553 = vsel %vm1428, %v1332, 0
        %v1556 = vsel %vm1428, %v1337, 0
        %v1559 = vsel %vm1428, %v1342, 0
        %v1562 = vsel %vm1428, %v1347, 0
        %v1565 = vsel %vm1428, %v1352, 0
        %v1568 = vsel %vm1428, %v1357, 0
        %v1571 = vsel %vm1428, %v1362, 0
        %v1574 = vsel %vm1428, %v1367, 0
        %v1577 = vsel %vm1428, %v1372, 0
        %v1580 = vsel %vm1428, %v1377, 0
        %v1583 = vsel %vm1428, %v1382, 0
        %v1586 = vsel %vm1428, %v1387, 0
        %v1589 = vsel %vm1428, %v1392, 0
        %v1592 = vsel %vm1428, %v1397, 0
        %v1595 = vsel %vm1428, %v1402, 0
        %v1598 = vsel %vm1428, %v1407, 0
        %v1601 = vsel %vm1428, %v1412, 0
        %v1604 = vsel %vm1428, %v1417, 0
        %v1607 = vsel %vm1428, %v1422, 0
        %v1610 = vsel %vm1428, %v1427, 0
        %vm1612 = vcmask 1040384
        %v1614 = vsel %vm1612, %v1122, 0
        %1616 = vmatprep.subr.mxu0 0.0
        %1617 = vmatpush1.msra.mxu0 %v1058
        %1618 = vmatprep.subr.mxu0 0.0
        %1619 = vmatpush1.msra.mxu0 %v1059
        %1620 = vmatprep.subr.mxu0 0.0
        %1621 = vmatpush1.msra.mxu0 %v1060
        %1622 = vmatprep.subr.mxu0 0.0
        %1623 = vmatpush1.msra.mxu0 %v1061
        %1624 = vmatprep.subr.mxu0 0.0
        %1625 = vmatpush1.msra.mxu0 %v1062
        %1626 = vmatprep.subr.mxu0 0.0
        %1627 = vmatpush1.msra.mxu0 %v1063
        %1628 = vmatprep.subr.mxu0 0.0
        %1629 = vmatpush1.msra.mxu0 %v1064
        %1630 = vmatprep.subr.mxu0 0.0
        %1631 = vmatpush1.msra.mxu0 %v1065
        %1632 = vmatprep.subr.mxu0 0.0
        %1633 = vmatpush1.msra.mxu0 %v1066
        %1634 = vmatprep.subr.mxu0 0.0
        %1635 = vmatpush1.msra.mxu0 %v1067
        %1636 = vmatprep.subr.mxu0 0.0
        %1637 = vmatpush1.msra.mxu0 %v1068
        %1638 = vmatprep.subr.mxu0 0.0
        %1639 = vmatpush1.msra.mxu0 %v1069
        %1640 = vmatprep.subr.mxu0 0.0
        %1641 = vmatpush1.msra.mxu0 %v1070
        %1642 = vmatprep.subr.mxu0 0.0
        %1643 = vmatpush1.msra.mxu0 %v1071
        %1644 = vmatprep.subr.mxu0 0.0
        %1645 = vmatpush1.msra.mxu0 %v1072
        %1646 = vmatprep.subr.mxu0 0.0
        %1647 = vmatpush1.msra.mxu0 %v1073
        %1648 = vmatprep.subr.mxu0 0.0
        %1649 = vmatpush1.msra.mxu0 %v1074
        %1650 = vmatprep.subr.mxu0 0.0
        %1651 = vmatpush1.msra.mxu0 %v1075
        %1652 = vmatprep.subr.mxu0 0.0
        %1653 = vmatpush1.msra.mxu0 %v1076
        %1654 = vmatprep.subr.mxu0 0.0
        %1655 = vmatpush1.msra.mxu0 %v1077
        %1656 = vmatprep.subr.mxu0 0.0
        %1657 = vmatpush1.msra.mxu0 %v1078
        %1658 = vmatprep.subr.mxu0 0.0
        %1659 = vmatpush1.msra.mxu0 %v1079
        %1660 = vmatprep.subr.mxu0 0.0
        %1661 = vmatpush1.msra.mxu0 %v1080
        %1662 = vmatprep.subr.mxu0 0.0
        %1663 = vmatpush1.msra.mxu0 %v1081
        %1664 = vmatprep.subr.mxu0 0.0
        %1665 = vmatpush1.msra.mxu0 %v1082
        %1666 = vmatprep.subr.mxu0 0.0
        %1667 = vmatpush1.msra.mxu0 %v1083
        %1668 = vmatprep.subr.mxu0 0.0
        %1669 = vmatpush1.msra.mxu0 %v1084
        %1670 = vmatprep.subr.mxu0 0.0
        %1671 = vmatpush1.msra.mxu0 %v1085
        %1672 = vmatprep.subr.mxu0 0.0
        %1673 = vmatpush1.msra.mxu0 %v1086
        %1674 = vmatprep.subr.mxu0 0.0
        %1675 = vmatpush1.msra.mxu0 %v1087
        %1676 = vmatprep.subr.mxu0 0.0
        %1677 = vmatpush1.msra.mxu0 %v1088
        %1678 = vmatprep.subr.mxu0 0.0
        %1679 = vmatpush1.msra.mxu0 %v1089
        %1680 = vmatprep.mubr.f32.mxu0 %v1124
        %1681 = vmatmul.mubr.f32.gmra.mrb[0].mxu0 %v1123
        %v1682 = vpop.f32.mrb[0].mxu0
        %v1683 = vadd.f32 0.0, %v1682
        %v1684 = vpop.f32.mrb[0].mxu0
        %1685 = vmatprep.mubr.f32.mxu0 %v1129
        %1686 = vmatmul.mubr.f32.gmra.mrb[0].mxu0 %v1128
        %v1687 = vpop.f32.mrb[0].mxu0
        %v1688 = vadd.f32 0.0, %v1687
        %v1689 = vpop.f32.mrb[0].mxu0
        %1690 = vmatprep.mubr.f32.mxu0 %v1134
        %1691 = vmatmul.mubr.f32.gmra.mrb[0].mxu0 %v1133
        %v1692 = vpop.f32.mrb[0].mxu0
        %v1693 = vadd.f32 0.0, %v1692
        %v1694 = vpop.f32.mrb[0].mxu0
        %1695 = vmatprep.mubr.f32.mxu0 %v1139
        %1696 = vmatmul.mubr.f32.gmra.mrb[0].mxu0 %v1138
        %v1697 = vpop.f32.mrb[0].mxu0
        %v1698 = vadd.f32 0.0, %v1697
        %v1699 = vpop.f32.mrb[0].mxu0
        %1700 = vmatprep.mubr.f32.mxu0 %v1144
        %1701 = vmatmul.mubr.f32.gmra.mrb[0].mxu0 %v1143
        %v1702 = vpop.f32.mrb[0].mxu0
        %v1703 = vadd.f32 0.0, %v1702
        %v1704 = vpop.f32.mrb[0].mxu0
        %1705 = vmatprep.mubr.f32.mxu0 %v1149
        %1706 = vmatmul.mubr.f32.gmra.mrb[0].mxu0 %v1148
        %v1707 = vpop.f32.mrb[0].mxu0
        %v1708 = vadd.f32 0.0, %v1707
        %v1709 = vpop.f32.mrb[0].mxu0
        %1710 = vmatprep.mubr.f32.mxu0 %v1154
        %1711 = vmatmul.mubr.f32.gmra.mrb[0].mxu0 %v1153
        %v1712 = vpop.f32.mrb[0].mxu0
        %v1713 = vadd.f32 0.0, %v1712
        %v1714 = vpop.f32.mrb[0].mxu0
        %1715 = vmatprep.mubr.f32.mxu0 %v1159
        %1716 = vmatmul.mubr.f32.gmra.mrb[0].mxu0 %v1158
        %v1717 = vpop.f32.mrb[0].mxu0
        %v1718 = vadd.f32 0.0, %v1717
        %v1719 = vpop.f32.mrb[0].mxu0
        %1720 = vmatprep.mubr.f32.mxu0 %v1164
        %1721 = vmatmul.mubr.f32.gmra.mrb[0].mxu0 %v1163
        %v1722 = vpop.f32.mrb[0].mxu0
        %v1723 = vadd.f32 0.0, %v1722
        %v1724 = vpop.f32.mrb[0].mxu0
        %1725 = vmatprep.mubr.f32.mxu0 %v1169
        %1726 = vmatmul.mubr.f32.gmra.mrb[0].mxu0 %v1168
        %v1727 = vpop.f32.mrb[0].mxu0
        %v1728 = vadd.f32 0.0, %v1727
        %v1729 = vpop.f32.mrb[0].mxu0
        %1730 = vmatprep.mubr.f32.mxu0 %v1174
        %1731 = vmatmul.mubr.f32.gmra.mrb[0].mxu0 %v1173
        %v1732 = vpop.f32.mrb[0].mxu0
        %v1733 = vadd.f32 0.0, %v1732
        %v1734 = vpop.f32.mrb[0].mxu0
        %1735 = vmatprep.mubr.f32.mxu0 %v1179
        %1736 = vmatmul.mubr.f32.gmra.mrb[0].mxu0 %v1178
        %v1737 = vpop.f32.mrb[0].mxu0
        %v1738 = vadd.f32 0.0, %v1737
        %v1739 = vpop.f32.mrb[0].mxu0
        %1740 = vmatprep.mubr.f32.mxu0 %v1184
        %1741 = vmatmul.mubr.f32.gmra.mrb[0].mxu0 %v1183
        %v1742 = vpop.f32.mrb[0].mxu0
        %v1743 = vadd.f32 0.0, %v1742
        %v1744 = vpop.f32.mrb[0].mxu0
        %1745 = vmatprep.mubr.f32.mxu0 %v1189
        %1746 = vmatmul.mubr.f32.gmra.mrb[0].mxu0 %v1188
        %v1747 = vpop.f32.mrb[0].mxu0
        %v1748 = vadd.f32 0.0, %v1747
        %v1749 = vpop.f32.mrb[0].mxu0
        %1750 = vmatprep.mubr.f32.mxu0 %v1194
        %1751 = vmatmul.mubr.f32.gmra.mrb[0].mxu0 %v1193
        %v1752 = vpop.f32.mrb[0].mxu0
        %v1753 = vadd.f32 0.0, %v1752
        %v1754 = vpop.f32.mrb[0].mxu0
        %1755 = vmatprep.mubr.f32.mxu0 %v1199
        %1756 = vmatmul.mubr.f32.gmra.mrb[0].mxu0 %v1198
        %v1757 = vpop.f32.mrb[0].mxu0
        %v1758 = vadd.f32 0.0, %v1757
        %v1759 = vpop.f32.mrb[0].mxu0
        %1760 = vmatprep.mubr.f32.mxu0 %v1204
        %1761 = vmatmul.mubr.f32.gmra.mrb[0].mxu0 %v1203
        %v1762 = vpop.f32.mrb[0].mxu0
        %v1763 = vadd.f32 0.0, %v1762
        %v1764 = vpop.f32.mrb[0].mxu0
        %1765 = vmatprep.mubr.f32.mxu0 %v1209
        %1766 = vmatmul.mubr.f32.gmra.mrb[0].mxu0 %v1208
        %v1767 = vpop.f32.mrb[0].mxu0
        %v1768 = vadd.f32 0.0, %v1767
        %v1769 = vpop.f32.mrb[0].mxu0
        %1770 = vmatprep.mubr.f32.mxu0 %v1214
        %1771 = vmatmul.mubr.f32.gmra.mrb[0].mxu0 %v1213
        %v1772 = vpop.f32.mrb[0].mxu0
        %v1773 = vadd.f32 0.0, %v1772
        %v1774 = vpop.f32.mrb[0].mxu0
        %1775 = vmatprep.mubr.f32.mxu0 %v1219
        %1776 = vmatmul.mubr.f32.gmra.mrb[0].mxu0 %v1218
        %v1777 = vpop.f32.mrb[0].mxu0
        %v1778 = vadd.f32 0.0, %v1777
        %v1779 = vpop.f32.mrb[0].mxu0
        %1780 = vmatprep.mubr.f32.mxu0 %v1224
        %1781 = vmatmul.mubr.f32.gmra.mrb[0].mxu0 %v1223
        %v1782 = vpop.f32.mrb[0].mxu0
        %v1783 = vadd.f32 0.0, %v1782
        %v1784 = vpop.f32.mrb[0].mxu0
        %1785 = vmatprep.mubr.f32.mxu0 %v1229
        %1786 = vmatmul.mubr.f32.gmra.mrb[0].mxu0 %v1228
        %v1787 = vpop.f32.mrb[0].mxu0
        %v1788 = vadd.f32 0.0, %v1787
        %v1789 = vpop.f32.mrb[0].mxu0
        %1790 = vmatprep.mubr.f32.mxu0 %v1234
        %1791 = vmatmul.mubr.f32.gmra.mrb[0].mxu0 %v1233
        %v1792 = vpop.f32.mrb[0].mxu0
        %v1793 = vadd.f32 0.0, %v1792
        %v1794 = vpop.f32.mrb[0].mxu0
        %1795 = vmatprep.mubr.f32.mxu0 %v1239
        %1796 = vmatmul.mubr.f32.gmra.mrb[0].mxu0 %v1238
        %v1797 = vpop.f32.mrb[0].mxu0
        %v1798 = vadd.f32 0.0, %v1797
        %v1799 = vpop.f32.mrb[0].mxu0
        %1800 = vmatprep.mubr.f32.mxu0 %v1244
        %1801 = vmatmul.mubr.f32.gmra.mrb[0].mxu0 %v1243
        %v1802 = vpop.f32.mrb[0].mxu0
        %v1803 = vadd.f32 0.0, %v1802
        %v1804 = vpop.f32.mrb[0].mxu0
        %1805 = vmatprep.mubr.f32.mxu0 %v1249
        %1806 = vmatmul.mubr.f32.gmra.mrb[0].mxu0 %v1248
        %v1807 = vpop.f32.mrb[0].mxu0
        %v1808 = vadd.f32 0.0, %v1807
        %v1809 = vpop.f32.mrb[0].mxu0
        %1810 = vmatprep.mubr.f32.mxu0 %v1254
        %1811 = vmatmul.mubr.f32.gmra.mrb[0].mxu0 %v1253
        %v1812 = vpop.f32.mrb[0].mxu0
        %v1813 = vadd.f32 0.0, %v1812
        %v1814 = vpop.f32.mrb[0].mxu0
        %1815 = vmatprep.mubr.f32.mxu0 %v1259
        %1816 = vmatmul.mubr.f32.gmra.mrb[0].mxu0 %v1258
        %v1817 = vpop.f32.mrb[0].mxu0
        %v1818 = vadd.f32 0.0, %v1817
        %v1819 = vpop.f32.mrb[0].mxu0
        %1820 = vmatprep.mubr.f32.mxu0 %v1264
        %1821 = vmatmul.mubr.f32.gmra.mrb[0].mxu0 %v1263
        %v1822 = vpop.f32.mrb[0].mxu0
        %v1823 = vadd.f32 0.0, %v1822
        %v1824 = vpop.f32.mrb[0].mxu0
        %1825 = vmatprep.mubr.f32.mxu0 %v1269
        %1826 = vmatmul.mubr.f32.gmra.mrb[0].mxu0 %v1268
        %v1827 = vpop.f32.mrb[0].mxu0
        %v1828 = vadd.f32 0.0, %v1827
        %v1829 = vpop.f32.mrb[0].mxu0
        %1830 = vmatprep.mubr.f32.mxu0 %v1274
        %1831 = vmatmul.mubr.f32.gmra.mrb[0].mxu0 %v1273
        %v1832 = vpop.f32.mrb[0].mxu0
        %v1833 = vadd.f32 0.0, %v1832
        %v1834 = vpop.f32.mrb[0].mxu0
        %1835 = vmatprep.mubr.f32.mxu0 %v1279
        %1836 = vmatmul.mubr.f32.gmra.mrb[0].mxu0 %v1278
        %v1837 = vpop.f32.mrb[0].mxu0
        %v1838 = vadd.f32 0.0, %v1837
        %v1839 = vpop.f32.mrb[0].mxu0
        %1840 = vmatprep.mubr.f32.mxu0 %v1284
        %1841 = vmatmul.mubr.f32.gmra.mrb[0].mxu0 %v1283
        %v1842 = vpop.f32.mrb[0].mxu0
        %v1843 = vadd.f32 0.0, %v1842
        %v1844 = vpop.f32.mrb[0].mxu0
        %1845 = vmatprep.mubr.f32.mxu0 %v1289
        %1846 = vmatmul.mubr.f32.gmra.mrb[0].mxu0 %v1288
        %v1847 = vpop.f32.mrb[0].mxu0
        %v1848 = vadd.f32 0.0, %v1847
        %v1849 = vpop.f32.mrb[0].mxu0
        %1850 = vmatprep.mubr.f32.mxu0 %v1294
        %1851 = vmatmul.mubr.f32.gmra.mrb[0].mxu0 %v1293
        %v1852 = vpop.f32.mrb[0].mxu0
        %v1853 = vadd.f32 0.0, %v1852
        %v1854 = vpop.f32.mrb[0].mxu0
        %1855 = vmatprep.mubr.f32.mxu0 %v1299
        %1856 = vmatmul.mubr.f32.gmra.mrb[0].mxu0 %v1298
        %v1857 = vpop.f32.mrb[0].mxu0
        %v1858 = vadd.f32 0.0, %v1857
        %v1859 = vpop.f32.mrb[0].mxu0
        %1860 = vmatprep.mubr.f32.mxu0 %v1304
        %1861 = vmatmul.mubr.f32.gmra.mrb[0].mxu0 %v1303
        %v1862 = vpop.f32.mrb[0].mxu0
        %v1863 = vadd.f32 0.0, %v1862
        %v1864 = vpop.f32.mrb[0].mxu0
        %1865 = vmatprep.mubr.f32.mxu0 %v1309
        %1866 = vmatmul.mubr.f32.gmra.mrb[0].mxu0 %v1308
        %v1867 = vpop.f32.mrb[0].mxu0
        %v1868 = vadd.f32 0.0, %v1867
        %v1869 = vpop.f32.mrb[0].mxu0
        %1870 = vmatprep.mubr.f32.mxu0 %v1314
        %1871 = vmatmul.mubr.f32.gmra.mrb[0].mxu0 %v1313
        %v1872 = vpop.f32.mrb[0].mxu0
        %v1873 = vadd.f32 0.0, %v1872
        %v1874 = vpop.f32.mrb[0].mxu0
        %1875 = vmatprep.mubr.f32.mxu0 %v1319
        %1876 = vmatmul.mubr.f32.gmra.mrb[0].mxu0 %v1318
        %v1877 = vpop.f32.mrb[0].mxu0
        %v1878 = vadd.f32 0.0, %v1877
        %v1879 = vpop.f32.mrb[0].mxu0
        %1880 = vmatprep.mubr.f32.mxu0 %v1324
        %1881 = vmatmul.mubr.f32.gmra.mrb[0].mxu0 %v1323
        %v1882 = vpop.f32.mrb[0].mxu0
        %v1883 = vadd.f32 0.0, %v1882
        %v1884 = vpop.f32.mrb[0].mxu0
        %1885 = vmatprep.mubr.f32.mxu0 %v1329
        %1886 = vmatmul.mubr.f32.gmra.mrb[0].mxu0 %v1328
        %v1887 = vpop.f32.mrb[0].mxu0
        %v1888 = vadd.f32 0.0, %v1887
        %v1889 = vpop.f32.mrb[0].mxu0
        %1890 = vmatprep.mubr.f32.mxu0 %v1334
        %1891 = vmatmul.mubr.f32.gmra.mrb[0].mxu0 %v1333
        %v1892 = vpop.f32.mrb[0].mxu0
        %v1893 = vadd.f32 0.0, %v1892
        %v1894 = vpop.f32.mrb[0].mxu0
        %1895 = vmatprep.mubr.f32.mxu0 %v1339
        %1896 = vmatmul.mubr.f32.gmra.mrb[0].mxu0 %v1338
        %v1897 = vpop.f32.mrb[0].mxu0
        %v1898 = vadd.f32 0.0, %v1897
        %v1899 = vpop.f32.mrb[0].mxu0
        %1900 = vmatprep.mubr.f32.mxu0 %v1344
        %1901 = vmatmul.mubr.f32.gmra.mrb[0].mxu0 %v1343
        %v1902 = vpop.f32.mrb[0].mxu0
        %v1903 = vadd.f32 0.0, %v1902
        %v1904 = vpop.f32.mrb[0].mxu0
        %1905 = vmatprep.mubr.f32.mxu0 %v1349
        %1906 = vmatmul.mubr.f32.gmra.mrb[0].mxu0 %v1348
        %v1907 = vpop.f32.mrb[0].mxu0
        %v1908 = vadd.f32 0.0, %v1907
        %v1909 = vpop.f32.mrb[0].mxu0
        %1910 = vmatprep.mubr.f32.mxu0 %v1354
        %1911 = vmatmul.mubr.f32.gmra.mrb[0].mxu0 %v1353
        %v1912 = vpop.f32.mrb[0].mxu0
        %v1913 = vadd.f32 0.0, %v1912
        %v1914 = vpop.f32.mrb[0].mxu0
        %1915 = vmatprep.mubr.f32.mxu0 %v1359
        %1916 = vmatmul.mubr.f32.gmra.mrb[0].mxu0 %v1358
        %v1917 = vpop.f32.mrb[0].mxu0
        %v1918 = vadd.f32 0.0, %v1917
        %v1919 = vpop.f32.mrb[0].mxu0
        %1920 = vmatprep.mubr.f32.mxu0 %v1364
        %1921 = vmatmul.mubr.f32.gmra.mrb[0].mxu0 %v1363
        %v1922 = vpop.f32.mrb[0].mxu0
        %v1923 = vadd.f32 0.0, %v1922
        %v1924 = vpop.f32.mrb[0].mxu0
        %1925 = vmatprep.mubr.f32.mxu0 %v1369
        %1926 = vmatmul.mubr.f32.gmra.mrb[0].mxu0 %v1368
        %v1927 = vpop.f32.mrb[0].mxu0
        %v1928 = vadd.f32 0.0, %v1927
        %v1929 = vpop.f32.mrb[0].mxu0
        %1930 = vmatprep.mubr.f32.mxu0 %v1374
        %1931 = vmatmul.mubr.f32.gmra.mrb[0].mxu0 %v1373
        %v1932 = vpop.f32.mrb[0].mxu0
        %v1933 = vadd.f32 0.0, %v1932
        %v1934 = vpop.f32.mrb[0].mxu0
        %1935 = vmatprep.mubr.f32.mxu0 %v1379
        %1936 = vmatmul.mubr.f32.gmra.mrb[0].mxu0 %v1378
        %v1937 = vpop.f32.mrb[0].mxu0
        %v1938 = vadd.f32 0.0, %v1937
        %v1939 = vpop.f32.mrb[0].mxu0
        %1940 = vmatprep.mubr.f32.mxu0 %v1384
        %1941 = vmatmul.mubr.f32.gmra.mrb[0].mxu0 %v1383
        %v1942 = vpop.f32.mrb[0].mxu0
        %v1943 = vadd.f32 0.0, %v1942
        %v1944 = vpop.f32.mrb[0].mxu0
        %1945 = vmatprep.mubr.f32.mxu0 %v1389
        %1946 = vmatmul.mubr.f32.gmra.mrb[0].mxu0 %v1388
        %v1947 = vpop.f32.mrb[0].mxu0
        %v1948 = vadd.f32 0.0, %v1947
        %v1949 = vpop.f32.mrb[0].mxu0
        %1950 = vmatprep.mubr.f32.mxu0 %v1394
        %1951 = vmatmul.mubr.f32.gmra.mrb[0].mxu0 %v1393
        %v1952 = vpop.f32.mrb[0].mxu0
        %v1953 = vadd.f32 0.0, %v1952
        %v1954 = vpop.f32.mrb[0].mxu0
        %1955 = vmatprep.mubr.f32.mxu0 %v1399
        %1956 = vmatmul.mubr.f32.gmra.mrb[0].mxu0 %v1398
        %v1957 = vpop.f32.mrb[0].mxu0
        %v1958 = vadd.f32 0.0, %v1957
        %v1959 = vpop.f32.mrb[0].mxu0
        %1960 = vmatprep.mubr.f32.mxu0 %v1404
        %1961 = vmatmul.mubr.f32.gmra.mrb[0].mxu0 %v1403
        %v1962 = vpop.f32.mrb[0].mxu0
        %v1963 = vadd.f32 0.0, %v1962
        %v1964 = vpop.f32.mrb[0].mxu0
        %1965 = vmatprep.mubr.f32.mxu0 %v1409
        %1966 = vmatmul.mubr.f32.gmra.mrb[0].mxu0 %v1408
        %v1967 = vpop.f32.mrb[0].mxu0
        %v1968 = vadd.f32 0.0, %v1967
        %v1969 = vpop.f32.mrb[0].mxu0
        %1970 = vmatprep.mubr.f32.mxu0 %v1414
        %1971 = vmatmul.mubr.f32.gmra.mrb[0].mxu0 %v1413
        %v1972 = vpop.f32.mrb[0].mxu0
        %v1973 = vadd.f32 0.0, %v1972
        %v1974 = vpop.f32.mrb[0].mxu0
        %1975 = vmatprep.mubr.f32.mxu0 %v1419
        %1976 = vmatmul.mubr.f32.gmra.mrb[0].mxu0 %v1418
        %v1977 = vpop.f32.mrb[0].mxu0
        %v1978 = vadd.f32 0.0, %v1977
        %v1979 = vpop.f32.mrb[0].mxu0
        %1980 = vmatprep.mubr.f32.mxu0 %v1424
        %1981 = vmatmul.mubr.f32.gmra.mrb[0].mxu0 %v1423
        %v1982 = vpop.f32.mrb[0].mxu0
        %v1983 = vadd.f32 0.0, %v1982
        %v1984 = vpop.f32.mrb[0].mxu0
        %1985 = vdwg.mxu0
        %1986 = vmatprep.subr.mxu0 0.0
        %1987 = vmatpush1.msra.mxu0 %v1090
        %1988 = vmatprep.subr.mxu0 0.0
        %1989 = vmatpush1.msra.mxu0 %v1091
        %1990 = vmatprep.subr.mxu0 0.0
        %1991 = vmatpush1.msra.mxu0 %v1092
        %1992 = vmatprep.subr.mxu0 0.0
        %1993 = vmatpush1.msra.mxu0 %v1093
        %1994 = vmatprep.subr.mxu0 0.0
        %1995 = vmatpush1.msra.mxu0 %v1094
        %1996 = vmatprep.subr.mxu0 0.0
        %1997 = vmatpush1.msra.mxu0 %v1095
        %1998 = vmatprep.subr.mxu0 0.0
        %1999 = vmatpush1.msra.mxu0 %v1096
        %2000 = vmatprep.subr.mxu0 0.0
        %2001 = vmatpush1.msra.mxu0 %v1097
        %2002 = vmatprep.subr.mxu0 0.0
        %2003 = vmatpush1.msra.mxu0 %v1098
        %2004 = vmatprep.subr.mxu0 0.0
        %2005 = vmatpush1.msra.mxu0 %v1099
        %2006 = vmatprep.subr.mxu0 0.0
        %2007 = vmatpush1.msra.mxu0 %v1100
        %2008 = vmatprep.subr.mxu0 0.0
        %2009 = vmatpush1.msra.mxu0 %v1101
        %2010 = vmatprep.subr.mxu0 0.0
        %2011 = vmatpush1.msra.mxu0 %v1102
        %2012 = vmatprep.subr.mxu0 0.0
        %2013 = vmatpush1.msra.mxu0 %v1103
        %2014 = vmatprep.subr.mxu0 0.0
        %2015 = vmatpush1.msra.mxu0 %v1104
        %2016 = vmatprep.subr.mxu0 0.0
        %2017 = vmatpush1.msra.mxu0 %v1105
        %2018 = vmatprep.subr.mxu0 0.0
        %2019 = vmatpush1.msra.mxu0 %v1106
        %2020 = vmatprep.subr.mxu0 0.0
        %2021 = vmatpush1.msra.mxu0 %v1107
        %2022 = vmatprep.subr.mxu0 0.0
        %2023 = vmatpush1.msra.mxu0 %v1108
        %2024 = vmatprep.subr.mxu0 0.0
        %2025 = vmatpush1.msra.mxu0 %v1109
        %2026 = vmatprep.subr.mxu0 0.0
        %2027 = vmatpush1.msra.mxu0 %v1110
        %2028 = vmatprep.subr.mxu0 0.0
        %2029 = vmatpush1.msra.mxu0 %v1111
        %2030 = vmatprep.subr.mxu0 0.0
        %2031 = vmatpush1.msra.mxu0 %v1112
        %2032 = vmatprep.subr.mxu0 0.0
        %2033 = vmatpush1.msra.mxu0 %v1113
        %2034 = vmatprep.subr.mxu0 0.0
        %2035 = vmatpush1.msra.mxu0 %v1114
        %2036 = vmatprep.subr.mxu0 0.0
        %2037 = vmatpush1.msra.mxu0 %v1115
        %2038 = vmatprep.subr.mxu0 0.0
        %2039 = vmatpush1.msra.mxu0 %v1116
        %2040 = vmatprep.subr.mxu0 0.0
        %2041 = vmatpush1.msra.mxu0 %v1117
        %2042 = vmatprep.subr.mxu0 0.0
        %2043 = vmatpush1.msra.mxu0 %v1118
        %2044 = vmatprep.subr.mxu0 0.0
        %2045 = vmatpush1.msra.mxu0 %v1119
        %2046 = vmatprep.subr.mxu0 0.0
        %2047 = vmatpush1.msra.mxu0 %v1120
        %2048 = vmatprep.subr.mxu0 0.0
        %2049 = vmatpush1.msra.mxu0 %v1121
        %2050 = vmatprep.mubr.f32.mxu0 %v1126
        %2051 = vmatmul.mubr.f32.gmra.mrb[0].mxu0 %v1125
        %v2052 = vpop.f32.mrb[0].mxu0
        %v2053 = vadd.f32 %v1683, %v2052
        %v2054 = vpop.f32.mrb[0].mxu0
        %2055 = vmatprep.mubr.f32.mxu0 %v1131
        %2056 = vmatmul.mubr.f32.gmra.mrb[0].mxu0 %v1130
        %v2057 = vpop.f32.mrb[0].mxu0
        %v2058 = vadd.f32 %v1688, %v2057
        %v2059 = vpop.f32.mrb[0].mxu0
        %2060 = vmatprep.mubr.f32.mxu0 %v1136
        %2061 = vmatmul.mubr.f32.gmra.mrb[0].mxu0 %v1135
        %v2062 = vpop.f32.mrb[0].mxu0
        %v2063 = vadd.f32 %v1693, %v2062
        %v2064 = vpop.f32.mrb[0].mxu0
        %2065 = vmatprep.mubr.f32.mxu0 %v1141
        %2066 = vmatmul.mubr.f32.gmra.mrb[0].mxu0 %v1140
        %v2067 = vpop.f32.mrb[0].mxu0
        %v2068 = vadd.f32 %v1698, %v2067
        %v2069 = vpop.f32.mrb[0].mxu0
        %2070 = vmatprep.mubr.f32.mxu0 %v1146
        %2071 = vmatmul.mubr.f32.gmra.mrb[0].mxu0 %v1145
        %v2072 = vpop.f32.mrb[0].mxu0
        %v2073 = vadd.f32 %v1703, %v2072
        %v2074 = vpop.f32.mrb[0].mxu0
        %2075 = vmatprep.mubr.f32.mxu0 %v1151
        %2076 = vmatmul.mubr.f32.gmra.mrb[0].mxu0 %v1150
        %v2077 = vpop.f32.mrb[0].mxu0
        %v2078 = vadd.f32 %v1708, %v2077
        %v2079 = vpop.f32.mrb[0].mxu0
        %2080 = vmatprep.mubr.f32.mxu0 %v1156
        %2081 = vmatmul.mubr.f32.gmra.mrb[0].mxu0 %v1155
        %v2082 = vpop.f32.mrb[0].mxu0
        %v2083 = vadd.f32 %v1713, %v2082
        %v2084 = vpop.f32.mrb[0].mxu0
        %2085 = vmatprep.mubr.f32.mxu0 %v1161
        %2086 = vmatmul.mubr.f32.gmra.mrb[0].mxu0 %v1160
        %v2087 = vpop.f32.mrb[0].mxu0
        %v2088 = vadd.f32 %v1718, %v2087
        %v2089 = vpop.f32.mrb[0].mxu0
        %2090 = vmatprep.mubr.f32.mxu0 %v1166
        %2091 = vmatmul.mubr.f32.gmra.mrb[0].mxu0 %v1165
        %v2092 = vpop.f32.mrb[0].mxu0
        %v2093 = vadd.f32 %v1723, %v2092
        %v2094 = vpop.f32.mrb[0].mxu0
        %2095 = vmatprep.mubr.f32.mxu0 %v1171
        %2096 = vmatmul.mubr.f32.gmra.mrb[0].mxu0 %v1170
        %v2097 = vpop.f32.mrb[0].mxu0
        %v2098 = vadd.f32 %v1728, %v2097
        %v2099 = vpop.f32.mrb[0].mxu0
        %2100 = vmatprep.mubr.f32.mxu0 %v1176
        %2101 = vmatmul.mubr.f32.gmra.mrb[0].mxu0 %v1175
        %v2102 = vpop.f32.mrb[0].mxu0
        %v2103 = vadd.f32 %v1733, %v2102
        %v2104 = vpop.f32.mrb[0].mxu0
        %2105 = vmatprep.mubr.f32.mxu0 %v1181
        %2106 = vmatmul.mubr.f32.gmra.mrb[0].mxu0 %v1180
        %v2107 = vpop.f32.mrb[0].mxu0
        %v2108 = vadd.f32 %v1738, %v2107
        %v2109 = vpop.f32.mrb[0].mxu0
        %2110 = vmatprep.mubr.f32.mxu0 %v1186
        %2111 = vmatmul.mubr.f32.gmra.mrb[0].mxu0 %v1185
        %v2112 = vpop.f32.mrb[0].mxu0
        %v2113 = vadd.f32 %v1743, %v2112
        %v2114 = vpop.f32.mrb[0].mxu0
        %2115 = vmatprep.mubr.f32.mxu0 %v1191
        %2116 = vmatmul.mubr.f32.gmra.mrb[0].mxu0 %v1190
        %v2117 = vpop.f32.mrb[0].mxu0
        %v2118 = vadd.f32 %v1748, %v2117
        %v2119 = vpop.f32.mrb[0].mxu0
        %2120 = vmatprep.mubr.f32.mxu0 %v1196
        %2121 = vmatmul.mubr.f32.gmra.mrb[0].mxu0 %v1195
        %v2122 = vpop.f32.mrb[0].mxu0
        %v2123 = vadd.f32 %v1753, %v2122
        %v2124 = vpop.f32.mrb[0].mxu0
        %2125 = vmatprep.mubr.f32.mxu0 %v1201
        %2126 = vmatmul.mubr.f32.gmra.mrb[0].mxu0 %v1200
        %v2127 = vpop.f32.mrb[0].mxu0
        %v2128 = vadd.f32 %v1758, %v2127
        %v2129 = vpop.f32.mrb[0].mxu0
        %2130 = vmatprep.mubr.f32.mxu0 %v1206
        %2131 = vmatmul.mubr.f32.gmra.mrb[0].mxu0 %v1205
        %v2132 = vpop.f32.mrb[0].mxu0
        %v2133 = vadd.f32 %v1763, %v2132
        %v2134 = vpop.f32.mrb[0].mxu0
        %2135 = vmatprep.mubr.f32.mxu0 %v1211
        %2136 = vmatmul.mubr.f32.gmra.mrb[0].mxu0 %v1210
        %v2137 = vpop.f32.mrb[0].mxu0
        %v2138 = vadd.f32 %v1768, %v2137
        %v2139 = vpop.f32.mrb[0].mxu0
        %2140 = vmatprep.mubr.f32.mxu0 %v1216
        %2141 = vmatmul.mubr.f32.gmra.mrb[0].mxu0 %v1215
        %v2142 = vpop.f32.mrb[0].mxu0
        %v2143 = vadd.f32 %v1773, %v2142
        %v2144 = vpop.f32.mrb[0].mxu0
        %2145 = vmatprep.mubr.f32.mxu0 %v1221
        %2146 = vmatmul.mubr.f32.gmra.mrb[0].mxu0 %v1220
        %v2147 = vpop.f32.mrb[0].mxu0
        %v2148 = vadd.f32 %v1778, %v2147
        %v2149 = vpop.f32.mrb[0].mxu0
        %2150 = vmatprep.mubr.f32.mxu0 %v1226
        %2151 = vmatmul.mubr.f32.gmra.mrb[0].mxu0 %v1225
        %v2152 = vpop.f32.mrb[0].mxu0
        %v2153 = vadd.f32 %v1783, %v2152
        %v2154 = vpop.f32.mrb[0].mxu0
        %2155 = vmatprep.mubr.f32.mxu0 %v1231
        %2156 = vmatmul.mubr.f32.gmra.mrb[0].mxu0 %v1230
        %v2157 = vpop.f32.mrb[0].mxu0
        %v2158 = vadd.f32 %v1788, %v2157
        %v2159 = vpop.f32.mrb[0].mxu0
        %2160 = vmatprep.mubr.f32.mxu0 %v1236
        %2161 = vmatmul.mubr.f32.gmra.mrb[0].mxu0 %v1235
        %v2162 = vpop.f32.mrb[0].mxu0
        %v2163 = vadd.f32 %v1793, %v2162
        %v2164 = vpop.f32.mrb[0].mxu0
        %2165 = vmatprep.mubr.f32.mxu0 %v1241
        %2166 = vmatmul.mubr.f32.gmra.mrb[0].mxu0 %v1240
        %v2167 = vpop.f32.mrb[0].mxu0
        %v2168 = vadd.f32 %v1798, %v2167
        %v2169 = vpop.f32.mrb[0].mxu0
        %2170 = vmatprep.mubr.f32.mxu0 %v1246
        %2171 = vmatmul.mubr.f32.gmra.mrb[0].mxu0 %v1245
        %v2172 = vpop.f32.mrb[0].mxu0
        %v2173 = vadd.f32 %v1803, %v2172
        %v2174 = vpop.f32.mrb[0].mxu0
        %2175 = vmatprep.mubr.f32.mxu0 %v1251
        %2176 = vmatmul.mubr.f32.gmra.mrb[0].mxu0 %v1250
        %v2177 = vpop.f32.mrb[0].mxu0
        %v2178 = vadd.f32 %v1808, %v2177
        %v2179 = vpop.f32.mrb[0].mxu0
        %2180 = vmatprep.mubr.f32.mxu0 %v1256
        %2181 = vmatmul.mubr.f32.gmra.mrb[0].mxu0 %v1255
        %v2182 = vpop.f32.mrb[0].mxu0
        %v2183 = vadd.f32 %v1813, %v2182
        %v2184 = vpop.f32.mrb[0].mxu0
        %2185 = vmatprep.mubr.f32.mxu0 %v1261
        %2186 = vmatmul.mubr.f32.gmra.mrb[0].mxu0 %v1260
        %v2187 = vpop.f32.mrb[0].mxu0
        %v2188 = vadd.f32 %v1818, %v2187
        %v2189 = vpop.f32.mrb[0].mxu0
        %2190 = vmatprep.mubr.f32.mxu0 %v1266
        %2191 = vmatmul.mubr.f32.gmra.mrb[0].mxu0 %v1265
        %v2192 = vpop.f32.mrb[0].mxu0
        %v2193 = vadd.f32 %v1823, %v2192
        %v2194 = vpop.f32.mrb[0].mxu0
        %2195 = vmatprep.mubr.f32.mxu0 %v1271
        %2196 = vmatmul.mubr.f32.gmra.mrb[0].mxu0 %v1270
        %v2197 = vpop.f32.mrb[0].mxu0
        %v2198 = vadd.f32 %v1828, %v2197
        %v2199 = vpop.f32.mrb[0].mxu0
        %2200 = vmatprep.mubr.f32.mxu0 %v1276
        %2201 = vmatmul.mubr.f32.gmra.mrb[0].mxu0 %v1275
        %v2202 = vpop.f32.mrb[0].mxu0
        %v2203 = vadd.f32 %v1833, %v2202
        %v2204 = vpop.f32.mrb[0].mxu0
        %2205 = vmatprep.mubr.f32.mxu0 %v1281
        %2206 = vmatmul.mubr.f32.gmra.mrb[0].mxu0 %v1280
        %v2207 = vpop.f32.mrb[0].mxu0
        %v2208 = vadd.f32 %v1838, %v2207
        %v2209 = vpop.f32.mrb[0].mxu0
        %2210 = vmatprep.mubr.f32.mxu0 %v1286
        %2211 = vmatmul.mubr.f32.gmra.mrb[0].mxu0 %v1285
        %v2212 = vpop.f32.mrb[0].mxu0
        %v2213 = vadd.f32 %v1843, %v2212
        %v2214 = vpop.f32.mrb[0].mxu0
        %2215 = vmatprep.mubr.f32.mxu0 %v1291
        %2216 = vmatmul.mubr.f32.gmra.mrb[0].mxu0 %v1290
        %v2217 = vpop.f32.mrb[0].mxu0
        %v2218 = vadd.f32 %v1848, %v2217
        %v2219 = vpop.f32.mrb[0].mxu0
        %2220 = vmatprep.mubr.f32.mxu0 %v1296
        %2221 = vmatmul.mubr.f32.gmra.mrb[0].mxu0 %v1295
        %v2222 = vpop.f32.mrb[0].mxu0
        %v2223 = vadd.f32 %v1853, %v2222
        %v2224 = vpop.f32.mrb[0].mxu0
        %2225 = vmatprep.mubr.f32.mxu0 %v1301
        %2226 = vmatmul.mubr.f32.gmra.mrb[0].mxu0 %v1300
        %v2227 = vpop.f32.mrb[0].mxu0
        %v2228 = vadd.f32 %v1858, %v2227
        %v2229 = vpop.f32.mrb[0].mxu0
        %2230 = vmatprep.mubr.f32.mxu0 %v1306
        %2231 = vmatmul.mubr.f32.gmra.mrb[0].mxu0 %v1305
        %v2232 = vpop.f32.mrb[0].mxu0
        %v2233 = vadd.f32 %v1863, %v2232
        %v2234 = vpop.f32.mrb[0].mxu0
        %2235 = vmatprep.mubr.f32.mxu0 %v1311
        %2236 = vmatmul.mubr.f32.gmra.mrb[0].mxu0 %v1310
        %v2237 = vpop.f32.mrb[0].mxu0
        %v2238 = vadd.f32 %v1868, %v2237
        %v2239 = vpop.f32.mrb[0].mxu0
        %2240 = vmatprep.mubr.f32.mxu0 %v1316
        %2241 = vmatmul.mubr.f32.gmra.mrb[0].mxu0 %v1315
        %v2242 = vpop.f32.mrb[0].mxu0
        %v2243 = vadd.f32 %v1873, %v2242
        %v2244 = vpop.f32.mrb[0].mxu0
        %2245 = vmatprep.mubr.f32.mxu0 %v1321
        %2246 = vmatmul.mubr.f32.gmra.mrb[0].mxu0 %v1320
        %v2247 = vpop.f32.mrb[0].mxu0
        %v2248 = vadd.f32 %v1878, %v2247
        %v2249 = vpop.f32.mrb[0].mxu0
        %2250 = vmatprep.mubr.f32.mxu0 %v1326
        %2251 = vmatmul.mubr.f32.gmra.mrb[0].mxu0 %v1325
        %v2252 = vpop.f32.mrb[0].mxu0
        %v2253 = vadd.f32 %v1883, %v2252
        %v2254 = vpop.f32.mrb[0].mxu0
        %2255 = vmatprep.mubr.f32.mxu0 %v1331
        %2256 = vmatmul.mubr.f32.gmra.mrb[0].mxu0 %v1330
        %v2257 = vpop.f32.mrb[0].mxu0
        %v2258 = vadd.f32 %v1888, %v2257
        %v2259 = vpop.f32.mrb[0].mxu0
        %2260 = vmatprep.mubr.f32.mxu0 %v1336
        %2261 = vmatmul.mubr.f32.gmra.mrb[0].mxu0 %v1335
        %v2262 = vpop.f32.mrb[0].mxu0
        %v2263 = vadd.f32 %v1893, %v2262
        %v2264 = vpop.f32.mrb[0].mxu0
        %2265 = vmatprep.mubr.f32.mxu0 %v1341
        %2266 = vmatmul.mubr.f32.gmra.mrb[0].mxu0 %v1340
        %v2267 = vpop.f32.mrb[0].mxu0
        %v2268 = vadd.f32 %v1898, %v2267
        %v2269 = vpop.f32.mrb[0].mxu0
        %2270 = vmatprep.mubr.f32.mxu0 %v1346
        %2271 = vmatmul.mubr.f32.gmra.mrb[0].mxu0 %v1345
        %v2272 = vpop.f32.mrb[0].mxu0
        %v2273 = vadd.f32 %v1903, %v2272
        %v2274 = vpop.f32.mrb[0].mxu0
        %2275 = vmatprep.mubr.f32.mxu0 %v1351
        %2276 = vmatmul.mubr.f32.gmra.mrb[0].mxu0 %v1350
        %v2277 = vpop.f32.mrb[0].mxu0
        %v2278 = vadd.f32 %v1908, %v2277
        %v2279 = vpop.f32.mrb[0].mxu0
        %2280 = vmatprep.mubr.f32.mxu0 %v1356
        %2281 = vmatmul.mubr.f32.gmra.mrb[0].mxu0 %v1355
        %v2282 = vpop.f32.mrb[0].mxu0
        %v2283 = vadd.f32 %v1913, %v2282
        %v2284 = vpop.f32.mrb[0].mxu0
        %2285 = vmatprep.mubr.f32.mxu0 %v1361
        %2286 = vmatmul.mubr.f32.gmra.mrb[0].mxu0 %v1360
        %v2287 = vpop.f32.mrb[0].mxu0
        %v2288 = vadd.f32 %v1918, %v2287
        %v2289 = vpop.f32.mrb[0].mxu0
        %2290 = vmatprep.mubr.f32.mxu0 %v1366
        %2291 = vmatmul.mubr.f32.gmra.mrb[0].mxu0 %v1365
        %v2292 = vpop.f32.mrb[0].mxu0
        %v2293 = vadd.f32 %v1923, %v2292
        %v2294 = vpop.f32.mrb[0].mxu0
        %2295 = vmatprep.mubr.f32.mxu0 %v1371
        %2296 = vmatmul.mubr.f32.gmra.mrb[0].mxu0 %v1370
        %v2297 = vpop.f32.mrb[0].mxu0
        %v2298 = vadd.f32 %v1928, %v2297
        %v2299 = vpop.f32.mrb[0].mxu0
        %2300 = vmatprep.mubr.f32.mxu0 %v1376
        %2301 = vmatmul.mubr.f32.gmra.mrb[0].mxu0 %v1375
        %v2302 = vpop.f32.mrb[0].mxu0
        %v2303 = vadd.f32 %v1933, %v2302
        %v2304 = vpop.f32.mrb[0].mxu0
        %2305 = vmatprep.mubr.f32.mxu0 %v1381
        %2306 = vmatmul.mubr.f32.gmra.mrb[0].mxu0 %v1380
        %v2307 = vpop.f32.mrb[0].mxu0
        %v2308 = vadd.f32 %v1938, %v2307
        %v2309 = vpop.f32.mrb[0].mxu0
        %2310 = vmatprep.mubr.f32.mxu0 %v1386
        %2311 = vmatmul.mubr.f32.gmra.mrb[0].mxu0 %v1385
        %v2312 = vpop.f32.mrb[0].mxu0
        %v2313 = vadd.f32 %v1943, %v2312
        %v2314 = vpop.f32.mrb[0].mxu0
        %2315 = vmatprep.mubr.f32.mxu0 %v1391
        %2316 = vmatmul.mubr.f32.gmra.mrb[0].mxu0 %v1390
        %v2317 = vpop.f32.mrb[0].mxu0
        %v2318 = vadd.f32 %v1948, %v2317
        %v2319 = vpop.f32.mrb[0].mxu0
        %2320 = vmatprep.mubr.f32.mxu0 %v1396
        %2321 = vmatmul.mubr.f32.gmra.mrb[0].mxu0 %v1395
        %v2322 = vpop.f32.mrb[0].mxu0
        %v2323 = vadd.f32 %v1953, %v2322
        %v2324 = vpop.f32.mrb[0].mxu0
        %2325 = vmatprep.mubr.f32.mxu0 %v1401
        %2326 = vmatmul.mubr.f32.gmra.mrb[0].mxu0 %v1400
        %v2327 = vpop.f32.mrb[0].mxu0
        %v2328 = vadd.f32 %v1958, %v2327
        %v2329 = vpop.f32.mrb[0].mxu0
        %2330 = vmatprep.mubr.f32.mxu0 %v1406
        %2331 = vmatmul.mubr.f32.gmra.mrb[0].mxu0 %v1405
        %v2332 = vpop.f32.mrb[0].mxu0
        %v2333 = vadd.f32 %v1963, %v2332
        %v2334 = vpop.f32.mrb[0].mxu0
        %2335 = vmatprep.mubr.f32.mxu0 %v1411
        %2336 = vmatmul.mubr.f32.gmra.mrb[0].mxu0 %v1410
        %v2337 = vpop.f32.mrb[0].mxu0
        %v2338 = vadd.f32 %v1968, %v2337
        %v2339 = vpop.f32.mrb[0].mxu0
        %2340 = vmatprep.mubr.f32.mxu0 %v1416
        %2341 = vmatmul.mubr.f32.gmra.mrb[0].mxu0 %v1415
        %v2342 = vpop.f32.mrb[0].mxu0
        %v2343 = vadd.f32 %v1973, %v2342
        %v2344 = vpop.f32.mrb[0].mxu0
        %2345 = vmatprep.mubr.f32.mxu0 %v1421
        %2346 = vmatmul.mubr.f32.gmra.mrb[0].mxu0 %v1420
        %v2347 = vpop.f32.mrb[0].mxu0
        %v2348 = vadd.f32 %v1978, %v2347
        %v2349 = vpop.f32.mrb[0].mxu0
        %2350 = vmatprep.mubr.f32.mxu0 %v1426
        %2351 = vmatmul.mubr.f32.gmra.mrb[0].mxu0 %v1425
        %v2352 = vpop.f32.mrb[0].mxu0
        %v2353 = vadd.f32 %v1983, %v2352
        %v2354 = vpop.f32.mrb[0].mxu0
        %2355 = vdwg.mxu0
        %2356 = vmatprep.subr.mxu0 0.0
        %2357 = vmatpush1.msra.mxu0 %v1614
        %2358 = vmatprep.subr.mxu0 0.0
        %2359 = vmatpush1.msra.mxu0 0.0
        %2360 = vmatprep.subr.mxu0 0.0
        %2361 = vmatpush1.msra.mxu0 0.0
        %2362 = vmatprep.subr.mxu0 0.0
        %2363 = vmatpush1.msra.mxu0 0.0
        %2364 = vmatprep.subr.mxu0 0.0
        %2365 = vmatpush1.msra.mxu0 0.0
        %2366 = vmatprep.subr.mxu0 0.0
        %2367 = vmatpush1.msra.mxu0 0.0
        %2368 = vmatprep.subr.mxu0 0.0
        %2369 = vmatpush1.msra.mxu0 0.0
        %2370 = vmatprep.subr.mxu0 0.0
        %2371 = vmatpush1.msra.mxu0 0.0
        %2372 = vmatprep.subr.mxu0 0.0
        %2373 = vmatpush1.msra.mxu0 0.0
        %2374 = vmatprep.subr.mxu0 0.0
        %2375 = vmatpush1.msra.mxu0 0.0
        %2376 = vmatprep.subr.mxu0 0.0
        %2377 = vmatpush1.msra.mxu0 0.0
        %2378 = vmatprep.subr.mxu0 0.0
        %2379 = vmatpush1.msra.mxu0 0.0
        %2380 = vmatprep.subr.mxu0 0.0
        %2381 = vmatpush1.msra.mxu0 0.0
        %2382 = vmatprep.subr.mxu0 0.0
        %2383 = vmatpush1.msra.mxu0 0.0
        %2384 = vmatprep.subr.mxu0 0.0
        %2385 = vmatpush1.msra.mxu0 0.0
        %2386 = vmatprep.subr.mxu0 0.0
        %2387 = vmatpush1.msra.mxu0 0.0
        %2388 = vmatprep.subr.mxu0 0.0
        %2389 = vmatpush1.msra.mxu0 0.0
        %2390 = vmatprep.subr.mxu0 0.0
        %2391 = vmatpush1.msra.mxu0 0.0
        %2392 = vmatprep.subr.mxu0 0.0
        %2393 = vmatpush1.msra.mxu0 0.0
        %2394 = vmatprep.subr.mxu0 0.0
        %2395 = vmatpush1.msra.mxu0 0.0
        %2396 = vmatprep.subr.mxu0 0.0
        %2397 = vmatpush1.msra.mxu0 0.0
        %2398 = vmatprep.subr.mxu0 0.0
        %2399 = vmatpush1.msra.mxu0 0.0
        %2400 = vmatprep.subr.mxu0 0.0
        %2401 = vmatpush1.msra.mxu0 0.0
        %2402 = vmatprep.subr.mxu0 0.0
        %2403 = vmatpush1.msra.mxu0 0.0
        %2404 = vmatprep.subr.mxu0 0.0
        %2405 = vmatpush1.msra.mxu0 0.0
        %2406 = vmatprep.subr.mxu0 0.0
        %2407 = vmatpush1.msra.mxu0 0.0
        %2408 = vmatprep.subr.mxu0 0.0
        %2409 = vmatpush1.msra.mxu0 0.0
        %2410 = vmatprep.subr.mxu0 0.0
        %2411 = vmatpush1.msra.mxu0 0.0
        %2412 = vmatprep.subr.mxu0 0.0
        %2413 = vmatpush1.msra.mxu0 0.0
        %2414 = vmatprep.subr.mxu0 0.0
        %2415 = vmatpush1.msra.mxu0 0.0
        %2416 = vmatprep.subr.mxu0 0.0
        %2417 = vmatpush1.msra.mxu0 0.0
        %2418 = vmatprep.subr.mxu0 0.0
        %2419 = vmatpush1.msra.mxu0 0.0
        %2420 = vmatprep.mubr.f32.mxu0 0.0
        %2421 = vmatmul.mubr.f32.gmra.mrb[0].mxu0 %v1430
        %v2422 = vpop.f32.mrb[0].mxu0
        %v2423 = vadd.f32 %v2053, %v2422
        %v2424 = vpop.f32.mrb[0].mxu0
        %2425 = vmatprep.mubr.f32.mxu0 0.0
        %2426 = vmatmul.mubr.f32.gmra.mrb[0].mxu0 %v1433
        %v2427 = vpop.f32.mrb[0].mxu0
        %v2428 = vadd.f32 %v2058, %v2427
        %v2429 = vpop.f32.mrb[0].mxu0
        %2430 = vmatprep.mubr.f32.mxu0 0.0
        %2431 = vmatmul.mubr.f32.gmra.mrb[0].mxu0 %v1436
        %v2432 = vpop.f32.mrb[0].mxu0
        %v2433 = vadd.f32 %v2063, %v2432
        %v2434 = vpop.f32.mrb[0].mxu0
        %2435 = vmatprep.mubr.f32.mxu0 0.0
        %2436 = vmatmul.mubr.f32.gmra.mrb[0].mxu0 %v1439
        %v2437 = vpop.f32.mrb[0].mxu0
        %v2438 = vadd.f32 %v2068, %v2437
        %v2439 = vpop.f32.mrb[0].mxu0
        %2440 = vmatprep.mubr.f32.mxu0 0.0
        %2441 = vmatmul.mubr.f32.gmra.mrb[0].mxu0 %v1442
        %v2442 = vpop.f32.mrb[0].mxu0
        %v2443 = vadd.f32 %v2073, %v2442
        %v2444 = vpop.f32.mrb[0].mxu0
        %2445 = vmatprep.mubr.f32.mxu0 0.0
        %2446 = vmatmul.mubr.f32.gmra.mrb[0].mxu0 %v1445
        %v2447 = vpop.f32.mrb[0].mxu0
        %v2448 = vadd.f32 %v2078, %v2447
        %v2449 = vpop.f32.mrb[0].mxu0
        %2450 = vmatprep.mubr.f32.mxu0 0.0
        %2451 = vmatmul.mubr.f32.gmra.mrb[0].mxu0 %v1448
        %v2452 = vpop.f32.mrb[0].mxu0
        %v2453 = vadd.f32 %v2083, %v2452
        %v2454 = vpop.f32.mrb[0].mxu0
        %2455 = vmatprep.mubr.f32.mxu0 0.0
        %2456 = vmatmul.mubr.f32.gmra.mrb[0].mxu0 %v1451
        %v2457 = vpop.f32.mrb[0].mxu0
        %v2458 = vadd.f32 %v2088, %v2457
        %v2459 = vpop.f32.mrb[0].mxu0
        %2460 = vmatprep.mubr.f32.mxu0 0.0
        %2461 = vmatmul.mubr.f32.gmra.mrb[0].mxu0 %v1454
        %v2462 = vpop.f32.mrb[0].mxu0
        %v2463 = vadd.f32 %v2093, %v2462
        %v2464 = vpop.f32.mrb[0].mxu0
        %2465 = vmatprep.mubr.f32.mxu0 0.0
        %2466 = vmatmul.mubr.f32.gmra.mrb[0].mxu0 %v1457
        %v2467 = vpop.f32.mrb[0].mxu0
        %v2468 = vadd.f32 %v2098, %v2467
        %v2469 = vpop.f32.mrb[0].mxu0
        %2470 = vmatprep.mubr.f32.mxu0 0.0
        %2471 = vmatmul.mubr.f32.gmra.mrb[0].mxu0 %v1460
        %v2472 = vpop.f32.mrb[0].mxu0
        %v2473 = vadd.f32 %v2103, %v2472
        %v2474 = vpop.f32.mrb[0].mxu0
        %2475 = vmatprep.mubr.f32.mxu0 0.0
        %2476 = vmatmul.mubr.f32.gmra.mrb[0].mxu0 %v1463
        %v2477 = vpop.f32.mrb[0].mxu0
        %v2478 = vadd.f32 %v2108, %v2477
        %v2479 = vpop.f32.mrb[0].mxu0
        %2480 = vmatprep.mubr.f32.mxu0 0.0
        %2481 = vmatmul.mubr.f32.gmra.mrb[0].mxu0 %v1466
        %v2482 = vpop.f32.mrb[0].mxu0
        %v2483 = vadd.f32 %v2113, %v2482
        %v2484 = vpop.f32.mrb[0].mxu0
        %2485 = vmatprep.mubr.f32.mxu0 0.0
        %2486 = vmatmul.mubr.f32.gmra.mrb[0].mxu0 %v1469
        %v2487 = vpop.f32.mrb[0].mxu0
        %v2488 = vadd.f32 %v2118, %v2487
        %v2489 = vpop.f32.mrb[0].mxu0
        %2490 = vmatprep.mubr.f32.mxu0 0.0
        %2491 = vmatmul.mubr.f32.gmra.mrb[0].mxu0 %v1472
        %v2492 = vpop.f32.mrb[0].mxu0
        %v2493 = vadd.f32 %v2123, %v2492
        %v2494 = vpop.f32.mrb[0].mxu0
        %2495 = vmatprep.mubr.f32.mxu0 0.0
        %2496 = vmatmul.mubr.f32.gmra.mrb[0].mxu0 %v1475
        %v2497 = vpop.f32.mrb[0].mxu0
        %v2498 = vadd.f32 %v2128, %v2497
        %v2499 = vpop.f32.mrb[0].mxu0
        %2500 = vmatprep.mubr.f32.mxu0 0.0
        %2501 = vmatmul.mubr.f32.gmra.mrb[0].mxu0 %v1478
        %v2502 = vpop.f32.mrb[0].mxu0
        %v2503 = vadd.f32 %v2133, %v2502
        %v2504 = vpop.f32.mrb[0].mxu0
        %2505 = vmatprep.mubr.f32.mxu0 0.0
        %2506 = vmatmul.mubr.f32.gmra.mrb[0].mxu0 %v1481
        %v2507 = vpop.f32.mrb[0].mxu0
        %v2508 = vadd.f32 %v2138, %v2507
        %v2509 = vpop.f32.mrb[0].mxu0
        %2510 = vmatprep.mubr.f32.mxu0 0.0
        %2511 = vmatmul.mubr.f32.gmra.mrb[0].mxu0 %v1484
        %v2512 = vpop.f32.mrb[0].mxu0
        %v2513 = vadd.f32 %v2143, %v2512
        %v2514 = vpop.f32.mrb[0].mxu0
        %2515 = vmatprep.mubr.f32.mxu0 0.0
        %2516 = vmatmul.mubr.f32.gmra.mrb[0].mxu0 %v1487
        %v2517 = vpop.f32.mrb[0].mxu0
        %v2518 = vadd.f32 %v2148, %v2517
        %v2519 = vpop.f32.mrb[0].mxu0
        %2520 = vmatprep.mubr.f32.mxu0 0.0
        %2521 = vmatmul.mubr.f32.gmra.mrb[0].mxu0 %v1490
        %v2522 = vpop.f32.mrb[0].mxu0
        %v2523 = vadd.f32 %v2153, %v2522
        %v2524 = vpop.f32.mrb[0].mxu0
        %2525 = vmatprep.mubr.f32.mxu0 0.0
        %2526 = vmatmul.mubr.f32.gmra.mrb[0].mxu0 %v1493
        %v2527 = vpop.f32.mrb[0].mxu0
        %v2528 = vadd.f32 %v2158, %v2527
        %v2529 = vpop.f32.mrb[0].mxu0
        %2530 = vmatprep.mubr.f32.mxu0 0.0
        %2531 = vmatmul.mubr.f32.gmra.mrb[0].mxu0 %v1496
        %v2532 = vpop.f32.mrb[0].mxu0
        %v2533 = vadd.f32 %v2163, %v2532
        %v2534 = vpop.f32.mrb[0].mxu0
        %2535 = vmatprep.mubr.f32.mxu0 0.0
        %2536 = vmatmul.mubr.f32.gmra.mrb[0].mxu0 %v1499
        %v2537 = vpop.f32.mrb[0].mxu0
        %v2538 = vadd.f32 %v2168, %v2537
        %v2539 = vpop.f32.mrb[0].mxu0
        %2540 = vmatprep.mubr.f32.mxu0 0.0
        %2541 = vmatmul.mubr.f32.gmra.mrb[0].mxu0 %v1502
        %v2542 = vpop.f32.mrb[0].mxu0
        %v2543 = vadd.f32 %v2173, %v2542
        %v2544 = vpop.f32.mrb[0].mxu0
        %2545 = vmatprep.mubr.f32.mxu0 0.0
        %2546 = vmatmul.mubr.f32.gmra.mrb[0].mxu0 %v1505
        %v2547 = vpop.f32.mrb[0].mxu0
        %v2548 = vadd.f32 %v2178, %v2547
        %v2549 = vpop.f32.mrb[0].mxu0
        %2550 = vmatprep.mubr.f32.mxu0 0.0
        %2551 = vmatmul.mubr.f32.gmra.mrb[0].mxu0 %v1508
        %v2552 = vpop.f32.mrb[0].mxu0
        %v2553 = vadd.f32 %v2183, %v2552
        %v2554 = vpop.f32.mrb[0].mxu0
        %2555 = vmatprep.mubr.f32.mxu0 0.0
        %2556 = vmatmul.mubr.f32.gmra.mrb[0].mxu0 %v1511
        %v2557 = vpop.f32.mrb[0].mxu0
        %v2558 = vadd.f32 %v2188, %v2557
        %v2559 = vpop.f32.mrb[0].mxu0
        %2560 = vmatprep.mubr.f32.mxu0 0.0
        %2561 = vmatmul.mubr.f32.gmra.mrb[0].mxu0 %v1514
        %v2562 = vpop.f32.mrb[0].mxu0
        %v2563 = vadd.f32 %v2193, %v2562
        %v2564 = vpop.f32.mrb[0].mxu0
        %2565 = vmatprep.mubr.f32.mxu0 0.0
        %2566 = vmatmul.mubr.f32.gmra.mrb[0].mxu0 %v1517
        %v2567 = vpop.f32.mrb[0].mxu0
        %v2568 = vadd.f32 %v2198, %v2567
        %v2569 = vpop.f32.mrb[0].mxu0
        %2570 = vmatprep.mubr.f32.mxu0 0.0
        %2571 = vmatmul.mubr.f32.gmra.mrb[0].mxu0 %v1520
        %v2572 = vpop.f32.mrb[0].mxu0
        %v2573 = vadd.f32 %v2203, %v2572
        %v2574 = vpop.f32.mrb[0].mxu0
        %2575 = vmatprep.mubr.f32.mxu0 0.0
        %2576 = vmatmul.mubr.f32.gmra.mrb[0].mxu0 %v1523
        %v2577 = vpop.f32.mrb[0].mxu0
        %v2578 = vadd.f32 %v2208, %v2577
        %v2579 = vpop.f32.mrb[0].mxu0
        %2580 = vmatprep.mubr.f32.mxu0 0.0
        %2581 = vmatmul.mubr.f32.gmra.mrb[0].mxu0 %v1526
        %v2582 = vpop.f32.mrb[0].mxu0
        %v2583 = vadd.f32 %v2213, %v2582
        %v2584 = vpop.f32.mrb[0].mxu0
        %2585 = vmatprep.mubr.f32.mxu0 0.0
        %2586 = vmatmul.mubr.f32.gmra.mrb[0].mxu0 %v1529
        %v2587 = vpop.f32.mrb[0].mxu0
        %v2588 = vadd.f32 %v2218, %v2587
        %v2589 = vpop.f32.mrb[0].mxu0
        %2590 = vmatprep.mubr.f32.mxu0 0.0
        %2591 = vmatmul.mubr.f32.gmra.mrb[0].mxu0 %v1532
        %v2592 = vpop.f32.mrb[0].mxu0
        %v2593 = vadd.f32 %v2223, %v2592
        %v2594 = vpop.f32.mrb[0].mxu0
        %2595 = vmatprep.mubr.f32.mxu0 0.0
        %2596 = vmatmul.mubr.f32.gmra.mrb[0].mxu0 %v1535
        %v2597 = vpop.f32.mrb[0].mxu0
        %v2598 = vadd.f32 %v2228, %v2597
        %v2599 = vpop.f32.mrb[0].mxu0
        %2600 = vmatprep.mubr.f32.mxu0 0.0
        %2601 = vmatmul.mubr.f32.gmra.mrb[0].mxu0 %v1538
        %v2602 = vpop.f32.mrb[0].mxu0
        %v2603 = vadd.f32 %v2233, %v2602
        %v2604 = vpop.f32.mrb[0].mxu0
        %2605 = vmatprep.mubr.f32.mxu0 0.0
        %2606 = vmatmul.mubr.f32.gmra.mrb[0].mxu0 %v1541
        %v2607 = vpop.f32.mrb[0].mxu0
        %v2608 = vadd.f32 %v2238, %v2607
        %v2609 = vpop.f32.mrb[0].mxu0
        %2610 = vmatprep.mubr.f32.mxu0 0.0
        %2611 = vmatmul.mubr.f32.gmra.mrb[0].mxu0 %v1544
        %v2612 = vpop.f32.mrb[0].mxu0
        %v2613 = vadd.f32 %v2243, %v2612
        %v2614 = vpop.f32.mrb[0].mxu0
        %2615 = vmatprep.mubr.f32.mxu0 0.0
        %2616 = vmatmul.mubr.f32.gmra.mrb[0].mxu0 %v1547
        %v2617 = vpop.f32.mrb[0].mxu0
        %v2618 = vadd.f32 %v2248, %v2617
        %v2619 = vpop.f32.mrb[0].mxu0
        %2620 = vmatprep.mubr.f32.mxu0 0.0
        %2621 = vmatmul.mubr.f32.gmra.mrb[0].mxu0 %v1550
        %v2622 = vpop.f32.mrb[0].mxu0
        %v2623 = vadd.f32 %v2253, %v2622
        %v2624 = vpop.f32.mrb[0].mxu0
        %2625 = vmatprep.mubr.f32.mxu0 0.0
        %2626 = vmatmul.mubr.f32.gmra.mrb[0].mxu0 %v1553
        %v2627 = vpop.f32.mrb[0].mxu0
        %v2628 = vadd.f32 %v2258, %v2627
        %v2629 = vpop.f32.mrb[0].mxu0
        %2630 = vmatprep.mubr.f32.mxu0 0.0
        %2631 = vmatmul.mubr.f32.gmra.mrb[0].mxu0 %v1556
        %v2632 = vpop.f32.mrb[0].mxu0
        %v2633 = vadd.f32 %v2263, %v2632
        %v2634 = vpop.f32.mrb[0].mxu0
        %2635 = vmatprep.mubr.f32.mxu0 0.0
        %2636 = vmatmul.mubr.f32.gmra.mrb[0].mxu0 %v1559
        %v2637 = vpop.f32.mrb[0].mxu0
        %v2638 = vadd.f32 %v2268, %v2637
        %v2639 = vpop.f32.mrb[0].mxu0
        %2640 = vmatprep.mubr.f32.mxu0 0.0
        %2641 = vmatmul.mubr.f32.gmra.mrb[0].mxu0 %v1562
        %v2642 = vpop.f32.mrb[0].mxu0
        %v2643 = vadd.f32 %v2273, %v2642
        %v2644 = vpop.f32.mrb[0].mxu0
        %2645 = vmatprep.mubr.f32.mxu0 0.0
        %2646 = vmatmul.mubr.f32.gmra.mrb[0].mxu0 %v1565
        %v2647 = vpop.f32.mrb[0].mxu0
        %v2648 = vadd.f32 %v2278, %v2647
        %v2649 = vpop.f32.mrb[0].mxu0
        %2650 = vmatprep.mubr.f32.mxu0 0.0
        %2651 = vmatmul.mubr.f32.gmra.mrb[0].mxu0 %v1568
        %v2652 = vpop.f32.mrb[0].mxu0
        %v2653 = vadd.f32 %v2283, %v2652
        %v2654 = vpop.f32.mrb[0].mxu0
        %2655 = vmatprep.mubr.f32.mxu0 0.0
        %2656 = vmatmul.mubr.f32.gmra.mrb[0].mxu0 %v1571
        %v2657 = vpop.f32.mrb[0].mxu0
        %v2658 = vadd.f32 %v2288, %v2657
        %v2659 = vpop.f32.mrb[0].mxu0
        %2660 = vmatprep.mubr.f32.mxu0 0.0
        %2661 = vmatmul.mubr.f32.gmra.mrb[0].mxu0 %v1574
        %v2662 = vpop.f32.mrb[0].mxu0
        %v2663 = vadd.f32 %v2293, %v2662
        %v2664 = vpop.f32.mrb[0].mxu0
        %2665 = vmatprep.mubr.f32.mxu0 0.0
        %2666 = vmatmul.mubr.f32.gmra.mrb[0].mxu0 %v1577
        %v2667 = vpop.f32.mrb[0].mxu0
        %v2668 = vadd.f32 %v2298, %v2667
        %v2669 = vpop.f32.mrb[0].mxu0
        %2670 = vmatprep.mubr.f32.mxu0 0.0
        %2671 = vmatmul.mubr.f32.gmra.mrb[0].mxu0 %v1580
        %v2672 = vpop.f32.mrb[0].mxu0
        %v2673 = vadd.f32 %v2303, %v2672
        %v2674 = vpop.f32.mrb[0].mxu0
        %2675 = vmatprep.mubr.f32.mxu0 0.0
        %2676 = vmatmul.mubr.f32.gmra.mrb[0].mxu0 %v1583
        %v2677 = vpop.f32.mrb[0].mxu0
        %v2678 = vadd.f32 %v2308, %v2677
        %v2679 = vpop.f32.mrb[0].mxu0
        %2680 = vmatprep.mubr.f32.mxu0 0.0
        %2681 = vmatmul.mubr.f32.gmra.mrb[0].mxu0 %v1586
        %v2682 = vpop.f32.mrb[0].mxu0
        %v2683 = vadd.f32 %v2313, %v2682
        %v2684 = vpop.f32.mrb[0].mxu0
        %2685 = vmatprep.mubr.f32.mxu0 0.0
        %2686 = vmatmul.mubr.f32.gmra.mrb[0].mxu0 %v1589
        %v2687 = vpop.f32.mrb[0].mxu0
        %v2688 = vadd.f32 %v2318, %v2687
        %v2689 = vpop.f32.mrb[0].mxu0
        %2690 = vmatprep.mubr.f32.mxu0 0.0
        %2691 = vmatmul.mubr.f32.gmra.mrb[0].mxu0 %v1592
        %v2692 = vpop.f32.mrb[0].mxu0
        %v2693 = vadd.f32 %v2323, %v2692
        %v2694 = vpop.f32.mrb[0].mxu0
        %2695 = vmatprep.mubr.f32.mxu0 0.0
        %2696 = vmatmul.mubr.f32.gmra.mrb[0].mxu0 %v1595
        %v2697 = vpop.f32.mrb[0].mxu0
        %v2698 = vadd.f32 %v2328, %v2697
        %v2699 = vpop.f32.mrb[0].mxu0
        %2700 = vmatprep.mubr.f32.mxu0 0.0
        %2701 = vmatmul.mubr.f32.gmra.mrb[0].mxu0 %v1598
        %v2702 = vpop.f32.mrb[0].mxu0
        %v2703 = vadd.f32 %v2333, %v2702
        %v2704 = vpop.f32.mrb[0].mxu0
        %2705 = vmatprep.mubr.f32.mxu0 0.0
        %2706 = vmatmul.mubr.f32.gmra.mrb[0].mxu0 %v1601
        %v2707 = vpop.f32.mrb[0].mxu0
        %v2708 = vadd.f32 %v2338, %v2707
        %v2709 = vpop.f32.mrb[0].mxu0
        %2710 = vmatprep.mubr.f32.mxu0 0.0
        %2711 = vmatmul.mubr.f32.gmra.mrb[0].mxu0 %v1604
        %v2712 = vpop.f32.mrb[0].mxu0
        %v2713 = vadd.f32 %v2343, %v2712
        %v2714 = vpop.f32.mrb[0].mxu0
        %2715 = vmatprep.mubr.f32.mxu0 0.0
        %2716 = vmatmul.mubr.f32.gmra.mrb[0].mxu0 %v1607
        %v2717 = vpop.f32.mrb[0].mxu0
        %v2718 = vadd.f32 %v2348, %v2717
        %v2719 = vpop.f32.mrb[0].mxu0
        %2720 = vmatprep.mubr.f32.mxu0 0.0
        %2721 = vmatmul.mubr.f32.gmra.mrb[0].mxu0 %v1610
        %v2722 = vpop.f32.mrb[0].mxu0
        %v2723 = vadd.f32 %v2353, %v2722
        %v2724 = vpop.f32.mrb[0].mxu0
        %2725 = vdwg.mxu0
        %2726 = vst [vmem:[#allocation2] sm:$0xff] %v2423
        %2727 = vst [vmem:[#allocation2 + $0x8] sm:$0xff] %v2428
        %2728 = vst [vmem:[#allocation2 + $0x10] sm:$0xff] %v2433
        %2729 = vst [vmem:[#allocation2 + $0x18] sm:$0xff] %v2438
        %2730 = vst [vmem:[#allocation2 + $0x20] sm:$0xff] %v2443
        %2731 = vst [vmem:[#allocation2 + $0x28] sm:$0xff] %v2448
        %2732 = vst [vmem:[#allocation2 + $0x30] sm:$0xff] %v2453
        %2733 = vst [vmem:[#allocation2 + $0x38] sm:$0xff] %v2458
        %2734 = vst [vmem:[#allocation2 + $0x40] sm:$0xff] %v2463
        %2735 = vst [vmem:[#allocation2 + $0x48] sm:$0xff] %v2468
        %2736 = vst [vmem:[#allocation2 + $0x50] sm:$0xff] %v2473
        %2737 = vst [vmem:[#allocation2 + $0x58] sm:$0xff] %v2478
        %2738 = vst [vmem:[#allocation2 + $0x60] sm:$0xff] %v2483
        %2739 = vst [vmem:[#allocation2 + $0x68] sm:$0xff] %v2488
        %2740 = vst [vmem:[#allocation2 + $0x70] sm:$0xff] %v2493
        %2741 = vst [vmem:[#allocation2 + $0x78] sm:$0xff] %v2498
        %2742 = vst [vmem:[#allocation2 + $0x80] sm:$0xff] %v2503
        %2743 = vst [vmem:[#allocation2 + $0x88] sm:$0xff] %v2508
        %2744 = vst [vmem:[#allocation2 + $0x90] sm:$0xff] %v2513
        %2745 = vst [vmem:[#allocation2 + $0x98] sm:$0xff] %v2518
        %2746 = vst [vmem:[#allocation2 + $0xa0] sm:$0xff] %v2523
        %2747 = vst [vmem:[#allocation2 + $0xa8] sm:$0xff] %v2528
        %2748 = vst [vmem:[#allocation2 + $0xb0] sm:$0xff] %v2533
        %2749 = vst [vmem:[#allocation2 + $0xb8] sm:$0xff] %v2538
        %2750 = vst [vmem:[#allocation2 + $0xc0] sm:$0xff] %v2543
        %2751 = vst [vmem:[#allocation2 + $0xc8] sm:$0xff] %v2548
        %2752 = vst [vmem:[#allocation2 + $0xd0] sm:$0xff] %v2553
        %2753 = vst [vmem:[#allocation2 + $0xd8] sm:$0xff] %v2558
        %2754 = vst [vmem:[#allocation2 + $0xe0] sm:$0xff] %v2563
        %2755 = vst [vmem:[#allocation2 + $0xe8] sm:$0xff] %v2568
        %2756 = vst [vmem:[#allocation2 + $0xf0] sm:$0xff] %v2573
        %2757 = vst [vmem:[#allocation2 + $0xf8] sm:$0xff] %v2578
        %2758 = vst [vmem:[#allocation2 + $0x100] sm:$0xff] %v2583
        %2759 = vst [vmem:[#allocation2 + $0x108] sm:$0xff] %v2588
        %2760 = vst [vmem:[#allocation2 + $0x110] sm:$0xff] %v2593
        %2761 = vst [vmem:[#allocation2 + $0x118] sm:$0xff] %v2598
        %2762 = vst [vmem:[#allocation2 + $0x120] sm:$0xff] %v2603
        %2763 = vst [vmem:[#allocation2 + $0x128] sm:$0xff] %v2608
        %2764 = vst [vmem:[#allocation2 + $0x130] sm:$0xff] %v2613
        %2765 = vst [vmem:[#allocation2 + $0x138] sm:$0xff] %v2618
        %2766 = vst [vmem:[#allocation2 + $0x140] sm:$0xff] %v2623
        %2767 = vst [vmem:[#allocation2 + $0x148] sm:$0xff] %v2628
        %2768 = vst [vmem:[#allocation2 + $0x150] sm:$0xff] %v2633
        %2769 = vst [vmem:[#allocation2 + $0x158] sm:$0xff] %v2638
        %2770 = vst [vmem:[#allocation2 + $0x160] sm:$0xff] %v2643
        %2771 = vst [vmem:[#allocation2 + $0x168] sm:$0xff] %v2648
        %2772 = vst [vmem:[#allocation2 + $0x170] sm:$0xff] %v2653
        %2773 = vst [vmem:[#allocation2 + $0x178] sm:$0xff] %v2658
        %2774 = vst [vmem:[#allocation2 + $0x180] sm:$0xff] %v2663
        %2775 = vst [vmem:[#allocation2 + $0x188] sm:$0xff] %v2668
        %2776 = vst [vmem:[#allocation2 + $0x190] sm:$0xff] %v2673
        %2777 = vst [vmem:[#allocation2 + $0x198] sm:$0xff] %v2678
        %2778 = vst [vmem:[#allocation2 + $0x1a0] sm:$0xff] %v2683
        %2779 = vst [vmem:[#allocation2 + $0x1a8] sm:$0xff] %v2688
        %2780 = vst [vmem:[#allocation2 + $0x1b0] sm:$0xff] %v2693
        %2781 = vst [vmem:[#allocation2 + $0x1b8] sm:$0xff] %v2698
        %2782 = vst [vmem:[#allocation2 + $0x1c0] sm:$0xff] %v2703
        %2783 = vst [vmem:[#allocation2 + $0x1c8] sm:$0xff] %v2708
        %2784 = vst [vmem:[#allocation2 + $0x1d0] sm:$0xff] %v2713
        %2785 = vst [vmem:[#allocation2 + $0x1d8] sm:$0xff] %v2718
        %2786 = vst [vmem:[#allocation2 + $0x1e0] sm:$0xf] %v2723
        %v2787 = vld [vmem:[%s3] sm:$0xff]
        %v2788 = vld [vmem:[%s3 + $0x10] sm:$0xff]
        %v2789 = vld [vmem:[%s3 + $0x20] sm:$0xff]
        %v2790 = vld [vmem:[%s3 + $0x30] sm:$0xff]
        %v2791 = vld [vmem:[%s3 + $0x40] sm:$0xff]
        %v2792 = vld [vmem:[%s3 + $0x50] sm:$0xff]
        %v2793 = vld [vmem:[%s3 + $0x60] sm:$0xff]
        %v2794 = vld [vmem:[%s3 + $0x70] sm:$0xff]
        %v2795 = vld [vmem:[%s3 + $0x80] sm:$0xff]
        %v2796 = vld [vmem:[%s3 + $0x90] sm:$0xff]
        %v2797 = vld [vmem:[%s3 + $0xa0] sm:$0xff]
        %v2798 = vld [vmem:[%s3 + $0xb0] sm:$0xff]
        %v2799 = vld [vmem:[%s3 + $0xc0] sm:$0xff]
        %v2800 = vld [vmem:[%s3 + $0xd0] sm:$0xff]
        %v2801 = vld [vmem:[%s3 + $0xe0] sm:$0xff]
        %v2802 = vld [vmem:[%s3 + $0xf0] sm:$0xff]
        %v2803 = vld [vmem:[%s296] sm:$0x3f]
        %vm2804 = vcmask 48128
        %v2806 = vsel %vm2804, %v2787, 0
        %v2809 = vsel %vm2804, %v2788, 0
        %v2812 = vsel %vm2804, %v2789, 0
        %v2815 = vsel %vm2804, %v2790, 0
        %v2818 = vsel %vm2804, %v2791, 0
        %v2821 = vsel %vm2804, %v2792, 0
        %v2824 = vsel %vm2804, %v2793, 0
        %v2827 = vsel %vm2804, %v2794, 0
        %v2830 = vsel %vm2804, %v2795, 0
        %v2833 = vsel %vm2804, %v2796, 0
        %v2836 = vsel %vm2804, %v2797, 0
        %v2839 = vsel %vm2804, %v2798, 0
        %v2842 = vsel %vm2804, %v2799, 0
        %v2845 = vsel %vm2804, %v2800, 0
        %v2848 = vsel %vm2804, %v2801, 0
        %v2851 = vsel %vm2804, %v2802, 0
        %vm2853 = vcmask 1045504
        %v2855 = vsel %vm2853, %v2803, 0
        %2857 = vmatprep.subr.mxu0 0.0
        %2858 = vmatpush1.msra.mxu0 %v2855
        %2859 = vmatprep.subr.mxu0 0.0
        %2860 = vmatpush1.msra.mxu0 0.0
        %2861 = vmatprep.subr.mxu0 0.0
        %2862 = vmatpush1.msra.mxu0 0.0
        %2863 = vmatprep.subr.mxu0 0.0
        %2864 = vmatpush1.msra.mxu0 0.0
        %2865 = vmatprep.subr.mxu0 0.0
        %2866 = vmatpush1.msra.mxu0 0.0
        %2867 = vmatprep.subr.mxu0 0.0
        %2868 = vmatpush1.msra.mxu0 0.0
        %2869 = vmatprep.subr.mxu0 0.0
        %2870 = vmatpush1.msra.mxu0 0.0
        %2871 = vmatprep.subr.mxu0 0.0
        %2872 = vmatpush1.msra.mxu0 0.0
        %2873 = vmatprep.subr.mxu0 0.0
        %2874 = vmatpush1.msra.mxu0 0.0
        %2875 = vmatprep.subr.mxu0 0.0
        %2876 = vmatpush1.msra.mxu0 0.0
        %2877 = vmatprep.subr.mxu0 0.0
        %2878 = vmatpush1.msra.mxu0 0.0
        %2879 = vmatprep.subr.mxu0 0.0
        %2880 = vmatpush1.msra.mxu0 0.0
        %2881 = vmatprep.subr.mxu0 0.0
        %2882 = vmatpush1.msra.mxu0 0.0
        %2883 = vmatprep.subr.mxu0 0.0
        %2884 = vmatpush1.msra.mxu0 0.0
        %2885 = vmatprep.subr.mxu0 0.0
        %2886 = vmatpush1.msra.mxu0 0.0
        %2887 = vmatprep.subr.mxu0 0.0
        %2888 = vmatpush1.msra.mxu0 0.0
        %2889 = vmatprep.subr.mxu0 0.0
        %2890 = vmatpush1.msra.mxu0 0.0
        %2891 = vmatprep.subr.mxu0 0.0
        %2892 = vmatpush1.msra.mxu0 0.0
        %2893 = vmatprep.subr.mxu0 0.0
        %2894 = vmatpush1.msra.mxu0 0.0
        %2895 = vmatprep.subr.mxu0 0.0
        %2896 = vmatpush1.msra.mxu0 0.0
        %2897 = vmatprep.subr.mxu0 0.0
        %2898 = vmatpush1.msra.mxu0 0.0
        %2899 = vmatprep.subr.mxu0 0.0
        %2900 = vmatpush1.msra.mxu0 0.0
        %2901 = vmatprep.subr.mxu0 0.0
        %2902 = vmatpush1.msra.mxu0 0.0
        %2903 = vmatprep.subr.mxu0 0.0
        %2904 = vmatpush1.msra.mxu0 0.0
        %2905 = vmatprep.subr.mxu0 0.0
        %2906 = vmatpush1.msra.mxu0 0.0
        %2907 = vmatprep.subr.mxu0 0.0
        %2908 = vmatpush1.msra.mxu0 0.0
        %2909 = vmatprep.subr.mxu0 0.0
        %2910 = vmatpush1.msra.mxu0 0.0
        %2911 = vmatprep.subr.mxu0 0.0
        %2912 = vmatpush1.msra.mxu0 0.0
        %2913 = vmatprep.subr.mxu0 0.0
        %2914 = vmatpush1.msra.mxu0 0.0
        %2915 = vmatprep.subr.mxu0 0.0
        %2916 = vmatpush1.msra.mxu0 0.0
        %2917 = vmatprep.subr.mxu0 0.0
        %2918 = vmatpush1.msra.mxu0 0.0
        %2919 = vmatprep.subr.mxu0 0.0
        %2920 = vmatpush1.msra.mxu0 0.0
        %2921 = vmatprep.mubr.f32.mxu0 0.0
        %2922 = vmatmul.mubr.f32.gmra.mrb[0].mxu0 %v2806
        %v2923 = vpop.f32.mrb[0].mxu0
        %v2924 = vadd.f32 0.0, %v2923
        %v2925 = vpop.f32.mrb[0].mxu0
        %2926 = vmatprep.mubr.f32.mxu0 0.0
        %2927 = vmatmul.mubr.f32.gmra.mrb[0].mxu0 %v2809
        %v2928 = vpop.f32.mrb[0].mxu0
        %v2929 = vadd.f32 0.0, %v2928
        %v2930 = vpop.f32.mrb[0].mxu0
        %2931 = vmatprep.mubr.f32.mxu0 0.0
        %2932 = vmatmul.mubr.f32.gmra.mrb[0].mxu0 %v2812
        %v2933 = vpop.f32.mrb[0].mxu0
        %v2934 = vadd.f32 0.0, %v2933
        %v2935 = vpop.f32.mrb[0].mxu0
        %2936 = vmatprep.mubr.f32.mxu0 0.0
        %2937 = vmatmul.mubr.f32.gmra.mrb[0].mxu0 %v2815
        %v2938 = vpop.f32.mrb[0].mxu0
        %v2939 = vadd.f32 0.0, %v2938
        %v2940 = vpop.f32.mrb[0].mxu0
        %2941 = vmatprep.mubr.f32.mxu0 0.0
        %2942 = vmatmul.mubr.f32.gmra.mrb[0].mxu0 %v2818
        %v2943 = vpop.f32.mrb[0].mxu0
        %v2944 = vadd.f32 0.0, %v2943
        %v2945 = vpop.f32.mrb[0].mxu0
        %2946 = vmatprep.mubr.f32.mxu0 0.0
        %2947 = vmatmul.mubr.f32.gmra.mrb[0].mxu0 %v2821
        %v2948 = vpop.f32.mrb[0].mxu0
        %v2949 = vadd.f32 0.0, %v2948
        %v2950 = vpop.f32.mrb[0].mxu0
        %2951 = vmatprep.mubr.f32.mxu0 0.0
        %2952 = vmatmul.mubr.f32.gmra.mrb[0].mxu0 %v2824
        %v2953 = vpop.f32.mrb[0].mxu0
        %v2954 = vadd.f32 0.0, %v2953
        %v2955 = vpop.f32.mrb[0].mxu0
        %2956 = vmatprep.mubr.f32.mxu0 0.0
        %2957 = vmatmul.mubr.f32.gmra.mrb[0].mxu0 %v2827
        %v2958 = vpop.f32.mrb[0].mxu0
        %v2959 = vadd.f32 0.0, %v2958
        %v2960 = vpop.f32.mrb[0].mxu0
        %2961 = vmatprep.mubr.f32.mxu0 0.0
        %2962 = vmatmul.mubr.f32.gmra.mrb[0].mxu0 %v2830
        %v2963 = vpop.f32.mrb[0].mxu0
        %v2964 = vadd.f32 0.0, %v2963
        %v2965 = vpop.f32.mrb[0].mxu0
        %2966 = vmatprep.mubr.f32.mxu0 0.0
        %2967 = vmatmul.mubr.f32.gmra.mrb[0].mxu0 %v2833
        %v2968 = vpop.f32.mrb[0].mxu0
        %v2969 = vadd.f32 0.0, %v2968
        %v2970 = vpop.f32.mrb[0].mxu0
        %2971 = vmatprep.mubr.f32.mxu0 0.0
        %2972 = vmatmul.mubr.f32.gmra.mrb[0].mxu0 %v2836
        %v2973 = vpop.f32.mrb[0].mxu0
        %v2974 = vadd.f32 0.0, %v2973
        %v2975 = vpop.f32.mrb[0].mxu0
        %2976 = vmatprep.mubr.f32.mxu0 0.0
        %2977 = vmatmul.mubr.f32.gmra.mrb[0].mxu0 %v2839
        %v2978 = vpop.f32.mrb[0].mxu0
        %v2979 = vadd.f32 0.0, %v2978
        %v2980 = vpop.f32.mrb[0].mxu0
        %2981 = vmatprep.mubr.f32.mxu0 0.0
        %2982 = vmatmul.mubr.f32.gmra.mrb[0].mxu0 %v2842
        %v2983 = vpop.f32.mrb[0].mxu0
        %v2984 = vadd.f32 0.0, %v2983
        %v2985 = vpop.f32.mrb[0].mxu0
        %2986 = vmatprep.mubr.f32.mxu0 0.0
        %2987 = vmatmul.mubr.f32.gmra.mrb[0].mxu0 %v2845
        %v2988 = vpop.f32.mrb[0].mxu0
        %v2989 = vadd.f32 0.0, %v2988
        %v2990 = vpop.f32.mrb[0].mxu0
        %2991 = vmatprep.mubr.f32.mxu0 0.0
        %2992 = vmatmul.mubr.f32.gmra.mrb[0].mxu0 %v2848
        %v2993 = vpop.f32.mrb[0].mxu0
        %v2994 = vadd.f32 0.0, %v2993
        %v2995 = vpop.f32.mrb[0].mxu0
        %2996 = vmatprep.mubr.f32.mxu0 0.0
        %2997 = vmatmul.mubr.f32.gmra.mrb[0].mxu0 %v2851
        %v2998 = vpop.f32.mrb[0].mxu0
        %v2999 = vadd.f32 0.0, %v2998
        %v3000 = vpop.f32.mrb[0].mxu0
        %3001 = vdwg.mxu0
        %3002 = vst [vmem:[#allocation3] sm:$0xff] %v2924
        %3003 = vst [vmem:[#allocation3 + $0x8] sm:$0xff] %v2929
        %3004 = vst [vmem:[#allocation3 + $0x10] sm:$0xff] %v2934
        %3005 = vst [vmem:[#allocation3 + $0x18] sm:$0xff] %v2939
        %3006 = vst [vmem:[#allocation3 + $0x20] sm:$0xff] %v2944
        %3007 = vst [vmem:[#allocation3 + $0x28] sm:$0xff] %v2949
        %3008 = vst [vmem:[#allocation3 + $0x30] sm:$0xff] %v2954
        %3009 = vst [vmem:[#allocation3 + $0x38] sm:$0xff] %v2959
        %3010 = vst [vmem:[#allocation3 + $0x40] sm:$0xff] %v2964
        %3011 = vst [vmem:[#allocation3 + $0x48] sm:$0xff] %v2969
        %3012 = vst [vmem:[#allocation3 + $0x50] sm:$0xff] %v2974
        %3013 = vst [vmem:[#allocation3 + $0x58] sm:$0xff] %v2979
        %3014 = vst [vmem:[#allocation3 + $0x60] sm:$0xff] %v2984
        %3015 = vst [vmem:[#allocation3 + $0x68] sm:$0xff] %v2989
        %3016 = vst [vmem:[#allocation3 + $0x70] sm:$0xff] %v2994
        %3017 = vst [vmem:[#allocation3 + $0x78] sm:$0xff] %v2999
        %v3018 = vld [vmem:[%s3] sm:$0xff]
        %v3019 = vld [vmem:[%s3 + $0x10] sm:$0xff]
        %v3020 = vld [vmem:[%s3 + $0x20] sm:$0xff]
        %v3021 = vld [vmem:[%s3 + $0x30] sm:$0xff]
        %v3022 = vld [vmem:[%s3 + $0x40] sm:$0xff]
        %v3023 = vld [vmem:[%s3 + $0x50] sm:$0xff]
        %v3024 = vld [vmem:[%s3 + $0x60] sm:$0xff]
        %v3025 = vld [vmem:[%s3 + $0x70] sm:$0xff]
        %v3026 = vld [vmem:[%s3 + $0x80] sm:$0xff]
        %v3027 = vld [vmem:[%s3 + $0x90] sm:$0xff]
        %v3028 = vld [vmem:[%s3 + $0xa0] sm:$0xff]
        %v3029 = vld [vmem:[%s3 + $0xb0] sm:$0xff]
        %v3030 = vld [vmem:[%s3 + $0xc0] sm:$0xff]
        %v3031 = vld [vmem:[%s3 + $0xd0] sm:$0xff]
        %v3032 = vld [vmem:[%s3 + $0xe0] sm:$0xff]
        %v3033 = vld [vmem:[%s3 + $0xf0] sm:$0xff]
        %v3034 = vld [vmem:[%s296 + $0x6] sm:$0x3f]
        %3051 = vrot.lane.b32.xlu0 %v3018, 122
        %v3052 = vpop.permute.xlu0 %3051
        %3053 = vrot.lane.b32.xlu0 %v3019, 122
        %v3054 = vpop.permute.xlu0 %3053
        %3055 = vrot.lane.b32.xlu0 %v3020, 122
        %v3056 = vpop.permute.xlu0 %3055
        %3057 = vrot.lane.b32.xlu0 %v3021, 122
        %v3058 = vpop.permute.xlu0 %3057
        %3059 = vrot.lane.b32.xlu0 %v3022, 122
        %v3060 = vpop.permute.xlu0 %3059
        %3061 = vrot.lane.b32.xlu0 %v3023, 122
        %v3062 = vpop.permute.xlu0 %3061
        %3063 = vrot.lane.b32.xlu0 %v3024, 122
        %v3064 = vpop.permute.xlu0 %3063
        %3065 = vrot.lane.b32.xlu0 %v3025, 122
        %v3066 = vpop.permute.xlu0 %3065
        %3067 = vrot.lane.b32.xlu0 %v3026, 122
        %v3068 = vpop.permute.xlu0 %3067
        %3069 = vrot.lane.b32.xlu0 %v3027, 122
        %v3070 = vpop.permute.xlu0 %3069
        %3071 = vrot.lane.b32.xlu0 %v3028, 122
        %v3072 = vpop.permute.xlu0 %3071
        %3073 = vrot.lane.b32.xlu0 %v3029, 122
        %v3074 = vpop.permute.xlu0 %3073
        %3075 = vrot.lane.b32.xlu0 %v3030, 122
        %v3076 = vpop.permute.xlu0 %3075
        %3077 = vrot.lane.b32.xlu0 %v3031, 122
        %v3078 = vpop.permute.xlu0 %3077
        %3079 = vrot.lane.b32.xlu0 %v3032, 122
        %v3080 = vpop.permute.xlu0 %3079
        %3081 = vrot.lane.b32.xlu0 %v3033, 122
        %v3082 = vpop.permute.xlu0 %3081
        %v3083 = vsel %vm2804, %v3052, 0
        %v3085 = vsel %vm2804, %v3054, 0
        %v3087 = vsel %vm2804, %v3056, 0
        %v3089 = vsel %vm2804, %v3058, 0
        %v3091 = vsel %vm2804, %v3060, 0
        %v3093 = vsel %vm2804, %v3062, 0
        %v3095 = vsel %vm2804, %v3064, 0
        %v3097 = vsel %vm2804, %v3066, 0
        %v3099 = vsel %vm2804, %v3068, 0
        %v3101 = vsel %vm2804, %v3070, 0
        %v3103 = vsel %vm2804, %v3072, 0
        %v3105 = vsel %vm2804, %v3074, 0
        %v3107 = vsel %vm2804, %v3076, 0
        %v3109 = vsel %vm2804, %v3078, 0
        %v3111 = vsel %vm2804, %v3080, 0
        %v3113 = vsel %vm2804, %v3082, 0
        %v3116 = vsel %vm2853, %v3034, 0
        %3118 = vmatprep.subr.mxu0 0.0
        %3119 = vmatpush1.msra.mxu0 %v3116
        %3120 = vmatprep.subr.mxu0 0.0
        %3121 = vmatpush1.msra.mxu0 0.0
        %3122 = vmatprep.subr.mxu0 0.0
        %3123 = vmatpush1.msra.mxu0 0.0
        %3124 = vmatprep.subr.mxu0 0.0
        %3125 = vmatpush1.msra.mxu0 0.0
        %3126 = vmatprep.subr.mxu0 0.0
        %3127 = vmatpush1.msra.mxu0 0.0
        %3128 = vmatprep.subr.mxu0 0.0
        %3129 = vmatpush1.msra.mxu0 0.0
        %3130 = vmatprep.subr.mxu0 0.0
        %3131 = vmatpush1.msra.mxu0 0.0
        %3132 = vmatprep.subr.mxu0 0.0
        %3133 = vmatpush1.msra.mxu0 0.0
        %3134 = vmatprep.subr.mxu0 0.0
        %3135 = vmatpush1.msra.mxu0 0.0
        %3136 = vmatprep.subr.mxu0 0.0
        %3137 = vmatpush1.msra.mxu0 0.0
        %3138 = vmatprep.subr.mxu0 0.0
        %3139 = vmatpush1.msra.mxu0 0.0
        %3140 = vmatprep.subr.mxu0 0.0
        %3141 = vmatpush1.msra.mxu0 0.0
        %3142 = vmatprep.subr.mxu0 0.0
        %3143 = vmatpush1.msra.mxu0 0.0
        %3144 = vmatprep.subr.mxu0 0.0
        %3145 = vmatpush1.msra.mxu0 0.0
        %3146 = vmatprep.subr.mxu0 0.0
        %3147 = vmatpush1.msra.mxu0 0.0
        %3148 = vmatprep.subr.mxu0 0.0
        %3149 = vmatpush1.msra.mxu0 0.0
        %3150 = vmatprep.subr.mxu0 0.0
        %3151 = vmatpush1.msra.mxu0 0.0
        %3152 = vmatprep.subr.mxu0 0.0
        %3153 = vmatpush1.msra.mxu0 0.0
        %3154 = vmatprep.subr.mxu0 0.0
        %3155 = vmatpush1.msra.mxu0 0.0
        %3156 = vmatprep.subr.mxu0 0.0
        %3157 = vmatpush1.msra.mxu0 0.0
        %3158 = vmatprep.subr.mxu0 0.0
        %3159 = vmatpush1.msra.mxu0 0.0
        %3160 = vmatprep.subr.mxu0 0.0
        %3161 = vmatpush1.msra.mxu0 0.0
        %3162 = vmatprep.subr.mxu0 0.0
        %3163 = vmatpush1.msra.mxu0 0.0
        %3164 = vmatprep.subr.mxu0 0.0
        %3165 = vmatpush1.msra.mxu0 0.0
        %3166 = vmatprep.subr.mxu0 0.0
        %3167 = vmatpush1.msra.mxu0 0.0
        %3168 = vmatprep.subr.mxu0 0.0
        %3169 = vmatpush1.msra.mxu0 0.0
        %3170 = vmatprep.subr.mxu0 0.0
        %3171 = vmatpush1.msra.mxu0 0.0
        %3172 = vmatprep.subr.mxu0 0.0
        %3173 = vmatpush1.msra.mxu0 0.0
        %3174 = vmatprep.subr.mxu0 0.0
        %3175 = vmatpush1.msra.mxu0 0.0
        %3176 = vmatprep.subr.mxu0 0.0
        %3177 = vmatpush1.msra.mxu0 0.0
        %3178 = vmatprep.subr.mxu0 0.0
        %3179 = vmatpush1.msra.mxu0 0.0
        %3180 = vmatprep.subr.mxu0 0.0
        %3181 = vmatpush1.msra.mxu0 0.0
        %3182 = vmatprep.mubr.f32.mxu0 0.0
        %3183 = vmatmul.mubr.f32.gmra.mrb[0].mxu0 %v3083
        %v3184 = vpop.f32.mrb[0].mxu0
        %v3185 = vadd.f32 0.0, %v3184
        %v3186 = vpop.f32.mrb[0].mxu0
        %3187 = vmatprep.mubr.f32.mxu0 0.0
        %3188 = vmatmul.mubr.f32.gmra.mrb[0].mxu0 %v3085
        %v3189 = vpop.f32.mrb[0].mxu0
        %v3190 = vadd.f32 0.0, %v3189
        %v3191 = vpop.f32.mrb[0].mxu0
        %3192 = vmatprep.mubr.f32.mxu0 0.0
        %3193 = vmatmul.mubr.f32.gmra.mrb[0].mxu0 %v3087
        %v3194 = vpop.f32.mrb[0].mxu0
        %v3195 = vadd.f32 0.0, %v3194
        %v3196 = vpop.f32.mrb[0].mxu0
        %3197 = vmatprep.mubr.f32.mxu0 0.0
        %3198 = vmatmul.mubr.f32.gmra.mrb[0].mxu0 %v3089
        %v3199 = vpop.f32.mrb[0].mxu0
        %v3200 = vadd.f32 0.0, %v3199
        %v3201 = vpop.f32.mrb[0].mxu0
        %3202 = vmatprep.mubr.f32.mxu0 0.0
        %3203 = vmatmul.mubr.f32.gmra.mrb[0].mxu0 %v3091
        %v3204 = vpop.f32.mrb[0].mxu0
        %v3205 = vadd.f32 0.0, %v3204
        %v3206 = vpop.f32.mrb[0].mxu0
        %3207 = vmatprep.mubr.f32.mxu0 0.0
        %3208 = vmatmul.mubr.f32.gmra.mrb[0].mxu0 %v3093
        %v3209 = vpop.f32.mrb[0].mxu0
        %v3210 = vadd.f32 0.0, %v3209
        %v3211 = vpop.f32.mrb[0].mxu0
        %3212 = vmatprep.mubr.f32.mxu0 0.0
        %3213 = vmatmul.mubr.f32.gmra.mrb[0].mxu0 %v3095
        %v3214 = vpop.f32.mrb[0].mxu0
        %v3215 = vadd.f32 0.0, %v3214
        %v3216 = vpop.f32.mrb[0].mxu0
        %3217 = vmatprep.mubr.f32.mxu0 0.0
        %3218 = vmatmul.mubr.f32.gmra.mrb[0].mxu0 %v3097
        %v3219 = vpop.f32.mrb[0].mxu0
        %v3220 = vadd.f32 0.0, %v3219
        %v3221 = vpop.f32.mrb[0].mxu0
        %3222 = vmatprep.mubr.f32.mxu0 0.0
        %3223 = vmatmul.mubr.f32.gmra.mrb[0].mxu0 %v3099
        %v3224 = vpop.f32.mrb[0].mxu0
        %v3225 = vadd.f32 0.0, %v3224
        %v3226 = vpop.f32.mrb[0].mxu0
        %3227 = vmatprep.mubr.f32.mxu0 0.0
        %3228 = vmatmul.mubr.f32.gmra.mrb[0].mxu0 %v3101
        %v3229 = vpop.f32.mrb[0].mxu0
        %v3230 = vadd.f32 0.0, %v3229
        %v3231 = vpop.f32.mrb[0].mxu0
        %3232 = vmatprep.mubr.f32.mxu0 0.0
        %3233 = vmatmul.mubr.f32.gmra.mrb[0].mxu0 %v3103
        %v3234 = vpop.f32.mrb[0].mxu0
        %v3235 = vadd.f32 0.0, %v3234
        %v3236 = vpop.f32.mrb[0].mxu0
        %3237 = vmatprep.mubr.f32.mxu0 0.0
        %3238 = vmatmul.mubr.f32.gmra.mrb[0].mxu0 %v3105
        %v3239 = vpop.f32.mrb[0].mxu0
        %v3240 = vadd.f32 0.0, %v3239
        %v3241 = vpop.f32.mrb[0].mxu0
        %3242 = vmatprep.mubr.f32.mxu0 0.0
        %3243 = vmatmul.mubr.f32.gmra.mrb[0].mxu0 %v3107
        %v3244 = vpop.f32.mrb[0].mxu0
        %v3245 = vadd.f32 0.0, %v3244
        %v3246 = vpop.f32.mrb[0].mxu0
        %3247 = vmatprep.mubr.f32.mxu0 0.0
        %3248 = vmatmul.mubr.f32.gmra.mrb[0].mxu0 %v3109
        %v3249 = vpop.f32.mrb[0].mxu0
        %v3250 = vadd.f32 0.0, %v3249
        %v3251 = vpop.f32.mrb[0].mxu0
        %3252 = vmatprep.mubr.f32.mxu0 0.0
        %3253 = vmatmul.mubr.f32.gmra.mrb[0].mxu0 %v3111
        %v3254 = vpop.f32.mrb[0].mxu0
        %v3255 = vadd.f32 0.0, %v3254
        %v3256 = vpop.f32.mrb[0].mxu0
        %3257 = vmatprep.mubr.f32.mxu0 0.0
        %3258 = vmatmul.mubr.f32.gmra.mrb[0].mxu0 %v3113
        %v3259 = vpop.f32.mrb[0].mxu0
        %v3260 = vadd.f32 0.0, %v3259
        %v3261 = vpop.f32.mrb[0].mxu0
        %3262 = vdwg.mxu0
        %3263 = vst [vmem:[#allocation3 + $0x80] sm:$0xff] %v3185
        %3264 = vst [vmem:[#allocation3 + $0x88] sm:$0xff] %v3190
        %3265 = vst [vmem:[#allocation3 + $0x90] sm:$0xff] %v3195
        %3266 = vst [vmem:[#allocation3 + $0x98] sm:$0xff] %v3200
        %3267 = vst [vmem:[#allocation3 + $0xa0] sm:$0xff] %v3205
        %3268 = vst [vmem:[#allocation3 + $0xa8] sm:$0xff] %v3210
        %3269 = vst [vmem:[#allocation3 + $0xb0] sm:$0xff] %v3215
        %3270 = vst [vmem:[#allocation3 + $0xb8] sm:$0xff] %v3220
        %3271 = vst [vmem:[#allocation3 + $0xc0] sm:$0xff] %v3225
        %3272 = vst [vmem:[#allocation3 + $0xc8] sm:$0xff] %v3230
        %3273 = vst [vmem:[#allocation3 + $0xd0] sm:$0xff] %v3235
        %3274 = vst [vmem:[#allocation3 + $0xd8] sm:$0xff] %v3240
        %3275 = vst [vmem:[#allocation3 + $0xe0] sm:$0xff] %v3245
        %3276 = vst [vmem:[#allocation3 + $0xe8] sm:$0xff] %v3250
        %3277 = vst [vmem:[#allocation3 + $0xf0] sm:$0xff] %v3255
        %3278 = vst [vmem:[#allocation3 + $0xf8] sm:$0xff] %v3260
        %v3279 = vld [vmem:[%s3] sm:$0xff]
        %v3280 = vld [vmem:[%s3 + $0x10] sm:$0xff]
        %v3281 = vld [vmem:[%s3 + $0x20] sm:$0xff]
        %v3282 = vld [vmem:[%s3 + $0x30] sm:$0xff]
        %v3283 = vld [vmem:[%s3 + $0x40] sm:$0xff]
        %v3284 = vld [vmem:[%s3 + $0x50] sm:$0xff]
        %v3285 = vld [vmem:[%s3 + $0x60] sm:$0xff]
        %v3286 = vld [vmem:[%s3 + $0x70] sm:$0xff]
        %v3287 = vld [vmem:[%s3 + $0x80] sm:$0xff]
        %v3288 = vld [vmem:[%s3 + $0x90] sm:$0xff]
        %v3289 = vld [vmem:[%s3 + $0xa0] sm:$0xff]
        %v3290 = vld [vmem:[%s3 + $0xb0] sm:$0xff]
        %v3291 = vld [vmem:[%s3 + $0xc0] sm:$0xff]
        %v3292 = vld [vmem:[%s3 + $0xd0] sm:$0xff]
        %v3293 = vld [vmem:[%s3 + $0xe0] sm:$0xff]
        %v3294 = vld [vmem:[%s3 + $0xf0] sm:$0xff]
        %v3295 = vld [vmem:[%s296 + $0xc] sm:$0x3f]
        %3312 = vrot.lane.b32.xlu0 %v3279, 116
        %v3313 = vpop.permute.xlu0 %3312
        %3314 = vrot.lane.b32.xlu0 %v3280, 116
        %v3315 = vpop.permute.xlu0 %3314
        %3316 = vrot.lane.b32.xlu0 %v3281, 116
        %v3317 = vpop.permute.xlu0 %3316
        %3318 = vrot.lane.b32.xlu0 %v3282, 116
        %v3319 = vpop.permute.xlu0 %3318
        %3320 = vrot.lane.b32.xlu0 %v3283, 116
        %v3321 = vpop.permute.xlu0 %3320
        %3322 = vrot.lane.b32.xlu0 %v3284, 116
        %v3323 = vpop.permute.xlu0 %3322
        %3324 = vrot.lane.b32.xlu0 %v3285, 116
        %v3325 = vpop.permute.xlu0 %3324
        %3326 = vrot.lane.b32.xlu0 %v3286, 116
        %v3327 = vpop.permute.xlu0 %3326
        %3328 = vrot.lane.b32.xlu0 %v3287, 116
        %v3329 = vpop.permute.xlu0 %3328
        %3330 = vrot.lane.b32.xlu0 %v3288, 116
        %v3331 = vpop.permute.xlu0 %3330
        %3332 = vrot.lane.b32.xlu0 %v3289, 116
        %v3333 = vpop.permute.xlu0 %3332
        %3334 = vrot.lane.b32.xlu0 %v3290, 116
        %v3335 = vpop.permute.xlu0 %3334
        %3336 = vrot.lane.b32.xlu0 %v3291, 116
        %v3337 = vpop.permute.xlu0 %3336
        %3338 = vrot.lane.b32.xlu0 %v3292, 116
        %v3339 = vpop.permute.xlu0 %3338
        %3340 = vrot.lane.b32.xlu0 %v3293, 116
        %v3341 = vpop.permute.xlu0 %3340
        %3342 = vrot.lane.b32.xlu0 %v3294, 116
        %v3343 = vpop.permute.xlu0 %3342
        %v3344 = vsel %vm2804, %v3313, 0
        %v3346 = vsel %vm2804, %v3315, 0
        %v3348 = vsel %vm2804, %v3317, 0
        %v3350 = vsel %vm2804, %v3319, 0
        %v3352 = vsel %vm2804, %v3321, 0
        %v3354 = vsel %vm2804, %v3323, 0
        %v3356 = vsel %vm2804, %v3325, 0
        %v3358 = vsel %vm2804, %v3327, 0
        %v3360 = vsel %vm2804, %v3329, 0
        %v3362 = vsel %vm2804, %v3331, 0
        %v3364 = vsel %vm2804, %v3333, 0
        %v3366 = vsel %vm2804, %v3335, 0
        %v3368 = vsel %vm2804, %v3337, 0
        %v3370 = vsel %vm2804, %v3339, 0
        %v3372 = vsel %vm2804, %v3341, 0
        %v3374 = vsel %vm2804, %v3343, 0
        %v3377 = vsel %vm2853, %v3295, 0
        %3379 = vmatprep.subr.mxu0 0.0
        %3380 = vmatpush1.msra.mxu0 %v3377
        %3381 = vmatprep.subr.mxu0 0.0
        %3382 = vmatpush1.msra.mxu0 0.0
        %3383 = vmatprep.subr.mxu0 0.0
        %3384 = vmatpush1.msra.mxu0 0.0
        %3385 = vmatprep.subr.mxu0 0.0
        %3386 = vmatpush1.msra.mxu0 0.0
        %3387 = vmatprep.subr.mxu0 0.0
        %3388 = vmatpush1.msra.mxu0 0.0
        %3389 = vmatprep.subr.mxu0 0.0
        %3390 = vmatpush1.msra.mxu0 0.0
        %3391 = vmatprep.subr.mxu0 0.0
        %3392 = vmatpush1.msra.mxu0 0.0
        %3393 = vmatprep.subr.mxu0 0.0
        %3394 = vmatpush1.msra.mxu0 0.0
        %3395 = vmatprep.subr.mxu0 0.0
        %3396 = vmatpush1.msra.mxu0 0.0
        %3397 = vmatprep.subr.mxu0 0.0
        %3398 = vmatpush1.msra.mxu0 0.0
        %3399 = vmatprep.subr.mxu0 0.0
        %3400 = vmatpush1.msra.mxu0 0.0
        %3401 = vmatprep.subr.mxu0 0.0
        %3402 = vmatpush1.msra.mxu0 0.0
        %3403 = vmatprep.subr.mxu0 0.0
        %3404 = vmatpush1.msra.mxu0 0.0
        %3405 = vmatprep.subr.mxu0 0.0
        %3406 = vmatpush1.msra.mxu0 0.0
        %3407 = vmatprep.subr.mxu0 0.0
        %3408 = vmatpush1.msra.mxu0 0.0
        %3409 = vmatprep.subr.mxu0 0.0
        %3410 = vmatpush1.msra.mxu0 0.0
        %3411 = vmatprep.subr.mxu0 0.0
        %3412 = vmatpush1.msra.mxu0 0.0
        %3413 = vmatprep.subr.mxu0 0.0
        %3414 = vmatpush1.msra.mxu0 0.0
        %3415 = vmatprep.subr.mxu0 0.0
        %3416 = vmatpush1.msra.mxu0 0.0
        %3417 = vmatprep.subr.mxu0 0.0
        %3418 = vmatpush1.msra.mxu0 0.0
        %3419 = vmatprep.subr.mxu0 0.0
        %3420 = vmatpush1.msra.mxu0 0.0
        %3421 = vmatprep.subr.mxu0 0.0
        %3422 = vmatpush1.msra.mxu0 0.0
        %3423 = vmatprep.subr.mxu0 0.0
        %3424 = vmatpush1.msra.mxu0 0.0
        %3425 = vmatprep.subr.mxu0 0.0
        %3426 = vmatpush1.msra.mxu0 0.0
        %3427 = vmatprep.subr.mxu0 0.0
        %3428 = vmatpush1.msra.mxu0 0.0
        %3429 = vmatprep.subr.mxu0 0.0
        %3430 = vmatpush1.msra.mxu0 0.0
        %3431 = vmatprep.subr.mxu0 0.0
        %3432 = vmatpush1.msra.mxu0 0.0
        %3433 = vmatprep.subr.mxu0 0.0
        %3434 = vmatpush1.msra.mxu0 0.0
        %3435 = vmatprep.subr.mxu0 0.0
        %3436 = vmatpush1.msra.mxu0 0.0
        %3437 = vmatprep.subr.mxu0 0.0
        %3438 = vmatpush1.msra.mxu0 0.0
        %3439 = vmatprep.subr.mxu0 0.0
        %3440 = vmatpush1.msra.mxu0 0.0
        %3441 = vmatprep.subr.mxu0 0.0
        %3442 = vmatpush1.msra.mxu0 0.0
        %3443 = vmatprep.mubr.f32.mxu0 0.0
        %3444 = vmatmul.mubr.f32.gmra.mrb[0].mxu0 %v3344
        %v3445 = vpop.f32.mrb[0].mxu0
        %v3446 = vadd.f32 0.0, %v3445
        %v3447 = vpop.f32.mrb[0].mxu0
        %3448 = vmatprep.mubr.f32.mxu0 0.0
        %3449 = vmatmul.mubr.f32.gmra.mrb[0].mxu0 %v3346
        %v3450 = vpop.f32.mrb[0].mxu0
        %v3451 = vadd.f32 0.0, %v3450
        %v3452 = vpop.f32.mrb[0].mxu0
        %3453 = vmatprep.mubr.f32.mxu0 0.0
        %3454 = vmatmul.mubr.f32.gmra.mrb[0].mxu0 %v3348
        %v3455 = vpop.f32.mrb[0].mxu0
        %v3456 = vadd.f32 0.0, %v3455
        %v3457 = vpop.f32.mrb[0].mxu0
        %3458 = vmatprep.mubr.f32.mxu0 0.0
        %3459 = vmatmul.mubr.f32.gmra.mrb[0].mxu0 %v3350
        %v3460 = vpop.f32.mrb[0].mxu0
        %v3461 = vadd.f32 0.0, %v3460
        %v3462 = vpop.f32.mrb[0].mxu0
        %3463 = vmatprep.mubr.f32.mxu0 0.0
        %3464 = vmatmul.mubr.f32.gmra.mrb[0].mxu0 %v3352
        %v3465 = vpop.f32.mrb[0].mxu0
        %v3466 = vadd.f32 0.0, %v3465
        %v3467 = vpop.f32.mrb[0].mxu0
        %3468 = vmatprep.mubr.f32.mxu0 0.0
        %3469 = vmatmul.mubr.f32.gmra.mrb[0].mxu0 %v3354
        %v3470 = vpop.f32.mrb[0].mxu0
        %v3471 = vadd.f32 0.0, %v3470
        %v3472 = vpop.f32.mrb[0].mxu0
        %3473 = vmatprep.mubr.f32.mxu0 0.0
        %3474 = vmatmul.mubr.f32.gmra.mrb[0].mxu0 %v3356
        %v3475 = vpop.f32.mrb[0].mxu0
        %v3476 = vadd.f32 0.0, %v3475
        %v3477 = vpop.f32.mrb[0].mxu0
        %3478 = vmatprep.mubr.f32.mxu0 0.0
        %3479 = vmatmul.mubr.f32.gmra.mrb[0].mxu0 %v3358
        %v3480 = vpop.f32.mrb[0].mxu0
        %v3481 = vadd.f32 0.0, %v3480
        %v3482 = vpop.f32.mrb[0].mxu0
        %3483 = vmatprep.mubr.f32.mxu0 0.0
        %3484 = vmatmul.mubr.f32.gmra.mrb[0].mxu0 %v3360
        %v3485 = vpop.f32.mrb[0].mxu0
        %v3486 = vadd.f32 0.0, %v3485
        %v3487 = vpop.f32.mrb[0].mxu0
        %3488 = vmatprep.mubr.f32.mxu0 0.0
        %3489 = vmatmul.mubr.f32.gmra.mrb[0].mxu0 %v3362
        %v3490 = vpop.f32.mrb[0].mxu0
        %v3491 = vadd.f32 0.0, %v3490
        %v3492 = vpop.f32.mrb[0].mxu0
        %3493 = vmatprep.mubr.f32.mxu0 0.0
        %3494 = vmatmul.mubr.f32.gmra.mrb[0].mxu0 %v3364
        %v3495 = vpop.f32.mrb[0].mxu0
        %v3496 = vadd.f32 0.0, %v3495
        %v3497 = vpop.f32.mrb[0].mxu0
        %3498 = vmatprep.mubr.f32.mxu0 0.0
        %3499 = vmatmul.mubr.f32.gmra.mrb[0].mxu0 %v3366
        %v3500 = vpop.f32.mrb[0].mxu0
        %v3501 = vadd.f32 0.0, %v3500
        %v3502 = vpop.f32.mrb[0].mxu0
        %3503 = vmatprep.mubr.f32.mxu0 0.0
        %3504 = vmatmul.mubr.f32.gmra.mrb[0].mxu0 %v3368
        %v3505 = vpop.f32.mrb[0].mxu0
        %v3506 = vadd.f32 0.0, %v3505
        %v3507 = vpop.f32.mrb[0].mxu0
        %3508 = vmatprep.mubr.f32.mxu0 0.0
        %3509 = vmatmul.mubr.f32.gmra.mrb[0].mxu0 %v3370
        %v3510 = vpop.f32.mrb[0].mxu0
        %v3511 = vadd.f32 0.0, %v3510
        %v3512 = vpop.f32.mrb[0].mxu0
        %3513 = vmatprep.mubr.f32.mxu0 0.0
        %3514 = vmatmul.mubr.f32.gmra.mrb[0].mxu0 %v3372
        %v3515 = vpop.f32.mrb[0].mxu0
        %v3516 = vadd.f32 0.0, %v3515
        %v3517 = vpop.f32.mrb[0].mxu0
        %3518 = vmatprep.mubr.f32.mxu0 0.0
        %3519 = vmatmul.mubr.f32.gmra.mrb[0].mxu0 %v3374
        %v3520 = vpop.f32.mrb[0].mxu0
        %v3521 = vadd.f32 0.0, %v3520
        %v3522 = vpop.f32.mrb[0].mxu0
        %3523 = vdwg.mxu0
        %3524 = vst [vmem:[#allocation3 + $0x100] sm:$0xff] %v3446
        %3525 = vst [vmem:[#allocation3 + $0x108] sm:$0xff] %v3451
        %3526 = vst [vmem:[#allocation3 + $0x110] sm:$0xff] %v3456
        %3527 = vst [vmem:[#allocation3 + $0x118] sm:$0xff] %v3461
        %3528 = vst [vmem:[#allocation3 + $0x120] sm:$0xff] %v3466
        %3529 = vst [vmem:[#allocation3 + $0x128] sm:$0xff] %v3471
        %3530 = vst [vmem:[#allocation3 + $0x130] sm:$0xff] %v3476
        %3531 = vst [vmem:[#allocation3 + $0x138] sm:$0xff] %v3481
        %3532 = vst [vmem:[#allocation3 + $0x140] sm:$0xff] %v3486
        %3533 = vst [vmem:[#allocation3 + $0x148] sm:$0xff] %v3491
        %3534 = vst [vmem:[#allocation3 + $0x150] sm:$0xff] %v3496
        %3535 = vst [vmem:[#allocation3 + $0x158] sm:$0xff] %v3501
        %3536 = vst [vmem:[#allocation3 + $0x160] sm:$0xff] %v3506
        %3537 = vst [vmem:[#allocation3 + $0x168] sm:$0xff] %v3511
        %3538 = vst [vmem:[#allocation3 + $0x170] sm:$0xff] %v3516
        %3539 = vst [vmem:[#allocation3 + $0x178] sm:$0xff] %v3521
        %v3540 = vld [vmem:[%s3] sm:$0xff]
        %v3541 = vld [vmem:[%s3 + $0x10] sm:$0xff]
        %v3542 = vld [vmem:[%s3 + $0x20] sm:$0xff]
        %v3543 = vld [vmem:[%s3 + $0x30] sm:$0xff]
        %v3544 = vld [vmem:[%s3 + $0x40] sm:$0xff]
        %v3545 = vld [vmem:[%s3 + $0x50] sm:$0xff]
        %v3546 = vld [vmem:[%s3 + $0x60] sm:$0xff]
        %v3547 = vld [vmem:[%s3 + $0x70] sm:$0xff]
        %v3548 = vld [vmem:[%s3 + $0x80] sm:$0xff]
        %v3549 = vld [vmem:[%s3 + $0x90] sm:$0xff]
        %v3550 = vld [vmem:[%s3 + $0xa0] sm:$0xff]
        %v3551 = vld [vmem:[%s3 + $0xb0] sm:$0xff]
        %v3552 = vld [vmem:[%s3 + $0xc0] sm:$0xff]
        %v3553 = vld [vmem:[%s3 + $0xd0] sm:$0xff]
        %v3554 = vld [vmem:[%s3 + $0xe0] sm:$0xff]
        %v3555 = vld [vmem:[%s3 + $0xf0] sm:$0xff]
        %v3556 = vld [vmem:[%s296 + $0x12] sm:$0x3f]
        %3573 = vrot.lane.b32.xlu0 %v3540, 110
        %v3574 = vpop.permute.xlu0 %3573
        %3575 = vrot.lane.b32.xlu0 %v3541, 110
        %v3576 = vpop.permute.xlu0 %3575
        %3577 = vrot.lane.b32.xlu0 %v3542, 110
        %v3578 = vpop.permute.xlu0 %3577
        %3579 = vrot.lane.b32.xlu0 %v3543, 110
        %v3580 = vpop.permute.xlu0 %3579
        %3581 = vrot.lane.b32.xlu0 %v3544, 110
        %v3582 = vpop.permute.xlu0 %3581
        %3583 = vrot.lane.b32.xlu0 %v3545, 110
        %v3584 = vpop.permute.xlu0 %3583
        %3585 = vrot.lane.b32.xlu0 %v3546, 110
        %v3586 = vpop.permute.xlu0 %3585
        %3587 = vrot.lane.b32.xlu0 %v3547, 110
        %v3588 = vpop.permute.xlu0 %3587
        %3589 = vrot.lane.b32.xlu0 %v3548, 110
        %v3590 = vpop.permute.xlu0 %3589
        %3591 = vrot.lane.b32.xlu0 %v3549, 110
        %v3592 = vpop.permute.xlu0 %3591
        %3593 = vrot.lane.b32.xlu0 %v3550, 110
        %v3594 = vpop.permute.xlu0 %3593
        %3595 = vrot.lane.b32.xlu0 %v3551, 110
        %v3596 = vpop.permute.xlu0 %3595
        %3597 = vrot.lane.b32.xlu0 %v3552, 110
        %v3598 = vpop.permute.xlu0 %3597
        %3599 = vrot.lane.b32.xlu0 %v3553, 110
        %v3600 = vpop.permute.xlu0 %3599
        %3601 = vrot.lane.b32.xlu0 %v3554, 110
        %v3602 = vpop.permute.xlu0 %3601
        %3603 = vrot.lane.b32.xlu0 %v3555, 110
        %v3604 = vpop.permute.xlu0 %3603
        %v3605 = vsel %vm2804, %v3574, 0
        %v3607 = vsel %vm2804, %v3576, 0
        %v3609 = vsel %vm2804, %v3578, 0
        %v3611 = vsel %vm2804, %v3580, 0
        %v3613 = vsel %vm2804, %v3582, 0
        %v3615 = vsel %vm2804, %v3584, 0
        %v3617 = vsel %vm2804, %v3586, 0
        %v3619 = vsel %vm2804, %v3588, 0
        %v3621 = vsel %vm2804, %v3590, 0
        %v3623 = vsel %vm2804, %v3592, 0
        %v3625 = vsel %vm2804, %v3594, 0
        %v3627 = vsel %vm2804, %v3596, 0
        %v3629 = vsel %vm2804, %v3598, 0
        %v3631 = vsel %vm2804, %v3600, 0
        %v3633 = vsel %vm2804, %v3602, 0
        %v3635 = vsel %vm2804, %v3604, 0
        %v3638 = vsel %vm2853, %v3556, 0
        %3640 = vmatprep.subr.mxu0 0.0
        %3641 = vmatpush1.msra.mxu0 %v3638
        %3642 = vmatprep.subr.mxu0 0.0
        %3643 = vmatpush1.msra.mxu0 0.0
        %3644 = vmatprep.subr.mxu0 0.0
        %3645 = vmatpush1.msra.mxu0 0.0
        %3646 = vmatprep.subr.mxu0 0.0
        %3647 = vmatpush1.msra.mxu0 0.0
        %3648 = vmatprep.subr.mxu0 0.0
        %3649 = vmatpush1.msra.mxu0 0.0
        %3650 = vmatprep.subr.mxu0 0.0
        %3651 = vmatpush1.msra.mxu0 0.0
        %3652 = vmatprep.subr.mxu0 0.0
        %3653 = vmatpush1.msra.mxu0 0.0
        %3654 = vmatprep.subr.mxu0 0.0
        %3655 = vmatpush1.msra.mxu0 0.0
        %3656 = vmatprep.subr.mxu0 0.0
        %3657 = vmatpush1.msra.mxu0 0.0
        %3658 = vmatprep.subr.mxu0 0.0
        %3659 = vmatpush1.msra.mxu0 0.0
        %3660 = vmatprep.subr.mxu0 0.0
        %3661 = vmatpush1.msra.mxu0 0.0
        %3662 = vmatprep.subr.mxu0 0.0
        %3663 = vmatpush1.msra.mxu0 0.0
        %3664 = vmatprep.subr.mxu0 0.0
        %3665 = vmatpush1.msra.mxu0 0.0
        %3666 = vmatprep.subr.mxu0 0.0
        %3667 = vmatpush1.msra.mxu0 0.0
        %3668 = vmatprep.subr.mxu0 0.0
        %3669 = vmatpush1.msra.mxu0 0.0
        %3670 = vmatprep.subr.mxu0 0.0
        %3671 = vmatpush1.msra.mxu0 0.0
        %3672 = vmatprep.subr.mxu0 0.0
        %3673 = vmatpush1.msra.mxu0 0.0
        %3674 = vmatprep.subr.mxu0 0.0
        %3675 = vmatpush1.msra.mxu0 0.0
        %3676 = vmatprep.subr.mxu0 0.0
        %3677 = vmatpush1.msra.mxu0 0.0
        %3678 = vmatprep.subr.mxu0 0.0
        %3679 = vmatpush1.msra.mxu0 0.0
        %3680 = vmatprep.subr.mxu0 0.0
        %3681 = vmatpush1.msra.mxu0 0.0
        %3682 = vmatprep.subr.mxu0 0.0
        %3683 = vmatpush1.msra.mxu0 0.0
        %3684 = vmatprep.subr.mxu0 0.0
        %3685 = vmatpush1.msra.mxu0 0.0
        %3686 = vmatprep.subr.mxu0 0.0
        %3687 = vmatpush1.msra.mxu0 0.0
        %3688 = vmatprep.subr.mxu0 0.0
        %3689 = vmatpush1.msra.mxu0 0.0
        %3690 = vmatprep.subr.mxu0 0.0
        %3691 = vmatpush1.msra.mxu0 0.0
        %3692 = vmatprep.subr.mxu0 0.0
        %3693 = vmatpush1.msra.mxu0 0.0
        %3694 = vmatprep.subr.mxu0 0.0
        %3695 = vmatpush1.msra.mxu0 0.0
        %3696 = vmatprep.subr.mxu0 0.0
        %3697 = vmatpush1.msra.mxu0 0.0
        %3698 = vmatprep.subr.mxu0 0.0
        %3699 = vmatpush1.msra.mxu0 0.0
        %3700 = vmatprep.subr.mxu0 0.0
        %3701 = vmatpush1.msra.mxu0 0.0
        %3702 = vmatprep.subr.mxu0 0.0
        %3703 = vmatpush1.msra.mxu0 0.0
        %3704 = vmatprep.mubr.f32.mxu0 0.0
        %3705 = vmatmul.mubr.f32.gmra.mrb[0].mxu0 %v3605
        %v3706 = vpop.f32.mrb[0].mxu0
        %v3707 = vadd.f32 0.0, %v3706
        %v3708 = vpop.f32.mrb[0].mxu0
        %3709 = vmatprep.mubr.f32.mxu0 0.0
        %3710 = vmatmul.mubr.f32.gmra.mrb[0].mxu0 %v3607
        %v3711 = vpop.f32.mrb[0].mxu0
        %v3712 = vadd.f32 0.0, %v3711
        %v3713 = vpop.f32.mrb[0].mxu0
        %3714 = vmatprep.mubr.f32.mxu0 0.0
        %3715 = vmatmul.mubr.f32.gmra.mrb[0].mxu0 %v3609
        %v3716 = vpop.f32.mrb[0].mxu0
        %v3717 = vadd.f32 0.0, %v3716
        %v3718 = vpop.f32.mrb[0].mxu0
        %3719 = vmatprep.mubr.f32.mxu0 0.0
        %3720 = vmatmul.mubr.f32.gmra.mrb[0].mxu0 %v3611
        %v3721 = vpop.f32.mrb[0].mxu0
        %v3722 = vadd.f32 0.0, %v3721
        %v3723 = vpop.f32.mrb[0].mxu0
        %3724 = vmatprep.mubr.f32.mxu0 0.0
        %3725 = vmatmul.mubr.f32.gmra.mrb[0].mxu0 %v3613
        %v3726 = vpop.f32.mrb[0].mxu0
        %v3727 = vadd.f32 0.0, %v3726
        %v3728 = vpop.f32.mrb[0].mxu0
        %3729 = vmatprep.mubr.f32.mxu0 0.0
        %3730 = vmatmul.mubr.f32.gmra.mrb[0].mxu0 %v3615
        %v3731 = vpop.f32.mrb[0].mxu0
        %v3732 = vadd.f32 0.0, %v3731
        %v3733 = vpop.f32.mrb[0].mxu0
        %3734 = vmatprep.mubr.f32.mxu0 0.0
        %3735 = vmatmul.mubr.f32.gmra.mrb[0].mxu0 %v3617
        %v3736 = vpop.f32.mrb[0].mxu0
        %v3737 = vadd.f32 0.0, %v3736
        %v3738 = vpop.f32.mrb[0].mxu0
        %3739 = vmatprep.mubr.f32.mxu0 0.0
        %3740 = vmatmul.mubr.f32.gmra.mrb[0].mxu0 %v3619
        %v3741 = vpop.f32.mrb[0].mxu0
        %v3742 = vadd.f32 0.0, %v3741
        %v3743 = vpop.f32.mrb[0].mxu0
        %3744 = vmatprep.mubr.f32.mxu0 0.0
        %3745 = vmatmul.mubr.f32.gmra.mrb[0].mxu0 %v3621
        %v3746 = vpop.f32.mrb[0].mxu0
        %v3747 = vadd.f32 0.0, %v3746
        %v3748 = vpop.f32.mrb[0].mxu0
        %3749 = vmatprep.mubr.f32.mxu0 0.0
        %3750 = vmatmul.mubr.f32.gmra.mrb[0].mxu0 %v3623
        %v3751 = vpop.f32.mrb[0].mxu0
        %v3752 = vadd.f32 0.0, %v3751
        %v3753 = vpop.f32.mrb[0].mxu0
        %3754 = vmatprep.mubr.f32.mxu0 0.0
        %3755 = vmatmul.mubr.f32.gmra.mrb[0].mxu0 %v3625
        %v3756 = vpop.f32.mrb[0].mxu0
        %v3757 = vadd.f32 0.0, %v3756
        %v3758 = vpop.f32.mrb[0].mxu0
        %3759 = vmatprep.mubr.f32.mxu0 0.0
        %3760 = vmatmul.mubr.f32.gmra.mrb[0].mxu0 %v3627
        %v3761 = vpop.f32.mrb[0].mxu0
        %v3762 = vadd.f32 0.0, %v3761
        %v3763 = vpop.f32.mrb[0].mxu0
        %3764 = vmatprep.mubr.f32.mxu0 0.0
        %3765 = vmatmul.mubr.f32.gmra.mrb[0].mxu0 %v3629
        %v3766 = vpop.f32.mrb[0].mxu0
        %v3767 = vadd.f32 0.0, %v3766
        %v3768 = vpop.f32.mrb[0].mxu0
        %3769 = vmatprep.mubr.f32.mxu0 0.0
        %3770 = vmatmul.mubr.f32.gmra.mrb[0].mxu0 %v3631
        %v3771 = vpop.f32.mrb[0].mxu0
        %v3772 = vadd.f32 0.0, %v3771
        %v3773 = vpop.f32.mrb[0].mxu0
        %3774 = vmatprep.mubr.f32.mxu0 0.0
        %3775 = vmatmul.mubr.f32.gmra.mrb[0].mxu0 %v3633
        %v3776 = vpop.f32.mrb[0].mxu0
        %v3777 = vadd.f32 0.0, %v3776
        %v3778 = vpop.f32.mrb[0].mxu0
        %3779 = vmatprep.mubr.f32.mxu0 0.0
        %3780 = vmatmul.mubr.f32.gmra.mrb[0].mxu0 %v3635
        %v3781 = vpop.f32.mrb[0].mxu0
        %v3782 = vadd.f32 0.0, %v3781
        %v3783 = vpop.f32.mrb[0].mxu0
        %3784 = vdwg.mxu0
        %3785 = vst [vmem:[#allocation3 + $0x180] sm:$0xff] %v3707
        %3786 = vst [vmem:[#allocation3 + $0x188] sm:$0xff] %v3712
        %3787 = vst [vmem:[#allocation3 + $0x190] sm:$0xff] %v3717
        %3788 = vst [vmem:[#allocation3 + $0x198] sm:$0xff] %v3722
        %3789 = vst [vmem:[#allocation3 + $0x1a0] sm:$0xff] %v3727
        %3790 = vst [vmem:[#allocation3 + $0x1a8] sm:$0xff] %v3732
        %3791 = vst [vmem:[#allocation3 + $0x1b0] sm:$0xff] %v3737
        %3792 = vst [vmem:[#allocation3 + $0x1b8] sm:$0xff] %v3742
        %3793 = vst [vmem:[#allocation3 + $0x1c0] sm:$0xff] %v3747
        %3794 = vst [vmem:[#allocation3 + $0x1c8] sm:$0xff] %v3752
        %3795 = vst [vmem:[#allocation3 + $0x1d0] sm:$0xff] %v3757
        %3796 = vst [vmem:[#allocation3 + $0x1d8] sm:$0xff] %v3762
        %3797 = vst [vmem:[#allocation3 + $0x1e0] sm:$0xff] %v3767
        %3798 = vst [vmem:[#allocation3 + $0x1e8] sm:$0xff] %v3772
        %3799 = vst [vmem:[#allocation3 + $0x1f0] sm:$0xff] %v3777
        %3800 = vst [vmem:[#allocation3 + $0x1f8] sm:$0xff] %v3782
        %v3801 = vld [vmem:[%s3] sm:$0xff]
        %v3802 = vld [vmem:[%s3 + $0x10] sm:$0xff]
        %v3803 = vld [vmem:[%s3 + $0x20] sm:$0xff]
        %v3804 = vld [vmem:[%s3 + $0x30] sm:$0xff]
        %v3805 = vld [vmem:[%s3 + $0x40] sm:$0xff]
        %v3806 = vld [vmem:[%s3 + $0x50] sm:$0xff]
        %v3807 = vld [vmem:[%s3 + $0x60] sm:$0xff]
        %v3808 = vld [vmem:[%s3 + $0x70] sm:$0xff]
        %v3809 = vld [vmem:[%s3 + $0x80] sm:$0xff]
        %v3810 = vld [vmem:[%s3 + $0x90] sm:$0xff]
        %v3811 = vld [vmem:[%s3 + $0xa0] sm:$0xff]
        %v3812 = vld [vmem:[%s3 + $0xb0] sm:$0xff]
        %v3813 = vld [vmem:[%s3 + $0xc0] sm:$0xff]
        %v3814 = vld [vmem:[%s3 + $0xd0] sm:$0xff]
        %v3815 = vld [vmem:[%s3 + $0xe0] sm:$0xff]
        %v3816 = vld [vmem:[%s3 + $0xf0] sm:$0xff]
        %v3817 = vld [vmem:[%s296 + $0x18] sm:$0x3f]
        %3834 = vrot.lane.b32.xlu0 %v3801, 104
        %v3835 = vpop.permute.xlu0 %3834
        %3836 = vrot.lane.b32.xlu0 %v3802, 104
        %v3837 = vpop.permute.xlu0 %3836
        %3838 = vrot.lane.b32.xlu0 %v3803, 104
        %v3839 = vpop.permute.xlu0 %3838
        %3840 = vrot.lane.b32.xlu0 %v3804, 104
        %v3841 = vpop.permute.xlu0 %3840
        %3842 = vrot.lane.b32.xlu0 %v3805, 104
        %v3843 = vpop.permute.xlu0 %3842
        %3844 = vrot.lane.b32.xlu0 %v3806, 104
        %v3845 = vpop.permute.xlu0 %3844
        %3846 = vrot.lane.b32.xlu0 %v3807, 104
        %v3847 = vpop.permute.xlu0 %3846
        %3848 = vrot.lane.b32.xlu0 %v3808, 104
        %v3849 = vpop.permute.xlu0 %3848
        %3850 = vrot.lane.b32.xlu0 %v3809, 104
        %v3851 = vpop.permute.xlu0 %3850
        %3852 = vrot.lane.b32.xlu0 %v3810, 104
        %v3853 = vpop.permute.xlu0 %3852
        %3854 = vrot.lane.b32.xlu0 %v3811, 104
        %v3855 = vpop.permute.xlu0 %3854
        %3856 = vrot.lane.b32.xlu0 %v3812, 104
        %v3857 = vpop.permute.xlu0 %3856
        %3858 = vrot.lane.b32.xlu0 %v3813, 104
        %v3859 = vpop.permute.xlu0 %3858
        %3860 = vrot.lane.b32.xlu0 %v3814, 104
        %v3861 = vpop.permute.xlu0 %3860
        %3862 = vrot.lane.b32.xlu0 %v3815, 104
        %v3863 = vpop.permute.xlu0 %3862
        %3864 = vrot.lane.b32.xlu0 %v3816, 104
        %v3865 = vpop.permute.xlu0 %3864
        %v3866 = vsel %vm2804, %v3835, 0
        %v3868 = vsel %vm2804, %v3837, 0
        %v3870 = vsel %vm2804, %v3839, 0
        %v3872 = vsel %vm2804, %v3841, 0
        %v3874 = vsel %vm2804, %v3843, 0
        %v3876 = vsel %vm2804, %v3845, 0
        %v3878 = vsel %vm2804, %v3847, 0
        %v3880 = vsel %vm2804, %v3849, 0
        %v3882 = vsel %vm2804, %v3851, 0
        %v3884 = vsel %vm2804, %v3853, 0
        %v3886 = vsel %vm2804, %v3855, 0
        %v3888 = vsel %vm2804, %v3857, 0
        %v3890 = vsel %vm2804, %v3859, 0
        %v3892 = vsel %vm2804, %v3861, 0
        %v3894 = vsel %vm2804, %v3863, 0
        %v3896 = vsel %vm2804, %v3865, 0
        %v3899 = vsel %vm2853, %v3817, 0
        %3901 = vmatprep.subr.mxu0 0.0
        %3902 = vmatpush1.msra.mxu0 %v3899
        %3903 = vmatprep.subr.mxu0 0.0
        %3904 = vmatpush1.msra.mxu0 0.0
        %3905 = vmatprep.subr.mxu0 0.0
        %3906 = vmatpush1.msra.mxu0 0.0
        %3907 = vmatprep.subr.mxu0 0.0
        %3908 = vmatpush1.msra.mxu0 0.0
        %3909 = vmatprep.subr.mxu0 0.0
        %3910 = vmatpush1.msra.mxu0 0.0
        %3911 = vmatprep.subr.mxu0 0.0
        %3912 = vmatpush1.msra.mxu0 0.0
        %3913 = vmatprep.subr.mxu0 0.0
        %3914 = vmatpush1.msra.mxu0 0.0
        %3915 = vmatprep.subr.mxu0 0.0
        %3916 = vmatpush1.msra.mxu0 0.0
        %3917 = vmatprep.subr.mxu0 0.0
        %3918 = vmatpush1.msra.mxu0 0.0
        %3919 = vmatprep.subr.mxu0 0.0
        %3920 = vmatpush1.msra.mxu0 0.0
        %3921 = vmatprep.subr.mxu0 0.0
        %3922 = vmatpush1.msra.mxu0 0.0
        %3923 = vmatprep.subr.mxu0 0.0
        %3924 = vmatpush1.msra.mxu0 0.0
        %3925 = vmatprep.subr.mxu0 0.0
        %3926 = vmatpush1.msra.mxu0 0.0
        %3927 = vmatprep.subr.mxu0 0.0
        %3928 = vmatpush1.msra.mxu0 0.0
        %3929 = vmatprep.subr.mxu0 0.0
        %3930 = vmatpush1.msra.mxu0 0.0
        %3931 = vmatprep.subr.mxu0 0.0
        %3932 = vmatpush1.msra.mxu0 0.0
        %3933 = vmatprep.subr.mxu0 0.0
        %3934 = vmatpush1.msra.mxu0 0.0
        %3935 = vmatprep.subr.mxu0 0.0
        %3936 = vmatpush1.msra.mxu0 0.0
        %3937 = vmatprep.subr.mxu0 0.0
        %3938 = vmatpush1.msra.mxu0 0.0
        %3939 = vmatprep.subr.mxu0 0.0
        %3940 = vmatpush1.msra.mxu0 0.0
        %3941 = vmatprep.subr.mxu0 0.0
        %3942 = vmatpush1.msra.mxu0 0.0
        %3943 = vmatprep.subr.mxu0 0.0
        %3944 = vmatpush1.msra.mxu0 0.0
        %3945 = vmatprep.subr.mxu0 0.0
        %3946 = vmatpush1.msra.mxu0 0.0
        %3947 = vmatprep.subr.mxu0 0.0
        %3948 = vmatpush1.msra.mxu0 0.0
        %3949 = vmatprep.subr.mxu0 0.0
        %3950 = vmatpush1.msra.mxu0 0.0
        %3951 = vmatprep.subr.mxu0 0.0
        %3952 = vmatpush1.msra.mxu0 0.0
        %3953 = vmatprep.subr.mxu0 0.0
        %3954 = vmatpush1.msra.mxu0 0.0
        %3955 = vmatprep.subr.mxu0 0.0
        %3956 = vmatpush1.msra.mxu0 0.0
        %3957 = vmatprep.subr.mxu0 0.0
        %3958 = vmatpush1.msra.mxu0 0.0
        %3959 = vmatprep.subr.mxu0 0.0
        %3960 = vmatpush1.msra.mxu0 0.0
        %3961 = vmatprep.subr.mxu0 0.0
        %3962 = vmatpush1.msra.mxu0 0.0
        %3963 = vmatprep.subr.mxu0 0.0
        %3964 = vmatpush1.msra.mxu0 0.0
        %3965 = vmatprep.mubr.f32.mxu0 0.0
        %3966 = vmatmul.mubr.f32.gmra.mrb[0].mxu0 %v3866
        %v3967 = vpop.f32.mrb[0].mxu0
        %v3968 = vadd.f32 0.0, %v3967
        %v3969 = vpop.f32.mrb[0].mxu0
        %3970 = vmatprep.mubr.f32.mxu0 0.0
        %3971 = vmatmul.mubr.f32.gmra.mrb[0].mxu0 %v3868
        %v3972 = vpop.f32.mrb[0].mxu0
        %v3973 = vadd.f32 0.0, %v3972
        %v3974 = vpop.f32.mrb[0].mxu0
        %3975 = vmatprep.mubr.f32.mxu0 0.0
        %3976 = vmatmul.mubr.f32.gmra.mrb[0].mxu0 %v3870
        %v3977 = vpop.f32.mrb[0].mxu0
        %v3978 = vadd.f32 0.0, %v3977
        %v3979 = vpop.f32.mrb[0].mxu0
        %3980 = vmatprep.mubr.f32.mxu0 0.0
        %3981 = vmatmul.mubr.f32.gmra.mrb[0].mxu0 %v3872
        %v3982 = vpop.f32.mrb[0].mxu0
        %v3983 = vadd.f32 0.0, %v3982
        %v3984 = vpop.f32.mrb[0].mxu0
        %3985 = vmatprep.mubr.f32.mxu0 0.0
        %3986 = vmatmul.mubr.f32.gmra.mrb[0].mxu0 %v3874
        %v3987 = vpop.f32.mrb[0].mxu0
        %v3988 = vadd.f32 0.0, %v3987
        %v3989 = vpop.f32.mrb[0].mxu0
        %3990 = vmatprep.mubr.f32.mxu0 0.0
        %3991 = vmatmul.mubr.f32.gmra.mrb[0].mxu0 %v3876
        %v3992 = vpop.f32.mrb[0].mxu0
        %v3993 = vadd.f32 0.0, %v3992
        %v3994 = vpop.f32.mrb[0].mxu0
        %3995 = vmatprep.mubr.f32.mxu0 0.0
        %3996 = vmatmul.mubr.f32.gmra.mrb[0].mxu0 %v3878
        %v3997 = vpop.f32.mrb[0].mxu0
        %v3998 = vadd.f32 0.0, %v3997
        %v3999 = vpop.f32.mrb[0].mxu0
        %4000 = vmatprep.mubr.f32.mxu0 0.0
        %4001 = vmatmul.mubr.f32.gmra.mrb[0].mxu0 %v3880
        %v4002 = vpop.f32.mrb[0].mxu0
        %v4003 = vadd.f32 0.0, %v4002
        %v4004 = vpop.f32.mrb[0].mxu0
        %4005 = vmatprep.mubr.f32.mxu0 0.0
        %4006 = vmatmul.mubr.f32.gmra.mrb[0].mxu0 %v3882
        %v4007 = vpop.f32.mrb[0].mxu0
        %v4008 = vadd.f32 0.0, %v4007
        %v4009 = vpop.f32.mrb[0].mxu0
        %4010 = vmatprep.mubr.f32.mxu0 0.0
        %4011 = vmatmul.mubr.f32.gmra.mrb[0].mxu0 %v3884
        %v4012 = vpop.f32.mrb[0].mxu0
        %v4013 = vadd.f32 0.0, %v4012
        %v4014 = vpop.f32.mrb[0].mxu0
        %4015 = vmatprep.mubr.f32.mxu0 0.0
        %4016 = vmatmul.mubr.f32.gmra.mrb[0].mxu0 %v3886
        %v4017 = vpop.f32.mrb[0].mxu0
        %v4018 = vadd.f32 0.0, %v4017
        %v4019 = vpop.f32.mrb[0].mxu0
        %4020 = vmatprep.mubr.f32.mxu0 0.0
        %4021 = vmatmul.mubr.f32.gmra.mrb[0].mxu0 %v3888
        %v4022 = vpop.f32.mrb[0].mxu0
        %v4023 = vadd.f32 0.0, %v4022
        %v4024 = vpop.f32.mrb[0].mxu0
        %4025 = vmatprep.mubr.f32.mxu0 0.0
        %4026 = vmatmul.mubr.f32.gmra.mrb[0].mxu0 %v3890
        %v4027 = vpop.f32.mrb[0].mxu0
        %v4028 = vadd.f32 0.0, %v4027
        %v4029 = vpop.f32.mrb[0].mxu0
        %4030 = vmatprep.mubr.f32.mxu0 0.0
        %4031 = vmatmul.mubr.f32.gmra.mrb[0].mxu0 %v3892
        %v4032 = vpop.f32.mrb[0].mxu0
        %v4033 = vadd.f32 0.0, %v4032
        %v4034 = vpop.f32.mrb[0].mxu0
        %4035 = vmatprep.mubr.f32.mxu0 0.0
        %4036 = vmatmul.mubr.f32.gmra.mrb[0].mxu0 %v3894
        %v4037 = vpop.f32.mrb[0].mxu0
        %v4038 = vadd.f32 0.0, %v4037
        %v4039 = vpop.f32.mrb[0].mxu0
        %4040 = vmatprep.mubr.f32.mxu0 0.0
        %4041 = vmatmul.mubr.f32.gmra.mrb[0].mxu0 %v3896
        %v4042 = vpop.f32.mrb[0].mxu0
        %v4043 = vadd.f32 0.0, %v4042
        %v4044 = vpop.f32.mrb[0].mxu0
        %4045 = vdwg.mxu0
        %4046 = vst [vmem:[#allocation3 + $0x200] sm:$0xff] %v3968
        %4047 = vst [vmem:[#allocation3 + $0x208] sm:$0xff] %v3973
        %4048 = vst [vmem:[#allocation3 + $0x210] sm:$0xff] %v3978
        %4049 = vst [vmem:[#allocation3 + $0x218] sm:$0xff] %v3983
        %4050 = vst [vmem:[#allocation3 + $0x220] sm:$0xff] %v3988
        %4051 = vst [vmem:[#allocation3 + $0x228] sm:$0xff] %v3993
        %4052 = vst [vmem:[#allocation3 + $0x230] sm:$0xff] %v3998
        %4053 = vst [vmem:[#allocation3 + $0x238] sm:$0xff] %v4003
        %4054 = vst [vmem:[#allocation3 + $0x240] sm:$0xff] %v4008
        %4055 = vst [vmem:[#allocation3 + $0x248] sm:$0xff] %v4013
        %4056 = vst [vmem:[#allocation3 + $0x250] sm:$0xff] %v4018
        %4057 = vst [vmem:[#allocation3 + $0x258] sm:$0xff] %v4023
        %4058 = vst [vmem:[#allocation3 + $0x260] sm:$0xff] %v4028
        %4059 = vst [vmem:[#allocation3 + $0x268] sm:$0xff] %v4033
        %4060 = vst [vmem:[#allocation3 + $0x270] sm:$0xff] %v4038
        %4061 = vst [vmem:[#allocation3 + $0x278] sm:$0xff] %v4043
        %v4062 = vld [vmem:[%s3] sm:$0xff]
        %v4063 = vld [vmem:[%s3 + $0x10] sm:$0xff]
        %v4064 = vld [vmem:[%s3 + $0x20] sm:$0xff]
        %v4065 = vld [vmem:[%s3 + $0x30] sm:$0xff]
        %v4066 = vld [vmem:[%s3 + $0x40] sm:$0xff]
        %v4067 = vld [vmem:[%s3 + $0x50] sm:$0xff]
        %v4068 = vld [vmem:[%s3 + $0x60] sm:$0xff]
        %v4069 = vld [vmem:[%s3 + $0x70] sm:$0xff]
        %v4070 = vld [vmem:[%s3 + $0x80] sm:$0xff]
        %v4071 = vld [vmem:[%s3 + $0x90] sm:$0xff]
        %v4072 = vld [vmem:[%s3 + $0xa0] sm:$0xff]
        %v4073 = vld [vmem:[%s3 + $0xb0] sm:$0xff]
        %v4074 = vld [vmem:[%s3 + $0xc0] sm:$0xff]
        %v4075 = vld [vmem:[%s3 + $0xd0] sm:$0xff]
        %v4076 = vld [vmem:[%s3 + $0xe0] sm:$0xff]
        %v4077 = vld [vmem:[%s3 + $0xf0] sm:$0xff]
        %v4078 = vld [vmem:[%s296 + $0x1e] sm:$0x3f]
        %4095 = vrot.lane.b32.xlu0 %v4062, 98
        %v4096 = vpop.permute.xlu0 %4095
        %4097 = vrot.lane.b32.xlu0 %v4063, 98
        %v4098 = vpop.permute.xlu0 %4097
        %4099 = vrot.lane.b32.xlu0 %v4064, 98
        %v4100 = vpop.permute.xlu0 %4099
        %4101 = vrot.lane.b32.xlu0 %v4065, 98
        %v4102 = vpop.permute.xlu0 %4101
        %4103 = vrot.lane.b32.xlu0 %v4066, 98
        %v4104 = vpop.permute.xlu0 %4103
        %4105 = vrot.lane.b32.xlu0 %v4067, 98
        %v4106 = vpop.permute.xlu0 %4105
        %4107 = vrot.lane.b32.xlu0 %v4068, 98
        %v4108 = vpop.permute.xlu0 %4107
        %4109 = vrot.lane.b32.xlu0 %v4069, 98
        %v4110 = vpop.permute.xlu0 %4109
        %4111 = vrot.lane.b32.xlu0 %v4070, 98
        %v4112 = vpop.permute.xlu0 %4111
        %4113 = vrot.lane.b32.xlu0 %v4071, 98
        %v4114 = vpop.permute.xlu0 %4113
        %4115 = vrot.lane.b32.xlu0 %v4072, 98
        %v4116 = vpop.permute.xlu0 %4115
        %4117 = vrot.lane.b32.xlu0 %v4073, 98
        %v4118 = vpop.permute.xlu0 %4117
        %4119 = vrot.lane.b32.xlu0 %v4074, 98
        %v4120 = vpop.permute.xlu0 %4119
        %4121 = vrot.lane.b32.xlu0 %v4075, 98
        %v4122 = vpop.permute.xlu0 %4121
        %4123 = vrot.lane.b32.xlu0 %v4076, 98
        %v4124 = vpop.permute.xlu0 %4123
        %4125 = vrot.lane.b32.xlu0 %v4077, 98
        %v4126 = vpop.permute.xlu0 %4125
        %v4127 = vsel %vm2804, %v4096, 0
        %v4129 = vsel %vm2804, %v4098, 0
        %v4131 = vsel %vm2804, %v4100, 0
        %v4133 = vsel %vm2804, %v4102, 0
        %v4135 = vsel %vm2804, %v4104, 0
        %v4137 = vsel %vm2804, %v4106, 0
        %v4139 = vsel %vm2804, %v4108, 0
        %v4141 = vsel %vm2804, %v4110, 0
        %v4143 = vsel %vm2804, %v4112, 0
        %v4145 = vsel %vm2804, %v4114, 0
        %v4147 = vsel %vm2804, %v4116, 0
        %v4149 = vsel %vm2804, %v4118, 0
        %v4151 = vsel %vm2804, %v4120, 0
        %v4153 = vsel %vm2804, %v4122, 0
        %v4155 = vsel %vm2804, %v4124, 0
        %v4157 = vsel %vm2804, %v4126, 0
        %v4160 = vsel %vm2853, %v4078, 0
        %4162 = vmatprep.subr.mxu0 0.0
        %4163 = vmatpush1.msra.mxu0 %v4160
        %4164 = vmatprep.subr.mxu0 0.0
        %4165 = vmatpush1.msra.mxu0 0.0
        %4166 = vmatprep.subr.mxu0 0.0
        %4167 = vmatpush1.msra.mxu0 0.0
        %4168 = vmatprep.subr.mxu0 0.0
        %4169 = vmatpush1.msra.mxu0 0.0
        %4170 = vmatprep.subr.mxu0 0.0
        %4171 = vmatpush1.msra.mxu0 0.0
        %4172 = vmatprep.subr.mxu0 0.0
        %4173 = vmatpush1.msra.mxu0 0.0
        %4174 = vmatprep.subr.mxu0 0.0
        %4175 = vmatpush1.msra.mxu0 0.0
        %4176 = vmatprep.subr.mxu0 0.0
        %4177 = vmatpush1.msra.mxu0 0.0
        %4178 = vmatprep.subr.mxu0 0.0
        %4179 = vmatpush1.msra.mxu0 0.0
        %4180 = vmatprep.subr.mxu0 0.0
        %4181 = vmatpush1.msra.mxu0 0.0
        %4182 = vmatprep.subr.mxu0 0.0
        %4183 = vmatpush1.msra.mxu0 0.0
        %4184 = vmatprep.subr.mxu0 0.0
        %4185 = vmatpush1.msra.mxu0 0.0
        %4186 = vmatprep.subr.mxu0 0.0
        %4187 = vmatpush1.msra.mxu0 0.0
        %4188 = vmatprep.subr.mxu0 0.0
        %4189 = vmatpush1.msra.mxu0 0.0
        %4190 = vmatprep.subr.mxu0 0.0
        %4191 = vmatpush1.msra.mxu0 0.0
        %4192 = vmatprep.subr.mxu0 0.0
        %4193 = vmatpush1.msra.mxu0 0.0
        %4194 = vmatprep.subr.mxu0 0.0
        %4195 = vmatpush1.msra.mxu0 0.0
        %4196 = vmatprep.subr.mxu0 0.0
        %4197 = vmatpush1.msra.mxu0 0.0
        %4198 = vmatprep.subr.mxu0 0.0
        %4199 = vmatpush1.msra.mxu0 0.0
        %4200 = vmatprep.subr.mxu0 0.0
        %4201 = vmatpush1.msra.mxu0 0.0
        %4202 = vmatprep.subr.mxu0 0.0
        %4203 = vmatpush1.msra.mxu0 0.0
        %4204 = vmatprep.subr.mxu0 0.0
        %4205 = vmatpush1.msra.mxu0 0.0
        %4206 = vmatprep.subr.mxu0 0.0
        %4207 = vmatpush1.msra.mxu0 0.0
        %4208 = vmatprep.subr.mxu0 0.0
        %4209 = vmatpush1.msra.mxu0 0.0
        %4210 = vmatprep.subr.mxu0 0.0
        %4211 = vmatpush1.msra.mxu0 0.0
        %4212 = vmatprep.subr.mxu0 0.0
        %4213 = vmatpush1.msra.mxu0 0.0
        %4214 = vmatprep.subr.mxu0 0.0
        %4215 = vmatpush1.msra.mxu0 0.0
        %4216 = vmatprep.subr.mxu0 0.0
        %4217 = vmatpush1.msra.mxu0 0.0
        %4218 = vmatprep.subr.mxu0 0.0
        %4219 = vmatpush1.msra.mxu0 0.0
        %4220 = vmatprep.subr.mxu0 0.0
        %4221 = vmatpush1.msra.mxu0 0.0
        %4222 = vmatprep.subr.mxu0 0.0
        %4223 = vmatpush1.msra.mxu0 0.0
        %4224 = vmatprep.subr.mxu0 0.0
        %4225 = vmatpush1.msra.mxu0 0.0
        %4226 = vmatprep.mubr.f32.mxu0 0.0
        %4227 = vmatmul.mubr.f32.gmra.mrb[0].mxu0 %v4127
        %v4228 = vpop.f32.mrb[0].mxu0
        %v4229 = vadd.f32 0.0, %v4228
        %v4230 = vpop.f32.mrb[0].mxu0
        %4231 = vmatprep.mubr.f32.mxu0 0.0
        %4232 = vmatmul.mubr.f32.gmra.mrb[0].mxu0 %v4129
        %v4233 = vpop.f32.mrb[0].mxu0
        %v4234 = vadd.f32 0.0, %v4233
        %v4235 = vpop.f32.mrb[0].mxu0
        %4236 = vmatprep.mubr.f32.mxu0 0.0
        %4237 = vmatmul.mubr.f32.gmra.mrb[0].mxu0 %v4131
        %v4238 = vpop.f32.mrb[0].mxu0
        %v4239 = vadd.f32 0.0, %v4238
        %v4240 = vpop.f32.mrb[0].mxu0
        %4241 = vmatprep.mubr.f32.mxu0 0.0
        %4242 = vmatmul.mubr.f32.gmra.mrb[0].mxu0 %v4133
        %v4243 = vpop.f32.mrb[0].mxu0
        %v4244 = vadd.f32 0.0, %v4243
        %v4245 = vpop.f32.mrb[0].mxu0
        %4246 = vmatprep.mubr.f32.mxu0 0.0
        %4247 = vmatmul.mubr.f32.gmra.mrb[0].mxu0 %v4135
        %v4248 = vpop.f32.mrb[0].mxu0
        %v4249 = vadd.f32 0.0, %v4248
        %v4250 = vpop.f32.mrb[0].mxu0
        %4251 = vmatprep.mubr.f32.mxu0 0.0
        %4252 = vmatmul.mubr.f32.gmra.mrb[0].mxu0 %v4137
        %v4253 = vpop.f32.mrb[0].mxu0
        %v4254 = vadd.f32 0.0, %v4253
        %v4255 = vpop.f32.mrb[0].mxu0
        %4256 = vmatprep.mubr.f32.mxu0 0.0
        %4257 = vmatmul.mubr.f32.gmra.mrb[0].mxu0 %v4139
        %v4258 = vpop.f32.mrb[0].mxu0
        %v4259 = vadd.f32 0.0, %v4258
        %v4260 = vpop.f32.mrb[0].mxu0
        %4261 = vmatprep.mubr.f32.mxu0 0.0
        %4262 = vmatmul.mubr.f32.gmra.mrb[0].mxu0 %v4141
        %v4263 = vpop.f32.mrb[0].mxu0
        %v4264 = vadd.f32 0.0, %v4263
        %v4265 = vpop.f32.mrb[0].mxu0
        %4266 = vmatprep.mubr.f32.mxu0 0.0
        %4267 = vmatmul.mubr.f32.gmra.mrb[0].mxu0 %v4143
        %v4268 = vpop.f32.mrb[0].mxu0
        %v4269 = vadd.f32 0.0, %v4268
        %v4270 = vpop.f32.mrb[0].mxu0
        %4271 = vmatprep.mubr.f32.mxu0 0.0
        %4272 = vmatmul.mubr.f32.gmra.mrb[0].mxu0 %v4145
        %v4273 = vpop.f32.mrb[0].mxu0
        %v4274 = vadd.f32 0.0, %v4273
        %v4275 = vpop.f32.mrb[0].mxu0
        %4276 = vmatprep.mubr.f32.mxu0 0.0
        %4277 = vmatmul.mubr.f32.gmra.mrb[0].mxu0 %v4147
        %v4278 = vpop.f32.mrb[0].mxu0
        %v4279 = vadd.f32 0.0, %v4278
        %v4280 = vpop.f32.mrb[0].mxu0
        %4281 = vmatprep.mubr.f32.mxu0 0.0
        %4282 = vmatmul.mubr.f32.gmra.mrb[0].mxu0 %v4149
        %v4283 = vpop.f32.mrb[0].mxu0
        %v4284 = vadd.f32 0.0, %v4283
        %v4285 = vpop.f32.mrb[0].mxu0
        %4286 = vmatprep.mubr.f32.mxu0 0.0
        %4287 = vmatmul.mubr.f32.gmra.mrb[0].mxu0 %v4151
        %v4288 = vpop.f32.mrb[0].mxu0
        %v4289 = vadd.f32 0.0, %v4288
        %v4290 = vpop.f32.mrb[0].mxu0
        %4291 = vmatprep.mubr.f32.mxu0 0.0
        %4292 = vmatmul.mubr.f32.gmra.mrb[0].mxu0 %v4153
        %v4293 = vpop.f32.mrb[0].mxu0
        %v4294 = vadd.f32 0.0, %v4293
        %v4295 = vpop.f32.mrb[0].mxu0
        %4296 = vmatprep.mubr.f32.mxu0 0.0
        %4297 = vmatmul.mubr.f32.gmra.mrb[0].mxu0 %v4155
        %v4298 = vpop.f32.mrb[0].mxu0
        %v4299 = vadd.f32 0.0, %v4298
        %v4300 = vpop.f32.mrb[0].mxu0
        %4301 = vmatprep.mubr.f32.mxu0 0.0
        %4302 = vmatmul.mubr.f32.gmra.mrb[0].mxu0 %v4157
        %v4303 = vpop.f32.mrb[0].mxu0
        %v4304 = vadd.f32 0.0, %v4303
        %v4305 = vpop.f32.mrb[0].mxu0
        %4306 = vdwg.mxu0
        %4307 = vst [vmem:[#allocation3 + $0x280] sm:$0xff] %v4229
        %4308 = vst [vmem:[#allocation3 + $0x288] sm:$0xff] %v4234
        %4309 = vst [vmem:[#allocation3 + $0x290] sm:$0xff] %v4239
        %4310 = vst [vmem:[#allocation3 + $0x298] sm:$0xff] %v4244
        %4311 = vst [vmem:[#allocation3 + $0x2a0] sm:$0xff] %v4249
        %4312 = vst [vmem:[#allocation3 + $0x2a8] sm:$0xff] %v4254
        %4313 = vst [vmem:[#allocation3 + $0x2b0] sm:$0xff] %v4259
        %4314 = vst [vmem:[#allocation3 + $0x2b8] sm:$0xff] %v4264
        %4315 = vst [vmem:[#allocation3 + $0x2c0] sm:$0xff] %v4269
        %4316 = vst [vmem:[#allocation3 + $0x2c8] sm:$0xff] %v4274
        %4317 = vst [vmem:[#allocation3 + $0x2d0] sm:$0xff] %v4279
        %4318 = vst [vmem:[#allocation3 + $0x2d8] sm:$0xff] %v4284
        %4319 = vst [vmem:[#allocation3 + $0x2e0] sm:$0xff] %v4289
        %4320 = vst [vmem:[#allocation3 + $0x2e8] sm:$0xff] %v4294
        %4321 = vst [vmem:[#allocation3 + $0x2f0] sm:$0xff] %v4299
        %4322 = vst [vmem:[#allocation3 + $0x2f8] sm:$0xff] %v4304
        %v4323 = vld [vmem:[%s3] sm:$0xff]
        %v4324 = vld [vmem:[%s3 + $0x10] sm:$0xff]
        %v4325 = vld [vmem:[%s3 + $0x20] sm:$0xff]
        %v4326 = vld [vmem:[%s3 + $0x30] sm:$0xff]
        %v4327 = vld [vmem:[%s3 + $0x40] sm:$0xff]
        %v4328 = vld [vmem:[%s3 + $0x50] sm:$0xff]
        %v4329 = vld [vmem:[%s3 + $0x60] sm:$0xff]
        %v4330 = vld [vmem:[%s3 + $0x70] sm:$0xff]
        %v4331 = vld [vmem:[%s3 + $0x80] sm:$0xff]
        %v4332 = vld [vmem:[%s3 + $0x90] sm:$0xff]
        %v4333 = vld [vmem:[%s3 + $0xa0] sm:$0xff]
        %v4334 = vld [vmem:[%s3 + $0xb0] sm:$0xff]
        %v4335 = vld [vmem:[%s3 + $0xc0] sm:$0xff]
        %v4336 = vld [vmem:[%s3 + $0xd0] sm:$0xff]
        %v4337 = vld [vmem:[%s3 + $0xe0] sm:$0xff]
        %v4338 = vld [vmem:[%s3 + $0xf0] sm:$0xff]
        %v4339 = vld [vmem:[%s296 + $0x24] sm:$0x3f]
        %4356 = vrot.lane.b32.xlu0 %v4323, 92
        %v4357 = vpop.permute.xlu0 %4356
        %4358 = vrot.lane.b32.xlu0 %v4324, 92
        %v4359 = vpop.permute.xlu0 %4358
        %4360 = vrot.lane.b32.xlu0 %v4325, 92
        %v4361 = vpop.permute.xlu0 %4360
        %4362 = vrot.lane.b32.xlu0 %v4326, 92
        %v4363 = vpop.permute.xlu0 %4362
        %4364 = vrot.lane.b32.xlu0 %v4327, 92
        %v4365 = vpop.permute.xlu0 %4364
        %4366 = vrot.lane.b32.xlu0 %v4328, 92
        %v4367 = vpop.permute.xlu0 %4366
        %4368 = vrot.lane.b32.xlu0 %v4329, 92
        %v4369 = vpop.permute.xlu0 %4368
        %4370 = vrot.lane.b32.xlu0 %v4330, 92
        %v4371 = vpop.permute.xlu0 %4370
        %4372 = vrot.lane.b32.xlu0 %v4331, 92
        %v4373 = vpop.permute.xlu0 %4372
        %4374 = vrot.lane.b32.xlu0 %v4332, 92
        %v4375 = vpop.permute.xlu0 %4374
        %4376 = vrot.lane.b32.xlu0 %v4333, 92
        %v4377 = vpop.permute.xlu0 %4376
        %4378 = vrot.lane.b32.xlu0 %v4334, 92
        %v4379 = vpop.permute.xlu0 %4378
        %4380 = vrot.lane.b32.xlu0 %v4335, 92
        %v4381 = vpop.permute.xlu0 %4380
        %4382 = vrot.lane.b32.xlu0 %v4336, 92
        %v4383 = vpop.permute.xlu0 %4382
        %4384 = vrot.lane.b32.xlu0 %v4337, 92
        %v4385 = vpop.permute.xlu0 %4384
        %4386 = vrot.lane.b32.xlu0 %v4338, 92
        %v4387 = vpop.permute.xlu0 %4386
        %v4388 = vsel %vm2804, %v4357, 0
        %v4390 = vsel %vm2804, %v4359, 0
        %v4392 = vsel %vm2804, %v4361, 0
        %v4394 = vsel %vm2804, %v4363, 0
        %v4396 = vsel %vm2804, %v4365, 0
        %v4398 = vsel %vm2804, %v4367, 0
        %v4400 = vsel %vm2804, %v4369, 0
        %v4402 = vsel %vm2804, %v4371, 0
        %v4404 = vsel %vm2804, %v4373, 0
        %v4406 = vsel %vm2804, %v4375, 0
        %v4408 = vsel %vm2804, %v4377, 0
        %v4410 = vsel %vm2804, %v4379, 0
        %v4412 = vsel %vm2804, %v4381, 0
        %v4414 = vsel %vm2804, %v4383, 0
        %v4416 = vsel %vm2804, %v4385, 0
        %v4418 = vsel %vm2804, %v4387, 0
        %v4421 = vsel %vm2853, %v4339, 0
        %4423 = vmatprep.subr.mxu0 0.0
        %4424 = vmatpush1.msra.mxu0 %v4421
        %4425 = vmatprep.subr.mxu0 0.0
        %4426 = vmatpush1.msra.mxu0 0.0
        %4427 = vmatprep.subr.mxu0 0.0
        %4428 = vmatpush1.msra.mxu0 0.0
        %4429 = vmatprep.subr.mxu0 0.0
        %4430 = vmatpush1.msra.mxu0 0.0
        %4431 = vmatprep.subr.mxu0 0.0
        %4432 = vmatpush1.msra.mxu0 0.0
        %4433 = vmatprep.subr.mxu0 0.0
        %4434 = vmatpush1.msra.mxu0 0.0
        %4435 = vmatprep.subr.mxu0 0.0
        %4436 = vmatpush1.msra.mxu0 0.0
        %4437 = vmatprep.subr.mxu0 0.0
        %4438 = vmatpush1.msra.mxu0 0.0
        %4439 = vmatprep.subr.mxu0 0.0
        %4440 = vmatpush1.msra.mxu0 0.0
        %4441 = vmatprep.subr.mxu0 0.0
        %4442 = vmatpush1.msra.mxu0 0.0
        %4443 = vmatprep.subr.mxu0 0.0
        %4444 = vmatpush1.msra.mxu0 0.0
        %4445 = vmatprep.subr.mxu0 0.0
        %4446 = vmatpush1.msra.mxu0 0.0
        %4447 = vmatprep.subr.mxu0 0.0
        %4448 = vmatpush1.msra.mxu0 0.0
        %4449 = vmatprep.subr.mxu0 0.0
        %4450 = vmatpush1.msra.mxu0 0.0
        %4451 = vmatprep.subr.mxu0 0.0
        %4452 = vmatpush1.msra.mxu0 0.0
        %4453 = vmatprep.subr.mxu0 0.0
        %4454 = vmatpush1.msra.mxu0 0.0
        %4455 = vmatprep.subr.mxu0 0.0
        %4456 = vmatpush1.msra.mxu0 0.0
        %4457 = vmatprep.subr.mxu0 0.0
        %4458 = vmatpush1.msra.mxu0 0.0
        %4459 = vmatprep.subr.mxu0 0.0
        %4460 = vmatpush1.msra.mxu0 0.0
        %4461 = vmatprep.subr.mxu0 0.0
        %4462 = vmatpush1.msra.mxu0 0.0
        %4463 = vmatprep.subr.mxu0 0.0
        %4464 = vmatpush1.msra.mxu0 0.0
        %4465 = vmatprep.subr.mxu0 0.0
        %4466 = vmatpush1.msra.mxu0 0.0
        %4467 = vmatprep.subr.mxu0 0.0
        %4468 = vmatpush1.msra.mxu0 0.0
        %4469 = vmatprep.subr.mxu0 0.0
        %4470 = vmatpush1.msra.mxu0 0.0
        %4471 = vmatprep.subr.mxu0 0.0
        %4472 = vmatpush1.msra.mxu0 0.0
        %4473 = vmatprep.subr.mxu0 0.0
        %4474 = vmatpush1.msra.mxu0 0.0
        %4475 = vmatprep.subr.mxu0 0.0
        %4476 = vmatpush1.msra.mxu0 0.0
        %4477 = vmatprep.subr.mxu0 0.0
        %4478 = vmatpush1.msra.mxu0 0.0
        %4479 = vmatprep.subr.mxu0 0.0
        %4480 = vmatpush1.msra.mxu0 0.0
        %4481 = vmatprep.subr.mxu0 0.0
        %4482 = vmatpush1.msra.mxu0 0.0
        %4483 = vmatprep.subr.mxu0 0.0
        %4484 = vmatpush1.msra.mxu0 0.0
        %4485 = vmatprep.subr.mxu0 0.0
        %4486 = vmatpush1.msra.mxu0 0.0
        %4487 = vmatprep.mubr.f32.mxu0 0.0
        %4488 = vmatmul.mubr.f32.gmra.mrb[0].mxu0 %v4388
        %v4489 = vpop.f32.mrb[0].mxu0
        %v4490 = vadd.f32 0.0, %v4489
        %v4491 = vpop.f32.mrb[0].mxu0
        %4492 = vmatprep.mubr.f32.mxu0 0.0
        %4493 = vmatmul.mubr.f32.gmra.mrb[0].mxu0 %v4390
        %v4494 = vpop.f32.mrb[0].mxu0
        %v4495 = vadd.f32 0.0, %v4494
        %v4496 = vpop.f32.mrb[0].mxu0
        %4497 = vmatprep.mubr.f32.mxu0 0.0
        %4498 = vmatmul.mubr.f32.gmra.mrb[0].mxu0 %v4392
        %v4499 = vpop.f32.mrb[0].mxu0
        %v4500 = vadd.f32 0.0, %v4499
        %v4501 = vpop.f32.mrb[0].mxu0
        %4502 = vmatprep.mubr.f32.mxu0 0.0
        %4503 = vmatmul.mubr.f32.gmra.mrb[0].mxu0 %v4394
        %v4504 = vpop.f32.mrb[0].mxu0
        %v4505 = vadd.f32 0.0, %v4504
        %v4506 = vpop.f32.mrb[0].mxu0
        %4507 = vmatprep.mubr.f32.mxu0 0.0
        %4508 = vmatmul.mubr.f32.gmra.mrb[0].mxu0 %v4396
        %v4509 = vpop.f32.mrb[0].mxu0
        %v4510 = vadd.f32 0.0, %v4509
        %v4511 = vpop.f32.mrb[0].mxu0
        %4512 = vmatprep.mubr.f32.mxu0 0.0
        %4513 = vmatmul.mubr.f32.gmra.mrb[0].mxu0 %v4398
        %v4514 = vpop.f32.mrb[0].mxu0
        %v4515 = vadd.f32 0.0, %v4514
        %v4516 = vpop.f32.mrb[0].mxu0
        %4517 = vmatprep.mubr.f32.mxu0 0.0
        %4518 = vmatmul.mubr.f32.gmra.mrb[0].mxu0 %v4400
        %v4519 = vpop.f32.mrb[0].mxu0
        %v4520 = vadd.f32 0.0, %v4519
        %v4521 = vpop.f32.mrb[0].mxu0
        %4522 = vmatprep.mubr.f32.mxu0 0.0
        %4523 = vmatmul.mubr.f32.gmra.mrb[0].mxu0 %v4402
        %v4524 = vpop.f32.mrb[0].mxu0
        %v4525 = vadd.f32 0.0, %v4524
        %v4526 = vpop.f32.mrb[0].mxu0
        %4527 = vmatprep.mubr.f32.mxu0 0.0
        %4528 = vmatmul.mubr.f32.gmra.mrb[0].mxu0 %v4404
        %v4529 = vpop.f32.mrb[0].mxu0
        %v4530 = vadd.f32 0.0, %v4529
        %v4531 = vpop.f32.mrb[0].mxu0
        %4532 = vmatprep.mubr.f32.mxu0 0.0
        %4533 = vmatmul.mubr.f32.gmra.mrb[0].mxu0 %v4406
        %v4534 = vpop.f32.mrb[0].mxu0
        %v4535 = vadd.f32 0.0, %v4534
        %v4536 = vpop.f32.mrb[0].mxu0
        %4537 = vmatprep.mubr.f32.mxu0 0.0
        %4538 = vmatmul.mubr.f32.gmra.mrb[0].mxu0 %v4408
        %v4539 = vpop.f32.mrb[0].mxu0
        %v4540 = vadd.f32 0.0, %v4539
        %v4541 = vpop.f32.mrb[0].mxu0
        %4542 = vmatprep.mubr.f32.mxu0 0.0
        %4543 = vmatmul.mubr.f32.gmra.mrb[0].mxu0 %v4410
        %v4544 = vpop.f32.mrb[0].mxu0
        %v4545 = vadd.f32 0.0, %v4544
        %v4546 = vpop.f32.mrb[0].mxu0
        %4547 = vmatprep.mubr.f32.mxu0 0.0
        %4548 = vmatmul.mubr.f32.gmra.mrb[0].mxu0 %v4412
        %v4549 = vpop.f32.mrb[0].mxu0
        %v4550 = vadd.f32 0.0, %v4549
        %v4551 = vpop.f32.mrb[0].mxu0
        %4552 = vmatprep.mubr.f32.mxu0 0.0
        %4553 = vmatmul.mubr.f32.gmra.mrb[0].mxu0 %v4414
        %v4554 = vpop.f32.mrb[0].mxu0
        %v4555 = vadd.f32 0.0, %v4554
        %v4556 = vpop.f32.mrb[0].mxu0
        %4557 = vmatprep.mubr.f32.mxu0 0.0
        %4558 = vmatmul.mubr.f32.gmra.mrb[0].mxu0 %v4416
        %v4559 = vpop.f32.mrb[0].mxu0
        %v4560 = vadd.f32 0.0, %v4559
        %v4561 = vpop.f32.mrb[0].mxu0
        %4562 = vmatprep.mubr.f32.mxu0 0.0
        %4563 = vmatmul.mubr.f32.gmra.mrb[0].mxu0 %v4418
        %v4564 = vpop.f32.mrb[0].mxu0
        %v4565 = vadd.f32 0.0, %v4564
        %v4566 = vpop.f32.mrb[0].mxu0
        %4567 = vdwg.mxu0
        %4568 = vst [vmem:[#allocation3 + $0x300] sm:$0xff] %v4490
        %4569 = vst [vmem:[#allocation3 + $0x308] sm:$0xff] %v4495
        %4570 = vst [vmem:[#allocation3 + $0x310] sm:$0xff] %v4500
        %4571 = vst [vmem:[#allocation3 + $0x318] sm:$0xff] %v4505
        %4572 = vst [vmem:[#allocation3 + $0x320] sm:$0xff] %v4510
        %4573 = vst [vmem:[#allocation3 + $0x328] sm:$0xff] %v4515
        %4574 = vst [vmem:[#allocation3 + $0x330] sm:$0xff] %v4520
        %4575 = vst [vmem:[#allocation3 + $0x338] sm:$0xff] %v4525
        %4576 = vst [vmem:[#allocation3 + $0x340] sm:$0xff] %v4530
        %4577 = vst [vmem:[#allocation3 + $0x348] sm:$0xff] %v4535
        %4578 = vst [vmem:[#allocation3 + $0x350] sm:$0xff] %v4540
        %4579 = vst [vmem:[#allocation3 + $0x358] sm:$0xff] %v4545
        %4580 = vst [vmem:[#allocation3 + $0x360] sm:$0xff] %v4550
        %4581 = vst [vmem:[#allocation3 + $0x368] sm:$0xff] %v4555
        %4582 = vst [vmem:[#allocation3 + $0x370] sm:$0xff] %v4560
        %4583 = vst [vmem:[#allocation3 + $0x378] sm:$0xff] %v4565
        %v4584 = vld [vmem:[%s3] sm:$0xff]
        %v4585 = vld [vmem:[%s3 + $0x10] sm:$0xff]
        %v4586 = vld [vmem:[%s3 + $0x20] sm:$0xff]
        %v4587 = vld [vmem:[%s3 + $0x30] sm:$0xff]
        %v4588 = vld [vmem:[%s3 + $0x40] sm:$0xff]
        %v4589 = vld [vmem:[%s3 + $0x50] sm:$0xff]
        %v4590 = vld [vmem:[%s3 + $0x60] sm:$0xff]
        %v4591 = vld [vmem:[%s3 + $0x70] sm:$0xff]
        %v4592 = vld [vmem:[%s3 + $0x80] sm:$0xff]
        %v4593 = vld [vmem:[%s3 + $0x90] sm:$0xff]
        %v4594 = vld [vmem:[%s3 + $0xa0] sm:$0xff]
        %v4595 = vld [vmem:[%s3 + $0xb0] sm:$0xff]
        %v4596 = vld [vmem:[%s3 + $0xc0] sm:$0xff]
        %v4597 = vld [vmem:[%s3 + $0xd0] sm:$0xff]
        %v4598 = vld [vmem:[%s3 + $0xe0] sm:$0xff]
        %v4599 = vld [vmem:[%s3 + $0xf0] sm:$0xff]
        %v4600 = vld [vmem:[%s296 + $0x2a] sm:$0x3f]
        %4617 = vrot.lane.b32.xlu0 %v4584, 86
        %v4618 = vpop.permute.xlu0 %4617
        %4619 = vrot.lane.b32.xlu0 %v4585, 86
        %v4620 = vpop.permute.xlu0 %4619
        %4621 = vrot.lane.b32.xlu0 %v4586, 86
        %v4622 = vpop.permute.xlu0 %4621
        %4623 = vrot.lane.b32.xlu0 %v4587, 86
        %v4624 = vpop.permute.xlu0 %4623
        %4625 = vrot.lane.b32.xlu0 %v4588, 86
        %v4626 = vpop.permute.xlu0 %4625
        %4627 = vrot.lane.b32.xlu0 %v4589, 86
        %v4628 = vpop.permute.xlu0 %4627
        %4629 = vrot.lane.b32.xlu0 %v4590, 86
        %v4630 = vpop.permute.xlu0 %4629
        %4631 = vrot.lane.b32.xlu0 %v4591, 86
        %v4632 = vpop.permute.xlu0 %4631
        %4633 = vrot.lane.b32.xlu0 %v4592, 86
        %v4634 = vpop.permute.xlu0 %4633
        %4635 = vrot.lane.b32.xlu0 %v4593, 86
        %v4636 = vpop.permute.xlu0 %4635
        %4637 = vrot.lane.b32.xlu0 %v4594, 86
        %v4638 = vpop.permute.xlu0 %4637
        %4639 = vrot.lane.b32.xlu0 %v4595, 86
        %v4640 = vpop.permute.xlu0 %4639
        %4641 = vrot.lane.b32.xlu0 %v4596, 86
        %v4642 = vpop.permute.xlu0 %4641
        %4643 = vrot.lane.b32.xlu0 %v4597, 86
        %v4644 = vpop.permute.xlu0 %4643
        %4645 = vrot.lane.b32.xlu0 %v4598, 86
        %v4646 = vpop.permute.xlu0 %4645
        %4647 = vrot.lane.b32.xlu0 %v4599, 86
        %v4648 = vpop.permute.xlu0 %4647
        %v4649 = vsel %vm2804, %v4618, 0
        %v4651 = vsel %vm2804, %v4620, 0
        %v4653 = vsel %vm2804, %v4622, 0
        %v4655 = vsel %vm2804, %v4624, 0
        %v4657 = vsel %vm2804, %v4626, 0
        %v4659 = vsel %vm2804, %v4628, 0
        %v4661 = vsel %vm2804, %v4630, 0
        %v4663 = vsel %vm2804, %v4632, 0
        %v4665 = vsel %vm2804, %v4634, 0
        %v4667 = vsel %vm2804, %v4636, 0
        %v4669 = vsel %vm2804, %v4638, 0
        %v4671 = vsel %vm2804, %v4640, 0
        %v4673 = vsel %vm2804, %v4642, 0
        %v4675 = vsel %vm2804, %v4644, 0
        %v4677 = vsel %vm2804, %v4646, 0
        %v4679 = vsel %vm2804, %v4648, 0
        %v4682 = vsel %vm2853, %v4600, 0
        %4684 = vmatprep.subr.mxu0 0.0
        %4685 = vmatpush1.msra.mxu0 %v4682
        %4686 = vmatprep.subr.mxu0 0.0
        %4687 = vmatpush1.msra.mxu0 0.0
        %4688 = vmatprep.subr.mxu0 0.0
        %4689 = vmatpush1.msra.mxu0 0.0
        %4690 = vmatprep.subr.mxu0 0.0
        %4691 = vmatpush1.msra.mxu0 0.0
        %4692 = vmatprep.subr.mxu0 0.0
        %4693 = vmatpush1.msra.mxu0 0.0
        %4694 = vmatprep.subr.mxu0 0.0
        %4695 = vmatpush1.msra.mxu0 0.0
        %4696 = vmatprep.subr.mxu0 0.0
        %4697 = vmatpush1.msra.mxu0 0.0
        %4698 = vmatprep.subr.mxu0 0.0
        %4699 = vmatpush1.msra.mxu0 0.0
        %4700 = vmatprep.subr.mxu0 0.0
        %4701 = vmatpush1.msra.mxu0 0.0
        %4702 = vmatprep.subr.mxu0 0.0
        %4703 = vmatpush1.msra.mxu0 0.0
        %4704 = vmatprep.subr.mxu0 0.0
        %4705 = vmatpush1.msra.mxu0 0.0
        %4706 = vmatprep.subr.mxu0 0.0
        %4707 = vmatpush1.msra.mxu0 0.0
        %4708 = vmatprep.subr.mxu0 0.0
        %4709 = vmatpush1.msra.mxu0 0.0
        %4710 = vmatprep.subr.mxu0 0.0
        %4711 = vmatpush1.msra.mxu0 0.0
        %4712 = vmatprep.subr.mxu0 0.0
        %4713 = vmatpush1.msra.mxu0 0.0
        %4714 = vmatprep.subr.mxu0 0.0
        %4715 = vmatpush1.msra.mxu0 0.0
        %4716 = vmatprep.subr.mxu0 0.0
        %4717 = vmatpush1.msra.mxu0 0.0
        %4718 = vmatprep.subr.mxu0 0.0
        %4719 = vmatpush1.msra.mxu0 0.0
        %4720 = vmatprep.subr.mxu0 0.0
        %4721 = vmatpush1.msra.mxu0 0.0
        %4722 = vmatprep.subr.mxu0 0.0
        %4723 = vmatpush1.msra.mxu0 0.0
        %4724 = vmatprep.subr.mxu0 0.0
        %4725 = vmatpush1.msra.mxu0 0.0
        %4726 = vmatprep.subr.mxu0 0.0
        %4727 = vmatpush1.msra.mxu0 0.0
        %4728 = vmatprep.subr.mxu0 0.0
        %4729 = vmatpush1.msra.mxu0 0.0
        %4730 = vmatprep.subr.mxu0 0.0
        %4731 = vmatpush1.msra.mxu0 0.0
        %4732 = vmatprep.subr.mxu0 0.0
        %4733 = vmatpush1.msra.mxu0 0.0
        %4734 = vmatprep.subr.mxu0 0.0
        %4735 = vmatpush1.msra.mxu0 0.0
        %4736 = vmatprep.subr.mxu0 0.0
        %4737 = vmatpush1.msra.mxu0 0.0
        %4738 = vmatprep.subr.mxu0 0.0
        %4739 = vmatpush1.msra.mxu0 0.0
        %4740 = vmatprep.subr.mxu0 0.0
        %4741 = vmatpush1.msra.mxu0 0.0
        %4742 = vmatprep.subr.mxu0 0.0
        %4743 = vmatpush1.msra.mxu0 0.0
        %4744 = vmatprep.subr.mxu0 0.0
        %4745 = vmatpush1.msra.mxu0 0.0
        %4746 = vmatprep.subr.mxu0 0.0
        %4747 = vmatpush1.msra.mxu0 0.0
        %4748 = vmatprep.mubr.f32.mxu0 0.0
        %4749 = vmatmul.mubr.f32.gmra.mrb[0].mxu0 %v4649
        %v4750 = vpop.f32.mrb[0].mxu0
        %v4751 = vadd.f32 0.0, %v4750
        %v4752 = vpop.f32.mrb[0].mxu0
        %4753 = vmatprep.mubr.f32.mxu0 0.0
        %4754 = vmatmul.mubr.f32.gmra.mrb[0].mxu0 %v4651
        %v4755 = vpop.f32.mrb[0].mxu0
        %v4756 = vadd.f32 0.0, %v4755
        %v4757 = vpop.f32.mrb[0].mxu0
        %4758 = vmatprep.mubr.f32.mxu0 0.0
        %4759 = vmatmul.mubr.f32.gmra.mrb[0].mxu0 %v4653
        %v4760 = vpop.f32.mrb[0].mxu0
        %v4761 = vadd.f32 0.0, %v4760
        %v4762 = vpop.f32.mrb[0].mxu0
        %4763 = vmatprep.mubr.f32.mxu0 0.0
        %4764 = vmatmul.mubr.f32.gmra.mrb[0].mxu0 %v4655
        %v4765 = vpop.f32.mrb[0].mxu0
        %v4766 = vadd.f32 0.0, %v4765
        %v4767 = vpop.f32.mrb[0].mxu0
        %4768 = vmatprep.mubr.f32.mxu0 0.0
        %4769 = vmatmul.mubr.f32.gmra.mrb[0].mxu0 %v4657
        %v4770 = vpop.f32.mrb[0].mxu0
        %v4771 = vadd.f32 0.0, %v4770
        %v4772 = vpop.f32.mrb[0].mxu0
        %4773 = vmatprep.mubr.f32.mxu0 0.0
        %4774 = vmatmul.mubr.f32.gmra.mrb[0].mxu0 %v4659
        %v4775 = vpop.f32.mrb[0].mxu0
        %v4776 = vadd.f32 0.0, %v4775
        %v4777 = vpop.f32.mrb[0].mxu0
        %4778 = vmatprep.mubr.f32.mxu0 0.0
        %4779 = vmatmul.mubr.f32.gmra.mrb[0].mxu0 %v4661
        %v4780 = vpop.f32.mrb[0].mxu0
        %v4781 = vadd.f32 0.0, %v4780
        %v4782 = vpop.f32.mrb[0].mxu0
        %4783 = vmatprep.mubr.f32.mxu0 0.0
        %4784 = vmatmul.mubr.f32.gmra.mrb[0].mxu0 %v4663
        %v4785 = vpop.f32.mrb[0].mxu0
        %v4786 = vadd.f32 0.0, %v4785
        %v4787 = vpop.f32.mrb[0].mxu0
        %4788 = vmatprep.mubr.f32.mxu0 0.0
        %4789 = vmatmul.mubr.f32.gmra.mrb[0].mxu0 %v4665
        %v4790 = vpop.f32.mrb[0].mxu0
        %v4791 = vadd.f32 0.0, %v4790
        %v4792 = vpop.f32.mrb[0].mxu0
        %4793 = vmatprep.mubr.f32.mxu0 0.0
        %4794 = vmatmul.mubr.f32.gmra.mrb[0].mxu0 %v4667
        %v4795 = vpop.f32.mrb[0].mxu0
        %v4796 = vadd.f32 0.0, %v4795
        %v4797 = vpop.f32.mrb[0].mxu0
        %4798 = vmatprep.mubr.f32.mxu0 0.0
        %4799 = vmatmul.mubr.f32.gmra.mrb[0].mxu0 %v4669
        %v4800 = vpop.f32.mrb[0].mxu0
        %v4801 = vadd.f32 0.0, %v4800
        %v4802 = vpop.f32.mrb[0].mxu0
        %4803 = vmatprep.mubr.f32.mxu0 0.0
        %4804 = vmatmul.mubr.f32.gmra.mrb[0].mxu0 %v4671
        %v4805 = vpop.f32.mrb[0].mxu0
        %v4806 = vadd.f32 0.0, %v4805
        %v4807 = vpop.f32.mrb[0].mxu0
        %4808 = vmatprep.mubr.f32.mxu0 0.0
        %4809 = vmatmul.mubr.f32.gmra.mrb[0].mxu0 %v4673
        %v4810 = vpop.f32.mrb[0].mxu0
        %v4811 = vadd.f32 0.0, %v4810
        %v4812 = vpop.f32.mrb[0].mxu0
        %4813 = vmatprep.mubr.f32.mxu0 0.0
        %4814 = vmatmul.mubr.f32.gmra.mrb[0].mxu0 %v4675
        %v4815 = vpop.f32.mrb[0].mxu0
        %v4816 = vadd.f32 0.0, %v4815
        %v4817 = vpop.f32.mrb[0].mxu0
        %4818 = vmatprep.mubr.f32.mxu0 0.0
        %4819 = vmatmul.mubr.f32.gmra.mrb[0].mxu0 %v4677
        %v4820 = vpop.f32.mrb[0].mxu0
        %v4821 = vadd.f32 0.0, %v4820
        %v4822 = vpop.f32.mrb[0].mxu0
        %4823 = vmatprep.mubr.f32.mxu0 0.0
        %4824 = vmatmul.mubr.f32.gmra.mrb[0].mxu0 %v4679
        %v4825 = vpop.f32.mrb[0].mxu0
        %v4826 = vadd.f32 0.0, %v4825
        %v4827 = vpop.f32.mrb[0].mxu0
        %4828 = vdwg.mxu0
        %4829 = vst [vmem:[#allocation3 + $0x380] sm:$0xff] %v4751
        %4830 = vst [vmem:[#allocation3 + $0x388] sm:$0xff] %v4756
        %4831 = vst [vmem:[#allocation3 + $0x390] sm:$0xff] %v4761
        %4832 = vst [vmem:[#allocation3 + $0x398] sm:$0xff] %v4766
        %4833 = vst [vmem:[#allocation3 + $0x3a0] sm:$0xff] %v4771
        %4834 = vst [vmem:[#allocation3 + $0x3a8] sm:$0xff] %v4776
        %4835 = vst [vmem:[#allocation3 + $0x3b0] sm:$0xff] %v4781
        %4836 = vst [vmem:[#allocation3 + $0x3b8] sm:$0xff] %v4786
        %4837 = vst [vmem:[#allocation3 + $0x3c0] sm:$0xff] %v4791
        %4838 = vst [vmem:[#allocation3 + $0x3c8] sm:$0xff] %v4796
        %4839 = vst [vmem:[#allocation3 + $0x3d0] sm:$0xff] %v4801
        %4840 = vst [vmem:[#allocation3 + $0x3d8] sm:$0xff] %v4806
        %4841 = vst [vmem:[#allocation3 + $0x3e0] sm:$0xff] %v4811
        %4842 = vst [vmem:[#allocation3 + $0x3e8] sm:$0xff] %v4816
        %4843 = vst [vmem:[#allocation3 + $0x3f0] sm:$0xff] %v4821
        %4844 = vst [vmem:[#allocation3 + $0x3f8] sm:$0xff] %v4826
        %v4845 = vld [vmem:[%s3] sm:$0xff]
        %v4846 = vld [vmem:[%s3 + $0x10] sm:$0xff]
        %v4847 = vld [vmem:[%s3 + $0x20] sm:$0xff]
        %v4848 = vld [vmem:[%s3 + $0x30] sm:$0xff]
        %v4849 = vld [vmem:[%s3 + $0x40] sm:$0xff]
        %v4850 = vld [vmem:[%s3 + $0x50] sm:$0xff]
        %v4851 = vld [vmem:[%s3 + $0x60] sm:$0xff]
        %v4852 = vld [vmem:[%s3 + $0x70] sm:$0xff]
        %v4853 = vld [vmem:[%s3 + $0x80] sm:$0xff]
        %v4854 = vld [vmem:[%s3 + $0x90] sm:$0xff]
        %v4855 = vld [vmem:[%s3 + $0xa0] sm:$0xff]
        %v4856 = vld [vmem:[%s3 + $0xb0] sm:$0xff]
        %v4857 = vld [vmem:[%s3 + $0xc0] sm:$0xff]
        %v4858 = vld [vmem:[%s3 + $0xd0] sm:$0xff]
        %v4859 = vld [vmem:[%s3 + $0xe0] sm:$0xff]
        %v4860 = vld [vmem:[%s3 + $0xf0] sm:$0xff]
        %v4861 = vld [vmem:[%s296 + $0x30] sm:$0x3f]
        %4878 = vrot.lane.b32.xlu0 %v4845, 80
        %v4879 = vpop.permute.xlu0 %4878
        %4880 = vrot.lane.b32.xlu0 %v4846, 80
        %v4881 = vpop.permute.xlu0 %4880
        %4882 = vrot.lane.b32.xlu0 %v4847, 80
        %v4883 = vpop.permute.xlu0 %4882
        %4884 = vrot.lane.b32.xlu0 %v4848, 80
        %v4885 = vpop.permute.xlu0 %4884
        %4886 = vrot.lane.b32.xlu0 %v4849, 80
        %v4887 = vpop.permute.xlu0 %4886
        %4888 = vrot.lane.b32.xlu0 %v4850, 80
        %v4889 = vpop.permute.xlu0 %4888
        %4890 = vrot.lane.b32.xlu0 %v4851, 80
        %v4891 = vpop.permute.xlu0 %4890
        %4892 = vrot.lane.b32.xlu0 %v4852, 80
        %v4893 = vpop.permute.xlu0 %4892
        %4894 = vrot.lane.b32.xlu0 %v4853, 80
        %v4895 = vpop.permute.xlu0 %4894
        %4896 = vrot.lane.b32.xlu0 %v4854, 80
        %v4897 = vpop.permute.xlu0 %4896
        %4898 = vrot.lane.b32.xlu0 %v4855, 80
        %v4899 = vpop.permute.xlu0 %4898
        %4900 = vrot.lane.b32.xlu0 %v4856, 80
        %v4901 = vpop.permute.xlu0 %4900
        %4902 = vrot.lane.b32.xlu0 %v4857, 80
        %v4903 = vpop.permute.xlu0 %4902
        %4904 = vrot.lane.b32.xlu0 %v4858, 80
        %v4905 = vpop.permute.xlu0 %4904
        %4906 = vrot.lane.b32.xlu0 %v4859, 80
        %v4907 = vpop.permute.xlu0 %4906
        %4908 = vrot.lane.b32.xlu0 %v4860, 80
        %v4909 = vpop.permute.xlu0 %4908
        %v4910 = vsel %vm2804, %v4879, 0
        %v4912 = vsel %vm2804, %v4881, 0
        %v4914 = vsel %vm2804, %v4883, 0
        %v4916 = vsel %vm2804, %v4885, 0
        %v4918 = vsel %vm2804, %v4887, 0
        %v4920 = vsel %vm2804, %v4889, 0
        %v4922 = vsel %vm2804, %v4891, 0
        %v4924 = vsel %vm2804, %v4893, 0
        %v4926 = vsel %vm2804, %v4895, 0
        %v4928 = vsel %vm2804, %v4897, 0
        %v4930 = vsel %vm2804, %v4899, 0
        %v4932 = vsel %vm2804, %v4901, 0
        %v4934 = vsel %vm2804, %v4903, 0
        %v4936 = vsel %vm2804, %v4905, 0
        %v4938 = vsel %vm2804, %v4907, 0
        %v4940 = vsel %vm2804, %v4909, 0
        %v4943 = vsel %vm2853, %v4861, 0
        %4945 = vmatprep.subr.mxu0 0.0
        %4946 = vmatpush1.msra.mxu0 %v4943
        %4947 = vmatprep.subr.mxu0 0.0
        %4948 = vmatpush1.msra.mxu0 0.0
        %4949 = vmatprep.subr.mxu0 0.0
        %4950 = vmatpush1.msra.mxu0 0.0
        %4951 = vmatprep.subr.mxu0 0.0
        %4952 = vmatpush1.msra.mxu0 0.0
        %4953 = vmatprep.subr.mxu0 0.0
        %4954 = vmatpush1.msra.mxu0 0.0
        %4955 = vmatprep.subr.mxu0 0.0
        %4956 = vmatpush1.msra.mxu0 0.0
        %4957 = vmatprep.subr.mxu0 0.0
        %4958 = vmatpush1.msra.mxu0 0.0
        %4959 = vmatprep.subr.mxu0 0.0
        %4960 = vmatpush1.msra.mxu0 0.0
        %4961 = vmatprep.subr.mxu0 0.0
        %4962 = vmatpush1.msra.mxu0 0.0
        %4963 = vmatprep.subr.mxu0 0.0
        %4964 = vmatpush1.msra.mxu0 0.0
        %4965 = vmatprep.subr.mxu0 0.0
        %4966 = vmatpush1.msra.mxu0 0.0
        %4967 = vmatprep.subr.mxu0 0.0
        %4968 = vmatpush1.msra.mxu0 0.0
        %4969 = vmatprep.subr.mxu0 0.0
        %4970 = vmatpush1.msra.mxu0 0.0
        %4971 = vmatprep.subr.mxu0 0.0
        %4972 = vmatpush1.msra.mxu0 0.0
        %4973 = vmatprep.subr.mxu0 0.0
        %4974 = vmatpush1.msra.mxu0 0.0
        %4975 = vmatprep.subr.mxu0 0.0
        %4976 = vmatpush1.msra.mxu0 0.0
        %4977 = vmatprep.subr.mxu0 0.0
        %4978 = vmatpush1.msra.mxu0 0.0
        %4979 = vmatprep.subr.mxu0 0.0
        %4980 = vmatpush1.msra.mxu0 0.0
        %4981 = vmatprep.subr.mxu0 0.0
        %4982 = vmatpush1.msra.mxu0 0.0
        %4983 = vmatprep.subr.mxu0 0.0
        %4984 = vmatpush1.msra.mxu0 0.0
        %4985 = vmatprep.subr.mxu0 0.0
        %4986 = vmatpush1.msra.mxu0 0.0
        %4987 = vmatprep.subr.mxu0 0.0
        %4988 = vmatpush1.msra.mxu0 0.0
        %4989 = vmatprep.subr.mxu0 0.0
        %4990 = vmatpush1.msra.mxu0 0.0
        %4991 = vmatprep.subr.mxu0 0.0
        %4992 = vmatpush1.msra.mxu0 0.0
        %4993 = vmatprep.subr.mxu0 0.0
        %4994 = vmatpush1.msra.mxu0 0.0
        %4995 = vmatprep.subr.mxu0 0.0
        %4996 = vmatpush1.msra.mxu0 0.0
        %4997 = vmatprep.subr.mxu0 0.0
        %4998 = vmatpush1.msra.mxu0 0.0
        %4999 = vmatprep.subr.mxu0 0.0
        %5000 = vmatpush1.msra.mxu0 0.0
        %5001 = vmatprep.subr.mxu0 0.0
        %5002 = vmatpush1.msra.mxu0 0.0
        %5003 = vmatprep.subr.mxu0 0.0
        %5004 = vmatpush1.msra.mxu0 0.0
        %5005 = vmatprep.subr.mxu0 0.0
        %5006 = vmatpush1.msra.mxu0 0.0
        %5007 = vmatprep.subr.mxu0 0.0
        %5008 = vmatpush1.msra.mxu0 0.0
        %5009 = vmatprep.mubr.f32.mxu0 0.0
        %5010 = vmatmul.mubr.f32.gmra.mrb[0].mxu0 %v4910
        %v5011 = vpop.f32.mrb[0].mxu0
        %v5012 = vadd.f32 0.0, %v5011
        %v5013 = vpop.f32.mrb[0].mxu0
        %5014 = vmatprep.mubr.f32.mxu0 0.0
        %5015 = vmatmul.mubr.f32.gmra.mrb[0].mxu0 %v4912
        %v5016 = vpop.f32.mrb[0].mxu0
        %v5017 = vadd.f32 0.0, %v5016
        %v5018 = vpop.f32.mrb[0].mxu0
        %5019 = vmatprep.mubr.f32.mxu0 0.0
        %5020 = vmatmul.mubr.f32.gmra.mrb[0].mxu0 %v4914
        %v5021 = vpop.f32.mrb[0].mxu0
        %v5022 = vadd.f32 0.0, %v5021
        %v5023 = vpop.f32.mrb[0].mxu0
        %5024 = vmatprep.mubr.f32.mxu0 0.0
        %5025 = vmatmul.mubr.f32.gmra.mrb[0].mxu0 %v4916
        %v5026 = vpop.f32.mrb[0].mxu0
        %v5027 = vadd.f32 0.0, %v5026
        %v5028 = vpop.f32.mrb[0].mxu0
        %5029 = vmatprep.mubr.f32.mxu0 0.0
        %5030 = vmatmul.mubr.f32.gmra.mrb[0].mxu0 %v4918
        %v5031 = vpop.f32.mrb[0].mxu0
        %v5032 = vadd.f32 0.0, %v5031
        %v5033 = vpop.f32.mrb[0].mxu0
        %5034 = vmatprep.mubr.f32.mxu0 0.0
        %5035 = vmatmul.mubr.f32.gmra.mrb[0].mxu0 %v4920
        %v5036 = vpop.f32.mrb[0].mxu0
        %v5037 = vadd.f32 0.0, %v5036
        %v5038 = vpop.f32.mrb[0].mxu0
        %5039 = vmatprep.mubr.f32.mxu0 0.0
        %5040 = vmatmul.mubr.f32.gmra.mrb[0].mxu0 %v4922
        %v5041 = vpop.f32.mrb[0].mxu0
        %v5042 = vadd.f32 0.0, %v5041
        %v5043 = vpop.f32.mrb[0].mxu0
        %5044 = vmatprep.mubr.f32.mxu0 0.0
        %5045 = vmatmul.mubr.f32.gmra.mrb[0].mxu0 %v4924
        %v5046 = vpop.f32.mrb[0].mxu0
        %v5047 = vadd.f32 0.0, %v5046
        %v5048 = vpop.f32.mrb[0].mxu0
        %5049 = vmatprep.mubr.f32.mxu0 0.0
        %5050 = vmatmul.mubr.f32.gmra.mrb[0].mxu0 %v4926
        %v5051 = vpop.f32.mrb[0].mxu0
        %v5052 = vadd.f32 0.0, %v5051
        %v5053 = vpop.f32.mrb[0].mxu0
        %5054 = vmatprep.mubr.f32.mxu0 0.0
        %5055 = vmatmul.mubr.f32.gmra.mrb[0].mxu0 %v4928
        %v5056 = vpop.f32.mrb[0].mxu0
        %v5057 = vadd.f32 0.0, %v5056
        %v5058 = vpop.f32.mrb[0].mxu0
        %5059 = vmatprep.mubr.f32.mxu0 0.0
        %5060 = vmatmul.mubr.f32.gmra.mrb[0].mxu0 %v4930
        %v5061 = vpop.f32.mrb[0].mxu0
        %v5062 = vadd.f32 0.0, %v5061
        %v5063 = vpop.f32.mrb[0].mxu0
        %5064 = vmatprep.mubr.f32.mxu0 0.0
        %5065 = vmatmul.mubr.f32.gmra.mrb[0].mxu0 %v4932
        %v5066 = vpop.f32.mrb[0].mxu0
        %v5067 = vadd.f32 0.0, %v5066
        %v5068 = vpop.f32.mrb[0].mxu0
        %5069 = vmatprep.mubr.f32.mxu0 0.0
        %5070 = vmatmul.mubr.f32.gmra.mrb[0].mxu0 %v4934
        %v5071 = vpop.f32.mrb[0].mxu0
        %v5072 = vadd.f32 0.0, %v5071
        %v5073 = vpop.f32.mrb[0].mxu0
        %5074 = vmatprep.mubr.f32.mxu0 0.0
        %5075 = vmatmul.mubr.f32.gmra.mrb[0].mxu0 %v4936
        %v5076 = vpop.f32.mrb[0].mxu0
        %v5077 = vadd.f32 0.0, %v5076
        %v5078 = vpop.f32.mrb[0].mxu0
        %5079 = vmatprep.mubr.f32.mxu0 0.0
        %5080 = vmatmul.mubr.f32.gmra.mrb[0].mxu0 %v4938
        %v5081 = vpop.f32.mrb[0].mxu0
        %v5082 = vadd.f32 0.0, %v5081
        %v5083 = vpop.f32.mrb[0].mxu0
        %5084 = vmatprep.mubr.f32.mxu0 0.0
        %5085 = vmatmul.mubr.f32.gmra.mrb[0].mxu0 %v4940
        %v5086 = vpop.f32.mrb[0].mxu0
        %v5087 = vadd.f32 0.0, %v5086
        %v5088 = vpop.f32.mrb[0].mxu0
        %5089 = vdwg.mxu0
        %5090 = vst [vmem:[#allocation3 + $0x400] sm:$0xff] %v5012
        %5091 = vst [vmem:[#allocation3 + $0x408] sm:$0xff] %v5017
        %5092 = vst [vmem:[#allocation3 + $0x410] sm:$0xff] %v5022
        %5093 = vst [vmem:[#allocation3 + $0x418] sm:$0xff] %v5027
        %5094 = vst [vmem:[#allocation3 + $0x420] sm:$0xff] %v5032
        %5095 = vst [vmem:[#allocation3 + $0x428] sm:$0xff] %v5037
        %5096 = vst [vmem:[#allocation3 + $0x430] sm:$0xff] %v5042
        %5097 = vst [vmem:[#allocation3 + $0x438] sm:$0xff] %v5047
        %5098 = vst [vmem:[#allocation3 + $0x440] sm:$0xff] %v5052
        %5099 = vst [vmem:[#allocation3 + $0x448] sm:$0xff] %v5057
        %5100 = vst [vmem:[#allocation3 + $0x450] sm:$0xff] %v5062
        %5101 = vst [vmem:[#allocation3 + $0x458] sm:$0xff] %v5067
        %5102 = vst [vmem:[#allocation3 + $0x460] sm:$0xff] %v5072
        %5103 = vst [vmem:[#allocation3 + $0x468] sm:$0xff] %v5077
        %5104 = vst [vmem:[#allocation3 + $0x470] sm:$0xff] %v5082
        %5105 = vst [vmem:[#allocation3 + $0x478] sm:$0xff] %v5087
        %v5106 = vld [vmem:[%s3] sm:$0xff]
        %v5107 = vld [vmem:[%s3 + $0x10] sm:$0xff]
        %v5108 = vld [vmem:[%s3 + $0x20] sm:$0xff]
        %v5109 = vld [vmem:[%s3 + $0x30] sm:$0xff]
        %v5110 = vld [vmem:[%s3 + $0x40] sm:$0xff]
        %v5111 = vld [vmem:[%s3 + $0x50] sm:$0xff]
        %v5112 = vld [vmem:[%s3 + $0x60] sm:$0xff]
        %v5113 = vld [vmem:[%s3 + $0x70] sm:$0xff]
        %v5114 = vld [vmem:[%s3 + $0x80] sm:$0xff]
        %v5115 = vld [vmem:[%s3 + $0x90] sm:$0xff]
        %v5116 = vld [vmem:[%s3 + $0xa0] sm:$0xff]
        %v5117 = vld [vmem:[%s3 + $0xb0] sm:$0xff]
        %v5118 = vld [vmem:[%s3 + $0xc0] sm:$0xff]
        %v5119 = vld [vmem:[%s3 + $0xd0] sm:$0xff]
        %v5120 = vld [vmem:[%s3 + $0xe0] sm:$0xff]
        %v5121 = vld [vmem:[%s3 + $0xf0] sm:$0xff]
        %v5122 = vld [vmem:[%s296 + $0x36] sm:$0x3f]
        %5139 = vrot.lane.b32.xlu0 %v5106, 74
        %v5140 = vpop.permute.xlu0 %5139
        %5141 = vrot.lane.b32.xlu0 %v5107, 74
        %v5142 = vpop.permute.xlu0 %5141
        %5143 = vrot.lane.b32.xlu0 %v5108, 74
        %v5144 = vpop.permute.xlu0 %5143
        %5145 = vrot.lane.b32.xlu0 %v5109, 74
        %v5146 = vpop.permute.xlu0 %5145
        %5147 = vrot.lane.b32.xlu0 %v5110, 74
        %v5148 = vpop.permute.xlu0 %5147
        %5149 = vrot.lane.b32.xlu0 %v5111, 74
        %v5150 = vpop.permute.xlu0 %5149
        %5151 = vrot.lane.b32.xlu0 %v5112, 74
        %v5152 = vpop.permute.xlu0 %5151
        %5153 = vrot.lane.b32.xlu0 %v5113, 74
        %v5154 = vpop.permute.xlu0 %5153
        %5155 = vrot.lane.b32.xlu0 %v5114, 74
        %v5156 = vpop.permute.xlu0 %5155
        %5157 = vrot.lane.b32.xlu0 %v5115, 74
        %v5158 = vpop.permute.xlu0 %5157
        %5159 = vrot.lane.b32.xlu0 %v5116, 74
        %v5160 = vpop.permute.xlu0 %5159
        %5161 = vrot.lane.b32.xlu0 %v5117, 74
        %v5162 = vpop.permute.xlu0 %5161
        %5163 = vrot.lane.b32.xlu0 %v5118, 74
        %v5164 = vpop.permute.xlu0 %5163
        %5165 = vrot.lane.b32.xlu0 %v5119, 74
        %v5166 = vpop.permute.xlu0 %5165
        %5167 = vrot.lane.b32.xlu0 %v5120, 74
        %v5168 = vpop.permute.xlu0 %5167
        %5169 = vrot.lane.b32.xlu0 %v5121, 74
        %v5170 = vpop.permute.xlu0 %5169
        %v5171 = vsel %vm2804, %v5140, 0
        %v5173 = vsel %vm2804, %v5142, 0
        %v5175 = vsel %vm2804, %v5144, 0
        %v5177 = vsel %vm2804, %v5146, 0
        %v5179 = vsel %vm2804, %v5148, 0
        %v5181 = vsel %vm2804, %v5150, 0
        %v5183 = vsel %vm2804, %v5152, 0
        %v5185 = vsel %vm2804, %v5154, 0
        %v5187 = vsel %vm2804, %v5156, 0
        %v5189 = vsel %vm2804, %v5158, 0
        %v5191 = vsel %vm2804, %v5160, 0
        %v5193 = vsel %vm2804, %v5162, 0
        %v5195 = vsel %vm2804, %v5164, 0
        %v5197 = vsel %vm2804, %v5166, 0
        %v5199 = vsel %vm2804, %v5168, 0
        %v5201 = vsel %vm2804, %v5170, 0
        %v5204 = vsel %vm2853, %v5122, 0
        %5206 = vmatprep.subr.mxu0 0.0
        %5207 = vmatpush1.msra.mxu0 %v5204
        %5208 = vmatprep.subr.mxu0 0.0
        %5209 = vmatpush1.msra.mxu0 0.0
        %5210 = vmatprep.subr.mxu0 0.0
        %5211 = vmatpush1.msra.mxu0 0.0
        %5212 = vmatprep.subr.mxu0 0.0
        %5213 = vmatpush1.msra.mxu0 0.0
        %5214 = vmatprep.subr.mxu0 0.0
        %5215 = vmatpush1.msra.mxu0 0.0
        %5216 = vmatprep.subr.mxu0 0.0
        %5217 = vmatpush1.msra.mxu0 0.0
        %5218 = vmatprep.subr.mxu0 0.0
        %5219 = vmatpush1.msra.mxu0 0.0
        %5220 = vmatprep.subr.mxu0 0.0
        %5221 = vmatpush1.msra.mxu0 0.0
        %5222 = vmatprep.subr.mxu0 0.0
        %5223 = vmatpush1.msra.mxu0 0.0
        %5224 = vmatprep.subr.mxu0 0.0
        %5225 = vmatpush1.msra.mxu0 0.0
        %5226 = vmatprep.subr.mxu0 0.0
        %5227 = vmatpush1.msra.mxu0 0.0
        %5228 = vmatprep.subr.mxu0 0.0
        %5229 = vmatpush1.msra.mxu0 0.0
        %5230 = vmatprep.subr.mxu0 0.0
        %5231 = vmatpush1.msra.mxu0 0.0
        %5232 = vmatprep.subr.mxu0 0.0
        %5233 = vmatpush1.msra.mxu0 0.0
        %5234 = vmatprep.subr.mxu0 0.0
        %5235 = vmatpush1.msra.mxu0 0.0
        %5236 = vmatprep.subr.mxu0 0.0
        %5237 = vmatpush1.msra.mxu0 0.0
        %5238 = vmatprep.subr.mxu0 0.0
        %5239 = vmatpush1.msra.mxu0 0.0
        %5240 = vmatprep.subr.mxu0 0.0
        %5241 = vmatpush1.msra.mxu0 0.0
        %5242 = vmatprep.subr.mxu0 0.0
        %5243 = vmatpush1.msra.mxu0 0.0
        %5244 = vmatprep.subr.mxu0 0.0
        %5245 = vmatpush1.msra.mxu0 0.0
        %5246 = vmatprep.subr.mxu0 0.0
        %5247 = vmatpush1.msra.mxu0 0.0
        %5248 = vmatprep.subr.mxu0 0.0
        %5249 = vmatpush1.msra.mxu0 0.0
        %5250 = vmatprep.subr.mxu0 0.0
        %5251 = vmatpush1.msra.mxu0 0.0
        %5252 = vmatprep.subr.mxu0 0.0
        %5253 = vmatpush1.msra.mxu0 0.0
        %5254 = vmatprep.subr.mxu0 0.0
        %5255 = vmatpush1.msra.mxu0 0.0
        %5256 = vmatprep.subr.mxu0 0.0
        %5257 = vmatpush1.msra.mxu0 0.0
        %5258 = vmatprep.subr.mxu0 0.0
        %5259 = vmatpush1.msra.mxu0 0.0
        %5260 = vmatprep.subr.mxu0 0.0
        %5261 = vmatpush1.msra.mxu0 0.0
        %5262 = vmatprep.subr.mxu0 0.0
        %5263 = vmatpush1.msra.mxu0 0.0
        %5264 = vmatprep.subr.mxu0 0.0
        %5265 = vmatpush1.msra.mxu0 0.0
        %5266 = vmatprep.subr.mxu0 0.0
        %5267 = vmatpush1.msra.mxu0 0.0
        %5268 = vmatprep.subr.mxu0 0.0
        %5269 = vmatpush1.msra.mxu0 0.0
        %5270 = vmatprep.mubr.f32.mxu0 0.0
        %5271 = vmatmul.mubr.f32.gmra.mrb[0].mxu0 %v5171
        %v5272 = vpop.f32.mrb[0].mxu0
        %v5273 = vadd.f32 0.0, %v5272
        %v5274 = vpop.f32.mrb[0].mxu0
        %5275 = vmatprep.mubr.f32.mxu0 0.0
        %5276 = vmatmul.mubr.f32.gmra.mrb[0].mxu0 %v5173
        %v5277 = vpop.f32.mrb[0].mxu0
        %v5278 = vadd.f32 0.0, %v5277
        %v5279 = vpop.f32.mrb[0].mxu0
        %5280 = vmatprep.mubr.f32.mxu0 0.0
        %5281 = vmatmul.mubr.f32.gmra.mrb[0].mxu0 %v5175
        %v5282 = vpop.f32.mrb[0].mxu0
        %v5283 = vadd.f32 0.0, %v5282
        %v5284 = vpop.f32.mrb[0].mxu0
        %5285 = vmatprep.mubr.f32.mxu0 0.0
        %5286 = vmatmul.mubr.f32.gmra.mrb[0].mxu0 %v5177
        %v5287 = vpop.f32.mrb[0].mxu0
        %v5288 = vadd.f32 0.0, %v5287
        %v5289 = vpop.f32.mrb[0].mxu0
        %5290 = vmatprep.mubr.f32.mxu0 0.0
        %5291 = vmatmul.mubr.f32.gmra.mrb[0].mxu0 %v5179
        %v5292 = vpop.f32.mrb[0].mxu0
        %v5293 = vadd.f32 0.0, %v5292
        %v5294 = vpop.f32.mrb[0].mxu0
        %5295 = vmatprep.mubr.f32.mxu0 0.0
        %5296 = vmatmul.mubr.f32.gmra.mrb[0].mxu0 %v5181
        %v5297 = vpop.f32.mrb[0].mxu0
        %v5298 = vadd.f32 0.0, %v5297
        %v5299 = vpop.f32.mrb[0].mxu0
        %5300 = vmatprep.mubr.f32.mxu0 0.0
        %5301 = vmatmul.mubr.f32.gmra.mrb[0].mxu0 %v5183
        %v5302 = vpop.f32.mrb[0].mxu0
        %v5303 = vadd.f32 0.0, %v5302
        %v5304 = vpop.f32.mrb[0].mxu0
        %5305 = vmatprep.mubr.f32.mxu0 0.0
        %5306 = vmatmul.mubr.f32.gmra.mrb[0].mxu0 %v5185
        %v5307 = vpop.f32.mrb[0].mxu0
        %v5308 = vadd.f32 0.0, %v5307
        %v5309 = vpop.f32.mrb[0].mxu0
        %5310 = vmatprep.mubr.f32.mxu0 0.0
        %5311 = vmatmul.mubr.f32.gmra.mrb[0].mxu0 %v5187
        %v5312 = vpop.f32.mrb[0].mxu0
        %v5313 = vadd.f32 0.0, %v5312
        %v5314 = vpop.f32.mrb[0].mxu0
        %5315 = vmatprep.mubr.f32.mxu0 0.0
        %5316 = vmatmul.mubr.f32.gmra.mrb[0].mxu0 %v5189
        %v5317 = vpop.f32.mrb[0].mxu0
        %v5318 = vadd.f32 0.0, %v5317
        %v5319 = vpop.f32.mrb[0].mxu0
        %5320 = vmatprep.mubr.f32.mxu0 0.0
        %5321 = vmatmul.mubr.f32.gmra.mrb[0].mxu0 %v5191
        %v5322 = vpop.f32.mrb[0].mxu0
        %v5323 = vadd.f32 0.0, %v5322
        %v5324 = vpop.f32.mrb[0].mxu0
        %5325 = vmatprep.mubr.f32.mxu0 0.0
        %5326 = vmatmul.mubr.f32.gmra.mrb[0].mxu0 %v5193
        %v5327 = vpop.f32.mrb[0].mxu0
        %v5328 = vadd.f32 0.0, %v5327
        %v5329 = vpop.f32.mrb[0].mxu0
        %5330 = vmatprep.mubr.f32.mxu0 0.0
        %5331 = vmatmul.mubr.f32.gmra.mrb[0].mxu0 %v5195
        %v5332 = vpop.f32.mrb[0].mxu0
        %v5333 = vadd.f32 0.0, %v5332
        %v5334 = vpop.f32.mrb[0].mxu0
        %5335 = vmatprep.mubr.f32.mxu0 0.0
        %5336 = vmatmul.mubr.f32.gmra.mrb[0].mxu0 %v5197
        %v5337 = vpop.f32.mrb[0].mxu0
        %v5338 = vadd.f32 0.0, %v5337
        %v5339 = vpop.f32.mrb[0].mxu0
        %5340 = vmatprep.mubr.f32.mxu0 0.0
        %5341 = vmatmul.mubr.f32.gmra.mrb[0].mxu0 %v5199
        %v5342 = vpop.f32.mrb[0].mxu0
        %v5343 = vadd.f32 0.0, %v5342
        %v5344 = vpop.f32.mrb[0].mxu0
        %5345 = vmatprep.mubr.f32.mxu0 0.0
        %5346 = vmatmul.mubr.f32.gmra.mrb[0].mxu0 %v5201
        %v5347 = vpop.f32.mrb[0].mxu0
        %v5348 = vadd.f32 0.0, %v5347
        %v5349 = vpop.f32.mrb[0].mxu0
        %5350 = vdwg.mxu0
        %5351 = vst [vmem:[#allocation3 + $0x480] sm:$0xff] %v5273
        %5352 = vst [vmem:[#allocation3 + $0x488] sm:$0xff] %v5278
        %5353 = vst [vmem:[#allocation3 + $0x490] sm:$0xff] %v5283
        %5354 = vst [vmem:[#allocation3 + $0x498] sm:$0xff] %v5288
        %5355 = vst [vmem:[#allocation3 + $0x4a0] sm:$0xff] %v5293
        %5356 = vst [vmem:[#allocation3 + $0x4a8] sm:$0xff] %v5298
        %5357 = vst [vmem:[#allocation3 + $0x4b0] sm:$0xff] %v5303
        %5358 = vst [vmem:[#allocation3 + $0x4b8] sm:$0xff] %v5308
        %5359 = vst [vmem:[#allocation3 + $0x4c0] sm:$0xff] %v5313
        %5360 = vst [vmem:[#allocation3 + $0x4c8] sm:$0xff] %v5318
        %5361 = vst [vmem:[#allocation3 + $0x4d0] sm:$0xff] %v5323
        %5362 = vst [vmem:[#allocation3 + $0x4d8] sm:$0xff] %v5328
        %5363 = vst [vmem:[#allocation3 + $0x4e0] sm:$0xff] %v5333
        %5364 = vst [vmem:[#allocation3 + $0x4e8] sm:$0xff] %v5338
        %5365 = vst [vmem:[#allocation3 + $0x4f0] sm:$0xff] %v5343
        %5366 = vst [vmem:[#allocation3 + $0x4f8] sm:$0xff] %v5348
        %v5367 = vld [vmem:[%s3] sm:$0xff]
        %v5368 = vld [vmem:[%s3 + $0x10] sm:$0xff]
        %v5369 = vld [vmem:[%s3 + $0x20] sm:$0xff]
        %v5370 = vld [vmem:[%s3 + $0x30] sm:$0xff]
        %v5371 = vld [vmem:[%s3 + $0x40] sm:$0xff]
        %v5372 = vld [vmem:[%s3 + $0x50] sm:$0xff]
        %v5373 = vld [vmem:[%s3 + $0x60] sm:$0xff]
        %v5374 = vld [vmem:[%s3 + $0x70] sm:$0xff]
        %v5375 = vld [vmem:[%s3 + $0x80] sm:$0xff]
        %v5376 = vld [vmem:[%s3 + $0x90] sm:$0xff]
        %v5377 = vld [vmem:[%s3 + $0xa0] sm:$0xff]
        %v5378 = vld [vmem:[%s3 + $0xb0] sm:$0xff]
        %v5379 = vld [vmem:[%s3 + $0xc0] sm:$0xff]
        %v5380 = vld [vmem:[%s3 + $0xd0] sm:$0xff]
        %v5381 = vld [vmem:[%s3 + $0xe0] sm:$0xff]
        %v5382 = vld [vmem:[%s3 + $0xf0] sm:$0xff]
        %v5383 = vld [vmem:[%s296 + $0x3c] sm:$0x3f]
        %5400 = vrot.lane.b32.xlu0 %v5367, 68
        %v5401 = vpop.permute.xlu0 %5400
        %5402 = vrot.lane.b32.xlu0 %v5368, 68
        %v5403 = vpop.permute.xlu0 %5402
        %5404 = vrot.lane.b32.xlu0 %v5369, 68
        %v5405 = vpop.permute.xlu0 %5404
        %5406 = vrot.lane.b32.xlu0 %v5370, 68
        %v5407 = vpop.permute.xlu0 %5406
        %5408 = vrot.lane.b32.xlu0 %v5371, 68
        %v5409 = vpop.permute.xlu0 %5408
        %5410 = vrot.lane.b32.xlu0 %v5372, 68
        %v5411 = vpop.permute.xlu0 %5410
        %5412 = vrot.lane.b32.xlu0 %v5373, 68
        %v5413 = vpop.permute.xlu0 %5412
        %5414 = vrot.lane.b32.xlu0 %v5374, 68
        %v5415 = vpop.permute.xlu0 %5414
        %5416 = vrot.lane.b32.xlu0 %v5375, 68
        %v5417 = vpop.permute.xlu0 %5416
        %5418 = vrot.lane.b32.xlu0 %v5376, 68
        %v5419 = vpop.permute.xlu0 %5418
        %5420 = vrot.lane.b32.xlu0 %v5377, 68
        %v5421 = vpop.permute.xlu0 %5420
        %5422 = vrot.lane.b32.xlu0 %v5378, 68
        %v5423 = vpop.permute.xlu0 %5422
        %5424 = vrot.lane.b32.xlu0 %v5379, 68
        %v5425 = vpop.permute.xlu0 %5424
        %5426 = vrot.lane.b32.xlu0 %v5380, 68
        %v5427 = vpop.permute.xlu0 %5426
        %5428 = vrot.lane.b32.xlu0 %v5381, 68
        %v5429 = vpop.permute.xlu0 %5428
        %5430 = vrot.lane.b32.xlu0 %v5382, 68
        %v5431 = vpop.permute.xlu0 %5430
        %v5432 = vsel %vm2804, %v5401, 0
        %v5434 = vsel %vm2804, %v5403, 0
        %v5436 = vsel %vm2804, %v5405, 0
        %v5438 = vsel %vm2804, %v5407, 0
        %v5440 = vsel %vm2804, %v5409, 0
        %v5442 = vsel %vm2804, %v5411, 0
        %v5444 = vsel %vm2804, %v5413, 0
        %v5446 = vsel %vm2804, %v5415, 0
        %v5448 = vsel %vm2804, %v5417, 0
        %v5450 = vsel %vm2804, %v5419, 0
        %v5452 = vsel %vm2804, %v5421, 0
        %v5454 = vsel %vm2804, %v5423, 0
        %v5456 = vsel %vm2804, %v5425, 0
        %v5458 = vsel %vm2804, %v5427, 0
        %v5460 = vsel %vm2804, %v5429, 0
        %v5462 = vsel %vm2804, %v5431, 0
        %v5465 = vsel %vm2853, %v5383, 0
        %5467 = vmatprep.subr.mxu0 0.0
        %5468 = vmatpush1.msra.mxu0 %v5465
        %5469 = vmatprep.subr.mxu0 0.0
        %5470 = vmatpush1.msra.mxu0 0.0
        %5471 = vmatprep.subr.mxu0 0.0
        %5472 = vmatpush1.msra.mxu0 0.0
        %5473 = vmatprep.subr.mxu0 0.0
        %5474 = vmatpush1.msra.mxu0 0.0
        %5475 = vmatprep.subr.mxu0 0.0
        %5476 = vmatpush1.msra.mxu0 0.0
        %5477 = vmatprep.subr.mxu0 0.0
        %5478 = vmatpush1.msra.mxu0 0.0
        %5479 = vmatprep.subr.mxu0 0.0
        %5480 = vmatpush1.msra.mxu0 0.0
        %5481 = vmatprep.subr.mxu0 0.0
        %5482 = vmatpush1.msra.mxu0 0.0
        %5483 = vmatprep.subr.mxu0 0.0
        %5484 = vmatpush1.msra.mxu0 0.0
        %5485 = vmatprep.subr.mxu0 0.0
        %5486 = vmatpush1.msra.mxu0 0.0
        %5487 = vmatprep.subr.mxu0 0.0
        %5488 = vmatpush1.msra.mxu0 0.0
        %5489 = vmatprep.subr.mxu0 0.0
        %5490 = vmatpush1.msra.mxu0 0.0
        %5491 = vmatprep.subr.mxu0 0.0
        %5492 = vmatpush1.msra.mxu0 0.0
        %5493 = vmatprep.subr.mxu0 0.0
        %5494 = vmatpush1.msra.mxu0 0.0
        %5495 = vmatprep.subr.mxu0 0.0
        %5496 = vmatpush1.msra.mxu0 0.0
        %5497 = vmatprep.subr.mxu0 0.0
        %5498 = vmatpush1.msra.mxu0 0.0
        %5499 = vmatprep.subr.mxu0 0.0
        %5500 = vmatpush1.msra.mxu0 0.0
        %5501 = vmatprep.subr.mxu0 0.0
        %5502 = vmatpush1.msra.mxu0 0.0
        %5503 = vmatprep.subr.mxu0 0.0
        %5504 = vmatpush1.msra.mxu0 0.0
        %5505 = vmatprep.subr.mxu0 0.0
        %5506 = vmatpush1.msra.mxu0 0.0
        %5507 = vmatprep.subr.mxu0 0.0
        %5508 = vmatpush1.msra.mxu0 0.0
        %5509 = vmatprep.subr.mxu0 0.0
        %5510 = vmatpush1.msra.mxu0 0.0
        %5511 = vmatprep.subr.mxu0 0.0
        %5512 = vmatpush1.msra.mxu0 0.0
        %5513 = vmatprep.subr.mxu0 0.0
        %5514 = vmatpush1.msra.mxu0 0.0
        %5515 = vmatprep.subr.mxu0 0.0
        %5516 = vmatpush1.msra.mxu0 0.0
        %5517 = vmatprep.subr.mxu0 0.0
        %5518 = vmatpush1.msra.mxu0 0.0
        %5519 = vmatprep.subr.mxu0 0.0
        %5520 = vmatpush1.msra.mxu0 0.0
        %5521 = vmatprep.subr.mxu0 0.0
        %5522 = vmatpush1.msra.mxu0 0.0
        %5523 = vmatprep.subr.mxu0 0.0
        %5524 = vmatpush1.msra.mxu0 0.0
        %5525 = vmatprep.subr.mxu0 0.0
        %5526 = vmatpush1.msra.mxu0 0.0
        %5527 = vmatprep.subr.mxu0 0.0
        %5528 = vmatpush1.msra.mxu0 0.0
        %5529 = vmatprep.subr.mxu0 0.0
        %5530 = vmatpush1.msra.mxu0 0.0
        %5531 = vmatprep.mubr.f32.mxu0 0.0
        %5532 = vmatmul.mubr.f32.gmra.mrb[0].mxu0 %v5432
        %v5533 = vpop.f32.mrb[0].mxu0
        %v5534 = vadd.f32 0.0, %v5533
        %v5535 = vpop.f32.mrb[0].mxu0
        %5536 = vmatprep.mubr.f32.mxu0 0.0
        %5537 = vmatmul.mubr.f32.gmra.mrb[0].mxu0 %v5434
        %v5538 = vpop.f32.mrb[0].mxu0
        %v5539 = vadd.f32 0.0, %v5538
        %v5540 = vpop.f32.mrb[0].mxu0
        %5541 = vmatprep.mubr.f32.mxu0 0.0
        %5542 = vmatmul.mubr.f32.gmra.mrb[0].mxu0 %v5436
        %v5543 = vpop.f32.mrb[0].mxu0
        %v5544 = vadd.f32 0.0, %v5543
        %v5545 = vpop.f32.mrb[0].mxu0
        %5546 = vmatprep.mubr.f32.mxu0 0.0
        %5547 = vmatmul.mubr.f32.gmra.mrb[0].mxu0 %v5438
        %v5548 = vpop.f32.mrb[0].mxu0
        %v5549 = vadd.f32 0.0, %v5548
        %v5550 = vpop.f32.mrb[0].mxu0
        %5551 = vmatprep.mubr.f32.mxu0 0.0
        %5552 = vmatmul.mubr.f32.gmra.mrb[0].mxu0 %v5440
        %v5553 = vpop.f32.mrb[0].mxu0
        %v5554 = vadd.f32 0.0, %v5553
        %v5555 = vpop.f32.mrb[0].mxu0
        %5556 = vmatprep.mubr.f32.mxu0 0.0
        %5557 = vmatmul.mubr.f32.gmra.mrb[0].mxu0 %v5442
        %v5558 = vpop.f32.mrb[0].mxu0
        %v5559 = vadd.f32 0.0, %v5558
        %v5560 = vpop.f32.mrb[0].mxu0
        %5561 = vmatprep.mubr.f32.mxu0 0.0
        %5562 = vmatmul.mubr.f32.gmra.mrb[0].mxu0 %v5444
        %v5563 = vpop.f32.mrb[0].mxu0
        %v5564 = vadd.f32 0.0, %v5563
        %v5565 = vpop.f32.mrb[0].mxu0
        %5566 = vmatprep.mubr.f32.mxu0 0.0
        %5567 = vmatmul.mubr.f32.gmra.mrb[0].mxu0 %v5446
        %v5568 = vpop.f32.mrb[0].mxu0
        %v5569 = vadd.f32 0.0, %v5568
        %v5570 = vpop.f32.mrb[0].mxu0
        %5571 = vmatprep.mubr.f32.mxu0 0.0
        %5572 = vmatmul.mubr.f32.gmra.mrb[0].mxu0 %v5448
        %v5573 = vpop.f32.mrb[0].mxu0
        %v5574 = vadd.f32 0.0, %v5573
        %v5575 = vpop.f32.mrb[0].mxu0
        %5576 = vmatprep.mubr.f32.mxu0 0.0
        %5577 = vmatmul.mubr.f32.gmra.mrb[0].mxu0 %v5450
        %v5578 = vpop.f32.mrb[0].mxu0
        %v5579 = vadd.f32 0.0, %v5578
        %v5580 = vpop.f32.mrb[0].mxu0
        %5581 = vmatprep.mubr.f32.mxu0 0.0
        %5582 = vmatmul.mubr.f32.gmra.mrb[0].mxu0 %v5452
        %v5583 = vpop.f32.mrb[0].mxu0
        %v5584 = vadd.f32 0.0, %v5583
        %v5585 = vpop.f32.mrb[0].mxu0
        %5586 = vmatprep.mubr.f32.mxu0 0.0
        %5587 = vmatmul.mubr.f32.gmra.mrb[0].mxu0 %v5454
        %v5588 = vpop.f32.mrb[0].mxu0
        %v5589 = vadd.f32 0.0, %v5588
        %v5590 = vpop.f32.mrb[0].mxu0
        %5591 = vmatprep.mubr.f32.mxu0 0.0
        %5592 = vmatmul.mubr.f32.gmra.mrb[0].mxu0 %v5456
        %v5593 = vpop.f32.mrb[0].mxu0
        %v5594 = vadd.f32 0.0, %v5593
        %v5595 = vpop.f32.mrb[0].mxu0
        %5596 = vmatprep.mubr.f32.mxu0 0.0
        %5597 = vmatmul.mubr.f32.gmra.mrb[0].mxu0 %v5458
        %v5598 = vpop.f32.mrb[0].mxu0
        %v5599 = vadd.f32 0.0, %v5598
        %v5600 = vpop.f32.mrb[0].mxu0
        %5601 = vmatprep.mubr.f32.mxu0 0.0
        %5602 = vmatmul.mubr.f32.gmra.mrb[0].mxu0 %v5460
        %v5603 = vpop.f32.mrb[0].mxu0
        %v5604 = vadd.f32 0.0, %v5603
        %v5605 = vpop.f32.mrb[0].mxu0
        %5606 = vmatprep.mubr.f32.mxu0 0.0
        %5607 = vmatmul.mubr.f32.gmra.mrb[0].mxu0 %v5462
        %v5608 = vpop.f32.mrb[0].mxu0
        %v5609 = vadd.f32 0.0, %v5608
        %v5610 = vpop.f32.mrb[0].mxu0
        %5611 = vdwg.mxu0
        %5612 = vst [vmem:[#allocation3 + $0x500] sm:$0xff] %v5534
        %5613 = vst [vmem:[#allocation3 + $0x508] sm:$0xff] %v5539
        %5614 = vst [vmem:[#allocation3 + $0x510] sm:$0xff] %v5544
        %5615 = vst [vmem:[#allocation3 + $0x518] sm:$0xff] %v5549
        %5616 = vst [vmem:[#allocation3 + $0x520] sm:$0xff] %v5554
        %5617 = vst [vmem:[#allocation3 + $0x528] sm:$0xff] %v5559
        %5618 = vst [vmem:[#allocation3 + $0x530] sm:$0xff] %v5564
        %5619 = vst [vmem:[#allocation3 + $0x538] sm:$0xff] %v5569
        %5620 = vst [vmem:[#allocation3 + $0x540] sm:$0xff] %v5574
        %5621 = vst [vmem:[#allocation3 + $0x548] sm:$0xff] %v5579
        %5622 = vst [vmem:[#allocation3 + $0x550] sm:$0xff] %v5584
        %5623 = vst [vmem:[#allocation3 + $0x558] sm:$0xff] %v5589
        %5624 = vst [vmem:[#allocation3 + $0x560] sm:$0xff] %v5594
        %5625 = vst [vmem:[#allocation3 + $0x568] sm:$0xff] %v5599
        %5626 = vst [vmem:[#allocation3 + $0x570] sm:$0xff] %v5604
        %5627 = vst [vmem:[#allocation3 + $0x578] sm:$0xff] %v5609
        %v5628 = vld [vmem:[%s3] sm:$0xff]
        %v5629 = vld [vmem:[%s3 + $0x10] sm:$0xff]
        %v5630 = vld [vmem:[%s3 + $0x20] sm:$0xff]
        %v5631 = vld [vmem:[%s3 + $0x30] sm:$0xff]
        %v5632 = vld [vmem:[%s3 + $0x40] sm:$0xff]
        %v5633 = vld [vmem:[%s3 + $0x50] sm:$0xff]
        %v5634 = vld [vmem:[%s3 + $0x60] sm:$0xff]
        %v5635 = vld [vmem:[%s3 + $0x70] sm:$0xff]
        %v5636 = vld [vmem:[%s3 + $0x80] sm:$0xff]
        %v5637 = vld [vmem:[%s3 + $0x90] sm:$0xff]
        %v5638 = vld [vmem:[%s3 + $0xa0] sm:$0xff]
        %v5639 = vld [vmem:[%s3 + $0xb0] sm:$0xff]
        %v5640 = vld [vmem:[%s3 + $0xc0] sm:$0xff]
        %v5641 = vld [vmem:[%s3 + $0xd0] sm:$0xff]
        %v5642 = vld [vmem:[%s3 + $0xe0] sm:$0xff]
        %v5643 = vld [vmem:[%s3 + $0xf0] sm:$0xff]
        %v5644 = vld [vmem:[%s296 + $0x42] sm:$0x3f]
        %5661 = vrot.lane.b32.xlu0 %v5628, 62
        %v5662 = vpop.permute.xlu0 %5661
        %5663 = vrot.lane.b32.xlu0 %v5629, 62
        %v5664 = vpop.permute.xlu0 %5663
        %5665 = vrot.lane.b32.xlu0 %v5630, 62
        %v5666 = vpop.permute.xlu0 %5665
        %5667 = vrot.lane.b32.xlu0 %v5631, 62
        %v5668 = vpop.permute.xlu0 %5667
        %5669 = vrot.lane.b32.xlu0 %v5632, 62
        %v5670 = vpop.permute.xlu0 %5669
        %5671 = vrot.lane.b32.xlu0 %v5633, 62
        %v5672 = vpop.permute.xlu0 %5671
        %5673 = vrot.lane.b32.xlu0 %v5634, 62
        %v5674 = vpop.permute.xlu0 %5673
        %5675 = vrot.lane.b32.xlu0 %v5635, 62
        %v5676 = vpop.permute.xlu0 %5675
        %5677 = vrot.lane.b32.xlu0 %v5636, 62
        %v5678 = vpop.permute.xlu0 %5677
        %5679 = vrot.lane.b32.xlu0 %v5637, 62
        %v5680 = vpop.permute.xlu0 %5679
        %5681 = vrot.lane.b32.xlu0 %v5638, 62
        %v5682 = vpop.permute.xlu0 %5681
        %5683 = vrot.lane.b32.xlu0 %v5639, 62
        %v5684 = vpop.permute.xlu0 %5683
        %5685 = vrot.lane.b32.xlu0 %v5640, 62
        %v5686 = vpop.permute.xlu0 %5685
        %5687 = vrot.lane.b32.xlu0 %v5641, 62
        %v5688 = vpop.permute.xlu0 %5687
        %5689 = vrot.lane.b32.xlu0 %v5642, 62
        %v5690 = vpop.permute.xlu0 %5689
        %5691 = vrot.lane.b32.xlu0 %v5643, 62
        %v5692 = vpop.permute.xlu0 %5691
        %v5693 = vsel %vm2804, %v5662, 0
        %v5695 = vsel %vm2804, %v5664, 0
        %v5697 = vsel %vm2804, %v5666, 0
        %v5699 = vsel %vm2804, %v5668, 0
        %v5701 = vsel %vm2804, %v5670, 0
        %v5703 = vsel %vm2804, %v5672, 0
        %v5705 = vsel %vm2804, %v5674, 0
        %v5707 = vsel %vm2804, %v5676, 0
        %v5709 = vsel %vm2804, %v5678, 0
        %v5711 = vsel %vm2804, %v5680, 0
        %v5713 = vsel %vm2804, %v5682, 0
        %v5715 = vsel %vm2804, %v5684, 0
        %v5717 = vsel %vm2804, %v5686, 0
        %v5719 = vsel %vm2804, %v5688, 0
        %v5721 = vsel %vm2804, %v5690, 0
        %v5723 = vsel %vm2804, %v5692, 0
        %v5726 = vsel %vm2853, %v5644, 0
        %5728 = vmatprep.subr.mxu0 0.0
        %5729 = vmatpush1.msra.mxu0 %v5726
        %5730 = vmatprep.subr.mxu0 0.0
        %5731 = vmatpush1.msra.mxu0 0.0
        %5732 = vmatprep.subr.mxu0 0.0
        %5733 = vmatpush1.msra.mxu0 0.0
        %5734 = vmatprep.subr.mxu0 0.0
        %5735 = vmatpush1.msra.mxu0 0.0
        %5736 = vmatprep.subr.mxu0 0.0
        %5737 = vmatpush1.msra.mxu0 0.0
        %5738 = vmatprep.subr.mxu0 0.0
        %5739 = vmatpush1.msra.mxu0 0.0
        %5740 = vmatprep.subr.mxu0 0.0
        %5741 = vmatpush1.msra.mxu0 0.0
        %5742 = vmatprep.subr.mxu0 0.0
        %5743 = vmatpush1.msra.mxu0 0.0
        %5744 = vmatprep.subr.mxu0 0.0
        %5745 = vmatpush1.msra.mxu0 0.0
        %5746 = vmatprep.subr.mxu0 0.0
        %5747 = vmatpush1.msra.mxu0 0.0
        %5748 = vmatprep.subr.mxu0 0.0
        %5749 = vmatpush1.msra.mxu0 0.0
        %5750 = vmatprep.subr.mxu0 0.0
        %5751 = vmatpush1.msra.mxu0 0.0
        %5752 = vmatprep.subr.mxu0 0.0
        %5753 = vmatpush1.msra.mxu0 0.0
        %5754 = vmatprep.subr.mxu0 0.0
        %5755 = vmatpush1.msra.mxu0 0.0
        %5756 = vmatprep.subr.mxu0 0.0
        %5757 = vmatpush1.msra.mxu0 0.0
        %5758 = vmatprep.subr.mxu0 0.0
        %5759 = vmatpush1.msra.mxu0 0.0
        %5760 = vmatprep.subr.mxu0 0.0
        %5761 = vmatpush1.msra.mxu0 0.0
        %5762 = vmatprep.subr.mxu0 0.0
        %5763 = vmatpush1.msra.mxu0 0.0
        %5764 = vmatprep.subr.mxu0 0.0
        %5765 = vmatpush1.msra.mxu0 0.0
        %5766 = vmatprep.subr.mxu0 0.0
        %5767 = vmatpush1.msra.mxu0 0.0
        %5768 = vmatprep.subr.mxu0 0.0
        %5769 = vmatpush1.msra.mxu0 0.0
        %5770 = vmatprep.subr.mxu0 0.0
        %5771 = vmatpush1.msra.mxu0 0.0
        %5772 = vmatprep.subr.mxu0 0.0
        %5773 = vmatpush1.msra.mxu0 0.0
        %5774 = vmatprep.subr.mxu0 0.0
        %5775 = vmatpush1.msra.mxu0 0.0
        %5776 = vmatprep.subr.mxu0 0.0
        %5777 = vmatpush1.msra.mxu0 0.0
        %5778 = vmatprep.subr.mxu0 0.0
        %5779 = vmatpush1.msra.mxu0 0.0
        %5780 = vmatprep.subr.mxu0 0.0
        %5781 = vmatpush1.msra.mxu0 0.0
        %5782 = vmatprep.subr.mxu0 0.0
        %5783 = vmatpush1.msra.mxu0 0.0
        %5784 = vmatprep.subr.mxu0 0.0
        %5785 = vmatpush1.msra.mxu0 0.0
        %5786 = vmatprep.subr.mxu0 0.0
        %5787 = vmatpush1.msra.mxu0 0.0
        %5788 = vmatprep.subr.mxu0 0.0
        %5789 = vmatpush1.msra.mxu0 0.0
        %5790 = vmatprep.subr.mxu0 0.0
        %5791 = vmatpush1.msra.mxu0 0.0
        %5792 = vmatprep.mubr.f32.mxu0 0.0
        %5793 = vmatmul.mubr.f32.gmra.mrb[0].mxu0 %v5693
        %v5794 = vpop.f32.mrb[0].mxu0
        %v5795 = vadd.f32 0.0, %v5794
        %v5796 = vpop.f32.mrb[0].mxu0
        %5797 = vmatprep.mubr.f32.mxu0 0.0
        %5798 = vmatmul.mubr.f32.gmra.mrb[0].mxu0 %v5695
        %v5799 = vpop.f32.mrb[0].mxu0
        %v5800 = vadd.f32 0.0, %v5799
        %v5801 = vpop.f32.mrb[0].mxu0
        %5802 = vmatprep.mubr.f32.mxu0 0.0
        %5803 = vmatmul.mubr.f32.gmra.mrb[0].mxu0 %v5697
        %v5804 = vpop.f32.mrb[0].mxu0
        %v5805 = vadd.f32 0.0, %v5804
        %v5806 = vpop.f32.mrb[0].mxu0
        %5807 = vmatprep.mubr.f32.mxu0 0.0
        %5808 = vmatmul.mubr.f32.gmra.mrb[0].mxu0 %v5699
        %v5809 = vpop.f32.mrb[0].mxu0
        %v5810 = vadd.f32 0.0, %v5809
        %v5811 = vpop.f32.mrb[0].mxu0
        %5812 = vmatprep.mubr.f32.mxu0 0.0
        %5813 = vmatmul.mubr.f32.gmra.mrb[0].mxu0 %v5701
        %v5814 = vpop.f32.mrb[0].mxu0
        %v5815 = vadd.f32 0.0, %v5814
        %v5816 = vpop.f32.mrb[0].mxu0
        %5817 = vmatprep.mubr.f32.mxu0 0.0
        %5818 = vmatmul.mubr.f32.gmra.mrb[0].mxu0 %v5703
        %v5819 = vpop.f32.mrb[0].mxu0
        %v5820 = vadd.f32 0.0, %v5819
        %v5821 = vpop.f32.mrb[0].mxu0
        %5822 = vmatprep.mubr.f32.mxu0 0.0
        %5823 = vmatmul.mubr.f32.gmra.mrb[0].mxu0 %v5705
        %v5824 = vpop.f32.mrb[0].mxu0
        %v5825 = vadd.f32 0.0, %v5824
        %v5826 = vpop.f32.mrb[0].mxu0
        %5827 = vmatprep.mubr.f32.mxu0 0.0
        %5828 = vmatmul.mubr.f32.gmra.mrb[0].mxu0 %v5707
        %v5829 = vpop.f32.mrb[0].mxu0
        %v5830 = vadd.f32 0.0, %v5829
        %v5831 = vpop.f32.mrb[0].mxu0
        %5832 = vmatprep.mubr.f32.mxu0 0.0
        %5833 = vmatmul.mubr.f32.gmra.mrb[0].mxu0 %v5709
        %v5834 = vpop.f32.mrb[0].mxu0
        %v5835 = vadd.f32 0.0, %v5834
        %v5836 = vpop.f32.mrb[0].mxu0
        %5837 = vmatprep.mubr.f32.mxu0 0.0
        %5838 = vmatmul.mubr.f32.gmra.mrb[0].mxu0 %v5711
        %v5839 = vpop.f32.mrb[0].mxu0
        %v5840 = vadd.f32 0.0, %v5839
        %v5841 = vpop.f32.mrb[0].mxu0
        %5842 = vmatprep.mubr.f32.mxu0 0.0
        %5843 = vmatmul.mubr.f32.gmra.mrb[0].mxu0 %v5713
        %v5844 = vpop.f32.mrb[0].mxu0
        %v5845 = vadd.f32 0.0, %v5844
        %v5846 = vpop.f32.mrb[0].mxu0
        %5847 = vmatprep.mubr.f32.mxu0 0.0
        %5848 = vmatmul.mubr.f32.gmra.mrb[0].mxu0 %v5715
        %v5849 = vpop.f32.mrb[0].mxu0
        %v5850 = vadd.f32 0.0, %v5849
        %v5851 = vpop.f32.mrb[0].mxu0
        %5852 = vmatprep.mubr.f32.mxu0 0.0
        %5853 = vmatmul.mubr.f32.gmra.mrb[0].mxu0 %v5717
        %v5854 = vpop.f32.mrb[0].mxu0
        %v5855 = vadd.f32 0.0, %v5854
        %v5856 = vpop.f32.mrb[0].mxu0
        %5857 = vmatprep.mubr.f32.mxu0 0.0
        %5858 = vmatmul.mubr.f32.gmra.mrb[0].mxu0 %v5719
        %v5859 = vpop.f32.mrb[0].mxu0
        %v5860 = vadd.f32 0.0, %v5859
        %v5861 = vpop.f32.mrb[0].mxu0
        %5862 = vmatprep.mubr.f32.mxu0 0.0
        %5863 = vmatmul.mubr.f32.gmra.mrb[0].mxu0 %v5721
        %v5864 = vpop.f32.mrb[0].mxu0
        %v5865 = vadd.f32 0.0, %v5864
        %v5866 = vpop.f32.mrb[0].mxu0
        %5867 = vmatprep.mubr.f32.mxu0 0.0
        %5868 = vmatmul.mubr.f32.gmra.mrb[0].mxu0 %v5723
        %v5869 = vpop.f32.mrb[0].mxu0
        %v5870 = vadd.f32 0.0, %v5869
        %v5871 = vpop.f32.mrb[0].mxu0
        %5872 = vdwg.mxu0
        %5873 = vst [vmem:[#allocation3 + $0x580] sm:$0xff] %v5795
        %5874 = vst [vmem:[#allocation3 + $0x588] sm:$0xff] %v5800
        %5875 = vst [vmem:[#allocation3 + $0x590] sm:$0xff] %v5805
        %5876 = vst [vmem:[#allocation3 + $0x598] sm:$0xff] %v5810
        %5877 = vst [vmem:[#allocation3 + $0x5a0] sm:$0xff] %v5815
        %5878 = vst [vmem:[#allocation3 + $0x5a8] sm:$0xff] %v5820
        %5879 = vst [vmem:[#allocation3 + $0x5b0] sm:$0xff] %v5825
        %5880 = vst [vmem:[#allocation3 + $0x5b8] sm:$0xff] %v5830
        %5881 = vst [vmem:[#allocation3 + $0x5c0] sm:$0xff] %v5835
        %5882 = vst [vmem:[#allocation3 + $0x5c8] sm:$0xff] %v5840
        %5883 = vst [vmem:[#allocation3 + $0x5d0] sm:$0xff] %v5845
        %5884 = vst [vmem:[#allocation3 + $0x5d8] sm:$0xff] %v5850
        %5885 = vst [vmem:[#allocation3 + $0x5e0] sm:$0xff] %v5855
        %5886 = vst [vmem:[#allocation3 + $0x5e8] sm:$0xff] %v5860
        %5887 = vst [vmem:[#allocation3 + $0x5f0] sm:$0xff] %v5865
        %5888 = vst [vmem:[#allocation3 + $0x5f8] sm:$0xff] %v5870
        %v5889 = vld [vmem:[%s3] sm:$0xff]
        %v5890 = vld [vmem:[%s3 + $0x10] sm:$0xff]
        %v5891 = vld [vmem:[%s3 + $0x20] sm:$0xff]
        %v5892 = vld [vmem:[%s3 + $0x30] sm:$0xff]
        %v5893 = vld [vmem:[%s3 + $0x40] sm:$0xff]
        %v5894 = vld [vmem:[%s3 + $0x50] sm:$0xff]
        %v5895 = vld [vmem:[%s3 + $0x60] sm:$0xff]
        %v5896 = vld [vmem:[%s3 + $0x70] sm:$0xff]
        %v5897 = vld [vmem:[%s3 + $0x80] sm:$0xff]
        %v5898 = vld [vmem:[%s3 + $0x90] sm:$0xff]
        %v5899 = vld [vmem:[%s3 + $0xa0] sm:$0xff]
        %v5900 = vld [vmem:[%s3 + $0xb0] sm:$0xff]
        %v5901 = vld [vmem:[%s3 + $0xc0] sm:$0xff]
        %v5902 = vld [vmem:[%s3 + $0xd0] sm:$0xff]
        %v5903 = vld [vmem:[%s3 + $0xe0] sm:$0xff]
        %v5904 = vld [vmem:[%s3 + $0xf0] sm:$0xff]
        %v5905 = vld [vmem:[%s296 + $0x48] sm:$0x3f]
        %5922 = vrot.lane.b32.xlu0 %v5889, 56
        %v5923 = vpop.permute.xlu0 %5922
        %5924 = vrot.lane.b32.xlu0 %v5890, 56
        %v5925 = vpop.permute.xlu0 %5924
        %5926 = vrot.lane.b32.xlu0 %v5891, 56
        %v5927 = vpop.permute.xlu0 %5926
        %5928 = vrot.lane.b32.xlu0 %v5892, 56
        %v5929 = vpop.permute.xlu0 %5928
        %5930 = vrot.lane.b32.xlu0 %v5893, 56
        %v5931 = vpop.permute.xlu0 %5930
        %5932 = vrot.lane.b32.xlu0 %v5894, 56
        %v5933 = vpop.permute.xlu0 %5932
        %5934 = vrot.lane.b32.xlu0 %v5895, 56
        %v5935 = vpop.permute.xlu0 %5934
        %5936 = vrot.lane.b32.xlu0 %v5896, 56
        %v5937 = vpop.permute.xlu0 %5936
        %5938 = vrot.lane.b32.xlu0 %v5897, 56
        %v5939 = vpop.permute.xlu0 %5938
        %5940 = vrot.lane.b32.xlu0 %v5898, 56
        %v5941 = vpop.permute.xlu0 %5940
        %5942 = vrot.lane.b32.xlu0 %v5899, 56
        %v5943 = vpop.permute.xlu0 %5942
        %5944 = vrot.lane.b32.xlu0 %v5900, 56
        %v5945 = vpop.permute.xlu0 %5944
        %5946 = vrot.lane.b32.xlu0 %v5901, 56
        %v5947 = vpop.permute.xlu0 %5946
        %5948 = vrot.lane.b32.xlu0 %v5902, 56
        %v5949 = vpop.permute.xlu0 %5948
        %5950 = vrot.lane.b32.xlu0 %v5903, 56
        %v5951 = vpop.permute.xlu0 %5950
        %5952 = vrot.lane.b32.xlu0 %v5904, 56
        %v5953 = vpop.permute.xlu0 %5952
        %v5954 = vsel %vm2804, %v5923, 0
        %v5956 = vsel %vm2804, %v5925, 0
        %v5958 = vsel %vm2804, %v5927, 0
        %v5960 = vsel %vm2804, %v5929, 0
        %v5962 = vsel %vm2804, %v5931, 0
        %v5964 = vsel %vm2804, %v5933, 0
        %v5966 = vsel %vm2804, %v5935, 0
        %v5968 = vsel %vm2804, %v5937, 0
        %v5970 = vsel %vm2804, %v5939, 0
        %v5972 = vsel %vm2804, %v5941, 0
        %v5974 = vsel %vm2804, %v5943, 0
        %v5976 = vsel %vm2804, %v5945, 0
        %v5978 = vsel %vm2804, %v5947, 0
        %v5980 = vsel %vm2804, %v5949, 0
        %v5982 = vsel %vm2804, %v5951, 0
        %v5984 = vsel %vm2804, %v5953, 0
        %v5987 = vsel %vm2853, %v5905, 0
        %5989 = vmatprep.subr.mxu0 0.0
        %5990 = vmatpush1.msra.mxu0 %v5987
        %5991 = vmatprep.subr.mxu0 0.0
        %5992 = vmatpush1.msra.mxu0 0.0
        %5993 = vmatprep.subr.mxu0 0.0
        %5994 = vmatpush1.msra.mxu0 0.0
        %5995 = vmatprep.subr.mxu0 0.0
        %5996 = vmatpush1.msra.mxu0 0.0
        %5997 = vmatprep.subr.mxu0 0.0
        %5998 = vmatpush1.msra.mxu0 0.0
        %5999 = vmatprep.subr.mxu0 0.0
        %6000 = vmatpush1.msra.mxu0 0.0
        %6001 = vmatprep.subr.mxu0 0.0
        %6002 = vmatpush1.msra.mxu0 0.0
        %6003 = vmatprep.subr.mxu0 0.0
        %6004 = vmatpush1.msra.mxu0 0.0
        %6005 = vmatprep.subr.mxu0 0.0
        %6006 = vmatpush1.msra.mxu0 0.0
        %6007 = vmatprep.subr.mxu0 0.0
        %6008 = vmatpush1.msra.mxu0 0.0
        %6009 = vmatprep.subr.mxu0 0.0
        %6010 = vmatpush1.msra.mxu0 0.0
        %6011 = vmatprep.subr.mxu0 0.0
        %6012 = vmatpush1.msra.mxu0 0.0
        %6013 = vmatprep.subr.mxu0 0.0
        %6014 = vmatpush1.msra.mxu0 0.0
        %6015 = vmatprep.subr.mxu0 0.0
        %6016 = vmatpush1.msra.mxu0 0.0
        %6017 = vmatprep.subr.mxu0 0.0
        %6018 = vmatpush1.msra.mxu0 0.0
        %6019 = vmatprep.subr.mxu0 0.0
        %6020 = vmatpush1.msra.mxu0 0.0
        %6021 = vmatprep.subr.mxu0 0.0
        %6022 = vmatpush1.msra.mxu0 0.0
        %6023 = vmatprep.subr.mxu0 0.0
        %6024 = vmatpush1.msra.mxu0 0.0
        %6025 = vmatprep.subr.mxu0 0.0
        %6026 = vmatpush1.msra.mxu0 0.0
        %6027 = vmatprep.subr.mxu0 0.0
        %6028 = vmatpush1.msra.mxu0 0.0
        %6029 = vmatprep.subr.mxu0 0.0
        %6030 = vmatpush1.msra.mxu0 0.0
        %6031 = vmatprep.subr.mxu0 0.0
        %6032 = vmatpush1.msra.mxu0 0.0
        %6033 = vmatprep.subr.mxu0 0.0
        %6034 = vmatpush1.msra.mxu0 0.0
        %6035 = vmatprep.subr.mxu0 0.0
        %6036 = vmatpush1.msra.mxu0 0.0
        %6037 = vmatprep.subr.mxu0 0.0
        %6038 = vmatpush1.msra.mxu0 0.0
        %6039 = vmatprep.subr.mxu0 0.0
        %6040 = vmatpush1.msra.mxu0 0.0
        %6041 = vmatprep.subr.mxu0 0.0
        %6042 = vmatpush1.msra.mxu0 0.0
        %6043 = vmatprep.subr.mxu0 0.0
        %6044 = vmatpush1.msra.mxu0 0.0
        %6045 = vmatprep.subr.mxu0 0.0
        %6046 = vmatpush1.msra.mxu0 0.0
        %6047 = vmatprep.subr.mxu0 0.0
        %6048 = vmatpush1.msra.mxu0 0.0
        %6049 = vmatprep.subr.mxu0 0.0
        %6050 = vmatpush1.msra.mxu0 0.0
        %6051 = vmatprep.subr.mxu0 0.0
        %6052 = vmatpush1.msra.mxu0 0.0
        %6053 = vmatprep.mubr.f32.mxu0 0.0
        %6054 = vmatmul.mubr.f32.gmra.mrb[0].mxu0 %v5954
        %v6055 = vpop.f32.mrb[0].mxu0
        %v6056 = vadd.f32 0.0, %v6055
        %v6057 = vpop.f32.mrb[0].mxu0
        %6058 = vmatprep.mubr.f32.mxu0 0.0
        %6059 = vmatmul.mubr.f32.gmra.mrb[0].mxu0 %v5956
        %v6060 = vpop.f32.mrb[0].mxu0
        %v6061 = vadd.f32 0.0, %v6060
        %v6062 = vpop.f32.mrb[0].mxu0
        %6063 = vmatprep.mubr.f32.mxu0 0.0
        %6064 = vmatmul.mubr.f32.gmra.mrb[0].mxu0 %v5958
        %v6065 = vpop.f32.mrb[0].mxu0
        %v6066 = vadd.f32 0.0, %v6065
        %v6067 = vpop.f32.mrb[0].mxu0
        %6068 = vmatprep.mubr.f32.mxu0 0.0
        %6069 = vmatmul.mubr.f32.gmra.mrb[0].mxu0 %v5960
        %v6070 = vpop.f32.mrb[0].mxu0
        %v6071 = vadd.f32 0.0, %v6070
        %v6072 = vpop.f32.mrb[0].mxu0
        %6073 = vmatprep.mubr.f32.mxu0 0.0
        %6074 = vmatmul.mubr.f32.gmra.mrb[0].mxu0 %v5962
        %v6075 = vpop.f32.mrb[0].mxu0
        %v6076 = vadd.f32 0.0, %v6075
        %v6077 = vpop.f32.mrb[0].mxu0
        %6078 = vmatprep.mubr.f32.mxu0 0.0
        %6079 = vmatmul.mubr.f32.gmra.mrb[0].mxu0 %v5964
        %v6080 = vpop.f32.mrb[0].mxu0
        %v6081 = vadd.f32 0.0, %v6080
        %v6082 = vpop.f32.mrb[0].mxu0
        %6083 = vmatprep.mubr.f32.mxu0 0.0
        %6084 = vmatmul.mubr.f32.gmra.mrb[0].mxu0 %v5966
        %v6085 = vpop.f32.mrb[0].mxu0
        %v6086 = vadd.f32 0.0, %v6085
        %v6087 = vpop.f32.mrb[0].mxu0
        %6088 = vmatprep.mubr.f32.mxu0 0.0
        %6089 = vmatmul.mubr.f32.gmra.mrb[0].mxu0 %v5968
        %v6090 = vpop.f32.mrb[0].mxu0
        %v6091 = vadd.f32 0.0, %v6090
        %v6092 = vpop.f32.mrb[0].mxu0
        %6093 = vmatprep.mubr.f32.mxu0 0.0
        %6094 = vmatmul.mubr.f32.gmra.mrb[0].mxu0 %v5970
        %v6095 = vpop.f32.mrb[0].mxu0
        %v6096 = vadd.f32 0.0, %v6095
        %v6097 = vpop.f32.mrb[0].mxu0
        %6098 = vmatprep.mubr.f32.mxu0 0.0
        %6099 = vmatmul.mubr.f32.gmra.mrb[0].mxu0 %v5972
        %v6100 = vpop.f32.mrb[0].mxu0
        %v6101 = vadd.f32 0.0, %v6100
        %v6102 = vpop.f32.mrb[0].mxu0
        %6103 = vmatprep.mubr.f32.mxu0 0.0
        %6104 = vmatmul.mubr.f32.gmra.mrb[0].mxu0 %v5974
        %v6105 = vpop.f32.mrb[0].mxu0
        %v6106 = vadd.f32 0.0, %v6105
        %v6107 = vpop.f32.mrb[0].mxu0
        %6108 = vmatprep.mubr.f32.mxu0 0.0
        %6109 = vmatmul.mubr.f32.gmra.mrb[0].mxu0 %v5976
        %v6110 = vpop.f32.mrb[0].mxu0
        %v6111 = vadd.f32 0.0, %v6110
        %v6112 = vpop.f32.mrb[0].mxu0
        %6113 = vmatprep.mubr.f32.mxu0 0.0
        %6114 = vmatmul.mubr.f32.gmra.mrb[0].mxu0 %v5978
        %v6115 = vpop.f32.mrb[0].mxu0
        %v6116 = vadd.f32 0.0, %v6115
        %v6117 = vpop.f32.mrb[0].mxu0
        %6118 = vmatprep.mubr.f32.mxu0 0.0
        %6119 = vmatmul.mubr.f32.gmra.mrb[0].mxu0 %v5980
        %v6120 = vpop.f32.mrb[0].mxu0
        %v6121 = vadd.f32 0.0, %v6120
        %v6122 = vpop.f32.mrb[0].mxu0
        %6123 = vmatprep.mubr.f32.mxu0 0.0
        %6124 = vmatmul.mubr.f32.gmra.mrb[0].mxu0 %v5982
        %v6125 = vpop.f32.mrb[0].mxu0
        %v6126 = vadd.f32 0.0, %v6125
        %v6127 = vpop.f32.mrb[0].mxu0
        %6128 = vmatprep.mubr.f32.mxu0 0.0
        %6129 = vmatmul.mubr.f32.gmra.mrb[0].mxu0 %v5984
        %v6130 = vpop.f32.mrb[0].mxu0
        %v6131 = vadd.f32 0.0, %v6130
        %v6132 = vpop.f32.mrb[0].mxu0
        %6133 = vdwg.mxu0
        %6134 = vst [vmem:[#allocation3 + $0x600] sm:$0xff] %v6056
        %6135 = vst [vmem:[#allocation3 + $0x608] sm:$0xff] %v6061
        %6136 = vst [vmem:[#allocation3 + $0x610] sm:$0xff] %v6066
        %6137 = vst [vmem:[#allocation3 + $0x618] sm:$0xff] %v6071
        %6138 = vst [vmem:[#allocation3 + $0x620] sm:$0xff] %v6076
        %6139 = vst [vmem:[#allocation3 + $0x628] sm:$0xff] %v6081
        %6140 = vst [vmem:[#allocation3 + $0x630] sm:$0xff] %v6086
        %6141 = vst [vmem:[#allocation3 + $0x638] sm:$0xff] %v6091
        %6142 = vst [vmem:[#allocation3 + $0x640] sm:$0xff] %v6096
        %6143 = vst [vmem:[#allocation3 + $0x648] sm:$0xff] %v6101
        %6144 = vst [vmem:[#allocation3 + $0x650] sm:$0xff] %v6106
        %6145 = vst [vmem:[#allocation3 + $0x658] sm:$0xff] %v6111
        %6146 = vst [vmem:[#allocation3 + $0x660] sm:$0xff] %v6116
        %6147 = vst [vmem:[#allocation3 + $0x668] sm:$0xff] %v6121
        %6148 = vst [vmem:[#allocation3 + $0x670] sm:$0xff] %v6126
        %6149 = vst [vmem:[#allocation3 + $0x678] sm:$0xff] %v6131
        %v6150 = vld [vmem:[%s3] sm:$0xff]
        %v6151 = vld [vmem:[%s3 + $0x10] sm:$0xff]
        %v6152 = vld [vmem:[%s3 + $0x20] sm:$0xff]
        %v6153 = vld [vmem:[%s3 + $0x30] sm:$0xff]
        %v6154 = vld [vmem:[%s3 + $0x40] sm:$0xff]
        %v6155 = vld [vmem:[%s3 + $0x50] sm:$0xff]
        %v6156 = vld [vmem:[%s3 + $0x60] sm:$0xff]
        %v6157 = vld [vmem:[%s3 + $0x70] sm:$0xff]
        %v6158 = vld [vmem:[%s3 + $0x80] sm:$0xff]
        %v6159 = vld [vmem:[%s3 + $0x90] sm:$0xff]
        %v6160 = vld [vmem:[%s3 + $0xa0] sm:$0xff]
        %v6161 = vld [vmem:[%s3 + $0xb0] sm:$0xff]
        %v6162 = vld [vmem:[%s3 + $0xc0] sm:$0xff]
        %v6163 = vld [vmem:[%s3 + $0xd0] sm:$0xff]
        %v6164 = vld [vmem:[%s3 + $0xe0] sm:$0xff]
        %v6165 = vld [vmem:[%s3 + $0xf0] sm:$0xff]
        %v6166 = vld [vmem:[%s296 + $0x4e] sm:$0x3f]
        %6183 = vrot.lane.b32.xlu0 %v6150, 50
        %v6184 = vpop.permute.xlu0 %6183
        %6185 = vrot.lane.b32.xlu0 %v6151, 50
        %v6186 = vpop.permute.xlu0 %6185
        %6187 = vrot.lane.b32.xlu0 %v6152, 50
        %v6188 = vpop.permute.xlu0 %6187
        %6189 = vrot.lane.b32.xlu0 %v6153, 50
        %v6190 = vpop.permute.xlu0 %6189
        %6191 = vrot.lane.b32.xlu0 %v6154, 50
        %v6192 = vpop.permute.xlu0 %6191
        %6193 = vrot.lane.b32.xlu0 %v6155, 50
        %v6194 = vpop.permute.xlu0 %6193
        %6195 = vrot.lane.b32.xlu0 %v6156, 50
        %v6196 = vpop.permute.xlu0 %6195
        %6197 = vrot.lane.b32.xlu0 %v6157, 50
        %v6198 = vpop.permute.xlu0 %6197
        %6199 = vrot.lane.b32.xlu0 %v6158, 50
        %v6200 = vpop.permute.xlu0 %6199
        %6201 = vrot.lane.b32.xlu0 %v6159, 50
        %v6202 = vpop.permute.xlu0 %6201
        %6203 = vrot.lane.b32.xlu0 %v6160, 50
        %v6204 = vpop.permute.xlu0 %6203
        %6205 = vrot.lane.b32.xlu0 %v6161, 50
        %v6206 = vpop.permute.xlu0 %6205
        %6207 = vrot.lane.b32.xlu0 %v6162, 50
        %v6208 = vpop.permute.xlu0 %6207
        %6209 = vrot.lane.b32.xlu0 %v6163, 50
        %v6210 = vpop.permute.xlu0 %6209
        %6211 = vrot.lane.b32.xlu0 %v6164, 50
        %v6212 = vpop.permute.xlu0 %6211
        %6213 = vrot.lane.b32.xlu0 %v6165, 50
        %v6214 = vpop.permute.xlu0 %6213
        %v6215 = vsel %vm2804, %v6184, 0
        %v6217 = vsel %vm2804, %v6186, 0
        %v6219 = vsel %vm2804, %v6188, 0
        %v6221 = vsel %vm2804, %v6190, 0
        %v6223 = vsel %vm2804, %v6192, 0
        %v6225 = vsel %vm2804, %v6194, 0
        %v6227 = vsel %vm2804, %v6196, 0
        %v6229 = vsel %vm2804, %v6198, 0
        %v6231 = vsel %vm2804, %v6200, 0
        %v6233 = vsel %vm2804, %v6202, 0
        %v6235 = vsel %vm2804, %v6204, 0
        %v6237 = vsel %vm2804, %v6206, 0
        %v6239 = vsel %vm2804, %v6208, 0
        %v6241 = vsel %vm2804, %v6210, 0
        %v6243 = vsel %vm2804, %v6212, 0
        %v6245 = vsel %vm2804, %v6214, 0
        %v6248 = vsel %vm2853, %v6166, 0
        %6250 = vmatprep.subr.mxu0 0.0
        %6251 = vmatpush1.msra.mxu0 %v6248
        %6252 = vmatprep.subr.mxu0 0.0
        %6253 = vmatpush1.msra.mxu0 0.0
        %6254 = vmatprep.subr.mxu0 0.0
        %6255 = vmatpush1.msra.mxu0 0.0
        %6256 = vmatprep.subr.mxu0 0.0
        %6257 = vmatpush1.msra.mxu0 0.0
        %6258 = vmatprep.subr.mxu0 0.0
        %6259 = vmatpush1.msra.mxu0 0.0
        %6260 = vmatprep.subr.mxu0 0.0
        %6261 = vmatpush1.msra.mxu0 0.0
        %6262 = vmatprep.subr.mxu0 0.0
        %6263 = vmatpush1.msra.mxu0 0.0
        %6264 = vmatprep.subr.mxu0 0.0
        %6265 = vmatpush1.msra.mxu0 0.0
        %6266 = vmatprep.subr.mxu0 0.0
        %6267 = vmatpush1.msra.mxu0 0.0
        %6268 = vmatprep.subr.mxu0 0.0
        %6269 = vmatpush1.msra.mxu0 0.0
        %6270 = vmatprep.subr.mxu0 0.0
        %6271 = vmatpush1.msra.mxu0 0.0
        %6272 = vmatprep.subr.mxu0 0.0
        %6273 = vmatpush1.msra.mxu0 0.0
        %6274 = vmatprep.subr.mxu0 0.0
        %6275 = vmatpush1.msra.mxu0 0.0
        %6276 = vmatprep.subr.mxu0 0.0
        %6277 = vmatpush1.msra.mxu0 0.0
        %6278 = vmatprep.subr.mxu0 0.0
        %6279 = vmatpush1.msra.mxu0 0.0
        %6280 = vmatprep.subr.mxu0 0.0
        %6281 = vmatpush1.msra.mxu0 0.0
        %6282 = vmatprep.subr.mxu0 0.0
        %6283 = vmatpush1.msra.mxu0 0.0
        %6284 = vmatprep.subr.mxu0 0.0
        %6285 = vmatpush1.msra.mxu0 0.0
        %6286 = vmatprep.subr.mxu0 0.0
        %6287 = vmatpush1.msra.mxu0 0.0
        %6288 = vmatprep.subr.mxu0 0.0
        %6289 = vmatpush1.msra.mxu0 0.0
        %6290 = vmatprep.subr.mxu0 0.0
        %6291 = vmatpush1.msra.mxu0 0.0
        %6292 = vmatprep.subr.mxu0 0.0
        %6293 = vmatpush1.msra.mxu0 0.0
        %6294 = vmatprep.subr.mxu0 0.0
        %6295 = vmatpush1.msra.mxu0 0.0
        %6296 = vmatprep.subr.mxu0 0.0
        %6297 = vmatpush1.msra.mxu0 0.0
        %6298 = vmatprep.subr.mxu0 0.0
        %6299 = vmatpush1.msra.mxu0 0.0
        %6300 = vmatprep.subr.mxu0 0.0
        %6301 = vmatpush1.msra.mxu0 0.0
        %6302 = vmatprep.subr.mxu0 0.0
        %6303 = vmatpush1.msra.mxu0 0.0
        %6304 = vmatprep.subr.mxu0 0.0
        %6305 = vmatpush1.msra.mxu0 0.0
        %6306 = vmatprep.subr.mxu0 0.0
        %6307 = vmatpush1.msra.mxu0 0.0
        %6308 = vmatprep.subr.mxu0 0.0
        %6309 = vmatpush1.msra.mxu0 0.0
        %6310 = vmatprep.subr.mxu0 0.0
        %6311 = vmatpush1.msra.mxu0 0.0
        %6312 = vmatprep.subr.mxu0 0.0
        %6313 = vmatpush1.msra.mxu0 0.0
        %6314 = vmatprep.mubr.f32.mxu0 0.0
        %6315 = vmatmul.mubr.f32.gmra.mrb[0].mxu0 %v6215
        %v6316 = vpop.f32.mrb[0].mxu0
        %v6317 = vadd.f32 0.0, %v6316
        %v6318 = vpop.f32.mrb[0].mxu0
        %6319 = vmatprep.mubr.f32.mxu0 0.0
        %6320 = vmatmul.mubr.f32.gmra.mrb[0].mxu0 %v6217
        %v6321 = vpop.f32.mrb[0].mxu0
        %v6322 = vadd.f32 0.0, %v6321
        %v6323 = vpop.f32.mrb[0].mxu0
        %6324 = vmatprep.mubr.f32.mxu0 0.0
        %6325 = vmatmul.mubr.f32.gmra.mrb[0].mxu0 %v6219
        %v6326 = vpop.f32.mrb[0].mxu0
        %v6327 = vadd.f32 0.0, %v6326
        %v6328 = vpop.f32.mrb[0].mxu0
        %6329 = vmatprep.mubr.f32.mxu0 0.0
        %6330 = vmatmul.mubr.f32.gmra.mrb[0].mxu0 %v6221
        %v6331 = vpop.f32.mrb[0].mxu0
        %v6332 = vadd.f32 0.0, %v6331
        %v6333 = vpop.f32.mrb[0].mxu0
        %6334 = vmatprep.mubr.f32.mxu0 0.0
        %6335 = vmatmul.mubr.f32.gmra.mrb[0].mxu0 %v6223
        %v6336 = vpop.f32.mrb[0].mxu0
        %v6337 = vadd.f32 0.0, %v6336
        %v6338 = vpop.f32.mrb[0].mxu0
        %6339 = vmatprep.mubr.f32.mxu0 0.0
        %6340 = vmatmul.mubr.f32.gmra.mrb[0].mxu0 %v6225
        %v6341 = vpop.f32.mrb[0].mxu0
        %v6342 = vadd.f32 0.0, %v6341
        %v6343 = vpop.f32.mrb[0].mxu0
        %6344 = vmatprep.mubr.f32.mxu0 0.0
        %6345 = vmatmul.mubr.f32.gmra.mrb[0].mxu0 %v6227
        %v6346 = vpop.f32.mrb[0].mxu0
        %v6347 = vadd.f32 0.0, %v6346
        %v6348 = vpop.f32.mrb[0].mxu0
        %6349 = vmatprep.mubr.f32.mxu0 0.0
        %6350 = vmatmul.mubr.f32.gmra.mrb[0].mxu0 %v6229
        %v6351 = vpop.f32.mrb[0].mxu0
        %v6352 = vadd.f32 0.0, %v6351
        %v6353 = vpop.f32.mrb[0].mxu0
        %6354 = vmatprep.mubr.f32.mxu0 0.0
        %6355 = vmatmul.mubr.f32.gmra.mrb[0].mxu0 %v6231
        %v6356 = vpop.f32.mrb[0].mxu0
        %v6357 = vadd.f32 0.0, %v6356
        %v6358 = vpop.f32.mrb[0].mxu0
        %6359 = vmatprep.mubr.f32.mxu0 0.0
        %6360 = vmatmul.mubr.f32.gmra.mrb[0].mxu0 %v6233
        %v6361 = vpop.f32.mrb[0].mxu0
        %v6362 = vadd.f32 0.0, %v6361
        %v6363 = vpop.f32.mrb[0].mxu0
        %6364 = vmatprep.mubr.f32.mxu0 0.0
        %6365 = vmatmul.mubr.f32.gmra.mrb[0].mxu0 %v6235
        %v6366 = vpop.f32.mrb[0].mxu0
        %v6367 = vadd.f32 0.0, %v6366
        %v6368 = vpop.f32.mrb[0].mxu0
        %6369 = vmatprep.mubr.f32.mxu0 0.0
        %6370 = vmatmul.mubr.f32.gmra.mrb[0].mxu0 %v6237
        %v6371 = vpop.f32.mrb[0].mxu0
        %v6372 = vadd.f32 0.0, %v6371
        %v6373 = vpop.f32.mrb[0].mxu0
        %6374 = vmatprep.mubr.f32.mxu0 0.0
        %6375 = vmatmul.mubr.f32.gmra.mrb[0].mxu0 %v6239
        %v6376 = vpop.f32.mrb[0].mxu0
        %v6377 = vadd.f32 0.0, %v6376
        %v6378 = vpop.f32.mrb[0].mxu0
        %6379 = vmatprep.mubr.f32.mxu0 0.0
        %6380 = vmatmul.mubr.f32.gmra.mrb[0].mxu0 %v6241
        %v6381 = vpop.f32.mrb[0].mxu0
        %v6382 = vadd.f32 0.0, %v6381
        %v6383 = vpop.f32.mrb[0].mxu0
        %6384 = vmatprep.mubr.f32.mxu0 0.0
        %6385 = vmatmul.mubr.f32.gmra.mrb[0].mxu0 %v6243
        %v6386 = vpop.f32.mrb[0].mxu0
        %v6387 = vadd.f32 0.0, %v6386
        %v6388 = vpop.f32.mrb[0].mxu0
        %6389 = vmatprep.mubr.f32.mxu0 0.0
        %6390 = vmatmul.mubr.f32.gmra.mrb[0].mxu0 %v6245
        %v6391 = vpop.f32.mrb[0].mxu0
        %v6392 = vadd.f32 0.0, %v6391
        %v6393 = vpop.f32.mrb[0].mxu0
        %6394 = vdwg.mxu0
        %6395 = vst [vmem:[#allocation3 + $0x680] sm:$0xff] %v6317
        %6396 = vst [vmem:[#allocation3 + $0x688] sm:$0xff] %v6322
        %6397 = vst [vmem:[#allocation3 + $0x690] sm:$0xff] %v6327
        %6398 = vst [vmem:[#allocation3 + $0x698] sm:$0xff] %v6332
        %6399 = vst [vmem:[#allocation3 + $0x6a0] sm:$0xff] %v6337
        %6400 = vst [vmem:[#allocation3 + $0x6a8] sm:$0xff] %v6342
        %6401 = vst [vmem:[#allocation3 + $0x6b0] sm:$0xff] %v6347
        %6402 = vst [vmem:[#allocation3 + $0x6b8] sm:$0xff] %v6352
        %6403 = vst [vmem:[#allocation3 + $0x6c0] sm:$0xff] %v6357
        %6404 = vst [vmem:[#allocation3 + $0x6c8] sm:$0xff] %v6362
        %6405 = vst [vmem:[#allocation3 + $0x6d0] sm:$0xff] %v6367
        %6406 = vst [vmem:[#allocation3 + $0x6d8] sm:$0xff] %v6372
        %6407 = vst [vmem:[#allocation3 + $0x6e0] sm:$0xff] %v6377
        %6408 = vst [vmem:[#allocation3 + $0x6e8] sm:$0xff] %v6382
        %6409 = vst [vmem:[#allocation3 + $0x6f0] sm:$0xff] %v6387
        %6410 = vst [vmem:[#allocation3 + $0x6f8] sm:$0xff] %v6392
        %v6411 = vld [vmem:[%s3] sm:$0xff]
        %v6412 = vld [vmem:[%s3 + $0x10] sm:$0xff]
        %v6413 = vld [vmem:[%s3 + $0x20] sm:$0xff]
        %v6414 = vld [vmem:[%s3 + $0x30] sm:$0xff]
        %v6415 = vld [vmem:[%s3 + $0x40] sm:$0xff]
        %v6416 = vld [vmem:[%s3 + $0x50] sm:$0xff]
        %v6417 = vld [vmem:[%s3 + $0x60] sm:$0xff]
        %v6418 = vld [vmem:[%s3 + $0x70] sm:$0xff]
        %v6419 = vld [vmem:[%s3 + $0x80] sm:$0xff]
        %v6420 = vld [vmem:[%s3 + $0x90] sm:$0xff]
        %v6421 = vld [vmem:[%s3 + $0xa0] sm:$0xff]
        %v6422 = vld [vmem:[%s3 + $0xb0] sm:$0xff]
        %v6423 = vld [vmem:[%s3 + $0xc0] sm:$0xff]
        %v6424 = vld [vmem:[%s3 + $0xd0] sm:$0xff]
        %v6425 = vld [vmem:[%s3 + $0xe0] sm:$0xff]
        %v6426 = vld [vmem:[%s3 + $0xf0] sm:$0xff]
        %v6427 = vld [vmem:[%s296 + $0x54] sm:$0x3f]
        %6444 = vrot.lane.b32.xlu0 %v6411, 44
        %v6445 = vpop.permute.xlu0 %6444
        %6446 = vrot.lane.b32.xlu0 %v6412, 44
        %v6447 = vpop.permute.xlu0 %6446
        %6448 = vrot.lane.b32.xlu0 %v6413, 44
        %v6449 = vpop.permute.xlu0 %6448
        %6450 = vrot.lane.b32.xlu0 %v6414, 44
        %v6451 = vpop.permute.xlu0 %6450
        %6452 = vrot.lane.b32.xlu0 %v6415, 44
        %v6453 = vpop.permute.xlu0 %6452
        %6454 = vrot.lane.b32.xlu0 %v6416, 44
        %v6455 = vpop.permute.xlu0 %6454
        %6456 = vrot.lane.b32.xlu0 %v6417, 44
        %v6457 = vpop.permute.xlu0 %6456
        %6458 = vrot.lane.b32.xlu0 %v6418, 44
        %v6459 = vpop.permute.xlu0 %6458
        %6460 = vrot.lane.b32.xlu0 %v6419, 44
        %v6461 = vpop.permute.xlu0 %6460
        %6462 = vrot.lane.b32.xlu0 %v6420, 44
        %v6463 = vpop.permute.xlu0 %6462
        %6464 = vrot.lane.b32.xlu0 %v6421, 44
        %v6465 = vpop.permute.xlu0 %6464
        %6466 = vrot.lane.b32.xlu0 %v6422, 44
        %v6467 = vpop.permute.xlu0 %6466
        %6468 = vrot.lane.b32.xlu0 %v6423, 44
        %v6469 = vpop.permute.xlu0 %6468
        %6470 = vrot.lane.b32.xlu0 %v6424, 44
        %v6471 = vpop.permute.xlu0 %6470
        %6472 = vrot.lane.b32.xlu0 %v6425, 44
        %v6473 = vpop.permute.xlu0 %6472
        %6474 = vrot.lane.b32.xlu0 %v6426, 44
        %v6475 = vpop.permute.xlu0 %6474
        %v6476 = vsel %vm2804, %v6445, 0
        %v6478 = vsel %vm2804, %v6447, 0
        %v6480 = vsel %vm2804, %v6449, 0
        %v6482 = vsel %vm2804, %v6451, 0
        %v6484 = vsel %vm2804, %v6453, 0
        %v6486 = vsel %vm2804, %v6455, 0
        %v6488 = vsel %vm2804, %v6457, 0
        %v6490 = vsel %vm2804, %v6459, 0
        %v6492 = vsel %vm2804, %v6461, 0
        %v6494 = vsel %vm2804, %v6463, 0
        %v6496 = vsel %vm2804, %v6465, 0
        %v6498 = vsel %vm2804, %v6467, 0
        %v6500 = vsel %vm2804, %v6469, 0
        %v6502 = vsel %vm2804, %v6471, 0
        %v6504 = vsel %vm2804, %v6473, 0
        %v6506 = vsel %vm2804, %v6475, 0
        %v6509 = vsel %vm2853, %v6427, 0
        %6511 = vmatprep.subr.mxu0 0.0
        %6512 = vmatpush1.msra.mxu0 %v6509
        %6513 = vmatprep.subr.mxu0 0.0
        %6514 = vmatpush1.msra.mxu0 0.0
        %6515 = vmatprep.subr.mxu0 0.0
        %6516 = vmatpush1.msra.mxu0 0.0
        %6517 = vmatprep.subr.mxu0 0.0
        %6518 = vmatpush1.msra.mxu0 0.0
        %6519 = vmatprep.subr.mxu0 0.0
        %6520 = vmatpush1.msra.mxu0 0.0
        %6521 = vmatprep.subr.mxu0 0.0
        %6522 = vmatpush1.msra.mxu0 0.0
        %6523 = vmatprep.subr.mxu0 0.0
        %6524 = vmatpush1.msra.mxu0 0.0
        %6525 = vmatprep.subr.mxu0 0.0
        %6526 = vmatpush1.msra.mxu0 0.0
        %6527 = vmatprep.subr.mxu0 0.0
        %6528 = vmatpush1.msra.mxu0 0.0
        %6529 = vmatprep.subr.mxu0 0.0
        %6530 = vmatpush1.msra.mxu0 0.0
        %6531 = vmatprep.subr.mxu0 0.0
        %6532 = vmatpush1.msra.mxu0 0.0
        %6533 = vmatprep.subr.mxu0 0.0
        %6534 = vmatpush1.msra.mxu0 0.0
        %6535 = vmatprep.subr.mxu0 0.0
        %6536 = vmatpush1.msra.mxu0 0.0
        %6537 = vmatprep.subr.mxu0 0.0
        %6538 = vmatpush1.msra.mxu0 0.0
        %6539 = vmatprep.subr.mxu0 0.0
        %6540 = vmatpush1.msra.mxu0 0.0
        %6541 = vmatprep.subr.mxu0 0.0
        %6542 = vmatpush1.msra.mxu0 0.0
        %6543 = vmatprep.subr.mxu0 0.0
        %6544 = vmatpush1.msra.mxu0 0.0
        %6545 = vmatprep.subr.mxu0 0.0
        %6546 = vmatpush1.msra.mxu0 0.0
        %6547 = vmatprep.subr.mxu0 0.0
        %6548 = vmatpush1.msra.mxu0 0.0
        %6549 = vmatprep.subr.mxu0 0.0
        %6550 = vmatpush1.msra.mxu0 0.0
        %6551 = vmatprep.subr.mxu0 0.0
        %6552 = vmatpush1.msra.mxu0 0.0
        %6553 = vmatprep.subr.mxu0 0.0
        %6554 = vmatpush1.msra.mxu0 0.0
        %6555 = vmatprep.subr.mxu0 0.0
        %6556 = vmatpush1.msra.mxu0 0.0
        %6557 = vmatprep.subr.mxu0 0.0
        %6558 = vmatpush1.msra.mxu0 0.0
        %6559 = vmatprep.subr.mxu0 0.0
        %6560 = vmatpush1.msra.mxu0 0.0
        %6561 = vmatprep.subr.mxu0 0.0
        %6562 = vmatpush1.msra.mxu0 0.0
        %6563 = vmatprep.subr.mxu0 0.0
        %6564 = vmatpush1.msra.mxu0 0.0
        %6565 = vmatprep.subr.mxu0 0.0
        %6566 = vmatpush1.msra.mxu0 0.0
        %6567 = vmatprep.subr.mxu0 0.0
        %6568 = vmatpush1.msra.mxu0 0.0
        %6569 = vmatprep.subr.mxu0 0.0
        %6570 = vmatpush1.msra.mxu0 0.0
        %6571 = vmatprep.subr.mxu0 0.0
        %6572 = vmatpush1.msra.mxu0 0.0
        %6573 = vmatprep.subr.mxu0 0.0
        %6574 = vmatpush1.msra.mxu0 0.0
        %6575 = vmatprep.mubr.f32.mxu0 0.0
        %6576 = vmatmul.mubr.f32.gmra.mrb[0].mxu0 %v6476
        %v6577 = vpop.f32.mrb[0].mxu0
        %v6578 = vadd.f32 0.0, %v6577
        %v6579 = vpop.f32.mrb[0].mxu0
        %6580 = vmatprep.mubr.f32.mxu0 0.0
        %6581 = vmatmul.mubr.f32.gmra.mrb[0].mxu0 %v6478
        %v6582 = vpop.f32.mrb[0].mxu0
        %v6583 = vadd.f32 0.0, %v6582
        %v6584 = vpop.f32.mrb[0].mxu0
        %6585 = vmatprep.mubr.f32.mxu0 0.0
        %6586 = vmatmul.mubr.f32.gmra.mrb[0].mxu0 %v6480
        %v6587 = vpop.f32.mrb[0].mxu0
        %v6588 = vadd.f32 0.0, %v6587
        %v6589 = vpop.f32.mrb[0].mxu0
        %6590 = vmatprep.mubr.f32.mxu0 0.0
        %6591 = vmatmul.mubr.f32.gmra.mrb[0].mxu0 %v6482
        %v6592 = vpop.f32.mrb[0].mxu0
        %v6593 = vadd.f32 0.0, %v6592
        %v6594 = vpop.f32.mrb[0].mxu0
        %6595 = vmatprep.mubr.f32.mxu0 0.0
        %6596 = vmatmul.mubr.f32.gmra.mrb[0].mxu0 %v6484
        %v6597 = vpop.f32.mrb[0].mxu0
        %v6598 = vadd.f32 0.0, %v6597
        %v6599 = vpop.f32.mrb[0].mxu0
        %6600 = vmatprep.mubr.f32.mxu0 0.0
        %6601 = vmatmul.mubr.f32.gmra.mrb[0].mxu0 %v6486
        %v6602 = vpop.f32.mrb[0].mxu0
        %v6603 = vadd.f32 0.0, %v6602
        %v6604 = vpop.f32.mrb[0].mxu0
        %6605 = vmatprep.mubr.f32.mxu0 0.0
        %6606 = vmatmul.mubr.f32.gmra.mrb[0].mxu0 %v6488
        %v6607 = vpop.f32.mrb[0].mxu0
        %v6608 = vadd.f32 0.0, %v6607
        %v6609 = vpop.f32.mrb[0].mxu0
        %6610 = vmatprep.mubr.f32.mxu0 0.0
        %6611 = vmatmul.mubr.f32.gmra.mrb[0].mxu0 %v6490
        %v6612 = vpop.f32.mrb[0].mxu0
        %v6613 = vadd.f32 0.0, %v6612
        %v6614 = vpop.f32.mrb[0].mxu0
        %6615 = vmatprep.mubr.f32.mxu0 0.0
        %6616 = vmatmul.mubr.f32.gmra.mrb[0].mxu0 %v6492
        %v6617 = vpop.f32.mrb[0].mxu0
        %v6618 = vadd.f32 0.0, %v6617
        %v6619 = vpop.f32.mrb[0].mxu0
        %6620 = vmatprep.mubr.f32.mxu0 0.0
        %6621 = vmatmul.mubr.f32.gmra.mrb[0].mxu0 %v6494
        %v6622 = vpop.f32.mrb[0].mxu0
        %v6623 = vadd.f32 0.0, %v6622
        %v6624 = vpop.f32.mrb[0].mxu0
        %6625 = vmatprep.mubr.f32.mxu0 0.0
        %6626 = vmatmul.mubr.f32.gmra.mrb[0].mxu0 %v6496
        %v6627 = vpop.f32.mrb[0].mxu0
        %v6628 = vadd.f32 0.0, %v6627
        %v6629 = vpop.f32.mrb[0].mxu0
        %6630 = vmatprep.mubr.f32.mxu0 0.0
        %6631 = vmatmul.mubr.f32.gmra.mrb[0].mxu0 %v6498
        %v6632 = vpop.f32.mrb[0].mxu0
        %v6633 = vadd.f32 0.0, %v6632
        %v6634 = vpop.f32.mrb[0].mxu0
        %6635 = vmatprep.mubr.f32.mxu0 0.0
        %6636 = vmatmul.mubr.f32.gmra.mrb[0].mxu0 %v6500
        %v6637 = vpop.f32.mrb[0].mxu0
        %v6638 = vadd.f32 0.0, %v6637
        %v6639 = vpop.f32.mrb[0].mxu0
        %6640 = vmatprep.mubr.f32.mxu0 0.0
        %6641 = vmatmul.mubr.f32.gmra.mrb[0].mxu0 %v6502
        %v6642 = vpop.f32.mrb[0].mxu0
        %v6643 = vadd.f32 0.0, %v6642
        %v6644 = vpop.f32.mrb[0].mxu0
        %6645 = vmatprep.mubr.f32.mxu0 0.0
        %6646 = vmatmul.mubr.f32.gmra.mrb[0].mxu0 %v6504
        %v6647 = vpop.f32.mrb[0].mxu0
        %v6648 = vadd.f32 0.0, %v6647
        %v6649 = vpop.f32.mrb[0].mxu0
        %6650 = vmatprep.mubr.f32.mxu0 0.0
        %6651 = vmatmul.mubr.f32.gmra.mrb[0].mxu0 %v6506
        %v6652 = vpop.f32.mrb[0].mxu0
        %v6653 = vadd.f32 0.0, %v6652
        %v6654 = vpop.f32.mrb[0].mxu0
        %6655 = vdwg.mxu0
        %6656 = vst [vmem:[#allocation3 + $0x700] sm:$0xff] %v6578
        %6657 = vst [vmem:[#allocation3 + $0x708] sm:$0xff] %v6583
        %6658 = vst [vmem:[#allocation3 + $0x710] sm:$0xff] %v6588
        %6659 = vst [vmem:[#allocation3 + $0x718] sm:$0xff] %v6593
        %6660 = vst [vmem:[#allocation3 + $0x720] sm:$0xff] %v6598
        %6661 = vst [vmem:[#allocation3 + $0x728] sm:$0xff] %v6603
        %6662 = vst [vmem:[#allocation3 + $0x730] sm:$0xff] %v6608
        %6663 = vst [vmem:[#allocation3 + $0x738] sm:$0xff] %v6613
        %6664 = vst [vmem:[#allocation3 + $0x740] sm:$0xff] %v6618
        %6665 = vst [vmem:[#allocation3 + $0x748] sm:$0xff] %v6623
        %6666 = vst [vmem:[#allocation3 + $0x750] sm:$0xff] %v6628
        %6667 = vst [vmem:[#allocation3 + $0x758] sm:$0xff] %v6633
        %6668 = vst [vmem:[#allocation3 + $0x760] sm:$0xff] %v6638
        %6669 = vst [vmem:[#allocation3 + $0x768] sm:$0xff] %v6643
        %6670 = vst [vmem:[#allocation3 + $0x770] sm:$0xff] %v6648
        %6671 = vst [vmem:[#allocation3 + $0x778] sm:$0xff] %v6653
        %v6672 = vld [vmem:[%s3] sm:$0xff]
        %v6673 = vld [vmem:[%s3 + $0x10] sm:$0xff]
        %v6674 = vld [vmem:[%s3 + $0x20] sm:$0xff]
        %v6675 = vld [vmem:[%s3 + $0x30] sm:$0xff]
        %v6676 = vld [vmem:[%s3 + $0x40] sm:$0xff]
        %v6677 = vld [vmem:[%s3 + $0x50] sm:$0xff]
        %v6678 = vld [vmem:[%s3 + $0x60] sm:$0xff]
        %v6679 = vld [vmem:[%s3 + $0x70] sm:$0xff]
        %v6680 = vld [vmem:[%s3 + $0x80] sm:$0xff]
        %v6681 = vld [vmem:[%s3 + $0x90] sm:$0xff]
        %v6682 = vld [vmem:[%s3 + $0xa0] sm:$0xff]
        %v6683 = vld [vmem:[%s3 + $0xb0] sm:$0xff]
        %v6684 = vld [vmem:[%s3 + $0xc0] sm:$0xff]
        %v6685 = vld [vmem:[%s3 + $0xd0] sm:$0xff]
        %v6686 = vld [vmem:[%s3 + $0xe0] sm:$0xff]
        %v6687 = vld [vmem:[%s3 + $0xf0] sm:$0xff]
        %v6688 = vld [vmem:[%s296 + $0x5a] sm:$0x3f]
        %6705 = vrot.lane.b32.xlu0 %v6672, 38
        %v6706 = vpop.permute.xlu0 %6705
        %6707 = vrot.lane.b32.xlu0 %v6673, 38
        %v6708 = vpop.permute.xlu0 %6707
        %6709 = vrot.lane.b32.xlu0 %v6674, 38
        %v6710 = vpop.permute.xlu0 %6709
        %6711 = vrot.lane.b32.xlu0 %v6675, 38
        %v6712 = vpop.permute.xlu0 %6711
        %6713 = vrot.lane.b32.xlu0 %v6676, 38
        %v6714 = vpop.permute.xlu0 %6713
        %6715 = vrot.lane.b32.xlu0 %v6677, 38
        %v6716 = vpop.permute.xlu0 %6715
        %6717 = vrot.lane.b32.xlu0 %v6678, 38
        %v6718 = vpop.permute.xlu0 %6717
        %6719 = vrot.lane.b32.xlu0 %v6679, 38
        %v6720 = vpop.permute.xlu0 %6719
        %6721 = vrot.lane.b32.xlu0 %v6680, 38
        %v6722 = vpop.permute.xlu0 %6721
        %6723 = vrot.lane.b32.xlu0 %v6681, 38
        %v6724 = vpop.permute.xlu0 %6723
        %6725 = vrot.lane.b32.xlu0 %v6682, 38
        %v6726 = vpop.permute.xlu0 %6725
        %6727 = vrot.lane.b32.xlu0 %v6683, 38
        %v6728 = vpop.permute.xlu0 %6727
        %6729 = vrot.lane.b32.xlu0 %v6684, 38
        %v6730 = vpop.permute.xlu0 %6729
        %6731 = vrot.lane.b32.xlu0 %v6685, 38
        %v6732 = vpop.permute.xlu0 %6731
        %6733 = vrot.lane.b32.xlu0 %v6686, 38
        %v6734 = vpop.permute.xlu0 %6733
        %6735 = vrot.lane.b32.xlu0 %v6687, 38
        %v6736 = vpop.permute.xlu0 %6735
        %v6737 = vsel %vm2804, %v6706, 0
        %v6739 = vsel %vm2804, %v6708, 0
        %v6741 = vsel %vm2804, %v6710, 0
        %v6743 = vsel %vm2804, %v6712, 0
        %v6745 = vsel %vm2804, %v6714, 0
        %v6747 = vsel %vm2804, %v6716, 0
        %v6749 = vsel %vm2804, %v6718, 0
        %v6751 = vsel %vm2804, %v6720, 0
        %v6753 = vsel %vm2804, %v6722, 0
        %v6755 = vsel %vm2804, %v6724, 0
        %v6757 = vsel %vm2804, %v6726, 0
        %v6759 = vsel %vm2804, %v6728, 0
        %v6761 = vsel %vm2804, %v6730, 0
        %v6763 = vsel %vm2804, %v6732, 0
        %v6765 = vsel %vm2804, %v6734, 0
        %v6767 = vsel %vm2804, %v6736, 0
        %v6770 = vsel %vm2853, %v6688, 0
        %6772 = vmatprep.subr.mxu0 0.0
        %6773 = vmatpush1.msra.mxu0 %v6770
        %6774 = vmatprep.subr.mxu0 0.0
        %6775 = vmatpush1.msra.mxu0 0.0
        %6776 = vmatprep.subr.mxu0 0.0
        %6777 = vmatpush1.msra.mxu0 0.0
        %6778 = vmatprep.subr.mxu0 0.0
        %6779 = vmatpush1.msra.mxu0 0.0
        %6780 = vmatprep.subr.mxu0 0.0
        %6781 = vmatpush1.msra.mxu0 0.0
        %6782 = vmatprep.subr.mxu0 0.0
        %6783 = vmatpush1.msra.mxu0 0.0
        %6784 = vmatprep.subr.mxu0 0.0
        %6785 = vmatpush1.msra.mxu0 0.0
        %6786 = vmatprep.subr.mxu0 0.0
        %6787 = vmatpush1.msra.mxu0 0.0
        %6788 = vmatprep.subr.mxu0 0.0
        %6789 = vmatpush1.msra.mxu0 0.0
        %6790 = vmatprep.subr.mxu0 0.0
        %6791 = vmatpush1.msra.mxu0 0.0
        %6792 = vmatprep.subr.mxu0 0.0
        %6793 = vmatpush1.msra.mxu0 0.0
        %6794 = vmatprep.subr.mxu0 0.0
        %6795 = vmatpush1.msra.mxu0 0.0
        %6796 = vmatprep.subr.mxu0 0.0
        %6797 = vmatpush1.msra.mxu0 0.0
        %6798 = vmatprep.subr.mxu0 0.0
        %6799 = vmatpush1.msra.mxu0 0.0
        %6800 = vmatprep.subr.mxu0 0.0
        %6801 = vmatpush1.msra.mxu0 0.0
        %6802 = vmatprep.subr.mxu0 0.0
        %6803 = vmatpush1.msra.mxu0 0.0
        %6804 = vmatprep.subr.mxu0 0.0
        %6805 = vmatpush1.msra.mxu0 0.0
        %6806 = vmatprep.subr.mxu0 0.0
        %6807 = vmatpush1.msra.mxu0 0.0
        %6808 = vmatprep.subr.mxu0 0.0
        %6809 = vmatpush1.msra.mxu0 0.0
        %6810 = vmatprep.subr.mxu0 0.0
        %6811 = vmatpush1.msra.mxu0 0.0
        %6812 = vmatprep.subr.mxu0 0.0
        %6813 = vmatpush1.msra.mxu0 0.0
        %6814 = vmatprep.subr.mxu0 0.0
        %6815 = vmatpush1.msra.mxu0 0.0
        %6816 = vmatprep.subr.mxu0 0.0
        %6817 = vmatpush1.msra.mxu0 0.0
        %6818 = vmatprep.subr.mxu0 0.0
        %6819 = vmatpush1.msra.mxu0 0.0
        %6820 = vmatprep.subr.mxu0 0.0
        %6821 = vmatpush1.msra.mxu0 0.0
        %6822 = vmatprep.subr.mxu0 0.0
        %6823 = vmatpush1.msra.mxu0 0.0
        %6824 = vmatprep.subr.mxu0 0.0
        %6825 = vmatpush1.msra.mxu0 0.0
        %6826 = vmatprep.subr.mxu0 0.0
        %6827 = vmatpush1.msra.mxu0 0.0
        %6828 = vmatprep.subr.mxu0 0.0
        %6829 = vmatpush1.msra.mxu0 0.0
        %6830 = vmatprep.subr.mxu0 0.0
        %6831 = vmatpush1.msra.mxu0 0.0
        %6832 = vmatprep.subr.mxu0 0.0
        %6833 = vmatpush1.msra.mxu0 0.0
        %6834 = vmatprep.subr.mxu0 0.0
        %6835 = vmatpush1.msra.mxu0 0.0
        %6836 = vmatprep.mubr.f32.mxu0 0.0
        %6837 = vmatmul.mubr.f32.gmra.mrb[0].mxu0 %v6737
        %v6838 = vpop.f32.mrb[0].mxu0
        %v6839 = vadd.f32 0.0, %v6838
        %v6840 = vpop.f32.mrb[0].mxu0
        %6841 = vmatprep.mubr.f32.mxu0 0.0
        %6842 = vmatmul.mubr.f32.gmra.mrb[0].mxu0 %v6739
        %v6843 = vpop.f32.mrb[0].mxu0
        %v6844 = vadd.f32 0.0, %v6843
        %v6845 = vpop.f32.mrb[0].mxu0
        %6846 = vmatprep.mubr.f32.mxu0 0.0
        %6847 = vmatmul.mubr.f32.gmra.mrb[0].mxu0 %v6741
        %v6848 = vpop.f32.mrb[0].mxu0
        %v6849 = vadd.f32 0.0, %v6848
        %v6850 = vpop.f32.mrb[0].mxu0
        %6851 = vmatprep.mubr.f32.mxu0 0.0
        %6852 = vmatmul.mubr.f32.gmra.mrb[0].mxu0 %v6743
        %v6853 = vpop.f32.mrb[0].mxu0
        %v6854 = vadd.f32 0.0, %v6853
        %v6855 = vpop.f32.mrb[0].mxu0
        %6856 = vmatprep.mubr.f32.mxu0 0.0
        %6857 = vmatmul.mubr.f32.gmra.mrb[0].mxu0 %v6745
        %v6858 = vpop.f32.mrb[0].mxu0
        %v6859 = vadd.f32 0.0, %v6858
        %v6860 = vpop.f32.mrb[0].mxu0
        %6861 = vmatprep.mubr.f32.mxu0 0.0
        %6862 = vmatmul.mubr.f32.gmra.mrb[0].mxu0 %v6747
        %v6863 = vpop.f32.mrb[0].mxu0
        %v6864 = vadd.f32 0.0, %v6863
        %v6865 = vpop.f32.mrb[0].mxu0
        %6866 = vmatprep.mubr.f32.mxu0 0.0
        %6867 = vmatmul.mubr.f32.gmra.mrb[0].mxu0 %v6749
        %v6868 = vpop.f32.mrb[0].mxu0
        %v6869 = vadd.f32 0.0, %v6868
        %v6870 = vpop.f32.mrb[0].mxu0
        %6871 = vmatprep.mubr.f32.mxu0 0.0
        %6872 = vmatmul.mubr.f32.gmra.mrb[0].mxu0 %v6751
        %v6873 = vpop.f32.mrb[0].mxu0
        %v6874 = vadd.f32 0.0, %v6873
        %v6875 = vpop.f32.mrb[0].mxu0
        %6876 = vmatprep.mubr.f32.mxu0 0.0
        %6877 = vmatmul.mubr.f32.gmra.mrb[0].mxu0 %v6753
        %v6878 = vpop.f32.mrb[0].mxu0
        %v6879 = vadd.f32 0.0, %v6878
        %v6880 = vpop.f32.mrb[0].mxu0
        %6881 = vmatprep.mubr.f32.mxu0 0.0
        %6882 = vmatmul.mubr.f32.gmra.mrb[0].mxu0 %v6755
        %v6883 = vpop.f32.mrb[0].mxu0
        %v6884 = vadd.f32 0.0, %v6883
        %v6885 = vpop.f32.mrb[0].mxu0
        %6886 = vmatprep.mubr.f32.mxu0 0.0
        %6887 = vmatmul.mubr.f32.gmra.mrb[0].mxu0 %v6757
        %v6888 = vpop.f32.mrb[0].mxu0
        %v6889 = vadd.f32 0.0, %v6888
        %v6890 = vpop.f32.mrb[0].mxu0
        %6891 = vmatprep.mubr.f32.mxu0 0.0
        %6892 = vmatmul.mubr.f32.gmra.mrb[0].mxu0 %v6759
        %v6893 = vpop.f32.mrb[0].mxu0
        %v6894 = vadd.f32 0.0, %v6893
        %v6895 = vpop.f32.mrb[0].mxu0
        %6896 = vmatprep.mubr.f32.mxu0 0.0
        %6897 = vmatmul.mubr.f32.gmra.mrb[0].mxu0 %v6761
        %v6898 = vpop.f32.mrb[0].mxu0
        %v6899 = vadd.f32 0.0, %v6898
        %v6900 = vpop.f32.mrb[0].mxu0
        %6901 = vmatprep.mubr.f32.mxu0 0.0
        %6902 = vmatmul.mubr.f32.gmra.mrb[0].mxu0 %v6763
        %v6903 = vpop.f32.mrb[0].mxu0
        %v6904 = vadd.f32 0.0, %v6903
        %v6905 = vpop.f32.mrb[0].mxu0
        %6906 = vmatprep.mubr.f32.mxu0 0.0
        %6907 = vmatmul.mubr.f32.gmra.mrb[0].mxu0 %v6765
        %v6908 = vpop.f32.mrb[0].mxu0
        %v6909 = vadd.f32 0.0, %v6908
        %v6910 = vpop.f32.mrb[0].mxu0
        %6911 = vmatprep.mubr.f32.mxu0 0.0
        %6912 = vmatmul.mubr.f32.gmra.mrb[0].mxu0 %v6767
        %v6913 = vpop.f32.mrb[0].mxu0
        %v6914 = vadd.f32 0.0, %v6913
        %v6915 = vpop.f32.mrb[0].mxu0
        %6916 = vdwg.mxu0
        %6917 = vst [vmem:[#allocation3 + $0x780] sm:$0xff] %v6839
        %6918 = vst [vmem:[#allocation3 + $0x788] sm:$0xff] %v6844
        %6919 = vst [vmem:[#allocation3 + $0x790] sm:$0xff] %v6849
        %6920 = vst [vmem:[#allocation3 + $0x798] sm:$0xff] %v6854
        %6921 = vst [vmem:[#allocation3 + $0x7a0] sm:$0xff] %v6859
        %6922 = vst [vmem:[#allocation3 + $0x7a8] sm:$0xff] %v6864
        %6923 = vst [vmem:[#allocation3 + $0x7b0] sm:$0xff] %v6869
        %6924 = vst [vmem:[#allocation3 + $0x7b8] sm:$0xff] %v6874
        %6925 = vst [vmem:[#allocation3 + $0x7c0] sm:$0xff] %v6879
        %6926 = vst [vmem:[#allocation3 + $0x7c8] sm:$0xff] %v6884
        %6927 = vst [vmem:[#allocation3 + $0x7d0] sm:$0xff] %v6889
        %6928 = vst [vmem:[#allocation3 + $0x7d8] sm:$0xff] %v6894
        %6929 = vst [vmem:[#allocation3 + $0x7e0] sm:$0xff] %v6899
        %6930 = vst [vmem:[#allocation3 + $0x7e8] sm:$0xff] %v6904
        %6931 = vst [vmem:[#allocation3 + $0x7f0] sm:$0xff] %v6909
        %6932 = vst [vmem:[#allocation3 + $0x7f8] sm:$0xff] %v6914
        %v6933 = vld [vmem:[%s3] sm:$0xff]
        %v6934 = vld [vmem:[%s3 + $0x10] sm:$0xff]
        %v6935 = vld [vmem:[%s3 + $0x20] sm:$0xff]
        %v6936 = vld [vmem:[%s3 + $0x30] sm:$0xff]
        %v6937 = vld [vmem:[%s3 + $0x40] sm:$0xff]
        %v6938 = vld [vmem:[%s3 + $0x50] sm:$0xff]
        %v6939 = vld [vmem:[%s3 + $0x60] sm:$0xff]
        %v6940 = vld [vmem:[%s3 + $0x70] sm:$0xff]
        %v6941 = vld [vmem:[%s3 + $0x80] sm:$0xff]
        %v6942 = vld [vmem:[%s3 + $0x90] sm:$0xff]
        %v6943 = vld [vmem:[%s3 + $0xa0] sm:$0xff]
        %v6944 = vld [vmem:[%s3 + $0xb0] sm:$0xff]
        %v6945 = vld [vmem:[%s3 + $0xc0] sm:$0xff]
        %v6946 = vld [vmem:[%s3 + $0xd0] sm:$0xff]
        %v6947 = vld [vmem:[%s3 + $0xe0] sm:$0xff]
        %v6948 = vld [vmem:[%s3 + $0xf0] sm:$0xff]
        %v6949 = vld [vmem:[%s296 + $0x60] sm:$0x3f]
        %6966 = vrot.lane.b32.xlu0 %v6933, 32
        %v6967 = vpop.permute.xlu0 %6966
        %6968 = vrot.lane.b32.xlu0 %v6934, 32
        %v6969 = vpop.permute.xlu0 %6968
        %6970 = vrot.lane.b32.xlu0 %v6935, 32
        %v6971 = vpop.permute.xlu0 %6970
        %6972 = vrot.lane.b32.xlu0 %v6936, 32
        %v6973 = vpop.permute.xlu0 %6972
        %6974 = vrot.lane.b32.xlu0 %v6937, 32
        %v6975 = vpop.permute.xlu0 %6974
        %6976 = vrot.lane.b32.xlu0 %v6938, 32
        %v6977 = vpop.permute.xlu0 %6976
        %6978 = vrot.lane.b32.xlu0 %v6939, 32
        %v6979 = vpop.permute.xlu0 %6978
        %6980 = vrot.lane.b32.xlu0 %v6940, 32
        %v6981 = vpop.permute.xlu0 %6980
        %6982 = vrot.lane.b32.xlu0 %v6941, 32
        %v6983 = vpop.permute.xlu0 %6982
        %6984 = vrot.lane.b32.xlu0 %v6942, 32
        %v6985 = vpop.permute.xlu0 %6984
        %6986 = vrot.lane.b32.xlu0 %v6943, 32
        %v6987 = vpop.permute.xlu0 %6986
        %6988 = vrot.lane.b32.xlu0 %v6944, 32
        %v6989 = vpop.permute.xlu0 %6988
        %6990 = vrot.lane.b32.xlu0 %v6945, 32
        %v6991 = vpop.permute.xlu0 %6990
        %6992 = vrot.lane.b32.xlu0 %v6946, 32
        %v6993 = vpop.permute.xlu0 %6992
        %6994 = vrot.lane.b32.xlu0 %v6947, 32
        %v6995 = vpop.permute.xlu0 %6994
        %6996 = vrot.lane.b32.xlu0 %v6948, 32
        %v6997 = vpop.permute.xlu0 %6996
        %v6998 = vsel %vm2804, %v6967, 0
        %v7000 = vsel %vm2804, %v6969, 0
        %v7002 = vsel %vm2804, %v6971, 0
        %v7004 = vsel %vm2804, %v6973, 0
        %v7006 = vsel %vm2804, %v6975, 0
        %v7008 = vsel %vm2804, %v6977, 0
        %v7010 = vsel %vm2804, %v6979, 0
        %v7012 = vsel %vm2804, %v6981, 0
        %v7014 = vsel %vm2804, %v6983, 0
        %v7016 = vsel %vm2804, %v6985, 0
        %v7018 = vsel %vm2804, %v6987, 0
        %v7020 = vsel %vm2804, %v6989, 0
        %v7022 = vsel %vm2804, %v6991, 0
        %v7024 = vsel %vm2804, %v6993, 0
        %v7026 = vsel %vm2804, %v6995, 0
        %v7028 = vsel %vm2804, %v6997, 0
        %v7031 = vsel %vm2853, %v6949, 0
        %7033 = vmatprep.subr.mxu0 0.0
        %7034 = vmatpush1.msra.mxu0 %v7031
        %7035 = vmatprep.subr.mxu0 0.0
        %7036 = vmatpush1.msra.mxu0 0.0
        %7037 = vmatprep.subr.mxu0 0.0
        %7038 = vmatpush1.msra.mxu0 0.0
        %7039 = vmatprep.subr.mxu0 0.0
        %7040 = vmatpush1.msra.mxu0 0.0
        %7041 = vmatprep.subr.mxu0 0.0
        %7042 = vmatpush1.msra.mxu0 0.0
        %7043 = vmatprep.subr.mxu0 0.0
        %7044 = vmatpush1.msra.mxu0 0.0
        %7045 = vmatprep.subr.mxu0 0.0
        %7046 = vmatpush1.msra.mxu0 0.0
        %7047 = vmatprep.subr.mxu0 0.0
        %7048 = vmatpush1.msra.mxu0 0.0
        %7049 = vmatprep.subr.mxu0 0.0
        %7050 = vmatpush1.msra.mxu0 0.0
        %7051 = vmatprep.subr.mxu0 0.0
        %7052 = vmatpush1.msra.mxu0 0.0
        %7053 = vmatprep.subr.mxu0 0.0
        %7054 = vmatpush1.msra.mxu0 0.0
        %7055 = vmatprep.subr.mxu0 0.0
        %7056 = vmatpush1.msra.mxu0 0.0
        %7057 = vmatprep.subr.mxu0 0.0
        %7058 = vmatpush1.msra.mxu0 0.0
        %7059 = vmatprep.subr.mxu0 0.0
        %7060 = vmatpush1.msra.mxu0 0.0
        %7061 = vmatprep.subr.mxu0 0.0
        %7062 = vmatpush1.msra.mxu0 0.0
        %7063 = vmatprep.subr.mxu0 0.0
        %7064 = vmatpush1.msra.mxu0 0.0
        %7065 = vmatprep.subr.mxu0 0.0
        %7066 = vmatpush1.msra.mxu0 0.0
        %7067 = vmatprep.subr.mxu0 0.0
        %7068 = vmatpush1.msra.mxu0 0.0
        %7069 = vmatprep.subr.mxu0 0.0
        %7070 = vmatpush1.msra.mxu0 0.0
        %7071 = vmatprep.subr.mxu0 0.0
        %7072 = vmatpush1.msra.mxu0 0.0
        %7073 = vmatprep.subr.mxu0 0.0
        %7074 = vmatpush1.msra.mxu0 0.0
        %7075 = vmatprep.subr.mxu0 0.0
        %7076 = vmatpush1.msra.mxu0 0.0
        %7077 = vmatprep.subr.mxu0 0.0
        %7078 = vmatpush1.msra.mxu0 0.0
        %7079 = vmatprep.subr.mxu0 0.0
        %7080 = vmatpush1.msra.mxu0 0.0
        %7081 = vmatprep.subr.mxu0 0.0
        %7082 = vmatpush1.msra.mxu0 0.0
        %7083 = vmatprep.subr.mxu0 0.0
        %7084 = vmatpush1.msra.mxu0 0.0
        %7085 = vmatprep.subr.mxu0 0.0
        %7086 = vmatpush1.msra.mxu0 0.0
        %7087 = vmatprep.subr.mxu0 0.0
        %7088 = vmatpush1.msra.mxu0 0.0
        %7089 = vmatprep.subr.mxu0 0.0
        %7090 = vmatpush1.msra.mxu0 0.0
        %7091 = vmatprep.subr.mxu0 0.0
        %7092 = vmatpush1.msra.mxu0 0.0
        %7093 = vmatprep.subr.mxu0 0.0
        %7094 = vmatpush1.msra.mxu0 0.0
        %7095 = vmatprep.subr.mxu0 0.0
        %7096 = vmatpush1.msra.mxu0 0.0
        %7097 = vmatprep.mubr.f32.mxu0 0.0
        %7098 = vmatmul.mubr.f32.gmra.mrb[0].mxu0 %v6998
        %v7099 = vpop.f32.mrb[0].mxu0
        %v7100 = vadd.f32 0.0, %v7099
        %v7101 = vpop.f32.mrb[0].mxu0
        %7102 = vmatprep.mubr.f32.mxu0 0.0
        %7103 = vmatmul.mubr.f32.gmra.mrb[0].mxu0 %v7000
        %v7104 = vpop.f32.mrb[0].mxu0
        %v7105 = vadd.f32 0.0, %v7104
        %v7106 = vpop.f32.mrb[0].mxu0
        %7107 = vmatprep.mubr.f32.mxu0 0.0
        %7108 = vmatmul.mubr.f32.gmra.mrb[0].mxu0 %v7002
        %v7109 = vpop.f32.mrb[0].mxu0
        %v7110 = vadd.f32 0.0, %v7109
        %v7111 = vpop.f32.mrb[0].mxu0
        %7112 = vmatprep.mubr.f32.mxu0 0.0
        %7113 = vmatmul.mubr.f32.gmra.mrb[0].mxu0 %v7004
        %v7114 = vpop.f32.mrb[0].mxu0
        %v7115 = vadd.f32 0.0, %v7114
        %v7116 = vpop.f32.mrb[0].mxu0
        %7117 = vmatprep.mubr.f32.mxu0 0.0
        %7118 = vmatmul.mubr.f32.gmra.mrb[0].mxu0 %v7006
        %v7119 = vpop.f32.mrb[0].mxu0
        %v7120 = vadd.f32 0.0, %v7119
        %v7121 = vpop.f32.mrb[0].mxu0
        %7122 = vmatprep.mubr.f32.mxu0 0.0
        %7123 = vmatmul.mubr.f32.gmra.mrb[0].mxu0 %v7008
        %v7124 = vpop.f32.mrb[0].mxu0
        %v7125 = vadd.f32 0.0, %v7124
        %v7126 = vpop.f32.mrb[0].mxu0
        %7127 = vmatprep.mubr.f32.mxu0 0.0
        %7128 = vmatmul.mubr.f32.gmra.mrb[0].mxu0 %v7010
        %v7129 = vpop.f32.mrb[0].mxu0
        %v7130 = vadd.f32 0.0, %v7129
        %v7131 = vpop.f32.mrb[0].mxu0
        %7132 = vmatprep.mubr.f32.mxu0 0.0
        %7133 = vmatmul.mubr.f32.gmra.mrb[0].mxu0 %v7012
        %v7134 = vpop.f32.mrb[0].mxu0
        %v7135 = vadd.f32 0.0, %v7134
        %v7136 = vpop.f32.mrb[0].mxu0
        %7137 = vmatprep.mubr.f32.mxu0 0.0
        %7138 = vmatmul.mubr.f32.gmra.mrb[0].mxu0 %v7014
        %v7139 = vpop.f32.mrb[0].mxu0
        %v7140 = vadd.f32 0.0, %v7139
        %v7141 = vpop.f32.mrb[0].mxu0
        %7142 = vmatprep.mubr.f32.mxu0 0.0
        %7143 = vmatmul.mubr.f32.gmra.mrb[0].mxu0 %v7016
        %v7144 = vpop.f32.mrb[0].mxu0
        %v7145 = vadd.f32 0.0, %v7144
        %v7146 = vpop.f32.mrb[0].mxu0
        %7147 = vmatprep.mubr.f32.mxu0 0.0
        %7148 = vmatmul.mubr.f32.gmra.mrb[0].mxu0 %v7018
        %v7149 = vpop.f32.mrb[0].mxu0
        %v7150 = vadd.f32 0.0, %v7149
        %v7151 = vpop.f32.mrb[0].mxu0
        %7152 = vmatprep.mubr.f32.mxu0 0.0
        %7153 = vmatmul.mubr.f32.gmra.mrb[0].mxu0 %v7020
        %v7154 = vpop.f32.mrb[0].mxu0
        %v7155 = vadd.f32 0.0, %v7154
        %v7156 = vpop.f32.mrb[0].mxu0
        %7157 = vmatprep.mubr.f32.mxu0 0.0
        %7158 = vmatmul.mubr.f32.gmra.mrb[0].mxu0 %v7022
        %v7159 = vpop.f32.mrb[0].mxu0
        %v7160 = vadd.f32 0.0, %v7159
        %v7161 = vpop.f32.mrb[0].mxu0
        %7162 = vmatprep.mubr.f32.mxu0 0.0
        %7163 = vmatmul.mubr.f32.gmra.mrb[0].mxu0 %v7024
        %v7164 = vpop.f32.mrb[0].mxu0
        %v7165 = vadd.f32 0.0, %v7164
        %v7166 = vpop.f32.mrb[0].mxu0
        %7167 = vmatprep.mubr.f32.mxu0 0.0
        %7168 = vmatmul.mubr.f32.gmra.mrb[0].mxu0 %v7026
        %v7169 = vpop.f32.mrb[0].mxu0
        %v7170 = vadd.f32 0.0, %v7169
        %v7171 = vpop.f32.mrb[0].mxu0
        %7172 = vmatprep.mubr.f32.mxu0 0.0
        %7173 = vmatmul.mubr.f32.gmra.mrb[0].mxu0 %v7028
        %v7174 = vpop.f32.mrb[0].mxu0
        %v7175 = vadd.f32 0.0, %v7174
        %v7176 = vpop.f32.mrb[0].mxu0
        %7177 = vdwg.mxu0
        %7178 = vst [vmem:[#allocation3 + $0x800] sm:$0xff] %v7100
        %7179 = vst [vmem:[#allocation3 + $0x808] sm:$0xff] %v7105
        %7180 = vst [vmem:[#allocation3 + $0x810] sm:$0xff] %v7110
        %7181 = vst [vmem:[#allocation3 + $0x818] sm:$0xff] %v7115
        %7182 = vst [vmem:[#allocation3 + $0x820] sm:$0xff] %v7120
        %7183 = vst [vmem:[#allocation3 + $0x828] sm:$0xff] %v7125
        %7184 = vst [vmem:[#allocation3 + $0x830] sm:$0xff] %v7130
        %7185 = vst [vmem:[#allocation3 + $0x838] sm:$0xff] %v7135
        %7186 = vst [vmem:[#allocation3 + $0x840] sm:$0xff] %v7140
        %7187 = vst [vmem:[#allocation3 + $0x848] sm:$0xff] %v7145
        %7188 = vst [vmem:[#allocation3 + $0x850] sm:$0xff] %v7150
        %7189 = vst [vmem:[#allocation3 + $0x858] sm:$0xff] %v7155
        %7190 = vst [vmem:[#allocation3 + $0x860] sm:$0xff] %v7160
        %7191 = vst [vmem:[#allocation3 + $0x868] sm:$0xff] %v7165
        %7192 = vst [vmem:[#allocation3 + $0x870] sm:$0xff] %v7170
        %7193 = vst [vmem:[#allocation3 + $0x878] sm:$0xff] %v7175
        %v7194 = vld [vmem:[%s3] sm:$0xff]
        %v7195 = vld [vmem:[%s3 + $0x10] sm:$0xff]
        %v7196 = vld [vmem:[%s3 + $0x20] sm:$0xff]
        %v7197 = vld [vmem:[%s3 + $0x30] sm:$0xff]
        %v7198 = vld [vmem:[%s3 + $0x40] sm:$0xff]
        %v7199 = vld [vmem:[%s3 + $0x50] sm:$0xff]
        %v7200 = vld [vmem:[%s3 + $0x60] sm:$0xff]
        %v7201 = vld [vmem:[%s3 + $0x70] sm:$0xff]
        %v7202 = vld [vmem:[%s3 + $0x80] sm:$0xff]
        %v7203 = vld [vmem:[%s3 + $0x90] sm:$0xff]
        %v7204 = vld [vmem:[%s3 + $0xa0] sm:$0xff]
        %v7205 = vld [vmem:[%s3 + $0xb0] sm:$0xff]
        %v7206 = vld [vmem:[%s3 + $0xc0] sm:$0xff]
        %v7207 = vld [vmem:[%s3 + $0xd0] sm:$0xff]
        %v7208 = vld [vmem:[%s3 + $0xe0] sm:$0xff]
        %v7209 = vld [vmem:[%s3 + $0xf0] sm:$0xff]
        %v7210 = vld [vmem:[%s296 + $0x66] sm:$0x3f]
        %7227 = vrot.lane.b32.xlu0 %v7194, 26
        %v7228 = vpop.permute.xlu0 %7227
        %7229 = vrot.lane.b32.xlu0 %v7195, 26
        %v7230 = vpop.permute.xlu0 %7229
        %7231 = vrot.lane.b32.xlu0 %v7196, 26
        %v7232 = vpop.permute.xlu0 %7231
        %7233 = vrot.lane.b32.xlu0 %v7197, 26
        %v7234 = vpop.permute.xlu0 %7233
        %7235 = vrot.lane.b32.xlu0 %v7198, 26
        %v7236 = vpop.permute.xlu0 %7235
        %7237 = vrot.lane.b32.xlu0 %v7199, 26
        %v7238 = vpop.permute.xlu0 %7237
        %7239 = vrot.lane.b32.xlu0 %v7200, 26
        %v7240 = vpop.permute.xlu0 %7239
        %7241 = vrot.lane.b32.xlu0 %v7201, 26
        %v7242 = vpop.permute.xlu0 %7241
        %7243 = vrot.lane.b32.xlu0 %v7202, 26
        %v7244 = vpop.permute.xlu0 %7243
        %7245 = vrot.lane.b32.xlu0 %v7203, 26
        %v7246 = vpop.permute.xlu0 %7245
        %7247 = vrot.lane.b32.xlu0 %v7204, 26
        %v7248 = vpop.permute.xlu0 %7247
        %7249 = vrot.lane.b32.xlu0 %v7205, 26
        %v7250 = vpop.permute.xlu0 %7249
        %7251 = vrot.lane.b32.xlu0 %v7206, 26
        %v7252 = vpop.permute.xlu0 %7251
        %7253 = vrot.lane.b32.xlu0 %v7207, 26
        %v7254 = vpop.permute.xlu0 %7253
        %7255 = vrot.lane.b32.xlu0 %v7208, 26
        %v7256 = vpop.permute.xlu0 %7255
        %7257 = vrot.lane.b32.xlu0 %v7209, 26
        %v7258 = vpop.permute.xlu0 %7257
        %v7259 = vsel %vm2804, %v7228, 0
        %v7261 = vsel %vm2804, %v7230, 0
        %v7263 = vsel %vm2804, %v7232, 0
        %v7265 = vsel %vm2804, %v7234, 0
        %v7267 = vsel %vm2804, %v7236, 0
        %v7269 = vsel %vm2804, %v7238, 0
        %v7271 = vsel %vm2804, %v7240, 0
        %v7273 = vsel %vm2804, %v7242, 0
        %v7275 = vsel %vm2804, %v7244, 0
        %v7277 = vsel %vm2804, %v7246, 0
        %v7279 = vsel %vm2804, %v7248, 0
        %v7281 = vsel %vm2804, %v7250, 0
        %v7283 = vsel %vm2804, %v7252, 0
        %v7285 = vsel %vm2804, %v7254, 0
        %v7287 = vsel %vm2804, %v7256, 0
        %v7289 = vsel %vm2804, %v7258, 0
        %v7292 = vsel %vm2853, %v7210, 0
        %7294 = vmatprep.subr.mxu0 0.0
        %7295 = vmatpush1.msra.mxu0 %v7292
        %7296 = vmatprep.subr.mxu0 0.0
        %7297 = vmatpush1.msra.mxu0 0.0
        %7298 = vmatprep.subr.mxu0 0.0
        %7299 = vmatpush1.msra.mxu0 0.0
        %7300 = vmatprep.subr.mxu0 0.0
        %7301 = vmatpush1.msra.mxu0 0.0
        %7302 = vmatprep.subr.mxu0 0.0
        %7303 = vmatpush1.msra.mxu0 0.0
        %7304 = vmatprep.subr.mxu0 0.0
        %7305 = vmatpush1.msra.mxu0 0.0
        %7306 = vmatprep.subr.mxu0 0.0
        %7307 = vmatpush1.msra.mxu0 0.0
        %7308 = vmatprep.subr.mxu0 0.0
        %7309 = vmatpush1.msra.mxu0 0.0
        %7310 = vmatprep.subr.mxu0 0.0
        %7311 = vmatpush1.msra.mxu0 0.0
        %7312 = vmatprep.subr.mxu0 0.0
        %7313 = vmatpush1.msra.mxu0 0.0
        %7314 = vmatprep.subr.mxu0 0.0
        %7315 = vmatpush1.msra.mxu0 0.0
        %7316 = vmatprep.subr.mxu0 0.0
        %7317 = vmatpush1.msra.mxu0 0.0
        %7318 = vmatprep.subr.mxu0 0.0
        %7319 = vmatpush1.msra.mxu0 0.0
        %7320 = vmatprep.subr.mxu0 0.0
        %7321 = vmatpush1.msra.mxu0 0.0
        %7322 = vmatprep.subr.mxu0 0.0
        %7323 = vmatpush1.msra.mxu0 0.0
        %7324 = vmatprep.subr.mxu0 0.0
        %7325 = vmatpush1.msra.mxu0 0.0
        %7326 = vmatprep.subr.mxu0 0.0
        %7327 = vmatpush1.msra.mxu0 0.0
        %7328 = vmatprep.subr.mxu0 0.0
        %7329 = vmatpush1.msra.mxu0 0.0
        %7330 = vmatprep.subr.mxu0 0.0
        %7331 = vmatpush1.msra.mxu0 0.0
        %7332 = vmatprep.subr.mxu0 0.0
        %7333 = vmatpush1.msra.mxu0 0.0
        %7334 = vmatprep.subr.mxu0 0.0
        %7335 = vmatpush1.msra.mxu0 0.0
        %7336 = vmatprep.subr.mxu0 0.0
        %7337 = vmatpush1.msra.mxu0 0.0
        %7338 = vmatprep.subr.mxu0 0.0
        %7339 = vmatpush1.msra.mxu0 0.0
        %7340 = vmatprep.subr.mxu0 0.0
        %7341 = vmatpush1.msra.mxu0 0.0
        %7342 = vmatprep.subr.mxu0 0.0
        %7343 = vmatpush1.msra.mxu0 0.0
        %7344 = vmatprep.subr.mxu0 0.0
        %7345 = vmatpush1.msra.mxu0 0.0
        %7346 = vmatprep.subr.mxu0 0.0
        %7347 = vmatpush1.msra.mxu0 0.0
        %7348 = vmatprep.subr.mxu0 0.0
        %7349 = vmatpush1.msra.mxu0 0.0
        %7350 = vmatprep.subr.mxu0 0.0
        %7351 = vmatpush1.msra.mxu0 0.0
        %7352 = vmatprep.subr.mxu0 0.0
        %7353 = vmatpush1.msra.mxu0 0.0
        %7354 = vmatprep.subr.mxu0 0.0
        %7355 = vmatpush1.msra.mxu0 0.0
        %7356 = vmatprep.subr.mxu0 0.0
        %7357 = vmatpush1.msra.mxu0 0.0
        %7358 = vmatprep.mubr.f32.mxu0 0.0
        %7359 = vmatmul.mubr.f32.gmra.mrb[0].mxu0 %v7259
        %v7360 = vpop.f32.mrb[0].mxu0
        %v7361 = vadd.f32 0.0, %v7360
        %v7362 = vpop.f32.mrb[0].mxu0
        %7363 = vmatprep.mubr.f32.mxu0 0.0
        %7364 = vmatmul.mubr.f32.gmra.mrb[0].mxu0 %v7261
        %v7365 = vpop.f32.mrb[0].mxu0
        %v7366 = vadd.f32 0.0, %v7365
        %v7367 = vpop.f32.mrb[0].mxu0
        %7368 = vmatprep.mubr.f32.mxu0 0.0
        %7369 = vmatmul.mubr.f32.gmra.mrb[0].mxu0 %v7263
        %v7370 = vpop.f32.mrb[0].mxu0
        %v7371 = vadd.f32 0.0, %v7370
        %v7372 = vpop.f32.mrb[0].mxu0
        %7373 = vmatprep.mubr.f32.mxu0 0.0
        %7374 = vmatmul.mubr.f32.gmra.mrb[0].mxu0 %v7265
        %v7375 = vpop.f32.mrb[0].mxu0
        %v7376 = vadd.f32 0.0, %v7375
        %v7377 = vpop.f32.mrb[0].mxu0
        %7378 = vmatprep.mubr.f32.mxu0 0.0
        %7379 = vmatmul.mubr.f32.gmra.mrb[0].mxu0 %v7267
        %v7380 = vpop.f32.mrb[0].mxu0
        %v7381 = vadd.f32 0.0, %v7380
        %v7382 = vpop.f32.mrb[0].mxu0
        %7383 = vmatprep.mubr.f32.mxu0 0.0
        %7384 = vmatmul.mubr.f32.gmra.mrb[0].mxu0 %v7269
        %v7385 = vpop.f32.mrb[0].mxu0
        %v7386 = vadd.f32 0.0, %v7385
        %v7387 = vpop.f32.mrb[0].mxu0
        %7388 = vmatprep.mubr.f32.mxu0 0.0
        %7389 = vmatmul.mubr.f32.gmra.mrb[0].mxu0 %v7271
        %v7390 = vpop.f32.mrb[0].mxu0
        %v7391 = vadd.f32 0.0, %v7390
        %v7392 = vpop.f32.mrb[0].mxu0
        %7393 = vmatprep.mubr.f32.mxu0 0.0
        %7394 = vmatmul.mubr.f32.gmra.mrb[0].mxu0 %v7273
        %v7395 = vpop.f32.mrb[0].mxu0
        %v7396 = vadd.f32 0.0, %v7395
        %v7397 = vpop.f32.mrb[0].mxu0
        %7398 = vmatprep.mubr.f32.mxu0 0.0
        %7399 = vmatmul.mubr.f32.gmra.mrb[0].mxu0 %v7275
        %v7400 = vpop.f32.mrb[0].mxu0
        %v7401 = vadd.f32 0.0, %v7400
        %v7402 = vpop.f32.mrb[0].mxu0
        %7403 = vmatprep.mubr.f32.mxu0 0.0
        %7404 = vmatmul.mubr.f32.gmra.mrb[0].mxu0 %v7277
        %v7405 = vpop.f32.mrb[0].mxu0
        %v7406 = vadd.f32 0.0, %v7405
        %v7407 = vpop.f32.mrb[0].mxu0
        %7408 = vmatprep.mubr.f32.mxu0 0.0
        %7409 = vmatmul.mubr.f32.gmra.mrb[0].mxu0 %v7279
        %v7410 = vpop.f32.mrb[0].mxu0
        %v7411 = vadd.f32 0.0, %v7410
        %v7412 = vpop.f32.mrb[0].mxu0
        %7413 = vmatprep.mubr.f32.mxu0 0.0
        %7414 = vmatmul.mubr.f32.gmra.mrb[0].mxu0 %v7281
        %v7415 = vpop.f32.mrb[0].mxu0
        %v7416 = vadd.f32 0.0, %v7415
        %v7417 = vpop.f32.mrb[0].mxu0
        %7418 = vmatprep.mubr.f32.mxu0 0.0
        %7419 = vmatmul.mubr.f32.gmra.mrb[0].mxu0 %v7283
        %v7420 = vpop.f32.mrb[0].mxu0
        %v7421 = vadd.f32 0.0, %v7420
        %v7422 = vpop.f32.mrb[0].mxu0
        %7423 = vmatprep.mubr.f32.mxu0 0.0
        %7424 = vmatmul.mubr.f32.gmra.mrb[0].mxu0 %v7285
        %v7425 = vpop.f32.mrb[0].mxu0
        %v7426 = vadd.f32 0.0, %v7425
        %v7427 = vpop.f32.mrb[0].mxu0
        %7428 = vmatprep.mubr.f32.mxu0 0.0
        %7429 = vmatmul.mubr.f32.gmra.mrb[0].mxu0 %v7287
        %v7430 = vpop.f32.mrb[0].mxu0
        %v7431 = vadd.f32 0.0, %v7430
        %v7432 = vpop.f32.mrb[0].mxu0
        %7433 = vmatprep.mubr.f32.mxu0 0.0
        %7434 = vmatmul.mubr.f32.gmra.mrb[0].mxu0 %v7289
        %v7435 = vpop.f32.mrb[0].mxu0
        %v7436 = vadd.f32 0.0, %v7435
        %v7437 = vpop.f32.mrb[0].mxu0
        %7438 = vdwg.mxu0
        %7439 = vst [vmem:[#allocation3 + $0x880] sm:$0xff] %v7361
        %7440 = vst [vmem:[#allocation3 + $0x888] sm:$0xff] %v7366
        %7441 = vst [vmem:[#allocation3 + $0x890] sm:$0xff] %v7371
        %7442 = vst [vmem:[#allocation3 + $0x898] sm:$0xff] %v7376
        %7443 = vst [vmem:[#allocation3 + $0x8a0] sm:$0xff] %v7381
        %7444 = vst [vmem:[#allocation3 + $0x8a8] sm:$0xff] %v7386
        %7445 = vst [vmem:[#allocation3 + $0x8b0] sm:$0xff] %v7391
        %7446 = vst [vmem:[#allocation3 + $0x8b8] sm:$0xff] %v7396
        %7447 = vst [vmem:[#allocation3 + $0x8c0] sm:$0xff] %v7401
        %7448 = vst [vmem:[#allocation3 + $0x8c8] sm:$0xff] %v7406
        %7449 = vst [vmem:[#allocation3 + $0x8d0] sm:$0xff] %v7411
        %7450 = vst [vmem:[#allocation3 + $0x8d8] sm:$0xff] %v7416
        %7451 = vst [vmem:[#allocation3 + $0x8e0] sm:$0xff] %v7421
        %7452 = vst [vmem:[#allocation3 + $0x8e8] sm:$0xff] %v7426
        %7453 = vst [vmem:[#allocation3 + $0x8f0] sm:$0xff] %v7431
        %7454 = vst [vmem:[#allocation3 + $0x8f8] sm:$0xff] %v7436
        %v7455 = vld [vmem:[%s3] sm:$0xff]
        %v7456 = vld [vmem:[%s3 + $0x10] sm:$0xff]
        %v7457 = vld [vmem:[%s3 + $0x20] sm:$0xff]
        %v7458 = vld [vmem:[%s3 + $0x30] sm:$0xff]
        %v7459 = vld [vmem:[%s3 + $0x40] sm:$0xff]
        %v7460 = vld [vmem:[%s3 + $0x50] sm:$0xff]
        %v7461 = vld [vmem:[%s3 + $0x60] sm:$0xff]
        %v7462 = vld [vmem:[%s3 + $0x70] sm:$0xff]
        %v7463 = vld [vmem:[%s3 + $0x80] sm:$0xff]
        %v7464 = vld [vmem:[%s3 + $0x90] sm:$0xff]
        %v7465 = vld [vmem:[%s3 + $0xa0] sm:$0xff]
        %v7466 = vld [vmem:[%s3 + $0xb0] sm:$0xff]
        %v7467 = vld [vmem:[%s3 + $0xc0] sm:$0xff]
        %v7468 = vld [vmem:[%s3 + $0xd0] sm:$0xff]
        %v7469 = vld [vmem:[%s3 + $0xe0] sm:$0xff]
        %v7470 = vld [vmem:[%s3 + $0xf0] sm:$0xff]
        %v7471 = vld [vmem:[%s296 + $0x6c] sm:$0x3f]
        %7488 = vrot.lane.b32.xlu0 %v7455, 20
        %v7489 = vpop.permute.xlu0 %7488
        %7490 = vrot.lane.b32.xlu0 %v7456, 20
        %v7491 = vpop.permute.xlu0 %7490
        %7492 = vrot.lane.b32.xlu0 %v7457, 20
        %v7493 = vpop.permute.xlu0 %7492
        %7494 = vrot.lane.b32.xlu0 %v7458, 20
        %v7495 = vpop.permute.xlu0 %7494
        %7496 = vrot.lane.b32.xlu0 %v7459, 20
        %v7497 = vpop.permute.xlu0 %7496
        %7498 = vrot.lane.b32.xlu0 %v7460, 20
        %v7499 = vpop.permute.xlu0 %7498
        %7500 = vrot.lane.b32.xlu0 %v7461, 20
        %v7501 = vpop.permute.xlu0 %7500
        %7502 = vrot.lane.b32.xlu0 %v7462, 20
        %v7503 = vpop.permute.xlu0 %7502
        %7504 = vrot.lane.b32.xlu0 %v7463, 20
        %v7505 = vpop.permute.xlu0 %7504
        %7506 = vrot.lane.b32.xlu0 %v7464, 20
        %v7507 = vpop.permute.xlu0 %7506
        %7508 = vrot.lane.b32.xlu0 %v7465, 20
        %v7509 = vpop.permute.xlu0 %7508
        %7510 = vrot.lane.b32.xlu0 %v7466, 20
        %v7511 = vpop.permute.xlu0 %7510
        %7512 = vrot.lane.b32.xlu0 %v7467, 20
        %v7513 = vpop.permute.xlu0 %7512
        %7514 = vrot.lane.b32.xlu0 %v7468, 20
        %v7515 = vpop.permute.xlu0 %7514
        %7516 = vrot.lane.b32.xlu0 %v7469, 20
        %v7517 = vpop.permute.xlu0 %7516
        %7518 = vrot.lane.b32.xlu0 %v7470, 20
        %v7519 = vpop.permute.xlu0 %7518
        %v7520 = vsel %vm2804, %v7489, 0
        %v7522 = vsel %vm2804, %v7491, 0
        %v7524 = vsel %vm2804, %v7493, 0
        %v7526 = vsel %vm2804, %v7495, 0
        %v7528 = vsel %vm2804, %v7497, 0
        %v7530 = vsel %vm2804, %v7499, 0
        %v7532 = vsel %vm2804, %v7501, 0
        %v7534 = vsel %vm2804, %v7503, 0
        %v7536 = vsel %vm2804, %v7505, 0
        %v7538 = vsel %vm2804, %v7507, 0
        %v7540 = vsel %vm2804, %v7509, 0
        %v7542 = vsel %vm2804, %v7511, 0
        %v7544 = vsel %vm2804, %v7513, 0
        %v7546 = vsel %vm2804, %v7515, 0
        %v7548 = vsel %vm2804, %v7517, 0
        %v7550 = vsel %vm2804, %v7519, 0
        %v7553 = vsel %vm2853, %v7471, 0
        %7555 = vmatprep.subr.mxu0 0.0
        %7556 = vmatpush1.msra.mxu0 %v7553
        %7557 = vmatprep.subr.mxu0 0.0
        %7558 = vmatpush1.msra.mxu0 0.0
        %7559 = vmatprep.subr.mxu0 0.0
        %7560 = vmatpush1.msra.mxu0 0.0
        %7561 = vmatprep.subr.mxu0 0.0
        %7562 = vmatpush1.msra.mxu0 0.0
        %7563 = vmatprep.subr.mxu0 0.0
        %7564 = vmatpush1.msra.mxu0 0.0
        %7565 = vmatprep.subr.mxu0 0.0
        %7566 = vmatpush1.msra.mxu0 0.0
        %7567 = vmatprep.subr.mxu0 0.0
        %7568 = vmatpush1.msra.mxu0 0.0
        %7569 = vmatprep.subr.mxu0 0.0
        %7570 = vmatpush1.msra.mxu0 0.0
        %7571 = vmatprep.subr.mxu0 0.0
        %7572 = vmatpush1.msra.mxu0 0.0
        %7573 = vmatprep.subr.mxu0 0.0
        %7574 = vmatpush1.msra.mxu0 0.0
        %7575 = vmatprep.subr.mxu0 0.0
        %7576 = vmatpush1.msra.mxu0 0.0
        %7577 = vmatprep.subr.mxu0 0.0
        %7578 = vmatpush1.msra.mxu0 0.0
        %7579 = vmatprep.subr.mxu0 0.0
        %7580 = vmatpush1.msra.mxu0 0.0
        %7581 = vmatprep.subr.mxu0 0.0
        %7582 = vmatpush1.msra.mxu0 0.0
        %7583 = vmatprep.subr.mxu0 0.0
        %7584 = vmatpush1.msra.mxu0 0.0
        %7585 = vmatprep.subr.mxu0 0.0
        %7586 = vmatpush1.msra.mxu0 0.0
        %7587 = vmatprep.subr.mxu0 0.0
        %7588 = vmatpush1.msra.mxu0 0.0
        %7589 = vmatprep.subr.mxu0 0.0
        %7590 = vmatpush1.msra.mxu0 0.0
        %7591 = vmatprep.subr.mxu0 0.0
        %7592 = vmatpush1.msra.mxu0 0.0
        %7593 = vmatprep.subr.mxu0 0.0
        %7594 = vmatpush1.msra.mxu0 0.0
        %7595 = vmatprep.subr.mxu0 0.0
        %7596 = vmatpush1.msra.mxu0 0.0
        %7597 = vmatprep.subr.mxu0 0.0
        %7598 = vmatpush1.msra.mxu0 0.0
        %7599 = vmatprep.subr.mxu0 0.0
        %7600 = vmatpush1.msra.mxu0 0.0
        %7601 = vmatprep.subr.mxu0 0.0
        %7602 = vmatpush1.msra.mxu0 0.0
        %7603 = vmatprep.subr.mxu0 0.0
        %7604 = vmatpush1.msra.mxu0 0.0
        %7605 = vmatprep.subr.mxu0 0.0
        %7606 = vmatpush1.msra.mxu0 0.0
        %7607 = vmatprep.subr.mxu0 0.0
        %7608 = vmatpush1.msra.mxu0 0.0
        %7609 = vmatprep.subr.mxu0 0.0
        %7610 = vmatpush1.msra.mxu0 0.0
        %7611 = vmatprep.subr.mxu0 0.0
        %7612 = vmatpush1.msra.mxu0 0.0
        %7613 = vmatprep.subr.mxu0 0.0
        %7614 = vmatpush1.msra.mxu0 0.0
        %7615 = vmatprep.subr.mxu0 0.0
        %7616 = vmatpush1.msra.mxu0 0.0
        %7617 = vmatprep.subr.mxu0 0.0
        %7618 = vmatpush1.msra.mxu0 0.0
        %7619 = vmatprep.mubr.f32.mxu0 0.0
        %7620 = vmatmul.mubr.f32.gmra.mrb[0].mxu0 %v7520
        %v7621 = vpop.f32.mrb[0].mxu0
        %v7622 = vadd.f32 0.0, %v7621
        %v7623 = vpop.f32.mrb[0].mxu0
        %7624 = vmatprep.mubr.f32.mxu0 0.0
        %7625 = vmatmul.mubr.f32.gmra.mrb[0].mxu0 %v7522
        %v7626 = vpop.f32.mrb[0].mxu0
        %v7627 = vadd.f32 0.0, %v7626
        %v7628 = vpop.f32.mrb[0].mxu0
        %7629 = vmatprep.mubr.f32.mxu0 0.0
        %7630 = vmatmul.mubr.f32.gmra.mrb[0].mxu0 %v7524
        %v7631 = vpop.f32.mrb[0].mxu0
        %v7632 = vadd.f32 0.0, %v7631
        %v7633 = vpop.f32.mrb[0].mxu0
        %7634 = vmatprep.mubr.f32.mxu0 0.0
        %7635 = vmatmul.mubr.f32.gmra.mrb[0].mxu0 %v7526
        %v7636 = vpop.f32.mrb[0].mxu0
        %v7637 = vadd.f32 0.0, %v7636
        %v7638 = vpop.f32.mrb[0].mxu0
        %7639 = vmatprep.mubr.f32.mxu0 0.0
        %7640 = vmatmul.mubr.f32.gmra.mrb[0].mxu0 %v7528
        %v7641 = vpop.f32.mrb[0].mxu0
        %v7642 = vadd.f32 0.0, %v7641
        %v7643 = vpop.f32.mrb[0].mxu0
        %7644 = vmatprep.mubr.f32.mxu0 0.0
        %7645 = vmatmul.mubr.f32.gmra.mrb[0].mxu0 %v7530
        %v7646 = vpop.f32.mrb[0].mxu0
        %v7647 = vadd.f32 0.0, %v7646
        %v7648 = vpop.f32.mrb[0].mxu0
        %7649 = vmatprep.mubr.f32.mxu0 0.0
        %7650 = vmatmul.mubr.f32.gmra.mrb[0].mxu0 %v7532
        %v7651 = vpop.f32.mrb[0].mxu0
        %v7652 = vadd.f32 0.0, %v7651
        %v7653 = vpop.f32.mrb[0].mxu0
        %7654 = vmatprep.mubr.f32.mxu0 0.0
        %7655 = vmatmul.mubr.f32.gmra.mrb[0].mxu0 %v7534
        %v7656 = vpop.f32.mrb[0].mxu0
        %v7657 = vadd.f32 0.0, %v7656
        %v7658 = vpop.f32.mrb[0].mxu0
        %7659 = vmatprep.mubr.f32.mxu0 0.0
        %7660 = vmatmul.mubr.f32.gmra.mrb[0].mxu0 %v7536
        %v7661 = vpop.f32.mrb[0].mxu0
        %v7662 = vadd.f32 0.0, %v7661
        %v7663 = vpop.f32.mrb[0].mxu0
        %7664 = vmatprep.mubr.f32.mxu0 0.0
        %7665 = vmatmul.mubr.f32.gmra.mrb[0].mxu0 %v7538
        %v7666 = vpop.f32.mrb[0].mxu0
        %v7667 = vadd.f32 0.0, %v7666
        %v7668 = vpop.f32.mrb[0].mxu0
        %7669 = vmatprep.mubr.f32.mxu0 0.0
        %7670 = vmatmul.mubr.f32.gmra.mrb[0].mxu0 %v7540
        %v7671 = vpop.f32.mrb[0].mxu0
        %v7672 = vadd.f32 0.0, %v7671
        %v7673 = vpop.f32.mrb[0].mxu0
        %7674 = vmatprep.mubr.f32.mxu0 0.0
        %7675 = vmatmul.mubr.f32.gmra.mrb[0].mxu0 %v7542
        %v7676 = vpop.f32.mrb[0].mxu0
        %v7677 = vadd.f32 0.0, %v7676
        %v7678 = vpop.f32.mrb[0].mxu0
        %7679 = vmatprep.mubr.f32.mxu0 0.0
        %7680 = vmatmul.mubr.f32.gmra.mrb[0].mxu0 %v7544
        %v7681 = vpop.f32.mrb[0].mxu0
        %v7682 = vadd.f32 0.0, %v7681
        %v7683 = vpop.f32.mrb[0].mxu0
        %7684 = vmatprep.mubr.f32.mxu0 0.0
        %7685 = vmatmul.mubr.f32.gmra.mrb[0].mxu0 %v7546
        %v7686 = vpop.f32.mrb[0].mxu0
        %v7687 = vadd.f32 0.0, %v7686
        %v7688 = vpop.f32.mrb[0].mxu0
        %7689 = vmatprep.mubr.f32.mxu0 0.0
        %7690 = vmatmul.mubr.f32.gmra.mrb[0].mxu0 %v7548
        %v7691 = vpop.f32.mrb[0].mxu0
        %v7692 = vadd.f32 0.0, %v7691
        %v7693 = vpop.f32.mrb[0].mxu0
        %7694 = vmatprep.mubr.f32.mxu0 0.0
        %7695 = vmatmul.mubr.f32.gmra.mrb[0].mxu0 %v7550
        %v7696 = vpop.f32.mrb[0].mxu0
        %v7697 = vadd.f32 0.0, %v7696
        %v7698 = vpop.f32.mrb[0].mxu0
        %7699 = vdwg.mxu0
        %7700 = vst [vmem:[#allocation3 + $0x900] sm:$0xff] %v7622
        %7701 = vst [vmem:[#allocation3 + $0x908] sm:$0xff] %v7627
        %7702 = vst [vmem:[#allocation3 + $0x910] sm:$0xff] %v7632
        %7703 = vst [vmem:[#allocation3 + $0x918] sm:$0xff] %v7637
        %7704 = vst [vmem:[#allocation3 + $0x920] sm:$0xff] %v7642
        %7705 = vst [vmem:[#allocation3 + $0x928] sm:$0xff] %v7647
        %7706 = vst [vmem:[#allocation3 + $0x930] sm:$0xff] %v7652
        %7707 = vst [vmem:[#allocation3 + $0x938] sm:$0xff] %v7657
        %7708 = vst [vmem:[#allocation3 + $0x940] sm:$0xff] %v7662
        %7709 = vst [vmem:[#allocation3 + $0x948] sm:$0xff] %v7667
        %7710 = vst [vmem:[#allocation3 + $0x950] sm:$0xff] %v7672
        %7711 = vst [vmem:[#allocation3 + $0x958] sm:$0xff] %v7677
        %7712 = vst [vmem:[#allocation3 + $0x960] sm:$0xff] %v7682
        %7713 = vst [vmem:[#allocation3 + $0x968] sm:$0xff] %v7687
        %7714 = vst [vmem:[#allocation3 + $0x970] sm:$0xff] %v7692
        %7715 = vst [vmem:[#allocation3 + $0x978] sm:$0xff] %v7697
        %v7716 = vld [vmem:[%s3] sm:$0xff]
        %v7717 = vld [vmem:[%s3 + $0x10] sm:$0xff]
        %v7718 = vld [vmem:[%s3 + $0x20] sm:$0xff]
        %v7719 = vld [vmem:[%s3 + $0x30] sm:$0xff]
        %v7720 = vld [vmem:[%s3 + $0x40] sm:$0xff]
        %v7721 = vld [vmem:[%s3 + $0x50] sm:$0xff]
        %v7722 = vld [vmem:[%s3 + $0x60] sm:$0xff]
        %v7723 = vld [vmem:[%s3 + $0x70] sm:$0xff]
        %v7724 = vld [vmem:[%s3 + $0x80] sm:$0xff]
        %v7725 = vld [vmem:[%s3 + $0x90] sm:$0xff]
        %v7726 = vld [vmem:[%s3 + $0xa0] sm:$0xff]
        %v7727 = vld [vmem:[%s3 + $0xb0] sm:$0xff]
        %v7728 = vld [vmem:[%s3 + $0xc0] sm:$0xff]
        %v7729 = vld [vmem:[%s3 + $0xd0] sm:$0xff]
        %v7730 = vld [vmem:[%s3 + $0xe0] sm:$0xff]
        %v7731 = vld [vmem:[%s3 + $0xf0] sm:$0xff]
        %v7732 = vld [vmem:[%s296 + $0x72] sm:$0x3f]
        %7749 = vrot.lane.b32.xlu0 %v7716, 14
        %v7750 = vpop.permute.xlu0 %7749
        %7751 = vrot.lane.b32.xlu0 %v7717, 14
        %v7752 = vpop.permute.xlu0 %7751
        %7753 = vrot.lane.b32.xlu0 %v7718, 14
        %v7754 = vpop.permute.xlu0 %7753
        %7755 = vrot.lane.b32.xlu0 %v7719, 14
        %v7756 = vpop.permute.xlu0 %7755
        %7757 = vrot.lane.b32.xlu0 %v7720, 14
        %v7758 = vpop.permute.xlu0 %7757
        %7759 = vrot.lane.b32.xlu0 %v7721, 14
        %v7760 = vpop.permute.xlu0 %7759
        %7761 = vrot.lane.b32.xlu0 %v7722, 14
        %v7762 = vpop.permute.xlu0 %7761
        %7763 = vrot.lane.b32.xlu0 %v7723, 14
        %v7764 = vpop.permute.xlu0 %7763
        %7765 = vrot.lane.b32.xlu0 %v7724, 14
        %v7766 = vpop.permute.xlu0 %7765
        %7767 = vrot.lane.b32.xlu0 %v7725, 14
        %v7768 = vpop.permute.xlu0 %7767
        %7769 = vrot.lane.b32.xlu0 %v7726, 14
        %v7770 = vpop.permute.xlu0 %7769
        %7771 = vrot.lane.b32.xlu0 %v7727, 14
        %v7772 = vpop.permute.xlu0 %7771
        %7773 = vrot.lane.b32.xlu0 %v7728, 14
        %v7774 = vpop.permute.xlu0 %7773
        %7775 = vrot.lane.b32.xlu0 %v7729, 14
        %v7776 = vpop.permute.xlu0 %7775
        %7777 = vrot.lane.b32.xlu0 %v7730, 14
        %v7778 = vpop.permute.xlu0 %7777
        %7779 = vrot.lane.b32.xlu0 %v7731, 14
        %v7780 = vpop.permute.xlu0 %7779
        %v7781 = vsel %vm2804, %v7750, 0
        %v7783 = vsel %vm2804, %v7752, 0
        %v7785 = vsel %vm2804, %v7754, 0
        %v7787 = vsel %vm2804, %v7756, 0
        %v7789 = vsel %vm2804, %v7758, 0
        %v7791 = vsel %vm2804, %v7760, 0
        %v7793 = vsel %vm2804, %v7762, 0
        %v7795 = vsel %vm2804, %v7764, 0
        %v7797 = vsel %vm2804, %v7766, 0
        %v7799 = vsel %vm2804, %v7768, 0
        %v7801 = vsel %vm2804, %v7770, 0
        %v7803 = vsel %vm2804, %v7772, 0
        %v7805 = vsel %vm2804, %v7774, 0
        %v7807 = vsel %vm2804, %v7776, 0
        %v7809 = vsel %vm2804, %v7778, 0
        %v7811 = vsel %vm2804, %v7780, 0
        %v7814 = vsel %vm2853, %v7732, 0
        %7816 = vmatprep.subr.mxu0 0.0
        %7817 = vmatpush1.msra.mxu0 %v7814
        %7818 = vmatprep.subr.mxu0 0.0
        %7819 = vmatpush1.msra.mxu0 0.0
        %7820 = vmatprep.subr.mxu0 0.0
        %7821 = vmatpush1.msra.mxu0 0.0
        %7822 = vmatprep.subr.mxu0 0.0
        %7823 = vmatpush1.msra.mxu0 0.0
        %7824 = vmatprep.subr.mxu0 0.0
        %7825 = vmatpush1.msra.mxu0 0.0
        %7826 = vmatprep.subr.mxu0 0.0
        %7827 = vmatpush1.msra.mxu0 0.0
        %7828 = vmatprep.subr.mxu0 0.0
        %7829 = vmatpush1.msra.mxu0 0.0
        %7830 = vmatprep.subr.mxu0 0.0
        %7831 = vmatpush1.msra.mxu0 0.0
        %7832 = vmatprep.subr.mxu0 0.0
        %7833 = vmatpush1.msra.mxu0 0.0
        %7834 = vmatprep.subr.mxu0 0.0
        %7835 = vmatpush1.msra.mxu0 0.0
        %7836 = vmatprep.subr.mxu0 0.0
        %7837 = vmatpush1.msra.mxu0 0.0
        %7838 = vmatprep.subr.mxu0 0.0
        %7839 = vmatpush1.msra.mxu0 0.0
        %7840 = vmatprep.subr.mxu0 0.0
        %7841 = vmatpush1.msra.mxu0 0.0
        %7842 = vmatprep.subr.mxu0 0.0
        %7843 = vmatpush1.msra.mxu0 0.0
        %7844 = vmatprep.subr.mxu0 0.0
        %7845 = vmatpush1.msra.mxu0 0.0
        %7846 = vmatprep.subr.mxu0 0.0
        %7847 = vmatpush1.msra.mxu0 0.0
        %7848 = vmatprep.subr.mxu0 0.0
        %7849 = vmatpush1.msra.mxu0 0.0
        %7850 = vmatprep.subr.mxu0 0.0
        %7851 = vmatpush1.msra.mxu0 0.0
        %7852 = vmatprep.subr.mxu0 0.0
        %7853 = vmatpush1.msra.mxu0 0.0
        %7854 = vmatprep.subr.mxu0 0.0
        %7855 = vmatpush1.msra.mxu0 0.0
        %7856 = vmatprep.subr.mxu0 0.0
        %7857 = vmatpush1.msra.mxu0 0.0
        %7858 = vmatprep.subr.mxu0 0.0
        %7859 = vmatpush1.msra.mxu0 0.0
        %7860 = vmatprep.subr.mxu0 0.0
        %7861 = vmatpush1.msra.mxu0 0.0
        %7862 = vmatprep.subr.mxu0 0.0
        %7863 = vmatpush1.msra.mxu0 0.0
        %7864 = vmatprep.subr.mxu0 0.0
        %7865 = vmatpush1.msra.mxu0 0.0
        %7866 = vmatprep.subr.mxu0 0.0
        %7867 = vmatpush1.msra.mxu0 0.0
        %7868 = vmatprep.subr.mxu0 0.0
        %7869 = vmatpush1.msra.mxu0 0.0
        %7870 = vmatprep.subr.mxu0 0.0
        %7871 = vmatpush1.msra.mxu0 0.0
        %7872 = vmatprep.subr.mxu0 0.0
        %7873 = vmatpush1.msra.mxu0 0.0
        %7874 = vmatprep.subr.mxu0 0.0
        %7875 = vmatpush1.msra.mxu0 0.0
        %7876 = vmatprep.subr.mxu0 0.0
        %7877 = vmatpush1.msra.mxu0 0.0
        %7878 = vmatprep.subr.mxu0 0.0
        %7879 = vmatpush1.msra.mxu0 0.0
        %7880 = vmatprep.mubr.f32.mxu0 0.0
        %7881 = vmatmul.mubr.f32.gmra.mrb[0].mxu0 %v7781
        %v7882 = vpop.f32.mrb[0].mxu0
        %v7883 = vadd.f32 0.0, %v7882
        %v7884 = vpop.f32.mrb[0].mxu0
        %7885 = vmatprep.mubr.f32.mxu0 0.0
        %7886 = vmatmul.mubr.f32.gmra.mrb[0].mxu0 %v7783
        %v7887 = vpop.f32.mrb[0].mxu0
        %v7888 = vadd.f32 0.0, %v7887
        %v7889 = vpop.f32.mrb[0].mxu0
        %7890 = vmatprep.mubr.f32.mxu0 0.0
        %7891 = vmatmul.mubr.f32.gmra.mrb[0].mxu0 %v7785
        %v7892 = vpop.f32.mrb[0].mxu0
        %v7893 = vadd.f32 0.0, %v7892
        %v7894 = vpop.f32.mrb[0].mxu0
        %7895 = vmatprep.mubr.f32.mxu0 0.0
        %7896 = vmatmul.mubr.f32.gmra.mrb[0].mxu0 %v7787
        %v7897 = vpop.f32.mrb[0].mxu0
        %v7898 = vadd.f32 0.0, %v7897
        %v7899 = vpop.f32.mrb[0].mxu0
        %7900 = vmatprep.mubr.f32.mxu0 0.0
        %7901 = vmatmul.mubr.f32.gmra.mrb[0].mxu0 %v7789
        %v7902 = vpop.f32.mrb[0].mxu0
        %v7903 = vadd.f32 0.0, %v7902
        %v7904 = vpop.f32.mrb[0].mxu0
        %7905 = vmatprep.mubr.f32.mxu0 0.0
        %7906 = vmatmul.mubr.f32.gmra.mrb[0].mxu0 %v7791
        %v7907 = vpop.f32.mrb[0].mxu0
        %v7908 = vadd.f32 0.0, %v7907
        %v7909 = vpop.f32.mrb[0].mxu0
        %7910 = vmatprep.mubr.f32.mxu0 0.0
        %7911 = vmatmul.mubr.f32.gmra.mrb[0].mxu0 %v7793
        %v7912 = vpop.f32.mrb[0].mxu0
        %v7913 = vadd.f32 0.0, %v7912
        %v7914 = vpop.f32.mrb[0].mxu0
        %7915 = vmatprep.mubr.f32.mxu0 0.0
        %7916 = vmatmul.mubr.f32.gmra.mrb[0].mxu0 %v7795
        %v7917 = vpop.f32.mrb[0].mxu0
        %v7918 = vadd.f32 0.0, %v7917
        %v7919 = vpop.f32.mrb[0].mxu0
        %7920 = vmatprep.mubr.f32.mxu0 0.0
        %7921 = vmatmul.mubr.f32.gmra.mrb[0].mxu0 %v7797
        %v7922 = vpop.f32.mrb[0].mxu0
        %v7923 = vadd.f32 0.0, %v7922
        %v7924 = vpop.f32.mrb[0].mxu0
        %7925 = vmatprep.mubr.f32.mxu0 0.0
        %7926 = vmatmul.mubr.f32.gmra.mrb[0].mxu0 %v7799
        %v7927 = vpop.f32.mrb[0].mxu0
        %v7928 = vadd.f32 0.0, %v7927
        %v7929 = vpop.f32.mrb[0].mxu0
        %7930 = vmatprep.mubr.f32.mxu0 0.0
        %7931 = vmatmul.mubr.f32.gmra.mrb[0].mxu0 %v7801
        %v7932 = vpop.f32.mrb[0].mxu0
        %v7933 = vadd.f32 0.0, %v7932
        %v7934 = vpop.f32.mrb[0].mxu0
        %7935 = vmatprep.mubr.f32.mxu0 0.0
        %7936 = vmatmul.mubr.f32.gmra.mrb[0].mxu0 %v7803
        %v7937 = vpop.f32.mrb[0].mxu0
        %v7938 = vadd.f32 0.0, %v7937
        %v7939 = vpop.f32.mrb[0].mxu0
        %7940 = vmatprep.mubr.f32.mxu0 0.0
        %7941 = vmatmul.mubr.f32.gmra.mrb[0].mxu0 %v7805
        %v7942 = vpop.f32.mrb[0].mxu0
        %v7943 = vadd.f32 0.0, %v7942
        %v7944 = vpop.f32.mrb[0].mxu0
        %7945 = vmatprep.mubr.f32.mxu0 0.0
        %7946 = vmatmul.mubr.f32.gmra.mrb[0].mxu0 %v7807
        %v7947 = vpop.f32.mrb[0].mxu0
        %v7948 = vadd.f32 0.0, %v7947
        %v7949 = vpop.f32.mrb[0].mxu0
        %7950 = vmatprep.mubr.f32.mxu0 0.0
        %7951 = vmatmul.mubr.f32.gmra.mrb[0].mxu0 %v7809
        %v7952 = vpop.f32.mrb[0].mxu0
        %v7953 = vadd.f32 0.0, %v7952
        %v7954 = vpop.f32.mrb[0].mxu0
        %7955 = vmatprep.mubr.f32.mxu0 0.0
        %7956 = vmatmul.mubr.f32.gmra.mrb[0].mxu0 %v7811
        %v7957 = vpop.f32.mrb[0].mxu0
        %v7958 = vadd.f32 0.0, %v7957
        %v7959 = vpop.f32.mrb[0].mxu0
        %7960 = vdwg.mxu0
        %7961 = vst [vmem:[#allocation3 + $0x980] sm:$0xff] %v7883
        %7962 = vst [vmem:[#allocation3 + $0x988] sm:$0xff] %v7888
        %7963 = vst [vmem:[#allocation3 + $0x990] sm:$0xff] %v7893
        %7964 = vst [vmem:[#allocation3 + $0x998] sm:$0xff] %v7898
        %7965 = vst [vmem:[#allocation3 + $0x9a0] sm:$0xff] %v7903
        %7966 = vst [vmem:[#allocation3 + $0x9a8] sm:$0xff] %v7908
        %7967 = vst [vmem:[#allocation3 + $0x9b0] sm:$0xff] %v7913
        %7968 = vst [vmem:[#allocation3 + $0x9b8] sm:$0xff] %v7918
        %7969 = vst [vmem:[#allocation3 + $0x9c0] sm:$0xff] %v7923
        %7970 = vst [vmem:[#allocation3 + $0x9c8] sm:$0xff] %v7928
        %7971 = vst [vmem:[#allocation3 + $0x9d0] sm:$0xff] %v7933
        %7972 = vst [vmem:[#allocation3 + $0x9d8] sm:$0xff] %v7938
        %7973 = vst [vmem:[#allocation3 + $0x9e0] sm:$0xff] %v7943
        %7974 = vst [vmem:[#allocation3 + $0x9e8] sm:$0xff] %v7948
        %7975 = vst [vmem:[#allocation3 + $0x9f0] sm:$0xff] %v7953
        %7976 = vst [vmem:[#allocation3 + $0x9f8] sm:$0xff] %v7958
        %v7977 = vld [vmem:[%s3] sm:$0xff]
        %v7978 = vld [vmem:[%s3 + $0x10] sm:$0xff]
        %v7979 = vld [vmem:[%s3 + $0x20] sm:$0xff]
        %v7980 = vld [vmem:[%s3 + $0x30] sm:$0xff]
        %v7981 = vld [vmem:[%s3 + $0x40] sm:$0xff]
        %v7982 = vld [vmem:[%s3 + $0x50] sm:$0xff]
        %v7983 = vld [vmem:[%s3 + $0x60] sm:$0xff]
        %v7984 = vld [vmem:[%s3 + $0x70] sm:$0xff]
        %v7985 = vld [vmem:[%s3 + $0x80] sm:$0xff]
        %v7986 = vld [vmem:[%s3 + $0x90] sm:$0xff]
        %v7987 = vld [vmem:[%s3 + $0xa0] sm:$0xff]
        %v7988 = vld [vmem:[%s3 + $0xb0] sm:$0xff]
        %v7989 = vld [vmem:[%s3 + $0xc0] sm:$0xff]
        %v7990 = vld [vmem:[%s3 + $0xd0] sm:$0xff]
        %v7991 = vld [vmem:[%s3 + $0xe0] sm:$0xff]
        %v7992 = vld [vmem:[%s3 + $0xf0] sm:$0xff]
        %v7993 = vld [vmem:[%s296 + $0x78] sm:$0x3f]
        %8010 = vrot.lane.b32.xlu0 %v7977, 8
        %v8011 = vpop.permute.xlu0 %8010
        %8012 = vrot.lane.b32.xlu0 %v7978, 8
        %v8013 = vpop.permute.xlu0 %8012
        %8014 = vrot.lane.b32.xlu0 %v7979, 8
        %v8015 = vpop.permute.xlu0 %8014
        %8016 = vrot.lane.b32.xlu0 %v7980, 8
        %v8017 = vpop.permute.xlu0 %8016
        %8018 = vrot.lane.b32.xlu0 %v7981, 8
        %v8019 = vpop.permute.xlu0 %8018
        %8020 = vrot.lane.b32.xlu0 %v7982, 8
        %v8021 = vpop.permute.xlu0 %8020
        %8022 = vrot.lane.b32.xlu0 %v7983, 8
        %v8023 = vpop.permute.xlu0 %8022
        %8024 = vrot.lane.b32.xlu0 %v7984, 8
        %v8025 = vpop.permute.xlu0 %8024
        %8026 = vrot.lane.b32.xlu0 %v7985, 8
        %v8027 = vpop.permute.xlu0 %8026
        %8028 = vrot.lane.b32.xlu0 %v7986, 8
        %v8029 = vpop.permute.xlu0 %8028
        %8030 = vrot.lane.b32.xlu0 %v7987, 8
        %v8031 = vpop.permute.xlu0 %8030
        %8032 = vrot.lane.b32.xlu0 %v7988, 8
        %v8033 = vpop.permute.xlu0 %8032
        %8034 = vrot.lane.b32.xlu0 %v7989, 8
        %v8035 = vpop.permute.xlu0 %8034
        %8036 = vrot.lane.b32.xlu0 %v7990, 8
        %v8037 = vpop.permute.xlu0 %8036
        %8038 = vrot.lane.b32.xlu0 %v7991, 8
        %v8039 = vpop.permute.xlu0 %8038
        %8040 = vrot.lane.b32.xlu0 %v7992, 8
        %v8041 = vpop.permute.xlu0 %8040
        %v8042 = vsel %vm2804, %v8011, 0
        %v8044 = vsel %vm2804, %v8013, 0
        %v8046 = vsel %vm2804, %v8015, 0
        %v8048 = vsel %vm2804, %v8017, 0
        %v8050 = vsel %vm2804, %v8019, 0
        %v8052 = vsel %vm2804, %v8021, 0
        %v8054 = vsel %vm2804, %v8023, 0
        %v8056 = vsel %vm2804, %v8025, 0
        %v8058 = vsel %vm2804, %v8027, 0
        %v8060 = vsel %vm2804, %v8029, 0
        %v8062 = vsel %vm2804, %v8031, 0
        %v8064 = vsel %vm2804, %v8033, 0
        %v8066 = vsel %vm2804, %v8035, 0
        %v8068 = vsel %vm2804, %v8037, 0
        %v8070 = vsel %vm2804, %v8039, 0
        %v8072 = vsel %vm2804, %v8041, 0
        %v8075 = vsel %vm2853, %v7993, 0
        %8077 = vmatprep.subr.mxu0 0.0
        %8078 = vmatpush1.msra.mxu0 %v8075
        %8079 = vmatprep.subr.mxu0 0.0
        %8080 = vmatpush1.msra.mxu0 0.0
        %8081 = vmatprep.subr.mxu0 0.0
        %8082 = vmatpush1.msra.mxu0 0.0
        %8083 = vmatprep.subr.mxu0 0.0
        %8084 = vmatpush1.msra.mxu0 0.0
        %8085 = vmatprep.subr.mxu0 0.0
        %8086 = vmatpush1.msra.mxu0 0.0
        %8087 = vmatprep.subr.mxu0 0.0
        %8088 = vmatpush1.msra.mxu0 0.0
        %8089 = vmatprep.subr.mxu0 0.0
        %8090 = vmatpush1.msra.mxu0 0.0
        %8091 = vmatprep.subr.mxu0 0.0
        %8092 = vmatpush1.msra.mxu0 0.0
        %8093 = vmatprep.subr.mxu0 0.0
        %8094 = vmatpush1.msra.mxu0 0.0
        %8095 = vmatprep.subr.mxu0 0.0
        %8096 = vmatpush1.msra.mxu0 0.0
        %8097 = vmatprep.subr.mxu0 0.0
        %8098 = vmatpush1.msra.mxu0 0.0
        %8099 = vmatprep.subr.mxu0 0.0
        %8100 = vmatpush1.msra.mxu0 0.0
        %8101 = vmatprep.subr.mxu0 0.0
        %8102 = vmatpush1.msra.mxu0 0.0
        %8103 = vmatprep.subr.mxu0 0.0
        %8104 = vmatpush1.msra.mxu0 0.0
        %8105 = vmatprep.subr.mxu0 0.0
        %8106 = vmatpush1.msra.mxu0 0.0
        %8107 = vmatprep.subr.mxu0 0.0
        %8108 = vmatpush1.msra.mxu0 0.0
        %8109 = vmatprep.subr.mxu0 0.0
        %8110 = vmatpush1.msra.mxu0 0.0
        %8111 = vmatprep.subr.mxu0 0.0
        %8112 = vmatpush1.msra.mxu0 0.0
        %8113 = vmatprep.subr.mxu0 0.0
        %8114 = vmatpush1.msra.mxu0 0.0
        %8115 = vmatprep.subr.mxu0 0.0
        %8116 = vmatpush1.msra.mxu0 0.0
        %8117 = vmatprep.subr.mxu0 0.0
        %8118 = vmatpush1.msra.mxu0 0.0
        %8119 = vmatprep.subr.mxu0 0.0
        %8120 = vmatpush1.msra.mxu0 0.0
        %8121 = vmatprep.subr.mxu0 0.0
        %8122 = vmatpush1.msra.mxu0 0.0
        %8123 = vmatprep.subr.mxu0 0.0
        %8124 = vmatpush1.msra.mxu0 0.0
        %8125 = vmatprep.subr.mxu0 0.0
        %8126 = vmatpush1.msra.mxu0 0.0
        %8127 = vmatprep.subr.mxu0 0.0
        %8128 = vmatpush1.msra.mxu0 0.0
        %8129 = vmatprep.subr.mxu0 0.0
        %8130 = vmatpush1.msra.mxu0 0.0
        %8131 = vmatprep.subr.mxu0 0.0
        %8132 = vmatpush1.msra.mxu0 0.0
        %8133 = vmatprep.subr.mxu0 0.0
        %8134 = vmatpush1.msra.mxu0 0.0
        %8135 = vmatprep.subr.mxu0 0.0
        %8136 = vmatpush1.msra.mxu0 0.0
        %8137 = vmatprep.subr.mxu0 0.0
        %8138 = vmatpush1.msra.mxu0 0.0
        %8139 = vmatprep.subr.mxu0 0.0
        %8140 = vmatpush1.msra.mxu0 0.0
        %8141 = vmatprep.mubr.f32.mxu0 0.0
        %8142 = vmatmul.mubr.f32.gmra.mrb[0].mxu0 %v8042
        %v8143 = vpop.f32.mrb[0].mxu0
        %v8144 = vadd.f32 0.0, %v8143
        %v8145 = vpop.f32.mrb[0].mxu0
        %8146 = vmatprep.mubr.f32.mxu0 0.0
        %8147 = vmatmul.mubr.f32.gmra.mrb[0].mxu0 %v8044
        %v8148 = vpop.f32.mrb[0].mxu0
        %v8149 = vadd.f32 0.0, %v8148
        %v8150 = vpop.f32.mrb[0].mxu0
        %8151 = vmatprep.mubr.f32.mxu0 0.0
        %8152 = vmatmul.mubr.f32.gmra.mrb[0].mxu0 %v8046
        %v8153 = vpop.f32.mrb[0].mxu0
        %v8154 = vadd.f32 0.0, %v8153
        %v8155 = vpop.f32.mrb[0].mxu0
        %8156 = vmatprep.mubr.f32.mxu0 0.0
        %8157 = vmatmul.mubr.f32.gmra.mrb[0].mxu0 %v8048
        %v8158 = vpop.f32.mrb[0].mxu0
        %v8159 = vadd.f32 0.0, %v8158
        %v8160 = vpop.f32.mrb[0].mxu0
        %8161 = vmatprep.mubr.f32.mxu0 0.0
        %8162 = vmatmul.mubr.f32.gmra.mrb[0].mxu0 %v8050
        %v8163 = vpop.f32.mrb[0].mxu0
        %v8164 = vadd.f32 0.0, %v8163
        %v8165 = vpop.f32.mrb[0].mxu0
        %8166 = vmatprep.mubr.f32.mxu0 0.0
        %8167 = vmatmul.mubr.f32.gmra.mrb[0].mxu0 %v8052
        %v8168 = vpop.f32.mrb[0].mxu0
        %v8169 = vadd.f32 0.0, %v8168
        %v8170 = vpop.f32.mrb[0].mxu0
        %8171 = vmatprep.mubr.f32.mxu0 0.0
        %8172 = vmatmul.mubr.f32.gmra.mrb[0].mxu0 %v8054
        %v8173 = vpop.f32.mrb[0].mxu0
        %v8174 = vadd.f32 0.0, %v8173
        %v8175 = vpop.f32.mrb[0].mxu0
        %8176 = vmatprep.mubr.f32.mxu0 0.0
        %8177 = vmatmul.mubr.f32.gmra.mrb[0].mxu0 %v8056
        %v8178 = vpop.f32.mrb[0].mxu0
        %v8179 = vadd.f32 0.0, %v8178
        %v8180 = vpop.f32.mrb[0].mxu0
        %8181 = vmatprep.mubr.f32.mxu0 0.0
        %8182 = vmatmul.mubr.f32.gmra.mrb[0].mxu0 %v8058
        %v8183 = vpop.f32.mrb[0].mxu0
        %v8184 = vadd.f32 0.0, %v8183
        %v8185 = vpop.f32.mrb[0].mxu0
        %8186 = vmatprep.mubr.f32.mxu0 0.0
        %8187 = vmatmul.mubr.f32.gmra.mrb[0].mxu0 %v8060
        %v8188 = vpop.f32.mrb[0].mxu0
        %v8189 = vadd.f32 0.0, %v8188
        %v8190 = vpop.f32.mrb[0].mxu0
        %8191 = vmatprep.mubr.f32.mxu0 0.0
        %8192 = vmatmul.mubr.f32.gmra.mrb[0].mxu0 %v8062
        %v8193 = vpop.f32.mrb[0].mxu0
        %v8194 = vadd.f32 0.0, %v8193
        %v8195 = vpop.f32.mrb[0].mxu0
        %8196 = vmatprep.mubr.f32.mxu0 0.0
        %8197 = vmatmul.mubr.f32.gmra.mrb[0].mxu0 %v8064
        %v8198 = vpop.f32.mrb[0].mxu0
        %v8199 = vadd.f32 0.0, %v8198
        %v8200 = vpop.f32.mrb[0].mxu0
        %8201 = vmatprep.mubr.f32.mxu0 0.0
        %8202 = vmatmul.mubr.f32.gmra.mrb[0].mxu0 %v8066
        %v8203 = vpop.f32.mrb[0].mxu0
        %v8204 = vadd.f32 0.0, %v8203
        %v8205 = vpop.f32.mrb[0].mxu0
        %8206 = vmatprep.mubr.f32.mxu0 0.0
        %8207 = vmatmul.mubr.f32.gmra.mrb[0].mxu0 %v8068
        %v8208 = vpop.f32.mrb[0].mxu0
        %v8209 = vadd.f32 0.0, %v8208
        %v8210 = vpop.f32.mrb[0].mxu0
        %8211 = vmatprep.mubr.f32.mxu0 0.0
        %8212 = vmatmul.mubr.f32.gmra.mrb[0].mxu0 %v8070
        %v8213 = vpop.f32.mrb[0].mxu0
        %v8214 = vadd.f32 0.0, %v8213
        %v8215 = vpop.f32.mrb[0].mxu0
        %8216 = vmatprep.mubr.f32.mxu0 0.0
        %8217 = vmatmul.mubr.f32.gmra.mrb[0].mxu0 %v8072
        %v8218 = vpop.f32.mrb[0].mxu0
        %v8219 = vadd.f32 0.0, %v8218
        %v8220 = vpop.f32.mrb[0].mxu0
        %8221 = vdwg.mxu0
        %8222 = vst [vmem:[#allocation3 + $0xa00] sm:$0xff] %v8144
        %8223 = vst [vmem:[#allocation3 + $0xa08] sm:$0xff] %v8149
        %8224 = vst [vmem:[#allocation3 + $0xa10] sm:$0xff] %v8154
        %8225 = vst [vmem:[#allocation3 + $0xa18] sm:$0xff] %v8159
        %8226 = vst [vmem:[#allocation3 + $0xa20] sm:$0xff] %v8164
        %8227 = vst [vmem:[#allocation3 + $0xa28] sm:$0xff] %v8169
        %8228 = vst [vmem:[#allocation3 + $0xa30] sm:$0xff] %v8174
        %8229 = vst [vmem:[#allocation3 + $0xa38] sm:$0xff] %v8179
        %8230 = vst [vmem:[#allocation3 + $0xa40] sm:$0xff] %v8184
        %8231 = vst [vmem:[#allocation3 + $0xa48] sm:$0xff] %v8189
        %8232 = vst [vmem:[#allocation3 + $0xa50] sm:$0xff] %v8194
        %8233 = vst [vmem:[#allocation3 + $0xa58] sm:$0xff] %v8199
        %8234 = vst [vmem:[#allocation3 + $0xa60] sm:$0xff] %v8204
        %8235 = vst [vmem:[#allocation3 + $0xa68] sm:$0xff] %v8209
        %8236 = vst [vmem:[#allocation3 + $0xa70] sm:$0xff] %v8214
        %8237 = vst [vmem:[#allocation3 + $0xa78] sm:$0xff] %v8219
        %v8238 = vld [vmem:[%s3] sm:$0xff]
        %v8239 = vld [vmem:[%s3 + $0x8] sm:$0xff]
        %v8240 = vld [vmem:[%s3 + $0x10] sm:$0xff]
        %v8241 = vld [vmem:[%s3 + $0x18] sm:$0xff]
        %v8242 = vld [vmem:[%s3 + $0x20] sm:$0xff]
        %v8243 = vld [vmem:[%s3 + $0x28] sm:$0xff]
        %v8244 = vld [vmem:[%s3 + $0x30] sm:$0xff]
        %v8245 = vld [vmem:[%s3 + $0x38] sm:$0xff]
        %v8246 = vld [vmem:[%s3 + $0x40] sm:$0xff]
        %v8247 = vld [vmem:[%s3 + $0x48] sm:$0xff]
        %v8248 = vld [vmem:[%s3 + $0x50] sm:$0xff]
        %v8249 = vld [vmem:[%s3 + $0x58] sm:$0xff]
        %v8250 = vld [vmem:[%s3 + $0x60] sm:$0xff]
        %v8251 = vld [vmem:[%s3 + $0x68] sm:$0xff]
        %v8252 = vld [vmem:[%s3 + $0x70] sm:$0xff]
        %v8253 = vld [vmem:[%s3 + $0x78] sm:$0xff]
        %v8254 = vld [vmem:[%s3 + $0x80] sm:$0xff]
        %v8255 = vld [vmem:[%s3 + $0x88] sm:$0xff]
        %v8256 = vld [vmem:[%s3 + $0x90] sm:$0xff]
        %v8257 = vld [vmem:[%s3 + $0x98] sm:$0xff]
        %v8258 = vld [vmem:[%s3 + $0xa0] sm:$0xff]
        %v8259 = vld [vmem:[%s3 + $0xa8] sm:$0xff]
        %v8260 = vld [vmem:[%s3 + $0xb0] sm:$0xff]
        %v8261 = vld [vmem:[%s3 + $0xb8] sm:$0xff]
        %v8262 = vld [vmem:[%s3 + $0xc0] sm:$0xff]
        %v8263 = vld [vmem:[%s3 + $0xc8] sm:$0xff]
        %v8264 = vld [vmem:[%s3 + $0xd0] sm:$0xff]
        %v8265 = vld [vmem:[%s3 + $0xd8] sm:$0xff]
        %v8266 = vld [vmem:[%s3 + $0xe0] sm:$0xff]
        %v8267 = vld [vmem:[%s3 + $0xe8] sm:$0xff]
        %v8268 = vld [vmem:[%s3 + $0xf0] sm:$0xff]
        %v8269 = vld [vmem:[%s3 + $0xf8] sm:$0xff]
        %v8270 = vld [vmem:[%s296 + $0x7e] sm:$0x3f]
        %8303 = vrot.lane.b32.xlu0 %v8238, 2
        %v8304 = vpop.permute.xlu0 %8303
        %8305 = vrot.lane.b32.xlu0 %v8239, 2
        %v8306 = vpop.permute.xlu0 %8305
        %8307 = vrot.lane.b32.xlu0 %v8240, 2
        %v8308 = vpop.permute.xlu0 %8307
        %8309 = vrot.lane.b32.xlu0 %v8241, 2
        %v8310 = vpop.permute.xlu0 %8309
        %8311 = vrot.lane.b32.xlu0 %v8242, 2
        %v8312 = vpop.permute.xlu0 %8311
        %8313 = vrot.lane.b32.xlu0 %v8243, 2
        %v8314 = vpop.permute.xlu0 %8313
        %8315 = vrot.lane.b32.xlu0 %v8244, 2
        %v8316 = vpop.permute.xlu0 %8315
        %8317 = vrot.lane.b32.xlu0 %v8245, 2
        %v8318 = vpop.permute.xlu0 %8317
        %8319 = vrot.lane.b32.xlu0 %v8246, 2
        %v8320 = vpop.permute.xlu0 %8319
        %8321 = vrot.lane.b32.xlu0 %v8247, 2
        %v8322 = vpop.permute.xlu0 %8321
        %8323 = vrot.lane.b32.xlu0 %v8248, 2
        %v8324 = vpop.permute.xlu0 %8323
        %8325 = vrot.lane.b32.xlu0 %v8249, 2
        %v8326 = vpop.permute.xlu0 %8325
        %8327 = vrot.lane.b32.xlu0 %v8250, 2
        %v8328 = vpop.permute.xlu0 %8327
        %8329 = vrot.lane.b32.xlu0 %v8251, 2
        %v8330 = vpop.permute.xlu0 %8329
        %8331 = vrot.lane.b32.xlu0 %v8252, 2
        %v8332 = vpop.permute.xlu0 %8331
        %8333 = vrot.lane.b32.xlu0 %v8253, 2
        %v8334 = vpop.permute.xlu0 %8333
        %8335 = vrot.lane.b32.xlu0 %v8254, 2
        %v8336 = vpop.permute.xlu0 %8335
        %8337 = vrot.lane.b32.xlu0 %v8255, 2
        %v8338 = vpop.permute.xlu0 %8337
        %8339 = vrot.lane.b32.xlu0 %v8256, 2
        %v8340 = vpop.permute.xlu0 %8339
        %8341 = vrot.lane.b32.xlu0 %v8257, 2
        %v8342 = vpop.permute.xlu0 %8341
        %8343 = vrot.lane.b32.xlu0 %v8258, 2
        %v8344 = vpop.permute.xlu0 %8343
        %8345 = vrot.lane.b32.xlu0 %v8259, 2
        %v8346 = vpop.permute.xlu0 %8345
        %8347 = vrot.lane.b32.xlu0 %v8260, 2
        %v8348 = vpop.permute.xlu0 %8347
        %8349 = vrot.lane.b32.xlu0 %v8261, 2
        %v8350 = vpop.permute.xlu0 %8349
        %8351 = vrot.lane.b32.xlu0 %v8262, 2
        %v8352 = vpop.permute.xlu0 %8351
        %8353 = vrot.lane.b32.xlu0 %v8263, 2
        %v8354 = vpop.permute.xlu0 %8353
        %8355 = vrot.lane.b32.xlu0 %v8264, 2
        %v8356 = vpop.permute.xlu0 %8355
        %8357 = vrot.lane.b32.xlu0 %v8265, 2
        %v8358 = vpop.permute.xlu0 %8357
        %8359 = vrot.lane.b32.xlu0 %v8266, 2
        %v8360 = vpop.permute.xlu0 %8359
        %8361 = vrot.lane.b32.xlu0 %v8267, 2
        %v8362 = vpop.permute.xlu0 %8361
        %8363 = vrot.lane.b32.xlu0 %v8268, 2
        %v8364 = vpop.permute.xlu0 %8363
        %8365 = vrot.lane.b32.xlu0 %v8269, 2
        %v8366 = vpop.permute.xlu0 %8365
        %vm8367 = vcmask 15360
        %v8368 = vsel %vm8367, %v8304, %v8306
        %v8369 = vsel %vm8367, %v8308, %v8310
        %v8370 = vsel %vm8367, %v8312, %v8314
        %v8371 = vsel %vm8367, %v8316, %v8318
        %v8372 = vsel %vm8367, %v8320, %v8322
        %v8373 = vsel %vm8367, %v8324, %v8326
        %v8374 = vsel %vm8367, %v8328, %v8330
        %v8375 = vsel %vm8367, %v8332, %v8334
        %v8376 = vsel %vm8367, %v8336, %v8338
        %v8377 = vsel %vm8367, %v8340, %v8342
        %v8378 = vsel %vm8367, %v8344, %v8346
        %v8379 = vsel %vm8367, %v8348, %v8350
        %v8380 = vsel %vm8367, %v8352, %v8354
        %v8381 = vsel %vm8367, %v8356, %v8358
        %v8382 = vsel %vm8367, %v8360, %v8362
        %v8383 = vsel %vm8367, %v8364, %v8366
        %v8384 = vsel %vm2804, %v8368, 0
        %v8386 = vsel %vm2804, %v8369, 0
        %v8388 = vsel %vm2804, %v8370, 0
        %v8390 = vsel %vm2804, %v8371, 0
        %v8392 = vsel %vm2804, %v8372, 0
        %v8394 = vsel %vm2804, %v8373, 0
        %v8396 = vsel %vm2804, %v8374, 0
        %v8398 = vsel %vm2804, %v8375, 0
        %v8400 = vsel %vm2804, %v8376, 0
        %v8402 = vsel %vm2804, %v8377, 0
        %v8404 = vsel %vm2804, %v8378, 0
        %v8406 = vsel %vm2804, %v8379, 0
        %v8408 = vsel %vm2804, %v8380, 0
        %v8410 = vsel %vm2804, %v8381, 0
        %v8412 = vsel %vm2804, %v8382, 0
        %v8414 = vsel %vm2804, %v8383, 0
        %v8417 = vsel %vm2853, %v8270, 0
        %8419 = vmatprep.subr.mxu0 0.0
        %8420 = vmatpush1.msra.mxu0 %v8417
        %8421 = vmatprep.subr.mxu0 0.0
        %8422 = vmatpush1.msra.mxu0 0.0
        %8423 = vmatprep.subr.mxu0 0.0
        %8424 = vmatpush1.msra.mxu0 0.0
        %8425 = vmatprep.subr.mxu0 0.0
        %8426 = vmatpush1.msra.mxu0 0.0
        %8427 = vmatprep.subr.mxu0 0.0
        %8428 = vmatpush1.msra.mxu0 0.0
        %8429 = vmatprep.subr.mxu0 0.0
        %8430 = vmatpush1.msra.mxu0 0.0
        %8431 = vmatprep.subr.mxu0 0.0
        %8432 = vmatpush1.msra.mxu0 0.0
        %8433 = vmatprep.subr.mxu0 0.0
        %8434 = vmatpush1.msra.mxu0 0.0
        %8435 = vmatprep.subr.mxu0 0.0
        %8436 = vmatpush1.msra.mxu0 0.0
        %8437 = vmatprep.subr.mxu0 0.0
        %8438 = vmatpush1.msra.mxu0 0.0
        %8439 = vmatprep.subr.mxu0 0.0
        %8440 = vmatpush1.msra.mxu0 0.0
        %8441 = vmatprep.subr.mxu0 0.0
        %8442 = vmatpush1.msra.mxu0 0.0
        %8443 = vmatprep.subr.mxu0 0.0
        %8444 = vmatpush1.msra.mxu0 0.0
        %8445 = vmatprep.subr.mxu0 0.0
        %8446 = vmatpush1.msra.mxu0 0.0
        %8447 = vmatprep.subr.mxu0 0.0
        %8448 = vmatpush1.msra.mxu0 0.0
        %8449 = vmatprep.subr.mxu0 0.0
        %8450 = vmatpush1.msra.mxu0 0.0
        %8451 = vmatprep.subr.mxu0 0.0
        %8452 = vmatpush1.msra.mxu0 0.0
        %8453 = vmatprep.subr.mxu0 0.0
        %8454 = vmatpush1.msra.mxu0 0.0
        %8455 = vmatprep.subr.mxu0 0.0
        %8456 = vmatpush1.msra.mxu0 0.0
        %8457 = vmatprep.subr.mxu0 0.0
        %8458 = vmatpush1.msra.mxu0 0.0
        %8459 = vmatprep.subr.mxu0 0.0
        %8460 = vmatpush1.msra.mxu0 0.0
        %8461 = vmatprep.subr.mxu0 0.0
        %8462 = vmatpush1.msra.mxu0 0.0
        %8463 = vmatprep.subr.mxu0 0.0
        %8464 = vmatpush1.msra.mxu0 0.0
        %8465 = vmatprep.subr.mxu0 0.0
        %8466 = vmatpush1.msra.mxu0 0.0
        %8467 = vmatprep.subr.mxu0 0.0
        %8468 = vmatpush1.msra.mxu0 0.0
        %8469 = vmatprep.subr.mxu0 0.0
        %8470 = vmatpush1.msra.mxu0 0.0
        %8471 = vmatprep.subr.mxu0 0.0
        %8472 = vmatpush1.msra.mxu0 0.0
        %8473 = vmatprep.subr.mxu0 0.0
        %8474 = vmatpush1.msra.mxu0 0.0
        %8475 = vmatprep.subr.mxu0 0.0
        %8476 = vmatpush1.msra.mxu0 0.0
        %8477 = vmatprep.subr.mxu0 0.0
        %8478 = vmatpush1.msra.mxu0 0.0
        %8479 = vmatprep.subr.mxu0 0.0
        %8480 = vmatpush1.msra.mxu0 0.0
        %8481 = vmatprep.subr.mxu0 0.0
        %8482 = vmatpush1.msra.mxu0 0.0
        %8483 = vmatprep.mubr.f32.mxu0 0.0
        %8484 = vmatmul.mubr.f32.gmra.mrb[0].mxu0 %v8384
        %v8485 = vpop.f32.mrb[0].mxu0
        %v8486 = vadd.f32 0.0, %v8485
        %v8487 = vpop.f32.mrb[0].mxu0
        %8488 = vmatprep.mubr.f32.mxu0 0.0
        %8489 = vmatmul.mubr.f32.gmra.mrb[0].mxu0 %v8386
        %v8490 = vpop.f32.mrb[0].mxu0
        %v8491 = vadd.f32 0.0, %v8490
        %v8492 = vpop.f32.mrb[0].mxu0
        %8493 = vmatprep.mubr.f32.mxu0 0.0
        %8494 = vmatmul.mubr.f32.gmra.mrb[0].mxu0 %v8388
        %v8495 = vpop.f32.mrb[0].mxu0
        %v8496 = vadd.f32 0.0, %v8495
        %v8497 = vpop.f32.mrb[0].mxu0
        %8498 = vmatprep.mubr.f32.mxu0 0.0
        %8499 = vmatmul.mubr.f32.gmra.mrb[0].mxu0 %v8390
        %v8500 = vpop.f32.mrb[0].mxu0
        %v8501 = vadd.f32 0.0, %v8500
        %v8502 = vpop.f32.mrb[0].mxu0
        %8503 = vmatprep.mubr.f32.mxu0 0.0
        %8504 = vmatmul.mubr.f32.gmra.mrb[0].mxu0 %v8392
        %v8505 = vpop.f32.mrb[0].mxu0
        %v8506 = vadd.f32 0.0, %v8505
        %v8507 = vpop.f32.mrb[0].mxu0
        %8508 = vmatprep.mubr.f32.mxu0 0.0
        %8509 = vmatmul.mubr.f32.gmra.mrb[0].mxu0 %v8394
        %v8510 = vpop.f32.mrb[0].mxu0
        %v8511 = vadd.f32 0.0, %v8510
        %v8512 = vpop.f32.mrb[0].mxu0
        %8513 = vmatprep.mubr.f32.mxu0 0.0
        %8514 = vmatmul.mubr.f32.gmra.mrb[0].mxu0 %v8396
        %v8515 = vpop.f32.mrb[0].mxu0
        %v8516 = vadd.f32 0.0, %v8515
        %v8517 = vpop.f32.mrb[0].mxu0
        %8518 = vmatprep.mubr.f32.mxu0 0.0
        %8519 = vmatmul.mubr.f32.gmra.mrb[0].mxu0 %v8398
        %v8520 = vpop.f32.mrb[0].mxu0
        %v8521 = vadd.f32 0.0, %v8520
        %v8522 = vpop.f32.mrb[0].mxu0
        %8523 = vmatprep.mubr.f32.mxu0 0.0
        %8524 = vmatmul.mubr.f32.gmra.mrb[0].mxu0 %v8400
        %v8525 = vpop.f32.mrb[0].mxu0
        %v8526 = vadd.f32 0.0, %v8525
        %v8527 = vpop.f32.mrb[0].mxu0
        %8528 = vmatprep.mubr.f32.mxu0 0.0
        %8529 = vmatmul.mubr.f32.gmra.mrb[0].mxu0 %v8402
        %v8530 = vpop.f32.mrb[0].mxu0
        %v8531 = vadd.f32 0.0, %v8530
        %v8532 = vpop.f32.mrb[0].mxu0
        %8533 = vmatprep.mubr.f32.mxu0 0.0
        %8534 = vmatmul.mubr.f32.gmra.mrb[0].mxu0 %v8404
        %v8535 = vpop.f32.mrb[0].mxu0
        %v8536 = vadd.f32 0.0, %v8535
        %v8537 = vpop.f32.mrb[0].mxu0
        %8538 = vmatprep.mubr.f32.mxu0 0.0
        %8539 = vmatmul.mubr.f32.gmra.mrb[0].mxu0 %v8406
        %v8540 = vpop.f32.mrb[0].mxu0
        %v8541 = vadd.f32 0.0, %v8540
        %v8542 = vpop.f32.mrb[0].mxu0
        %8543 = vmatprep.mubr.f32.mxu0 0.0
        %8544 = vmatmul.mubr.f32.gmra.mrb[0].mxu0 %v8408
        %v8545 = vpop.f32.mrb[0].mxu0
        %v8546 = vadd.f32 0.0, %v8545
        %v8547 = vpop.f32.mrb[0].mxu0
        %8548 = vmatprep.mubr.f32.mxu0 0.0
        %8549 = vmatmul.mubr.f32.gmra.mrb[0].mxu0 %v8410
        %v8550 = vpop.f32.mrb[0].mxu0
        %v8551 = vadd.f32 0.0, %v8550
        %v8552 = vpop.f32.mrb[0].mxu0
        %8553 = vmatprep.mubr.f32.mxu0 0.0
        %8554 = vmatmul.mubr.f32.gmra.mrb[0].mxu0 %v8412
        %v8555 = vpop.f32.mrb[0].mxu0
        %v8556 = vadd.f32 0.0, %v8555
        %v8557 = vpop.f32.mrb[0].mxu0
        %8558 = vmatprep.mubr.f32.mxu0 0.0
        %8559 = vmatmul.mubr.f32.gmra.mrb[0].mxu0 %v8414
        %v8560 = vpop.f32.mrb[0].mxu0
        %v8561 = vadd.f32 0.0, %v8560
        %v8562 = vpop.f32.mrb[0].mxu0
        %8563 = vdwg.mxu0
        %8564 = vst [vmem:[#allocation3 + $0xa80] sm:$0xff] %v8486
        %8565 = vst [vmem:[#allocation3 + $0xa88] sm:$0xff] %v8491
        %8566 = vst [vmem:[#allocation3 + $0xa90] sm:$0xff] %v8496
        %8567 = vst [vmem:[#allocation3 + $0xa98] sm:$0xff] %v8501
        %8568 = vst [vmem:[#allocation3 + $0xaa0] sm:$0xff] %v8506
        %8569 = vst [vmem:[#allocation3 + $0xaa8] sm:$0xff] %v8511
        %8570 = vst [vmem:[#allocation3 + $0xab0] sm:$0xff] %v8516
        %8571 = vst [vmem:[#allocation3 + $0xab8] sm:$0xff] %v8521
        %8572 = vst [vmem:[#allocation3 + $0xac0] sm:$0xff] %v8526
        %8573 = vst [vmem:[#allocation3 + $0xac8] sm:$0xff] %v8531
        %8574 = vst [vmem:[#allocation3 + $0xad0] sm:$0xff] %v8536
        %8575 = vst [vmem:[#allocation3 + $0xad8] sm:$0xff] %v8541
        %8576 = vst [vmem:[#allocation3 + $0xae0] sm:$0xff] %v8546
        %8577 = vst [vmem:[#allocation3 + $0xae8] sm:$0xff] %v8551
        %8578 = vst [vmem:[#allocation3 + $0xaf0] sm:$0xff] %v8556
        %8579 = vst [vmem:[#allocation3 + $0xaf8] sm:$0xff] %v8561
        %v8580 = vld [vmem:[%s4] sm:$0xff]
        %v8581 = vld [vmem:[%s4 + $0x8] sm:$0xff]
        %v8582 = vld [vmem:[%s4 + $0x10] sm:$0xff]
        %v8583 = vld [vmem:[%s4 + $0x18] sm:$0xff]
        %v8584 = vld [vmem:[%s4 + $0x20] sm:$0xff]
        %v8585 = vld [vmem:[%s4 + $0x28] sm:$0xff]
        %v8586 = vld [vmem:[%s4 + $0x30] sm:$0xff]
        %v8587 = vld [vmem:[%s4 + $0x38] sm:$0xff]
        %8589 = vset.pattern.permute.xlu0 0
        %8590 = vperm.xlu0 %8589, %v8580
        %v8591 = vpop.permute.xlu0 %8590
        %8594 = vset.pattern.permute.xlu0 0
        %8595 = vperm.xlu0 %8594, %v8581
        %v8596 = vpop.permute.xlu0 %8595
        %8599 = vset.pattern.permute.xlu0 0
        %8600 = vperm.xlu0 %8599, %v8582
        %v8601 = vpop.permute.xlu0 %8600
        %8604 = vset.pattern.permute.xlu0 0
        %8605 = vperm.xlu0 %8604, %v8583
        %v8606 = vpop.permute.xlu0 %8605
        %8609 = vset.pattern.permute.xlu0 0
        %8610 = vperm.xlu0 %8609, %v8584
        %v8611 = vpop.permute.xlu0 %8610
        %8614 = vset.pattern.permute.xlu0 0
        %8615 = vperm.xlu0 %8614, %v8585
        %v8616 = vpop.permute.xlu0 %8615
        %8619 = vset.pattern.permute.xlu0 0
        %8620 = vperm.xlu0 %8619, %v8586
        %v8621 = vpop.permute.xlu0 %8620
        %8624 = vset.pattern.permute.xlu0 0
        %8625 = vperm.xlu0 %8624, %v8587
        %v8626 = vpop.permute.xlu0 %8625
        loop: start=0, step=1, limit=22
        $region79: #{tpu_custom_call.1} parent=73 // loop_pre_header
          _
        $region80: #{tpu_custom_call.1} parent=73 // loop_header
          %s8629 = sphi 0, %s8633
          %p8630 = scmp.ge.s32.totalorder %s8629, 22
        $region81: #{tpu_custom_call.1} parent=73 // loop_header_branch
          %8632 = sbr.rel (%p8630) target = $region85
        $region82: #{tpu_custom_call.1} parent=73 // loop_body
          %s8634 = smul.u32 %s8629, 128
          %s8635 = sadd.s32 %s8634, 64
          %s8636 = scalar_lea.vmem [#allocation3], %s8635
          %v8637 = vld [vmem:[%s8636] sm:$0xff]
          %v8638 = vld [vmem:[%s8636 + $0x8] sm:$0xff]
          %v8639 = vld [vmem:[%s8636 + $0x10] sm:$0xff]
          %v8640 = vld [vmem:[%s8636 + $0x18] sm:$0xff]
          %v8641 = vld [vmem:[%s8636 + $0x20] sm:$0xff]
          %v8642 = vld [vmem:[%s8636 + $0x28] sm:$0xff]
          %v8643 = vld [vmem:[%s8636 + $0x30] sm:$0xff]
          %v8644 = vld [vmem:[%s8636 + $0x38] sm:$0xff]
          %s8645 = smul.u32 %s8629, 23
          %s8646 = scalar_lea.vmem [#allocation2], %s8645
          %v8647 = vld [vmem:[%s8646] sm:$0x1]
          %v8648 = vlaneseq
          %v8649 = vshrl.u32 %v8648, 7
          %v8650 = vsub.s32 0, %v8649
          %v8651 = vrot.slane %v8647, %v8650
          %v8652 = vmul.f32 %v8651, %v8637
          %v8653 = vmul.f32 %v8651, %v8638
          %v8654 = vmul.f32 %v8651, %v8639
          %v8655 = vmul.f32 %v8651, %v8640
          %v8656 = vmul.f32 %v8651, %v8641
          %v8657 = vmul.f32 %v8651, %v8642
          %v8658 = vmul.f32 %v8651, %v8643
          %v8659 = vmul.f32 %v8651, %v8644
          %v8660 = vadd.f32 %v8652, %v8591
          %v8661 = vadd.f32 %v8653, %v8596
          %v8662 = vadd.f32 %v8654, %v8601
          %v8663 = vadd.f32 %v8655, %v8606
          %v8664 = vadd.f32 %v8656, %v8611
          %v8665 = vadd.f32 %v8657, %v8616
          %v8666 = vadd.f32 %v8658, %v8621
          %v8667 = vadd.f32 %v8659, %v8626
          %s8668 = smul.u32 %s8629, 22
          %s8669 = scalar_lea.vmem [#allocation2], %s8668
          %v8670 = vld [vmem:[%s8669] sm:$0x1]
          %v8671 = vld [vmem:[#allocation3] sm:$0xff]
          %v8672 = vld [vmem:[#allocation3 + $0x8] sm:$0xff]
          %v8673 = vld [vmem:[#allocation3 + $0x10] sm:$0xff]
          %v8674 = vld [vmem:[#allocation3 + $0x18] sm:$0xff]
          %v8675 = vld [vmem:[#allocation3 + $0x20] sm:$0xff]
          %v8676 = vld [vmem:[#allocation3 + $0x28] sm:$0xff]
          %v8677 = vld [vmem:[#allocation3 + $0x30] sm:$0xff]
          %v8678 = vld [vmem:[#allocation3 + $0x38] sm:$0xff]
          %v8679 = vlaneseq
          %v8680 = vshrl.u32 %v8679, 7
          %v8681 = vsub.s32 0, %v8680
          %v8682 = vrot.slane %v8670, %v8681
          %v8683 = vmul.f32 %v8682, %v8671
          %v8684 = vmul.f32 %v8682, %v8672
          %v8685 = vmul.f32 %v8682, %v8673
          %v8686 = vmul.f32 %v8682, %v8674
          %v8687 = vmul.f32 %v8682, %v8675
          %v8688 = vmul.f32 %v8682, %v8676
          %v8689 = vmul.f32 %v8682, %v8677
          %v8690 = vmul.f32 %v8682, %v8678
          %v8691 = vadd.f32 %v8660, %v8683
          %v8692 = vadd.f32 %v8661, %v8684
          %v8693 = vadd.f32 %v8662, %v8685
          %v8694 = vadd.f32 %v8663, %v8686
          %v8695 = vadd.f32 %v8664, %v8687
          %v8696 = vadd.f32 %v8665, %v8688
          %v8697 = vadd.f32 %v8666, %v8689
          %v8698 = vadd.f32 %v8667, %v8690
          %s8699 = sadd.s32 %s8668, 1
          %s8700 = scalar_lea.vmem [#allocation2], %s8699
          %v8701 = vld [vmem:[%s8700] sm:$0x1]
          %v8702 = vld [vmem:[#allocation3 + $0x80] sm:$0xff]
          %v8703 = vld [vmem:[#allocation3 + $0x88] sm:$0xff]
          %v8704 = vld [vmem:[#allocation3 + $0x90] sm:$0xff]
          %v8705 = vld [vmem:[#allocation3 + $0x98] sm:$0xff]
          %v8706 = vld [vmem:[#allocation3 + $0xa0] sm:$0xff]
          %v8707 = vld [vmem:[#allocation3 + $0xa8] sm:$0xff]
          %v8708 = vld [vmem:[#allocation3 + $0xb0] sm:$0xff]
          %v8709 = vld [vmem:[#allocation3 + $0xb8] sm:$0xff]
          %v8710 = vlaneseq
          %v8711 = vshrl.u32 %v8710, 7
          %v8712 = vsub.s32 0, %v8711
          %v8713 = vrot.slane %v8701, %v8712
          %v8714 = vmul.f32 %v8713, %v8702
          %v8715 = vmul.f32 %v8713, %v8703
          %v8716 = vmul.f32 %v8713, %v8704
          %v8717 = vmul.f32 %v8713, %v8705
          %v8718 = vmul.f32 %v8713, %v8706
          %v8719 = vmul.f32 %v8713, %v8707
          %v8720 = vmul.f32 %v8713, %v8708
          %v8721 = vmul.f32 %v8713, %v8709
          %v8722 = vadd.f32 %v8691, %v8714
          %v8723 = vadd.f32 %v8692, %v8715
          %v8724 = vadd.f32 %v8693, %v8716
          %v8725 = vadd.f32 %v8694, %v8717
          %v8726 = vadd.f32 %v8695, %v8718
          %v8727 = vadd.f32 %v8696, %v8719
          %v8728 = vadd.f32 %v8697, %v8720
          %v8729 = vadd.f32 %v8698, %v8721
          %s8730 = sadd.s32 %s8668, 2
          %s8731 = scalar_lea.vmem [#allocation2], %s8730
          %v8732 = vld [vmem:[%s8731] sm:$0x1]
          %v8733 = vld [vmem:[#allocation3 + $0x100] sm:$0xff]
          %v8734 = vld [vmem:[#allocation3 + $0x108] sm:$0xff]
          %v8735 = vld [vmem:[#allocation3 + $0x110] sm:$0xff]
          %v8736 = vld [vmem:[#allocation3 + $0x118] sm:$0xff]
          %v8737 = vld [vmem:[#allocation3 + $0x120] sm:$0xff]
          %v8738 = vld [vmem:[#allocation3 + $0x128] sm:$0xff]
          %v8739 = vld [vmem:[#allocation3 + $0x130] sm:$0xff]
          %v8740 = vld [vmem:[#allocation3 + $0x138] sm:$0xff]
          %v8741 = vlaneseq
          %v8742 = vshrl.u32 %v8741, 7
          %v8743 = vsub.s32 0, %v8742
          %v8744 = vrot.slane %v8732, %v8743
          %v8745 = vmul.f32 %v8744, %v8733
          %v8746 = vmul.f32 %v8744, %v8734
          %v8747 = vmul.f32 %v8744, %v8735
          %v8748 = vmul.f32 %v8744, %v8736
          %v8749 = vmul.f32 %v8744, %v8737
          %v8750 = vmul.f32 %v8744, %v8738
          %v8751 = vmul.f32 %v8744, %v8739
          %v8752 = vmul.f32 %v8744, %v8740
          %v8753 = vadd.f32 %v8722, %v8745
          %v8754 = vadd.f32 %v8723, %v8746
          %v8755 = vadd.f32 %v8724, %v8747
          %v8756 = vadd.f32 %v8725, %v8748
          %v8757 = vadd.f32 %v8726, %v8749
          %v8758 = vadd.f32 %v8727, %v8750
          %v8759 = vadd.f32 %v8728, %v8751
          %v8760 = vadd.f32 %v8729, %v8752
          %s8761 = sadd.s32 %s8668, 3
          %s8762 = scalar_lea.vmem [#allocation2], %s8761
          %v8763 = vld [vmem:[%s8762] sm:$0x1]
          %v8764 = vld [vmem:[#allocation3 + $0x180] sm:$0xff]
          %v8765 = vld [vmem:[#allocation3 + $0x188] sm:$0xff]
          %v8766 = vld [vmem:[#allocation3 + $0x190] sm:$0xff]
          %v8767 = vld [vmem:[#allocation3 + $0x198] sm:$0xff]
          %v8768 = vld [vmem:[#allocation3 + $0x1a0] sm:$0xff]
          %v8769 = vld [vmem:[#allocation3 + $0x1a8] sm:$0xff]
          %v8770 = vld [vmem:[#allocation3 + $0x1b0] sm:$0xff]
          %v8771 = vld [vmem:[#allocation3 + $0x1b8] sm:$0xff]
          %v8772 = vlaneseq
          %v8773 = vshrl.u32 %v8772, 7
          %v8774 = vsub.s32 0, %v8773
          %v8775 = vrot.slane %v8763, %v8774
          %v8776 = vmul.f32 %v8775, %v8764
          %v8777 = vmul.f32 %v8775, %v8765
          %v8778 = vmul.f32 %v8775, %v8766
          %v8779 = vmul.f32 %v8775, %v8767
          %v8780 = vmul.f32 %v8775, %v8768
          %v8781 = vmul.f32 %v8775, %v8769
          %v8782 = vmul.f32 %v8775, %v8770
          %v8783 = vmul.f32 %v8775, %v8771
          %v8784 = vadd.f32 %v8753, %v8776
          %v8785 = vadd.f32 %v8754, %v8777
          %v8786 = vadd.f32 %v8755, %v8778
          %v8787 = vadd.f32 %v8756, %v8779
          %v8788 = vadd.f32 %v8757, %v8780
          %v8789 = vadd.f32 %v8758, %v8781
          %v8790 = vadd.f32 %v8759, %v8782
          %v8791 = vadd.f32 %v8760, %v8783
          %s8792 = sadd.s32 %s8668, 4
          %s8793 = scalar_lea.vmem [#allocation2], %s8792
          %v8794 = vld [vmem:[%s8793] sm:$0x1]
          %v8795 = vld [vmem:[#allocation3 + $0x200] sm:$0xff]
          %v8796 = vld [vmem:[#allocation3 + $0x208] sm:$0xff]
          %v8797 = vld [vmem:[#allocation3 + $0x210] sm:$0xff]
          %v8798 = vld [vmem:[#allocation3 + $0x218] sm:$0xff]
          %v8799 = vld [vmem:[#allocation3 + $0x220] sm:$0xff]
          %v8800 = vld [vmem:[#allocation3 + $0x228] sm:$0xff]
          %v8801 = vld [vmem:[#allocation3 + $0x230] sm:$0xff]
          %v8802 = vld [vmem:[#allocation3 + $0x238] sm:$0xff]
          %v8803 = vlaneseq
          %v8804 = vshrl.u32 %v8803, 7
          %v8805 = vsub.s32 0, %v8804
          %v8806 = vrot.slane %v8794, %v8805
          %v8807 = vmul.f32 %v8806, %v8795
          %v8808 = vmul.f32 %v8806, %v8796
          %v8809 = vmul.f32 %v8806, %v8797
          %v8810 = vmul.f32 %v8806, %v8798
          %v8811 = vmul.f32 %v8806, %v8799
          %v8812 = vmul.f32 %v8806, %v8800
          %v8813 = vmul.f32 %v8806, %v8801
          %v8814 = vmul.f32 %v8806, %v8802
          %v8815 = vadd.f32 %v8784, %v8807
          %v8816 = vadd.f32 %v8785, %v8808
          %v8817 = vadd.f32 %v8786, %v8809
          %v8818 = vadd.f32 %v8787, %v8810
          %v8819 = vadd.f32 %v8788, %v8811
          %v8820 = vadd.f32 %v8789, %v8812
          %v8821 = vadd.f32 %v8790, %v8813
          %v8822 = vadd.f32 %v8791, %v8814
          %s8823 = sadd.s32 %s8668, 5
          %s8824 = scalar_lea.vmem [#allocation2], %s8823
          %v8825 = vld [vmem:[%s8824] sm:$0x1]
          %v8826 = vld [vmem:[#allocation3 + $0x280] sm:$0xff]
          %v8827 = vld [vmem:[#allocation3 + $0x288] sm:$0xff]
          %v8828 = vld [vmem:[#allocation3 + $0x290] sm:$0xff]
          %v8829 = vld [vmem:[#allocation3 + $0x298] sm:$0xff]
          %v8830 = vld [vmem:[#allocation3 + $0x2a0] sm:$0xff]
          %v8831 = vld [vmem:[#allocation3 + $0x2a8] sm:$0xff]
          %v8832 = vld [vmem:[#allocation3 + $0x2b0] sm:$0xff]
          %v8833 = vld [vmem:[#allocation3 + $0x2b8] sm:$0xff]
          %v8834 = vlaneseq
          %v8835 = vshrl.u32 %v8834, 7
          %v8836 = vsub.s32 0, %v8835
          %v8837 = vrot.slane %v8825, %v8836
          %v8838 = vmul.f32 %v8837, %v8826
          %v8839 = vmul.f32 %v8837, %v8827
          %v8840 = vmul.f32 %v8837, %v8828
          %v8841 = vmul.f32 %v8837, %v8829
          %v8842 = vmul.f32 %v8837, %v8830
          %v8843 = vmul.f32 %v8837, %v8831
          %v8844 = vmul.f32 %v8837, %v8832
          %v8845 = vmul.f32 %v8837, %v8833
          %v8846 = vadd.f32 %v8815, %v8838
          %v8847 = vadd.f32 %v8816, %v8839
          %v8848 = vadd.f32 %v8817, %v8840
          %v8849 = vadd.f32 %v8818, %v8841
          %v8850 = vadd.f32 %v8819, %v8842
          %v8851 = vadd.f32 %v8820, %v8843
          %v8852 = vadd.f32 %v8821, %v8844
          %v8853 = vadd.f32 %v8822, %v8845
          %s8854 = sadd.s32 %s8668, 6
          %s8855 = scalar_lea.vmem [#allocation2], %s8854
          %v8856 = vld [vmem:[%s8855] sm:$0x1]
          %v8857 = vld [vmem:[#allocation3 + $0x300] sm:$0xff]
          %v8858 = vld [vmem:[#allocation3 + $0x308] sm:$0xff]
          %v8859 = vld [vmem:[#allocation3 + $0x310] sm:$0xff]
          %v8860 = vld [vmem:[#allocation3 + $0x318] sm:$0xff]
          %v8861 = vld [vmem:[#allocation3 + $0x320] sm:$0xff]
          %v8862 = vld [vmem:[#allocation3 + $0x328] sm:$0xff]
          %v8863 = vld [vmem:[#allocation3 + $0x330] sm:$0xff]
          %v8864 = vld [vmem:[#allocation3 + $0x338] sm:$0xff]
          %v8865 = vlaneseq
          %v8866 = vshrl.u32 %v8865, 7
          %v8867 = vsub.s32 0, %v8866
          %v8868 = vrot.slane %v8856, %v8867
          %v8869 = vmul.f32 %v8868, %v8857
          %v8870 = vmul.f32 %v8868, %v8858
          %v8871 = vmul.f32 %v8868, %v8859
          %v8872 = vmul.f32 %v8868, %v8860
          %v8873 = vmul.f32 %v8868, %v8861
          %v8874 = vmul.f32 %v8868, %v8862
          %v8875 = vmul.f32 %v8868, %v8863
          %v8876 = vmul.f32 %v8868, %v8864
          %v8877 = vadd.f32 %v8846, %v8869
          %v8878 = vadd.f32 %v8847, %v8870
          %v8879 = vadd.f32 %v8848, %v8871
          %v8880 = vadd.f32 %v8849, %v8872
          %v8881 = vadd.f32 %v8850, %v8873
          %v8882 = vadd.f32 %v8851, %v8874
          %v8883 = vadd.f32 %v8852, %v8875
          %v8884 = vadd.f32 %v8853, %v8876
          %s8885 = sadd.s32 %s8668, 7
          %s8886 = scalar_lea.vmem [#allocation2], %s8885
          %v8887 = vld [vmem:[%s8886] sm:$0x1]
          %v8888 = vld [vmem:[#allocation3 + $0x380] sm:$0xff]
          %v8889 = vld [vmem:[#allocation3 + $0x388] sm:$0xff]
          %v8890 = vld [vmem:[#allocation3 + $0x390] sm:$0xff]
          %v8891 = vld [vmem:[#allocation3 + $0x398] sm:$0xff]
          %v8892 = vld [vmem:[#allocation3 + $0x3a0] sm:$0xff]
          %v8893 = vld [vmem:[#allocation3 + $0x3a8] sm:$0xff]
          %v8894 = vld [vmem:[#allocation3 + $0x3b0] sm:$0xff]
          %v8895 = vld [vmem:[#allocation3 + $0x3b8] sm:$0xff]
          %v8896 = vlaneseq
          %v8897 = vshrl.u32 %v8896, 7
          %v8898 = vsub.s32 0, %v8897
          %v8899 = vrot.slane %v8887, %v8898
          %v8900 = vmul.f32 %v8899, %v8888
          %v8901 = vmul.f32 %v8899, %v8889
          %v8902 = vmul.f32 %v8899, %v8890
          %v8903 = vmul.f32 %v8899, %v8891
          %v8904 = vmul.f32 %v8899, %v8892
          %v8905 = vmul.f32 %v8899, %v8893
          %v8906 = vmul.f32 %v8899, %v8894
          %v8907 = vmul.f32 %v8899, %v8895
          %v8908 = vadd.f32 %v8877, %v8900
          %v8909 = vadd.f32 %v8878, %v8901
          %v8910 = vadd.f32 %v8879, %v8902
          %v8911 = vadd.f32 %v8880, %v8903
          %v8912 = vadd.f32 %v8881, %v8904
          %v8913 = vadd.f32 %v8882, %v8905
          %v8914 = vadd.f32 %v8883, %v8906
          %v8915 = vadd.f32 %v8884, %v8907
          %s8916 = sadd.s32 %s8668, 8
          %s8917 = scalar_lea.vmem [#allocation2], %s8916
          %v8918 = vld [vmem:[%s8917] sm:$0x1]
          %v8919 = vld [vmem:[#allocation3 + $0x400] sm:$0xff]
          %v8920 = vld [vmem:[#allocation3 + $0x408] sm:$0xff]
          %v8921 = vld [vmem:[#allocation3 + $0x410] sm:$0xff]
          %v8922 = vld [vmem:[#allocation3 + $0x418] sm:$0xff]
          %v8923 = vld [vmem:[#allocation3 + $0x420] sm:$0xff]
          %v8924 = vld [vmem:[#allocation3 + $0x428] sm:$0xff]
          %v8925 = vld [vmem:[#allocation3 + $0x430] sm:$0xff]
          %v8926 = vld [vmem:[#allocation3 + $0x438] sm:$0xff]
          %v8927 = vlaneseq
          %v8928 = vshrl.u32 %v8927, 7
          %v8929 = vsub.s32 0, %v8928
          %v8930 = vrot.slane %v8918, %v8929
          %v8931 = vmul.f32 %v8930, %v8919
          %v8932 = vmul.f32 %v8930, %v8920
          %v8933 = vmul.f32 %v8930, %v8921
          %v8934 = vmul.f32 %v8930, %v8922
          %v8935 = vmul.f32 %v8930, %v8923
          %v8936 = vmul.f32 %v8930, %v8924
          %v8937 = vmul.f32 %v8930, %v8925
          %v8938 = vmul.f32 %v8930, %v8926
          %v8939 = vadd.f32 %v8908, %v8931
          %v8940 = vadd.f32 %v8909, %v8932
          %v8941 = vadd.f32 %v8910, %v8933
          %v8942 = vadd.f32 %v8911, %v8934
          %v8943 = vadd.f32 %v8912, %v8935
          %v8944 = vadd.f32 %v8913, %v8936
          %v8945 = vadd.f32 %v8914, %v8937
          %v8946 = vadd.f32 %v8915, %v8938
          %s8947 = sadd.s32 %s8668, 9
          %s8948 = scalar_lea.vmem [#allocation2], %s8947
          %v8949 = vld [vmem:[%s8948] sm:$0x1]
          %v8950 = vld [vmem:[#allocation3 + $0x480] sm:$0xff]
          %v8951 = vld [vmem:[#allocation3 + $0x488] sm:$0xff]
          %v8952 = vld [vmem:[#allocation3 + $0x490] sm:$0xff]
          %v8953 = vld [vmem:[#allocation3 + $0x498] sm:$0xff]
          %v8954 = vld [vmem:[#allocation3 + $0x4a0] sm:$0xff]
          %v8955 = vld [vmem:[#allocation3 + $0x4a8] sm:$0xff]
          %v8956 = vld [vmem:[#allocation3 + $0x4b0] sm:$0xff]
          %v8957 = vld [vmem:[#allocation3 + $0x4b8] sm:$0xff]
          %v8958 = vlaneseq
          %v8959 = vshrl.u32 %v8958, 7
          %v8960 = vsub.s32 0, %v8959
          %v8961 = vrot.slane %v8949, %v8960
          %v8962 = vmul.f32 %v8961, %v8950
          %v8963 = vmul.f32 %v8961, %v8951
          %v8964 = vmul.f32 %v8961, %v8952
          %v8965 = vmul.f32 %v8961, %v8953
          %v8966 = vmul.f32 %v8961, %v8954
          %v8967 = vmul.f32 %v8961, %v8955
          %v8968 = vmul.f32 %v8961, %v8956
          %v8969 = vmul.f32 %v8961, %v8957
          %v8970 = vadd.f32 %v8939, %v8962
          %v8971 = vadd.f32 %v8940, %v8963
          %v8972 = vadd.f32 %v8941, %v8964
          %v8973 = vadd.f32 %v8942, %v8965
          %v8974 = vadd.f32 %v8943, %v8966
          %v8975 = vadd.f32 %v8944, %v8967
          %v8976 = vadd.f32 %v8945, %v8968
          %v8977 = vadd.f32 %v8946, %v8969
          %s8978 = sadd.s32 %s8668, 10
          %s8979 = scalar_lea.vmem [#allocation2], %s8978
          %v8980 = vld [vmem:[%s8979] sm:$0x1]
          %v8981 = vld [vmem:[#allocation3 + $0x500] sm:$0xff]
          %v8982 = vld [vmem:[#allocation3 + $0x508] sm:$0xff]
          %v8983 = vld [vmem:[#allocation3 + $0x510] sm:$0xff]
          %v8984 = vld [vmem:[#allocation3 + $0x518] sm:$0xff]
          %v8985 = vld [vmem:[#allocation3 + $0x520] sm:$0xff]
          %v8986 = vld [vmem:[#allocation3 + $0x528] sm:$0xff]
          %v8987 = vld [vmem:[#allocation3 + $0x530] sm:$0xff]
          %v8988 = vld [vmem:[#allocation3 + $0x538] sm:$0xff]
          %v8989 = vlaneseq
          %v8990 = vshrl.u32 %v8989, 7
          %v8991 = vsub.s32 0, %v8990
          %v8992 = vrot.slane %v8980, %v8991
          %v8993 = vmul.f32 %v8992, %v8981
          %v8994 = vmul.f32 %v8992, %v8982
          %v8995 = vmul.f32 %v8992, %v8983
          %v8996 = vmul.f32 %v8992, %v8984
          %v8997 = vmul.f32 %v8992, %v8985
          %v8998 = vmul.f32 %v8992, %v8986
          %v8999 = vmul.f32 %v8992, %v8987
          %v9000 = vmul.f32 %v8992, %v8988
          %v9001 = vadd.f32 %v8970, %v8993
          %v9002 = vadd.f32 %v8971, %v8994
          %v9003 = vadd.f32 %v8972, %v8995
          %v9004 = vadd.f32 %v8973, %v8996
          %v9005 = vadd.f32 %v8974, %v8997
          %v9006 = vadd.f32 %v8975, %v8998
          %v9007 = vadd.f32 %v8976, %v8999
          %v9008 = vadd.f32 %v8977, %v9000
          %s9009 = sadd.s32 %s8668, 11
          %s9010 = scalar_lea.vmem [#allocation2], %s9009
          %v9011 = vld [vmem:[%s9010] sm:$0x1]
          %v9012 = vld [vmem:[#allocation3 + $0x580] sm:$0xff]
          %v9013 = vld [vmem:[#allocation3 + $0x588] sm:$0xff]
          %v9014 = vld [vmem:[#allocation3 + $0x590] sm:$0xff]
          %v9015 = vld [vmem:[#allocation3 + $0x598] sm:$0xff]
          %v9016 = vld [vmem:[#allocation3 + $0x5a0] sm:$0xff]
          %v9017 = vld [vmem:[#allocation3 + $0x5a8] sm:$0xff]
          %v9018 = vld [vmem:[#allocation3 + $0x5b0] sm:$0xff]
          %v9019 = vld [vmem:[#allocation3 + $0x5b8] sm:$0xff]
          %v9020 = vlaneseq
          %v9021 = vshrl.u32 %v9020, 7
          %v9022 = vsub.s32 0, %v9021
          %v9023 = vrot.slane %v9011, %v9022
          %v9024 = vmul.f32 %v9023, %v9012
          %v9025 = vmul.f32 %v9023, %v9013
          %v9026 = vmul.f32 %v9023, %v9014
          %v9027 = vmul.f32 %v9023, %v9015
          %v9028 = vmul.f32 %v9023, %v9016
          %v9029 = vmul.f32 %v9023, %v9017
          %v9030 = vmul.f32 %v9023, %v9018
          %v9031 = vmul.f32 %v9023, %v9019
          %v9032 = vadd.f32 %v9001, %v9024
          %v9033 = vadd.f32 %v9002, %v9025
          %v9034 = vadd.f32 %v9003, %v9026
          %v9035 = vadd.f32 %v9004, %v9027
          %v9036 = vadd.f32 %v9005, %v9028
          %v9037 = vadd.f32 %v9006, %v9029
          %v9038 = vadd.f32 %v9007, %v9030
          %v9039 = vadd.f32 %v9008, %v9031
          %s9040 = sadd.s32 %s8668, 12
          %s9041 = scalar_lea.vmem [#allocation2], %s9040
          %v9042 = vld [vmem:[%s9041] sm:$0x1]
          %v9043 = vld [vmem:[#allocation3 + $0x600] sm:$0xff]
          %v9044 = vld [vmem:[#allocation3 + $0x608] sm:$0xff]
          %v9045 = vld [vmem:[#allocation3 + $0x610] sm:$0xff]
          %v9046 = vld [vmem:[#allocation3 + $0x618] sm:$0xff]
          %v9047 = vld [vmem:[#allocation3 + $0x620] sm:$0xff]
          %v9048 = vld [vmem:[#allocation3 + $0x628] sm:$0xff]
          %v9049 = vld [vmem:[#allocation3 + $0x630] sm:$0xff]
          %v9050 = vld [vmem:[#allocation3 + $0x638] sm:$0xff]
          %v9051 = vlaneseq
          %v9052 = vshrl.u32 %v9051, 7
          %v9053 = vsub.s32 0, %v9052
          %v9054 = vrot.slane %v9042, %v9053
          %v9055 = vmul.f32 %v9054, %v9043
          %v9056 = vmul.f32 %v9054, %v9044
          %v9057 = vmul.f32 %v9054, %v9045
          %v9058 = vmul.f32 %v9054, %v9046
          %v9059 = vmul.f32 %v9054, %v9047
          %v9060 = vmul.f32 %v9054, %v9048
          %v9061 = vmul.f32 %v9054, %v9049
          %v9062 = vmul.f32 %v9054, %v9050
          %v9063 = vadd.f32 %v9032, %v9055
          %v9064 = vadd.f32 %v9033, %v9056
          %v9065 = vadd.f32 %v9034, %v9057
          %v9066 = vadd.f32 %v9035, %v9058
          %v9067 = vadd.f32 %v9036, %v9059
          %v9068 = vadd.f32 %v9037, %v9060
          %v9069 = vadd.f32 %v9038, %v9061
          %v9070 = vadd.f32 %v9039, %v9062
          %s9071 = sadd.s32 %s8668, 13
          %s9072 = scalar_lea.vmem [#allocation2], %s9071
          %v9073 = vld [vmem:[%s9072] sm:$0x1]
          %v9074 = vld [vmem:[#allocation3 + $0x680] sm:$0xff]
          %v9075 = vld [vmem:[#allocation3 + $0x688] sm:$0xff]
          %v9076 = vld [vmem:[#allocation3 + $0x690] sm:$0xff]
          %v9077 = vld [vmem:[#allocation3 + $0x698] sm:$0xff]
          %v9078 = vld [vmem:[#allocation3 + $0x6a0] sm:$0xff]
          %v9079 = vld [vmem:[#allocation3 + $0x6a8] sm:$0xff]
          %v9080 = vld [vmem:[#allocation3 + $0x6b0] sm:$0xff]
          %v9081 = vld [vmem:[#allocation3 + $0x6b8] sm:$0xff]
          %v9082 = vlaneseq
          %v9083 = vshrl.u32 %v9082, 7
          %v9084 = vsub.s32 0, %v9083
          %v9085 = vrot.slane %v9073, %v9084
          %v9086 = vmul.f32 %v9085, %v9074
          %v9087 = vmul.f32 %v9085, %v9075
          %v9088 = vmul.f32 %v9085, %v9076
          %v9089 = vmul.f32 %v9085, %v9077
          %v9090 = vmul.f32 %v9085, %v9078
          %v9091 = vmul.f32 %v9085, %v9079
          %v9092 = vmul.f32 %v9085, %v9080
          %v9093 = vmul.f32 %v9085, %v9081
          %v9094 = vadd.f32 %v9063, %v9086
          %v9095 = vadd.f32 %v9064, %v9087
          %v9096 = vadd.f32 %v9065, %v9088
          %v9097 = vadd.f32 %v9066, %v9089
          %v9098 = vadd.f32 %v9067, %v9090
          %v9099 = vadd.f32 %v9068, %v9091
          %v9100 = vadd.f32 %v9069, %v9092
          %v9101 = vadd.f32 %v9070, %v9093
          %s9102 = sadd.s32 %s8668, 14
          %s9103 = scalar_lea.vmem [#allocation2], %s9102
          %v9104 = vld [vmem:[%s9103] sm:$0x1]
          %v9105 = vld [vmem:[#allocation3 + $0x700] sm:$0xff]
          %v9106 = vld [vmem:[#allocation3 + $0x708] sm:$0xff]
          %v9107 = vld [vmem:[#allocation3 + $0x710] sm:$0xff]
          %v9108 = vld [vmem:[#allocation3 + $0x718] sm:$0xff]
          %v9109 = vld [vmem:[#allocation3 + $0x720] sm:$0xff]
          %v9110 = vld [vmem:[#allocation3 + $0x728] sm:$0xff]
          %v9111 = vld [vmem:[#allocation3 + $0x730] sm:$0xff]
          %v9112 = vld [vmem:[#allocation3 + $0x738] sm:$0xff]
          %v9113 = vlaneseq
          %v9114 = vshrl.u32 %v9113, 7
          %v9115 = vsub.s32 0, %v9114
          %v9116 = vrot.slane %v9104, %v9115
          %v9117 = vmul.f32 %v9116, %v9105
          %v9118 = vmul.f32 %v9116, %v9106
          %v9119 = vmul.f32 %v9116, %v9107
          %v9120 = vmul.f32 %v9116, %v9108
          %v9121 = vmul.f32 %v9116, %v9109
          %v9122 = vmul.f32 %v9116, %v9110
          %v9123 = vmul.f32 %v9116, %v9111
          %v9124 = vmul.f32 %v9116, %v9112
          %v9125 = vadd.f32 %v9094, %v9117
          %v9126 = vadd.f32 %v9095, %v9118
          %v9127 = vadd.f32 %v9096, %v9119
          %v9128 = vadd.f32 %v9097, %v9120
          %v9129 = vadd.f32 %v9098, %v9121
          %v9130 = vadd.f32 %v9099, %v9122
          %v9131 = vadd.f32 %v9100, %v9123
          %v9132 = vadd.f32 %v9101, %v9124
          %s9133 = sadd.s32 %s8668, 15
          %s9134 = scalar_lea.vmem [#allocation2], %s9133
          %v9135 = vld [vmem:[%s9134] sm:$0x1]
          %v9136 = vld [vmem:[#allocation3 + $0x780] sm:$0xff]
          %v9137 = vld [vmem:[#allocation3 + $0x788] sm:$0xff]
          %v9138 = vld [vmem:[#allocation3 + $0x790] sm:$0xff]
          %v9139 = vld [vmem:[#allocation3 + $0x798] sm:$0xff]
          %v9140 = vld [vmem:[#allocation3 + $0x7a0] sm:$0xff]
          %v9141 = vld [vmem:[#allocation3 + $0x7a8] sm:$0xff]
          %v9142 = vld [vmem:[#allocation3 + $0x7b0] sm:$0xff]
          %v9143 = vld [vmem:[#allocation3 + $0x7b8] sm:$0xff]
          %v9144 = vlaneseq
          %v9145 = vshrl.u32 %v9144, 7
          %v9146 = vsub.s32 0, %v9145
          %v9147 = vrot.slane %v9135, %v9146
          %v9148 = vmul.f32 %v9147, %v9136
          %v9149 = vmul.f32 %v9147, %v9137
          %v9150 = vmul.f32 %v9147, %v9138
          %v9151 = vmul.f32 %v9147, %v9139
          %v9152 = vmul.f32 %v9147, %v9140
          %v9153 = vmul.f32 %v9147, %v9141
          %v9154 = vmul.f32 %v9147, %v9142
          %v9155 = vmul.f32 %v9147, %v9143
          %v9156 = vadd.f32 %v9125, %v9148
          %v9157 = vadd.f32 %v9126, %v9149
          %v9158 = vadd.f32 %v9127, %v9150
          %v9159 = vadd.f32 %v9128, %v9151
          %v9160 = vadd.f32 %v9129, %v9152
          %v9161 = vadd.f32 %v9130, %v9153
          %v9162 = vadd.f32 %v9131, %v9154
          %v9163 = vadd.f32 %v9132, %v9155
          %s9164 = sadd.s32 %s8668, 16
          %s9165 = scalar_lea.vmem [#allocation2], %s9164
          %v9166 = vld [vmem:[%s9165] sm:$0x1]
          %v9167 = vld [vmem:[#allocation3 + $0x800] sm:$0xff]
          %v9168 = vld [vmem:[#allocation3 + $0x808] sm:$0xff]
          %v9169 = vld [vmem:[#allocation3 + $0x810] sm:$0xff]
          %v9170 = vld [vmem:[#allocation3 + $0x818] sm:$0xff]
          %v9171 = vld [vmem:[#allocation3 + $0x820] sm:$0xff]
          %v9172 = vld [vmem:[#allocation3 + $0x828] sm:$0xff]
          %v9173 = vld [vmem:[#allocation3 + $0x830] sm:$0xff]
          %v9174 = vld [vmem:[#allocation3 + $0x838] sm:$0xff]
          %v9175 = vlaneseq
          %v9176 = vshrl.u32 %v9175, 7
          %v9177 = vsub.s32 0, %v9176
          %v9178 = vrot.slane %v9166, %v9177
          %v9179 = vmul.f32 %v9178, %v9167
          %v9180 = vmul.f32 %v9178, %v9168
          %v9181 = vmul.f32 %v9178, %v9169
          %v9182 = vmul.f32 %v9178, %v9170
          %v9183 = vmul.f32 %v9178, %v9171
          %v9184 = vmul.f32 %v9178, %v9172
          %v9185 = vmul.f32 %v9178, %v9173
          %v9186 = vmul.f32 %v9178, %v9174
          %v9187 = vadd.f32 %v9156, %v9179
          %v9188 = vadd.f32 %v9157, %v9180
          %v9189 = vadd.f32 %v9158, %v9181
          %v9190 = vadd.f32 %v9159, %v9182
          %v9191 = vadd.f32 %v9160, %v9183
          %v9192 = vadd.f32 %v9161, %v9184
          %v9193 = vadd.f32 %v9162, %v9185
          %v9194 = vadd.f32 %v9163, %v9186
          %s9195 = sadd.s32 %s8668, 17
          %s9196 = scalar_lea.vmem [#allocation2], %s9195
          %v9197 = vld [vmem:[%s9196] sm:$0x1]
          %v9198 = vld [vmem:[#allocation3 + $0x880] sm:$0xff]
          %v9199 = vld [vmem:[#allocation3 + $0x888] sm:$0xff]
          %v9200 = vld [vmem:[#allocation3 + $0x890] sm:$0xff]
          %v9201 = vld [vmem:[#allocation3 + $0x898] sm:$0xff]
          %v9202 = vld [vmem:[#allocation3 + $0x8a0] sm:$0xff]
          %v9203 = vld [vmem:[#allocation3 + $0x8a8] sm:$0xff]
          %v9204 = vld [vmem:[#allocation3 + $0x8b0] sm:$0xff]
          %v9205 = vld [vmem:[#allocation3 + $0x8b8] sm:$0xff]
          %v9206 = vlaneseq
          %v9207 = vshrl.u32 %v9206, 7
          %v9208 = vsub.s32 0, %v9207
          %v9209 = vrot.slane %v9197, %v9208
          %v9210 = vmul.f32 %v9209, %v9198
          %v9211 = vmul.f32 %v9209, %v9199
          %v9212 = vmul.f32 %v9209, %v9200
          %v9213 = vmul.f32 %v9209, %v9201
          %v9214 = vmul.f32 %v9209, %v9202
          %v9215 = vmul.f32 %v9209, %v9203
          %v9216 = vmul.f32 %v9209, %v9204
          %v9217 = vmul.f32 %v9209, %v9205
          %v9218 = vadd.f32 %v9187, %v9210
          %v9219 = vadd.f32 %v9188, %v9211
          %v9220 = vadd.f32 %v9189, %v9212
          %v9221 = vadd.f32 %v9190, %v9213
          %v9222 = vadd.f32 %v9191, %v9214
          %v9223 = vadd.f32 %v9192, %v9215
          %v9224 = vadd.f32 %v9193, %v9216
          %v9225 = vadd.f32 %v9194, %v9217
          %s9226 = sadd.s32 %s8668, 18
          %s9227 = scalar_lea.vmem [#allocation2], %s9226
          %v9228 = vld [vmem:[%s9227] sm:$0x1]
          %v9229 = vld [vmem:[#allocation3 + $0x900] sm:$0xff]
          %v9230 = vld [vmem:[#allocation3 + $0x908] sm:$0xff]
          %v9231 = vld [vmem:[#allocation3 + $0x910] sm:$0xff]
          %v9232 = vld [vmem:[#allocation3 + $0x918] sm:$0xff]
          %v9233 = vld [vmem:[#allocation3 + $0x920] sm:$0xff]
          %v9234 = vld [vmem:[#allocation3 + $0x928] sm:$0xff]
          %v9235 = vld [vmem:[#allocation3 + $0x930] sm:$0xff]
          %v9236 = vld [vmem:[#allocation3 + $0x938] sm:$0xff]
          %v9237 = vlaneseq
          %v9238 = vshrl.u32 %v9237, 7
          %v9239 = vsub.s32 0, %v9238
          %v9240 = vrot.slane %v9228, %v9239
          %v9241 = vmul.f32 %v9240, %v9229
          %v9242 = vmul.f32 %v9240, %v9230
          %v9243 = vmul.f32 %v9240, %v9231
          %v9244 = vmul.f32 %v9240, %v9232
          %v9245 = vmul.f32 %v9240, %v9233
          %v9246 = vmul.f32 %v9240, %v9234
          %v9247 = vmul.f32 %v9240, %v9235
          %v9248 = vmul.f32 %v9240, %v9236
          %v9249 = vadd.f32 %v9218, %v9241
          %v9250 = vadd.f32 %v9219, %v9242
          %v9251 = vadd.f32 %v9220, %v9243
          %v9252 = vadd.f32 %v9221, %v9244
          %v9253 = vadd.f32 %v9222, %v9245
          %v9254 = vadd.f32 %v9223, %v9246
          %v9255 = vadd.f32 %v9224, %v9247
          %v9256 = vadd.f32 %v9225, %v9248
          %s9257 = sadd.s32 %s8668, 19
          %s9258 = scalar_lea.vmem [#allocation2], %s9257
          %v9259 = vld [vmem:[%s9258] sm:$0x1]
          %v9260 = vld [vmem:[#allocation3 + $0x980] sm:$0xff]
          %v9261 = vld [vmem:[#allocation3 + $0x988] sm:$0xff]
          %v9262 = vld [vmem:[#allocation3 + $0x990] sm:$0xff]
          %v9263 = vld [vmem:[#allocation3 + $0x998] sm:$0xff]
          %v9264 = vld [vmem:[#allocation3 + $0x9a0] sm:$0xff]
          %v9265 = vld [vmem:[#allocation3 + $0x9a8] sm:$0xff]
          %v9266 = vld [vmem:[#allocation3 + $0x9b0] sm:$0xff]
          %v9267 = vld [vmem:[#allocation3 + $0x9b8] sm:$0xff]
          %v9268 = vlaneseq
          %v9269 = vshrl.u32 %v9268, 7
          %v9270 = vsub.s32 0, %v9269
          %v9271 = vrot.slane %v9259, %v9270
          %v9272 = vmul.f32 %v9271, %v9260
          %v9273 = vmul.f32 %v9271, %v9261
          %v9274 = vmul.f32 %v9271, %v9262
          %v9275 = vmul.f32 %v9271, %v9263
          %v9276 = vmul.f32 %v9271, %v9264
          %v9277 = vmul.f32 %v9271, %v9265
          %v9278 = vmul.f32 %v9271, %v9266
          %v9279 = vmul.f32 %v9271, %v9267
          %v9280 = vadd.f32 %v9249, %v9272
          %v9281 = vadd.f32 %v9250, %v9273
          %v9282 = vadd.f32 %v9251, %v9274
          %v9283 = vadd.f32 %v9252, %v9275
          %v9284 = vadd.f32 %v9253, %v9276
          %v9285 = vadd.f32 %v9254, %v9277
          %v9286 = vadd.f32 %v9255, %v9278
          %v9287 = vadd.f32 %v9256, %v9279
          %s9288 = sadd.s32 %s8668, 20
          %s9289 = scalar_lea.vmem [#allocation2], %s9288
          %v9290 = vld [vmem:[%s9289] sm:$0x1]
          %v9291 = vld [vmem:[#allocation3 + $0xa00] sm:$0xff]
          %v9292 = vld [vmem:[#allocation3 + $0xa08] sm:$0xff]
          %v9293 = vld [vmem:[#allocation3 + $0xa10] sm:$0xff]
          %v9294 = vld [vmem:[#allocation3 + $0xa18] sm:$0xff]
          %v9295 = vld [vmem:[#allocation3 + $0xa20] sm:$0xff]
          %v9296 = vld [vmem:[#allocation3 + $0xa28] sm:$0xff]
          %v9297 = vld [vmem:[#allocation3 + $0xa30] sm:$0xff]
          %v9298 = vld [vmem:[#allocation3 + $0xa38] sm:$0xff]
          %v9299 = vlaneseq
          %v9300 = vshrl.u32 %v9299, 7
          %v9301 = vsub.s32 0, %v9300
          %v9302 = vrot.slane %v9290, %v9301
          %v9303 = vmul.f32 %v9302, %v9291
          %v9304 = vmul.f32 %v9302, %v9292
          %v9305 = vmul.f32 %v9302, %v9293
          %v9306 = vmul.f32 %v9302, %v9294
          %v9307 = vmul.f32 %v9302, %v9295
          %v9308 = vmul.f32 %v9302, %v9296
          %v9309 = vmul.f32 %v9302, %v9297
          %v9310 = vmul.f32 %v9302, %v9298
          %v9311 = vadd.f32 %v9280, %v9303
          %v9312 = vadd.f32 %v9281, %v9304
          %v9313 = vadd.f32 %v9282, %v9305
          %v9314 = vadd.f32 %v9283, %v9306
          %v9315 = vadd.f32 %v9284, %v9307
          %v9316 = vadd.f32 %v9285, %v9308
          %v9317 = vadd.f32 %v9286, %v9309
          %v9318 = vadd.f32 %v9287, %v9310
          %s9319 = sadd.s32 %s8668, 21
          %s9320 = scalar_lea.vmem [#allocation2], %s9319
          %v9321 = vld [vmem:[%s9320] sm:$0x1]
          %v9322 = vld [vmem:[#allocation3 + $0xa80] sm:$0xff]
          %v9323 = vld [vmem:[#allocation3 + $0xa88] sm:$0xff]
          %v9324 = vld [vmem:[#allocation3 + $0xa90] sm:$0xff]
          %v9325 = vld [vmem:[#allocation3 + $0xa98] sm:$0xff]
          %v9326 = vld [vmem:[#allocation3 + $0xaa0] sm:$0xff]
          %v9327 = vld [vmem:[#allocation3 + $0xaa8] sm:$0xff]
          %v9328 = vld [vmem:[#allocation3 + $0xab0] sm:$0xff]
          %v9329 = vld [vmem:[#allocation3 + $0xab8] sm:$0xff]
          %v9330 = vlaneseq
          %v9331 = vshrl.u32 %v9330, 7
          %v9332 = vsub.s32 0, %v9331
          %v9333 = vrot.slane %v9321, %v9332
          %v9334 = vmul.f32 %v9333, %v9322
          %v9335 = vmul.f32 %v9333, %v9323
          %v9336 = vmul.f32 %v9333, %v9324
          %v9337 = vmul.f32 %v9333, %v9325
          %v9338 = vmul.f32 %v9333, %v9326
          %v9339 = vmul.f32 %v9333, %v9327
          %v9340 = vmul.f32 %v9333, %v9328
          %v9341 = vmul.f32 %v9333, %v9329
          %v9342 = vadd.f32 %v9311, %v9334
          %v9343 = vadd.f32 %v9312, %v9335
          %v9344 = vadd.f32 %v9313, %v9336
          %v9345 = vadd.f32 %v9314, %v9337
          %v9346 = vadd.f32 %v9315, %v9338
          %v9347 = vadd.f32 %v9316, %v9339
          %v9348 = vadd.f32 %v9317, %v9340
          %v9349 = vadd.f32 %v9318, %v9341
          %s9350 = smul.u32 %s8629, 64
          %s9351 = scalar_lea.vmem %s320, %s9350 [#allocation5]
          %9352 = vst [vmem:[%s9351] sm:$0xff] %v9342
          %9353 = vst [vmem:[%s9351 + $0x8] sm:$0xff] %v9343
          %9354 = vst [vmem:[%s9351 + $0x10] sm:$0xff] %v9344
          %9355 = vst [vmem:[%s9351 + $0x18] sm:$0xff] %v9345
          %9356 = vst [vmem:[%s9351 + $0x20] sm:$0xff] %v9346
          %9357 = vst [vmem:[%s9351 + $0x28] sm:$0xff] %v9347
          %9358 = vst [vmem:[%s9351 + $0x30] sm:$0xff] %v9348
          %9359 = vst [vmem:[%s9351 + $0x38] sm:$0xff] %v9349
        $region83: #{tpu_custom_call.1} parent=73 // loop_footer
          %s8633 = sadd.s32 1, %s8629
        $region84: #{tpu_custom_call.1} parent=73 // loop_footer_branch
          %8628 = sbr.rel target = $region80
        $region85: #{tpu_custom_call.1} parent=73 // loop_exit
          _
        %s9360 = sand.u32 %s137, 1
        %s9361 = scalar_lea.sflag [#allocation6], %s9360
        %s9362 = sand.u32 %s137, 1
        %s9363 = smul.addr %s9362, 1408
        %s9364 = scalar_lea.vmem [#allocation5], %s9363
        // Predicated region
        $region86: #{tpu_custom_call.1} parent=73 // pred_check
          %p9365 = pneg %p147
        $region87: #{tpu_custom_call.1} parent=73 // pred_check_branch
          %9367 = sbr.rel (%p9365) target = $region89
        $region88: #{tpu_custom_call.1} parent=73 // pred_region
          %s9369 = ssub.s32 22528, 22528
          %9370 = vsyncadd %s9361, %s9369
          %s9371 = smul.addr %s19, 128
          %s9372 = scalar_lea.hbm %s5, %s9371
          %s9373 = sshll.u32 %s9364, 4
          %s9374 = int_to_ptr.vmem [resolvable:$true] %s9373
          %9379 = dma.vmem_to_hbm [thread:$0]  %s9374, 22528, %s9372, %s9361, 128, 256, 8
        $region89: #{tpu_custom_call.1} parent=73 // pred_fallthru
          _
      $region74: #{tpu_custom_call.1} parent=5 // pred_fallthru
        _
      %p9380 = scmp.le.s32.totalorder 2, %s14
      // Predicated region
      $region90: #{tpu_custom_call.1} parent=5 // pred_check
        %p9381 = pneg %p9380
      $region91: #{tpu_custom_call.1} parent=5 // pred_check_branch
        %9383 = sbr.rel (%p9381) target = $region93
      $region92: #{tpu_custom_call.1} parent=5 // pred_region
        %s9384 = ssub.s32 %s14, 2
        // Predicated region
        $region94: #{tpu_custom_call.1} parent=92 // pred_check
          %p9385 = pneg %p153
        $region95: #{tpu_custom_call.1} parent=92 // pred_check_branch
          %9387 = sbr.rel (%p9385) target = $region97
        $region96: #{tpu_custom_call.1} parent=92 // pred_region
          %s9388 = sand.u32 %s138, 1
          %s9389 = scalar_lea.sflag [#allocation6], %s9388
          %s9390 = sand.u32 %s138, 1
          %s9391 = smul.addr %s9390, 1408
          %s9392 = scalar_lea.vmem [#allocation5], %s9391
          %9393 = dma.done %s9389, 22528
        $region97: #{tpu_custom_call.1} parent=92 // pred_fallthru
          _
      $region93: #{tpu_custom_call.1} parent=5 // pred_fallthru
        _
    $region6: #{tpu_custom_call.1} parent=1 // loop_footer
      %s18 = sadd.s32 1, %s14
    $region7: #{tpu_custom_call.1} parent=1 // loop_footer_branch
      %13 = sbr.rel target = $region3
    $region8: #{tpu_custom_call.1} parent=1 // loop_exit
      _
    %9394 = vsyncpa [#allocation6], 1
    %s9395 = scalar_lea.sflag [#allocation6], 1
    %9396 = vsyncpa %s9395, 1

</llo_original>
